<compile_context>
chip_gen: v6e
topology: v6e:2x2x1
jax: 0.10.0
libtpu: 0.0.40
codegen_flags: <defaults>
</compile_context>

<pallas_src>
import functools

import jax
import jax.numpy as jnp
from jax.experimental import pallas as pl
from jax.experimental.pallas import tpu as pltpu


def _round_up(x, m):
    return ((x + m - 1) // m) * m


# ----------------------------------------------------------------------------
# Per-generation tiling profile
# ----------------------------------------------------------------------------
def _tpu_profile():
    kind = ""
    try:
        kind = jax.devices()[0].device_kind.lower()
    except Exception:
        pass
    if ("v5 lite" in kind) or ("v5e" in kind) or ("v5lite" in kind):
        # v5e: 4x128x128 MXU (TN=256 buys nothing), 16 MiB scoped default.
        return dict(name="v5e", tn_max=128,
                    block_budget=12 << 20, vmem_limit=64 << 20,
                    vmem_ceiling=112 << 20)
    if "v7" in kind:
        # v7x: 64 MiB physical VMEM shared by 2 TCs -> tight budget.
        return dict(name="v7x", tn_max=256,
                    block_budget=20 << 20, vmem_limit=48 << 20,
                    vmem_ceiling=56 << 20)
    if "v6" in kind:
        return dict(name="v6e", tn_max=256,
                    block_budget=40 << 20, vmem_limit=96 << 20,
                    vmem_ceiling=112 << 20)
    # Unknown generation: conservative.
    return dict(name="default", tn_max=128,
                block_budget=12 << 20, vmem_limit=64 << 20,
                vmem_ceiling=56 << 20)


def _pick_row_tile(OH, OW, cin2, th, tw, tn, Hs, Ws, out_bytes, budget):
    """Largest output-row tile (divisor of OH, sublane-friendly) fitting budget."""
    fixed = (Hs * Ws * cin2 * 2 * 2          # x block, bf16, double-buffered
             + th * tw * cin2 * tn * 2 * 2)  # weight block, bf16, double-buffered
    cands = [d for d in range(OH, 0, -1)
             if OH % d == 0 and ((d * OW) % 8 == 0 or d == OH)]

    def need(d):
        tile_m = d * OW
        rows = d + th - 1
        return (fixed
                + tile_m * tn * out_bytes * 2   # out block, double-buffered
                + tile_m * tn * 4               # f32 accumulator scratch
                + tw * rows * OW * cin2 * 2)    # window scratch (bf16)

    for d in cands:
        if need(d) <= budget:
            return d, need(d)
    d = cands[-1]
    return d, need(d)


# ----------------------------------------------------------------------------
# Pallas kernel: conv taps + bias + LeakyReLU, fused.
# One grid step = (one image) x (one Cout tile) x (one output-row tile).
#   x_ref  : (1, Hs, Ws, cin2)          bf16  spatially padded, stride folded
#   w_ref  : (th*tw, cin2, TN)          bf16
#   b_ref  : (1, TN)                    f32
#   o_ref  : (1, tile_oh*OW, TN)        bf16 / f32
#   win_ref: (tw, tile_oh+th-1, OW, cin2) bf16  VMEM scratch (hoisted W windows)
#   acc_ref: (tile_oh*OW, TN)           f32   VMEM scratch accumulator
# ----------------------------------------------------------------------------
def _conv_rows_lrelu_kernel(x_ref, w_ref, b_ref, o_ref, win_ref, acc_ref, *,
                            th, tw, tile_oh, ow, cin2, slope):
    r = pl.program_id(2)                      # output-row tile index
    rows = tile_oh + th - 1
    tile_m = tile_oh * ow
    h0 = r * tile_oh
    if tile_oh % 8 == 0:
        h0 = pl.multiple_of(h0, 8)

    # Hoist the W-shifted window copies: tw copies per step instead of th*tw.
    # (The W slice is non-contiguous, so it is a copy either way -- do it once.)
    for j in range(tw):
        win_ref[j] = x_ref[0, pl.ds(h0, rows), pl.ds(j, ow), :]

    bias = b_ref[...]                          # (1, TN) f32, broadcasts over rows
    for i in range(th):
        # KW taps accumulate into a vreg-resident partial; the VMEM accumulator
        # is read/written only once per KH tap.
        part = None
        for j in range(tw):
            lhs = win_ref[j, i:i + tile_oh].reshape(tile_m, cin2)   # free view
            d = jnp.dot(lhs, w_ref[i * tw + j],
                        preferred_element_type=jnp.float32)
            part = d if part is None else part + d
        if i == 0:
            acc_ref[...] = part + bias
        else:
            acc_ref[...] += part

    a = acc_ref[...]
    a = jnp.maximum(a, slope * a)              # LeakyReLU, f32
    o_ref[0] = a.astype(o_ref.dtype)


# ----------------------------------------------------------------------------
# Conv2d + bias + LeakyReLU (NHWC), single fused pallas_call per conv
# ----------------------------------------------------------------------------
def conv2d_lrelu_nhwc(x_nhwc, w_oihw, b, *, stride, padding, slope, out_dtype,
                      profile):
    """x_nhwc: (N, H, W, Cin_act); Cin_act may exceed the weight's Cin because of
    channel padding carried over from the previous layer (padded channels are 0).
    w_oihw: (Cout, Cin, KH, KW) f32 (PyTorch layout); b: (Cout,) f32.
    Returns (N, OH, OW, Cout_padded), Cout padded to a multiple of 128."""
    N, H, W, cin_act = x_nhwc.shape
    cout, cin_w, KH, KW = w_oihw.shape
    assert cin_act >= cin_w
    s = stride
    assert KH % s == 0 and KW % s == 0, "stride must divide the kernel size"
    OH = (H + 2 * padding - KH) // s + 1
    OW = (W + 2 * padding - KW) // s + 1

    cout_p = _round_up(cout, 128)
    tn = profile["tn_max"] if cout_p % profile["tn_max"] == 0 else 128
    th, tw = KH // s, KW // s                 # taps after stride folding
    cin2 = s * s * cin_act

    # --- parameters (parameter-sized work, plain JAX, once per call) ---
    # OIHW -> (KH, KW, Cin_act, Cout_p); zero-pad Cin up to the activation channel
    # count and Cout up to a lane-dense multiple of 128.
    w = jnp.transpose(w_oihw, (2, 3, 1, 0))
    w = jnp.pad(w, ((0, 0), (0, 0), (0, cin_act - cin_w), (0, cout_p - cout)))
    # Fold the stride into channels; tap/phase ordering matches the activation
    # space-to-depth below.
    w = w.reshape(th, s, tw, s, cin_act, cout_p).transpose(0, 2, 1, 3, 4, 5)
    w = w.reshape(th * tw, cin2, cout_p).astype(jnp.bfloat16)
    bias = jnp.pad(b.astype(jnp.float32), (0, cout_p - cout)).reshape(1, cout_p)
    # INVARIANT: padded Cout columns of `w` and `bias` are exactly zero and
    # LeakyReLU(0) == 0, so this conv's padded output channels are zero and are
    # safe (zero-weighted) inputs to the next conv.  Do not change the pad
    # values or the activation without revisiting this.

    # --- activation layout (size-preserving): spatial pad + space-to-depth ---
    xp = jnp.pad(x_nhwc, ((0, 0), (padding, padding), (padding, padding), (0, 0)))
    Hp, Wp = xp.shape[1], xp.shape[2]
    Hp2, Wp2 = _round_up(Hp, s), _round_up(Wp, s)
    if (Hp2, Wp2) != (Hp, Wp):
        xp = jnp.pad(xp, ((0, 0), (0, Hp2 - Hp), (0, Wp2 - Wp), (0, 0)))
    Hs, Ws = Hp2 // s, Wp2 // s
    if s > 1:
        xp = xp.reshape(N, Hs, s, Ws, s, cin_act).transpose(0, 1, 3, 2, 4, 5)
        xp = xp.reshape(N, Hs, Ws, cin2)
    xs = xp.astype(jnp.bfloat16)

    # --- per-generation tiling ---
    out_bytes = jnp.dtype(out_dtype).itemsize
    tile_oh, need = _pick_row_tile(OH, OW, cin2, th, tw, tn, Hs, Ws, out_bytes,
                                   profile["block_budget"])
    tile_m = tile_oh * OW
    n_rows = OH // tile_oh
    n_co = cout_p // tn
    rows = tile_oh + th - 1
    M = OH * OW
    vmem_limit = int(min(profile["vmem_ceiling"],
                         max(profile["vmem_limit"], need + (8 << 20))))

    # --- grid order: keep the LARGER of {activation block, weight block} resident
    # (its block index constant along the faster axes -> no re-DMA). ---
    x_block_bytes = Hs * Ws * cin2 * 2
    w_block_bytes = th * tw * cin2 * tn * 2
    if x_block_bytes >= w_block_bytes:
        # activation-resident: batch is the slowest axis (also the axis a 2-TC
        # chip splits first, so only the small weights get duplicated per core).
        grid = (N, n_co, n_rows)
        x_map = lambda n, co, r: (n, 0, 0, 0)
        w_map = lambda n, co, r: (0, 0, co)
        b_map = lambda n, co, r: (0, co)
        o_map = lambda n, co, r: (n, r, co)
    else:
        # weight-resident: Cout tiles slowest, weights stay in VMEM across batch.
        grid = (n_co, N, n_rows)
        x_map = lambda co, n, r: (n, 0, 0, 0)
        w_map = lambda co, n, r: (0, 0, co)
        b_map = lambda co, n, r: (0, co)
        o_map = lambda co, n, r: (n, r, co)

    kernel = functools.partial(_conv_rows_lrelu_kernel, th=th, tw=tw,
                               tile_oh=tile_oh, ow=OW, cin2=cin2, slope=slope)

    out = pl.pallas_call(
        kernel,
        out_shape=jax.ShapeDtypeStruct((N, M, cout_p), out_dtype),
        grid_spec=pltpu.PrefetchScalarGridSpec(
            num_scalar_prefetch=0,
            grid=grid,
            in_specs=[
                pl.BlockSpec((1, Hs, Ws, cin2), x_map),
                pl.BlockSpec((th * tw, cin2, tn), w_map),
                pl.BlockSpec((1, tn), b_map),
            ],
            out_specs=pl.BlockSpec((1, tile_m, tn), o_map),
            scratch_shapes=[
                pltpu.VMEM((tw, rows, OW, cin2), jnp.bfloat16),   # window scratch
                pltpu.VMEM((tile_m, tn), jnp.float32),            # accumulator
            ],
        ),
        compiler_params=pltpu.CompilerParams(
            dimension_semantics=("parallel", "parallel", "arbitrary"),
            vmem_limit_bytes=vmem_limit),
    )(xs, w, bias)
    # Metadata-only reshape to NHWC; channel padding is kept so the next conv
    # consumes a lane-dense bf16 intermediate without any re-layout.
    return out.reshape(N, OH, OW, cout_p)


# ----------------------------------------------------------------------------
# Spectral normalization (parameter transform, plain JAX power iteration).
# Note: torch.nn.utils.spectral_norm persists u/v across steps (1 iter/step);
# here we re-run power iteration from a fresh u -- numerically equivalent
# normalization, not bit-identical training-state semantics.
# ----------------------------------------------------------------------------
def spectral_norm_weight(w_oihw, key, n_iter=5, eps=1e-12):
    cout = w_oihw.shape[0]
    w_mat = w_oihw.reshape(cout, -1)
    u = jax.random.normal(key, (cout,), dtype=jnp.float32)
    u = u / (jnp.linalg.norm(u) + eps)
    for _ in range(n_iter):
        v = w_mat.T @ u
        v = v / (jnp.linalg.norm(v) + eps)
        u = w_mat @ v
        u = u / (jnp.linalg.norm(u) + eps)
    sigma = u @ (w_mat @ v)
    return w_oihw / sigma


# ----------------------------------------------------------------------------
# DiscBlock forward (d_spectral_norm=True, Leaky_ReLU)
# ----------------------------------------------------------------------------
def disc_block_forward(x_nchw, params, slope=0.1):
    profile = _tpu_profile()
    # NCHW (PyTorch) -> NHWC (channels on the TPU lane axis), bf16 data path.
    x = jnp.transpose(x_nchw, (0, 2, 3, 1)).astype(jnp.bfloat16)
    # conv0: 3x3, stride 1, pad 1, fused LeakyReLU.  Intermediate stays bf16/NHWC
    # with Cout padded to 128, fed straight into conv1.
    h = conv2d_lrelu_nhwc(x, params["w0"], params["b0"], stride=1, padding=1,
                          slope=slope, out_dtype=jnp.bfloat16, profile=profile)
    # conv1: 4x4, stride 2, pad 1, fused LeakyReLU; f32 result.
    y = conv2d_lrelu_nhwc(h, params["w1"], params["b1"], stride=2, padding=1,
                          slope=slope, out_dtype=jnp.float32, profile=profile)
    cout = params["w1"].shape[0]
    # Strip lane padding and return PyTorch NCHW (slice fuses with transpose).
    return jnp.transpose(y[..., :cout], (0, 3, 1, 2))


# ----------------------------------------------------------------------------
# Pure-JAX reference with the same bf16 quantization points as the kernels
# ----------------------------------------------------------------------------
def _ref_forward(x_nchw, params, slope=0.1):
    def conv(x, w, b, stride, pad):
        y = jax.lax.conv_general_dilated(
            x.astype(jnp.bfloat16), w.astype(jnp.bfloat16),
            window_strides=(stride, stride), padding=[(pad, pad), (pad, pad)],
            dimension_numbers=("NCHW", "OIHW", "NCHW"),
            preferred_element_type=jnp.float32)
        return y + b.reshape(1, -1, 1, 1)

    def lrelu(v):
        return jnp.maximum(v, slope * v)

    a0 = lrelu(conv(x_nchw, params["w0"], params["b0"], 1, 1)).astype(jnp.bfloat16)
    return lrelu(conv(a0, params["w1"], params["b1"], 2, 1))


if __name__ == "__main__":
    key = jax.random.PRNGKey(0)
    k_x, k_w0, k_b0, k_w1, k_b1, k_u0, k_u1 = jax.random.split(key, 7)

    N, Cin, Cout, H, W = 2, 4, 8, 16, 16

    x = jax.random.normal(k_x, (N, Cin, H, W), dtype=jnp.float32)

    # Deterministic params (PyTorch OIHW conv layout), spectral-normalized.
    w0 = 0.1 * jax.random.normal(k_w0, (Cout, Cin, 3, 3), dtype=jnp.float32)
    b0 = 0.05 * jax.random.normal(k_b0, (Cout,), dtype=jnp.float32)
    w1 = 0.1 * jax.random.normal(k_w1, (Cout, Cout, 4, 4), dtype=jnp.float32)
    b1 = 0.05 * jax.random.normal(k_b1, (Cout,), dtype=jnp.float32)

    params = {
        "w0": spectral_norm_weight(w0, k_u0),
        "b0": b0,
        "w1": spectral_norm_weight(w1, k_u1),
        "b1": b1,
    }

    out = jax.jit(disc_block_forward)(x, params)
    out = jax.block_until_ready(out)

    ref = _ref_forward(x, params)
    assert out.shape == (N, Cout, H // 2, W // 2), out.shape
    err = float(jnp.max(jnp.abs(out - ref)))
    assert jnp.allclose(out, ref, atol=5e-3, rtol=5e-3), err

    print("KERNEL_OK")
</pallas_src>

<mosaic_0001>
module attributes {stable_mosaic.version = 11 : i64} {
  func.func @_conv_rows_lrelu_kernel(%arg0: i32, %arg1: i32, %arg2: i32, %arg3: memref<1x18x18x4xbf16, #tpu.memory_space<vmem>>, %arg4: memref<9x4x128xbf16, #tpu.memory_space<vmem>>, %arg5: memref<1x128xf32, #tpu.memory_space<vmem>>, %arg6: memref<1x256x128xbf16, #tpu.memory_space<vmem>>, %arg7: memref<3x18x16x4xbf16, #tpu.memory_space<vmem>>, %arg8: memref<256x128xf32, #tpu.memory_space<vmem>>) attributes {dimension_semantics = [#tpu.dimension_semantics<parallel>, #tpu.dimension_semantics<parallel>, #tpu.dimension_semantics<arbitrary>], iteration_bounds = array<i64: 1, 2, 1>, scalar_prefetch = 0 : i64, scratch_operands = 2 : i64, tpu.core_type = #tpu.core_type<tc>, window_params = [{transform_indices = @transform_0, window_bounds = array<i64: 1, 18, 18, 4>}, {transform_indices = @transform_1, window_bounds = array<i64: 9, 4, 128>}, {transform_indices = @transform_2, window_bounds = array<i64: 1, 128>}, {transform_indices = @transform_3, window_bounds = array<i64: 1, 256, 128>}]} {
    %c16_i32 = arith.constant 16 : i32
    %0 = arith.muli %arg2, %c16_i32 : i32
    %1 = tpu.assume_multiple %0, 8 : i32
    %c0 = arith.constant 0 : index
    %2 = arith.index_cast %1 : i32 to index
    %c0_0 = arith.constant 0 : index
    %c0_1 = arith.constant 0 : index
    %3 = vector.load %arg3[%c0, %2, %c0_0, %c0_1] : memref<1x18x18x4xbf16, #tpu.memory_space<vmem>>, vector<1x18x16x4xbf16>
    %4 = vector.shape_cast %3 : vector<1x18x16x4xbf16> to vector<18x16x4xbf16>
    %c0_2 = arith.constant 0 : index
    %c0_3 = arith.constant 0 : index
    %c0_4 = arith.constant 0 : index
    %c0_5 = arith.constant 0 : index
    %5 = vector.load %arg7[%c0_2, %c0_3, %c0_4, %c0_5] : memref<3x18x16x4xbf16, #tpu.memory_space<vmem>>, vector<1x18x16x4xbf16>
    %6 = vector.shape_cast %5 : vector<1x18x16x4xbf16> to vector<18x16x4xbf16>
    %7 = vector.shape_cast %4 : vector<18x16x4xbf16> to vector<1x18x16x4xbf16>
    tpu.vector_store %arg7[%c0_2, %c0_3, %c0_4, %c0_5], %7 {strides = array<i32>} : memref<3x18x16x4xbf16, #tpu.memory_space<vmem>>, vector<1x18x16x4xbf16>,
    %c0_6 = arith.constant 0 : index
    %8 = arith.index_cast %1 : i32 to index
    %c1 = arith.constant 1 : index
    %c0_7 = arith.constant 0 : index
    %9 = vector.load %arg3[%c0_6, %8, %c1, %c0_7] : memref<1x18x18x4xbf16, #tpu.memory_space<vmem>>, vector<1x18x16x4xbf16>
    %10 = vector.shape_cast %9 : vector<1x18x16x4xbf16> to vector<18x16x4xbf16>
    %c1_8 = arith.constant 1 : index
    %c0_9 = arith.constant 0 : index
    %c0_10 = arith.constant 0 : index
    %c0_11 = arith.constant 0 : index
    %11 = vector.load %arg7[%c1_8, %c0_9, %c0_10, %c0_11] : memref<3x18x16x4xbf16, #tpu.memory_space<vmem>>, vector<1x18x16x4xbf16>
    %12 = vector.shape_cast %11 : vector<1x18x16x4xbf16> to vector<18x16x4xbf16>
    %13 = vector.shape_cast %10 : vector<18x16x4xbf16> to vector<1x18x16x4xbf16>
    tpu.vector_store %arg7[%c1_8, %c0_9, %c0_10, %c0_11], %13 {strides = array<i32>} : memref<3x18x16x4xbf16, #tpu.memory_space<vmem>>, vector<1x18x16x4xbf16>,
    %c0_12 = arith.constant 0 : index
    %14 = arith.index_cast %1 : i32 to index
    %c2 = arith.constant 2 : index
    %c0_13 = arith.constant 0 : index
    %15 = vector.load %arg3[%c0_12, %14, %c2, %c0_13] : memref<1x18x18x4xbf16, #tpu.memory_space<vmem>>, vector<1x18x16x4xbf16>
    %16 = vector.shape_cast %15 : vector<1x18x16x4xbf16> to vector<18x16x4xbf16>
    %c2_14 = arith.constant 2 : index
    %c0_15 = arith.constant 0 : index
    %c0_16 = arith.constant 0 : index
    %c0_17 = arith.constant 0 : index
    %17 = vector.load %arg7[%c2_14, %c0_15, %c0_16, %c0_17] : memref<3x18x16x4xbf16, #tpu.memory_space<vmem>>, vector<1x18x16x4xbf16>
    %18 = vector.shape_cast %17 : vector<1x18x16x4xbf16> to vector<18x16x4xbf16>
    %19 = vector.shape_cast %16 : vector<18x16x4xbf16> to vector<1x18x16x4xbf16>
    tpu.vector_store %arg7[%c2_14, %c0_15, %c0_16, %c0_17], %19 {strides = array<i32>} : memref<3x18x16x4xbf16, #tpu.memory_space<vmem>>, vector<1x18x16x4xbf16>,
    %c0_18 = arith.constant 0 : index
    %c0_19 = arith.constant 0 : index
    %20 = vector.load %arg5[%c0_18, %c0_19] : memref<1x128xf32, #tpu.memory_space<vmem>>, vector<1x128xf32>
    %c0_20 = arith.constant 0 : index
    %c0_21 = arith.constant 0 : index
    %c0_22 = arith.constant 0 : index
    %c0_23 = arith.constant 0 : index
    %21 = vector.load %arg7[%c0_20, %c0_21, %c0_22, %c0_23] : memref<3x18x16x4xbf16, #tpu.memory_space<vmem>>, vector<1x16x16x4xbf16>
    %22 = vector.shape_cast %21 : vector<1x16x16x4xbf16> to vector<16x16x4xbf16>
    %23 = vector.shape_cast %22 : vector<16x16x4xbf16> to vector<256x4xbf16>
    %c0_24 = arith.constant 0 : index
    %c0_25 = arith.constant 0 : index
    %c0_26 = arith.constant 0 : index
    %24 = vector.load %arg4[%c0_24, %c0_25, %c0_26] : memref<9x4x128xbf16, #tpu.memory_space<vmem>>, vector<1x4x128xbf16>
    %25 = vector.shape_cast %24 : vector<1x4x128xbf16> to vector<4x128xbf16>
    %cst = arith.constant dense<0.000000e+00> : vector<256x128xf32>
    %26 = tpu.matmul %23, %25, %cst {dimension_numbers = #tpu.dot_dimension_numbers<[1], [0], [0], [1], [0, 0, 1, 1], [], []>} : vector<256x4xbf16>, vector<4x128xbf16>, vector<256x128xf32> -> vector<256x128xf32>
    %c1_27 = arith.constant 1 : index
    %c0_28 = arith.constant 0 : index
    %c0_29 = arith.constant 0 : index
    %c0_30 = arith.constant 0 : index
    %27 = vector.load %arg7[%c1_27, %c0_28, %c0_29, %c0_30] : memref<3x18x16x4xbf16, #tpu.memory_space<vmem>>, vector<1x16x16x4xbf16>
    %28 = vector.shape_cast %27 : vector<1x16x16x4xbf16> to vector<16x16x4xbf16>
    %29 = vector.shape_cast %28 : vector<16x16x4xbf16> to vector<256x4xbf16>
    %c1_31 = arith.constant 1 : index
    %c0_32 = arith.constant 0 : index
    %c0_33 = arith.constant 0 : index
    %30 = vector.load %arg4[%c1_31, %c0_32, %c0_33] : memref<9x4x128xbf16, #tpu.memory_space<vmem>>, vector<1x4x128xbf16>
    %31 = vector.shape_cast %30 : vector<1x4x128xbf16> to vector<4x128xbf16>
    %cst_34 = arith.constant dense<0.000000e+00> : vector<256x128xf32>
    %32 = tpu.matmul %29, %31, %cst_34 {dimension_numbers = #tpu.dot_dimension_numbers<[1], [0], [0], [1], [0, 0, 1, 1], [], []>} : vector<256x4xbf16>, vector<4x128xbf16>, vector<256x128xf32> -> vector<256x128xf32>
    %33 = arith.addf %26, %32 : vector<256x128xf32>
    %c2_35 = arith.constant 2 : index
    %c0_36 = arith.constant 0 : index
    %c0_37 = arith.constant 0 : index
    %c0_38 = arith.constant 0 : index
    %34 = vector.load %arg7[%c2_35, %c0_36, %c0_37, %c0_38] : memref<3x18x16x4xbf16, #tpu.memory_space<vmem>>, vector<1x16x16x4xbf16>
    %35 = vector.shape_cast %34 : vector<1x16x16x4xbf16> to vector<16x16x4xbf16>
    %36 = vector.shape_cast %35 : vector<16x16x4xbf16> to vector<256x4xbf16>
    %c2_39 = arith.constant 2 : index
    %c0_40 = arith.constant 0 : index
    %c0_41 = arith.constant 0 : index
    %37 = vector.load %arg4[%c2_39, %c0_40, %c0_41] : memref<9x4x128xbf16, #tpu.memory_space<vmem>>, vector<1x4x128xbf16>
    %38 = vector.shape_cast %37 : vector<1x4x128xbf16> to vector<4x128xbf16>
    %cst_42 = arith.constant dense<0.000000e+00> : vector<256x128xf32>
    %39 = tpu.matmul %36, %38, %cst_42 {dimension_numbers = #tpu.dot_dimension_numbers<[1], [0], [0], [1], [0, 0, 1, 1], [], []>} : vector<256x4xbf16>, vector<4x128xbf16>, vector<256x128xf32> -> vector<256x128xf32>
    %40 = arith.addf %33, %39 : vector<256x128xf32>
    %41 = vector.broadcast %20 : vector<1x128xf32> to vector<256x128xf32>
    %42 = arith.addf %40, %41 : vector<256x128xf32>
    %c0_43 = arith.constant 0 : index
    %c0_44 = arith.constant 0 : index
    %43 = vector.load %arg8[%c0_43, %c0_44] : memref<256x128xf32, #tpu.memory_space<vmem>>, vector<256x128xf32>
    tpu.vector_store %arg8[%c0_43, %c0_44], %42 {strides = array<i32>} : memref<256x128xf32, #tpu.memory_space<vmem>>, vector<256x128xf32>,
    %c0_45 = arith.constant 0 : index
    %c1_46 = arith.constant 1 : index
    %c0_47 = arith.constant 0 : index
    %c0_48 = arith.constant 0 : index
    %44 = vector.load %arg7[%c0_45, %c1_46, %c0_47, %c0_48] : memref<3x18x16x4xbf16, #tpu.memory_space<vmem>>, vector<1x16x16x4xbf16>
    %45 = vector.shape_cast %44 : vector<1x16x16x4xbf16> to vector<16x16x4xbf16>
    %46 = vector.shape_cast %45 : vector<16x16x4xbf16> to vector<256x4xbf16>
    %c3 = arith.constant 3 : index
    %c0_49 = arith.constant 0 : index
    %c0_50 = arith.constant 0 : index
    %47 = vector.load %arg4[%c3, %c0_49, %c0_50] : memref<9x4x128xbf16, #tpu.memory_space<vmem>>, vector<1x4x128xbf16>
    %48 = vector.shape_cast %47 : vector<1x4x128xbf16> to vector<4x128xbf16>
    %cst_51 = arith.constant dense<0.000000e+00> : vector<256x128xf32>
    %49 = tpu.matmul %46, %48, %cst_51 {dimension_numbers = #tpu.dot_dimension_numbers<[1], [0], [0], [1], [0, 0, 1, 1], [], []>} : vector<256x4xbf16>, vector<4x128xbf16>, vector<256x128xf32> -> vector<256x128xf32>
    %c1_52 = arith.constant 1 : index
    %c1_53 = arith.constant 1 : index
    %c0_54 = arith.constant 0 : index
    %c0_55 = arith.constant 0 : index
    %50 = vector.load %arg7[%c1_52, %c1_53, %c0_54, %c0_55] : memref<3x18x16x4xbf16, #tpu.memory_space<vmem>>, vector<1x16x16x4xbf16>
    %51 = vector.shape_cast %50 : vector<1x16x16x4xbf16> to vector<16x16x4xbf16>
    %52 = vector.shape_cast %51 : vector<16x16x4xbf16> to vector<256x4xbf16>
    %c4 = arith.constant 4 : index
    %c0_56 = arith.constant 0 : index
    %c0_57 = arith.constant 0 : index
    %53 = vector.load %arg4[%c4, %c0_56, %c0_57] : memref<9x4x128xbf16, #tpu.memory_space<vmem>>, vector<1x4x128xbf16>
    %54 = vector.shape_cast %53 : vector<1x4x128xbf16> to vector<4x128xbf16>
    %cst_58 = arith.constant dense<0.000000e+00> : vector<256x128xf32>
    %55 = tpu.matmul %52, %54, %cst_58 {dimension_numbers = #tpu.dot_dimension_numbers<[1], [0], [0], [1], [0, 0, 1, 1], [], []>} : vector<256x4xbf16>, vector<4x128xbf16>, vector<256x128xf32> -> vector<256x128xf32>
    %56 = arith.addf %49, %55 : vector<256x128xf32>
    %c2_59 = arith.constant 2 : index
    %c1_60 = arith.constant 1 : index
    %c0_61 = arith.constant 0 : index
    %c0_62 = arith.constant 0 : index
    %57 = vector.load %arg7[%c2_59, %c1_60, %c0_61, %c0_62] : memref<3x18x16x4xbf16, #tpu.memory_space<vmem>>, vector<1x16x16x4xbf16>
    %58 = vector.shape_cast %57 : vector<1x16x16x4xbf16> to vector<16x16x4xbf16>
    %59 = vector.shape_cast %58 : vector<16x16x4xbf16> to vector<256x4xbf16>
    %c5 = arith.constant 5 : index
    %c0_63 = arith.constant 0 : index
    %c0_64 = arith.constant 0 : index
    %60 = vector.load %arg4[%c5, %c0_63, %c0_64] : memref<9x4x128xbf16, #tpu.memory_space<vmem>>, vector<1x4x128xbf16>
    %61 = vector.shape_cast %60 : vector<1x4x128xbf16> to vector<4x128xbf16>
    %cst_65 = arith.constant dense<0.000000e+00> : vector<256x128xf32>
    %62 = tpu.matmul %59, %61, %cst_65 {dimension_numbers = #tpu.dot_dimension_numbers<[1], [0], [0], [1], [0, 0, 1, 1], [], []>} : vector<256x4xbf16>, vector<4x128xbf16>, vector<256x128xf32> -> vector<256x128xf32>
    %63 = arith.addf %56, %62 : vector<256x128xf32>
    %c0_66 = arith.constant 0 : index
    %c0_67 = arith.constant 0 : index
    %64 = vector.load %arg8[%c0_66, %c0_67] : memref<256x128xf32, #tpu.memory_space<vmem>>, vector<256x128xf32>
    %65 = arith.addf %64, %63 : vector<256x128xf32>
    %c0_68 = arith.constant 0 : index
    %c0_69 = arith.constant 0 : index
    %66 = vector.load %arg8[%c0_68, %c0_69] : memref<256x128xf32, #tpu.memory_space<vmem>>, vector<256x128xf32>
    tpu.vector_store %arg8[%c0_68, %c0_69], %65 {strides = array<i32>} : memref<256x128xf32, #tpu.memory_space<vmem>>, vector<256x128xf32>,
    %c0_70 = arith.constant 0 : index
    %c2_71 = arith.constant 2 : index
    %c0_72 = arith.constant 0 : index
    %c0_73 = arith.constant 0 : index
    %67 = vector.load %arg7[%c0_70, %c2_71, %c0_72, %c0_73] : memref<3x18x16x4xbf16, #tpu.memory_space<vmem>>, vector<1x16x16x4xbf16>
    %68 = vector.shape_cast %67 : vector<1x16x16x4xbf16> to vector<16x16x4xbf16>
    %69 = vector.shape_cast %68 : vector<16x16x4xbf16> to vector<256x4xbf16>
    %c6 = arith.constant 6 : index
    %c0_74 = arith.constant 0 : index
    %c0_75 = arith.constant 0 : index
    %70 = vector.load %arg4[%c6, %c0_74, %c0_75] : memref<9x4x128xbf16, #tpu.memory_space<vmem>>, vector<1x4x128xbf16>
    %71 = vector.shape_cast %70 : vector<1x4x128xbf16> to vector<4x128xbf16>
    %cst_76 = arith.constant dense<0.000000e+00> : vector<256x128xf32>
    %72 = tpu.matmul %69, %71, %cst_76 {dimension_numbers = #tpu.dot_dimension_numbers<[1], [0], [0], [1], [0, 0, 1, 1], [], []>} : vector<256x4xbf16>, vector<4x128xbf16>, vector<256x128xf32> -> vector<256x128xf32>
    %c1_77 = arith.constant 1 : index
    %c2_78 = arith.constant 2 : index
    %c0_79 = arith.constant 0 : index
    %c0_80 = arith.constant 0 : index
    %73 = vector.load %arg7[%c1_77, %c2_78, %c0_79, %c0_80] : memref<3x18x16x4xbf16, #tpu.memory_space<vmem>>, vector<1x16x16x4xbf16>
    %74 = vector.shape_cast %73 : vector<1x16x16x4xbf16> to vector<16x16x4xbf16>
    %75 = vector.shape_cast %74 : vector<16x16x4xbf16> to vector<256x4xbf16>
    %c7 = arith.constant 7 : index
    %c0_81 = arith.constant 0 : index
    %c0_82 = arith.constant 0 : index
    %76 = vector.load %arg4[%c7, %c0_81, %c0_82] : memref<9x4x128xbf16, #tpu.memory_space<vmem>>, vector<1x4x128xbf16>
    %77 = vector.shape_cast %76 : vector<1x4x128xbf16> to vector<4x128xbf16>
    %cst_83 = arith.constant dense<0.000000e+00> : vector<256x128xf32>
    %78 = tpu.matmul %75, %77, %cst_83 {dimension_numbers = #tpu.dot_dimension_numbers<[1], [0], [0], [1], [0, 0, 1, 1], [], []>} : vector<256x4xbf16>, vector<4x128xbf16>, vector<256x128xf32> -> vector<256x128xf32>
    %79 = arith.addf %72, %78 : vector<256x128xf32>
    %c2_84 = arith.constant 2 : index
    %c2_85 = arith.constant 2 : index
    %c0_86 = arith.constant 0 : index
    %c0_87 = arith.constant 0 : index
    %80 = vector.load %arg7[%c2_84, %c2_85, %c0_86, %c0_87] : memref<3x18x16x4xbf16, #tpu.memory_space<vmem>>, vector<1x16x16x4xbf16>
    %81 = vector.shape_cast %80 : vector<1x16x16x4xbf16> to vector<16x16x4xbf16>
    %82 = vector.shape_cast %81 : vector<16x16x4xbf16> to vector<256x4xbf16>
    %c8 = arith.constant 8 : index
    %c0_88 = arith.constant 0 : index
    %c0_89 = arith.constant 0 : index
    %83 = vector.load %arg4[%c8, %c0_88, %c0_89] : memref<9x4x128xbf16, #tpu.memory_space<vmem>>, vector<1x4x128xbf16>
    %84 = vector.shape_cast %83 : vector<1x4x128xbf16> to vector<4x128xbf16>
    %cst_90 = arith.constant dense<0.000000e+00> : vector<256x128xf32>
    %85 = tpu.matmul %82, %84, %cst_90 {dimension_numbers = #tpu.dot_dimension_numbers<[1], [0], [0], [1], [0, 0, 1, 1], [], []>} : vector<256x4xbf16>, vector<4x128xbf16>, vector<256x128xf32> -> vector<256x128xf32>
    %86 = arith.addf %79, %85 : vector<256x128xf32>
    %c0_91 = arith.constant 0 : index
    %c0_92 = arith.constant 0 : index
    %87 = vector.load %arg8[%c0_91, %c0_92] : memref<256x128xf32, #tpu.memory_space<vmem>>, vector<256x128xf32>
    %88 = arith.addf %87, %86 : vector<256x128xf32>
    %c0_93 = arith.constant 0 : index
    %c0_94 = arith.constant 0 : index
    %89 = vector.load %arg8[%c0_93, %c0_94] : memref<256x128xf32, #tpu.memory_space<vmem>>, vector<256x128xf32>
    tpu.vector_store %arg8[%c0_93, %c0_94], %88 {strides = array<i32>} : memref<256x128xf32, #tpu.memory_space<vmem>>, vector<256x128xf32>,
    %c0_95 = arith.constant 0 : index
    %c0_96 = arith.constant 0 : index
    %90 = vector.load %arg8[%c0_95, %c0_96] : memref<256x128xf32, #tpu.memory_space<vmem>>, vector<256x128xf32>
    %cst_97 = arith.constant 1.000000e-01 : f32
    %91 = vector.broadcast %cst_97 : f32 to vector<256x128xf32>
    %92 = arith.mulf %91, %90 : vector<256x128xf32>
    %93 = arith.maximumf %90, %92 : vector<256x128xf32>
    %94 = arith.truncf %93 : vector<256x128xf32> to vector<256x128xbf16>
    %c0_98 = arith.constant 0 : index
    %c0_99 = arith.constant 0 : index
    %c0_100 = arith.constant 0 : index
    %95 = vector.load %arg6[%c0_98, %c0_99, %c0_100] : memref<1x256x128xbf16, #tpu.memory_space<vmem>>, vector<1x256x128xbf16>
    %96 = vector.shape_cast %95 : vector<1x256x128xbf16> to vector<256x128xbf16>
    %97 = vector.shape_cast %94 : vector<256x128xbf16> to vector<1x256x128xbf16>
    tpu.vector_store %arg6[%c0_98, %c0_99, %c0_100], %97 {strides = array<i32>} : memref<1x256x128xbf16, #tpu.memory_space<vmem>>, vector<1x256x128xbf16>,
    return
  }
  func.func @transform_0(%arg0: i32, %arg1: i32, %arg2: i32) -> (i32, i32, i32, i32) {
    %c0_i32 = arith.constant 0 : i32
    %c0_i32_0 = arith.constant 0 : i32
    %c0_i32_1 = arith.constant 0 : i32
    %c0_i32_2 = arith.constant 0 : i32
    return %arg1, %c0_i32, %c0_i32_0, %c0_i32_1 : i32, i32, i32, i32
  }
  func.func @transform_1(%arg0: i32, %arg1: i32, %arg2: i32) -> (i32, i32, i32) {
    %c0_i32 = arith.constant 0 : i32
    %c0_i32_0 = arith.constant 0 : i32
    %c0_i32_1 = arith.constant 0 : i32
    return %c0_i32, %c0_i32_0, %arg0 : i32, i32, i32
  }
  func.func @transform_2(%arg0: i32, %arg1: i32, %arg2: i32) -> (i32, i32) {
    %c0_i32 = arith.constant 0 : i32
    %c0_i32_0 = arith.constant 0 : i32
    return %c0_i32, %arg0 : i32, i32
  }
  func.func @transform_3(%arg0: i32, %arg1: i32, %arg2: i32) -> (i32, i32, i32) {
    %c0_i32 = arith.constant 0 : i32
    return %arg1, %arg2, %arg0 : i32, i32, i32
  }
}

module attributes {stable_mosaic.version = 11 : i64} {
  func.func @_conv_rows_lrelu_kernel(%arg0: i32, %arg1: i32, %arg2: i32, %arg3: memref<1x9x9x512xbf16, #tpu.memory_space<vmem>>, %arg4: memref<4x512x128xbf16, #tpu.memory_space<vmem>>, %arg5: memref<1x128xf32, #tpu.memory_space<vmem>>, %arg6: memref<1x64x128xf32, #tpu.memory_space<vmem>>, %arg7: memref<2x9x8x512xbf16, #tpu.memory_space<vmem>>, %arg8: memref<64x128xf32, #tpu.memory_space<vmem>>) attributes {dimension_semantics = [#tpu.dimension_semantics<parallel>, #tpu.dimension_semantics<parallel>, #tpu.dimension_semantics<arbitrary>], iteration_bounds = array<i64: 1, 2, 1>, scalar_prefetch = 0 : i64, scratch_operands = 2 : i64, tpu.core_type = #tpu.core_type<tc>, window_params = [{transform_indices = @transform_0, window_bounds = array<i64: 1, 9, 9, 512>}, {transform_indices = @transform_1, window_bounds = array<i64: 4, 512, 128>}, {transform_indices = @transform_2, window_bounds = array<i64: 1, 128>}, {transform_indices = @transform_3, window_bounds = array<i64: 1, 64, 128>}]} {
    %c8_i32 = arith.constant 8 : i32
    %0 = arith.muli %arg2, %c8_i32 : i32
    %1 = tpu.assume_multiple %0, 8 : i32
    %c0 = arith.constant 0 : index
    %2 = arith.index_cast %1 : i32 to index
    %c0_0 = arith.constant 0 : index
    %c0_1 = arith.constant 0 : index
    %3 = vector.load %arg3[%c0, %2, %c0_0, %c0_1] : memref<1x9x9x512xbf16, #tpu.memory_space<vmem>>, vector<1x9x8x512xbf16>
    %4 = vector.shape_cast %3 : vector<1x9x8x512xbf16> to vector<9x8x512xbf16>
    %c0_2 = arith.constant 0 : index
    %c0_3 = arith.constant 0 : index
    %c0_4 = arith.constant 0 : index
    %c0_5 = arith.constant 0 : index
    %5 = vector.load %arg7[%c0_2, %c0_3, %c0_4, %c0_5] : memref<2x9x8x512xbf16, #tpu.memory_space<vmem>>, vector<1x9x8x512xbf16>
    %6 = vector.shape_cast %5 : vector<1x9x8x512xbf16> to vector<9x8x512xbf16>
    %7 = vector.shape_cast %4 : vector<9x8x512xbf16> to vector<1x9x8x512xbf16>
    tpu.vector_store %arg7[%c0_2, %c0_3, %c0_4, %c0_5], %7 {strides = array<i32>} : memref<2x9x8x512xbf16, #tpu.memory_space<vmem>>, vector<1x9x8x512xbf16>,
    %c0_6 = arith.constant 0 : index
    %8 = arith.index_cast %1 : i32 to index
    %c1 = arith.constant 1 : index
    %c0_7 = arith.constant 0 : index
    %9 = vector.load %arg3[%c0_6, %8, %c1, %c0_7] : memref<1x9x9x512xbf16, #tpu.memory_space<vmem>>, vector<1x9x8x512xbf16>
    %10 = vector.shape_cast %9 : vector<1x9x8x512xbf16> to vector<9x8x512xbf16>
    %c1_8 = arith.constant 1 : index
    %c0_9 = arith.constant 0 : index
    %c0_10 = arith.constant 0 : index
    %c0_11 = arith.constant 0 : index
    %11 = vector.load %arg7[%c1_8, %c0_9, %c0_10, %c0_11] : memref<2x9x8x512xbf16, #tpu.memory_space<vmem>>, vector<1x9x8x512xbf16>
    %12 = vector.shape_cast %11 : vector<1x9x8x512xbf16> to vector<9x8x512xbf16>
    %13 = vector.shape_cast %10 : vector<9x8x512xbf16> to vector<1x9x8x512xbf16>
    tpu.vector_store %arg7[%c1_8, %c0_9, %c0_10, %c0_11], %13 {strides = array<i32>} : memref<2x9x8x512xbf16, #tpu.memory_space<vmem>>, vector<1x9x8x512xbf16>,
    %c0_12 = arith.constant 0 : index
    %c0_13 = arith.constant 0 : index
    %14 = vector.load %arg5[%c0_12, %c0_13] : memref<1x128xf32, #tpu.memory_space<vmem>>, vector<1x128xf32>
    %c0_14 = arith.constant 0 : index
    %c0_15 = arith.constant 0 : index
    %c0_16 = arith.constant 0 : index
    %c0_17 = arith.constant 0 : index
    %15 = vector.load %arg7[%c0_14, %c0_15, %c0_16, %c0_17] : memref<2x9x8x512xbf16, #tpu.memory_space<vmem>>, vector<1x8x8x512xbf16>
    %16 = vector.shape_cast %15 : vector<1x8x8x512xbf16> to vector<8x8x512xbf16>
    %17 = vector.shape_cast %16 : vector<8x8x512xbf16> to vector<64x512xbf16>
    %c0_18 = arith.constant 0 : index
    %c0_19 = arith.constant 0 : index
    %c0_20 = arith.constant 0 : index
    %18 = vector.load %arg4[%c0_18, %c0_19, %c0_20] : memref<4x512x128xbf16, #tpu.memory_space<vmem>>, vector<1x512x128xbf16>
    %19 = vector.shape_cast %18 : vector<1x512x128xbf16> to vector<512x128xbf16>
    %cst = arith.constant dense<0.000000e+00> : vector<64x128xf32>
    %20 = tpu.matmul %17, %19, %cst {dimension_numbers = #tpu.dot_dimension_numbers<[1], [0], [0], [1], [0, 0, 1, 1], [], []>} : vector<64x512xbf16>, vector<512x128xbf16>, vector<64x128xf32> -> vector<64x128xf32>
    %c1_21 = arith.constant 1 : index
    %c0_22 = arith.constant 0 : index
    %c0_23 = arith.constant 0 : index
    %c0_24 = arith.constant 0 : index
    %21 = vector.load %arg7[%c1_21, %c0_22, %c0_23, %c0_24] : memref<2x9x8x512xbf16, #tpu.memory_space<vmem>>, vector<1x8x8x512xbf16>
    %22 = vector.shape_cast %21 : vector<1x8x8x512xbf16> to vector<8x8x512xbf16>
    %23 = vector.shape_cast %22 : vector<8x8x512xbf16> to vector<64x512xbf16>
    %c1_25 = arith.constant 1 : index
    %c0_26 = arith.constant 0 : index
    %c0_27 = arith.constant 0 : index
    %24 = vector.load %arg4[%c1_25, %c0_26, %c0_27] : memref<4x512x128xbf16, #tpu.memory_space<vmem>>, vector<1x512x128xbf16>
    %25 = vector.shape_cast %24 : vector<1x512x128xbf16> to vector<512x128xbf16>
    %cst_28 = arith.constant dense<0.000000e+00> : vector<64x128xf32>
    %26 = tpu.matmul %23, %25, %cst_28 {dimension_numbers = #tpu.dot_dimension_numbers<[1], [0], [0], [1], [0, 0, 1, 1], [], []>} : vector<64x512xbf16>, vector<512x128xbf16>, vector<64x128xf32> -> vector<64x128xf32>
    %27 = arith.addf %20, %26 : vector<64x128xf32>
    %28 = vector.broadcast %14 : vector<1x128xf32> to vector<64x128xf32>
    %29 = arith.addf %27, %28 : vector<64x128xf32>
    %c0_29 = arith.constant 0 : index
    %c0_30 = arith.constant 0 : index
    %30 = vector.load %arg8[%c0_29, %c0_30] : memref<64x128xf32, #tpu.memory_space<vmem>>, vector<64x128xf32>
    tpu.vector_store %arg8[%c0_29, %c0_30], %29 {strides = array<i32>} : memref<64x128xf32, #tpu.memory_space<vmem>>, vector<64x128xf32>,
    %c0_31 = arith.constant 0 : index
    %c1_32 = arith.constant 1 : index
    %c0_33 = arith.constant 0 : index
    %c0_34 = arith.constant 0 : index
    %31 = vector.load %arg7[%c0_31, %c1_32, %c0_33, %c0_34] : memref<2x9x8x512xbf16, #tpu.memory_space<vmem>>, vector<1x8x8x512xbf16>
    %32 = vector.shape_cast %31 : vector<1x8x8x512xbf16> to vector<8x8x512xbf16>
    %33 = vector.shape_cast %32 : vector<8x8x512xbf16> to vector<64x512xbf16>
    %c2 = arith.constant 2 : index
    %c0_35 = arith.constant 0 : index
    %c0_36 = arith.constant 0 : index
    %34 = vector.load %arg4[%c2, %c0_35, %c0_36] : memref<4x512x128xbf16, #tpu.memory_space<vmem>>, vector<1x512x128xbf16>
    %35 = vector.shape_cast %34 : vector<1x512x128xbf16> to vector<512x128xbf16>
    %cst_37 = arith.constant dense<0.000000e+00> : vector<64x128xf32>
    %36 = tpu.matmul %33, %35, %cst_37 {dimension_numbers = #tpu.dot_dimension_numbers<[1], [0], [0], [1], [0, 0, 1, 1], [], []>} : vector<64x512xbf16>, vector<512x128xbf16>, vector<64x128xf32> -> vector<64x128xf32>
    %c1_38 = arith.constant 1 : index
    %c1_39 = arith.constant 1 : index
    %c0_40 = arith.constant 0 : index
    %c0_41 = arith.constant 0 : index
    %37 = vector.load %arg7[%c1_38, %c1_39, %c0_40, %c0_41] : memref<2x9x8x512xbf16, #tpu.memory_space<vmem>>, vector<1x8x8x512xbf16>
    %38 = vector.shape_cast %37 : vector<1x8x8x512xbf16> to vector<8x8x512xbf16>
    %39 = vector.shape_cast %38 : vector<8x8x512xbf16> to vector<64x512xbf16>
    %c3 = arith.constant 3 : index
    %c0_42 = arith.constant 0 : index
    %c0_43 = arith.constant 0 : index
    %40 = vector.load %arg4[%c3, %c0_42, %c0_43] : memref<4x512x128xbf16, #tpu.memory_space<vmem>>, vector<1x512x128xbf16>
    %41 = vector.shape_cast %40 : vector<1x512x128xbf16> to vector<512x128xbf16>
    %cst_44 = arith.constant dense<0.000000e+00> : vector<64x128xf32>
    %42 = tpu.matmul %39, %41, %cst_44 {dimension_numbers = #tpu.dot_dimension_numbers<[1], [0], [0], [1], [0, 0, 1, 1], [], []>} : vector<64x512xbf16>, vector<512x128xbf16>, vector<64x128xf32> -> vector<64x128xf32>
    %43 = arith.addf %36, %42 : vector<64x128xf32>
    %c0_45 = arith.constant 0 : index
    %c0_46 = arith.constant 0 : index
    %44 = vector.load %arg8[%c0_45, %c0_46] : memref<64x128xf32, #tpu.memory_space<vmem>>, vector<64x128xf32>
    %45 = arith.addf %44, %43 : vector<64x128xf32>
    %c0_47 = arith.constant 0 : index
    %c0_48 = arith.constant 0 : index
    %46 = vector.load %arg8[%c0_47, %c0_48] : memref<64x128xf32, #tpu.memory_space<vmem>>, vector<64x128xf32>
    tpu.vector_store %arg8[%c0_47, %c0_48], %45 {strides = array<i32>} : memref<64x128xf32, #tpu.memory_space<vmem>>, vector<64x128xf32>,
    %c0_49 = arith.constant 0 : index
    %c0_50 = arith.constant 0 : index
    %47 = vector.load %arg8[%c0_49, %c0_50] : memref<64x128xf32, #tpu.memory_space<vmem>>, vector<64x128xf32>
    %cst_51 = arith.constant 1.000000e-01 : f32
    %48 = vector.broadcast %cst_51 : f32 to vector<64x128xf32>
    %49 = arith.mulf %48, %47 : vector<64x128xf32>
    %50 = arith.maximumf %47, %49 : vector<64x128xf32>
    %c0_52 = arith.constant 0 : index
    %c0_53 = arith.constant 0 : index
    %c0_54 = arith.constant 0 : index
    %51 = vector.load %arg6[%c0_52, %c0_53, %c0_54] : memref<1x64x128xf32, #tpu.memory_space<vmem>>, vector<1x64x128xf32>
    %52 = vector.shape_cast %51 : vector<1x64x128xf32> to vector<64x128xf32>
    %53 = vector.shape_cast %50 : vector<64x128xf32> to vector<1x64x128xf32>
    tpu.vector_store %arg6[%c0_52, %c0_53, %c0_54], %53 {strides = array<i32>} : memref<1x64x128xf32, #tpu.memory_space<vmem>>, vector<1x64x128xf32>,
    return
  }
  func.func @transform_0(%arg0: i32, %arg1: i32, %arg2: i32) -> (i32, i32, i32, i32) {
    %c0_i32 = arith.constant 0 : i32
    %c0_i32_0 = arith.constant 0 : i32
    %c0_i32_1 = arith.constant 0 : i32
    %c0_i32_2 = arith.constant 0 : i32
    return %arg1, %c0_i32, %c0_i32_0, %c0_i32_1 : i32, i32, i32, i32
  }
  func.func @transform_1(%arg0: i32, %arg1: i32, %arg2: i32) -> (i32, i32, i32) {
    %c0_i32 = arith.constant 0 : i32
    %c0_i32_0 = arith.constant 0 : i32
    %c0_i32_1 = arith.constant 0 : i32
    return %c0_i32, %c0_i32_0, %arg0 : i32, i32, i32
  }
  func.func @transform_2(%arg0: i32, %arg1: i32, %arg2: i32) -> (i32, i32) {
    %c0_i32 = arith.constant 0 : i32
    %c0_i32_0 = arith.constant 0 : i32
    return %c0_i32, %arg0 : i32, i32
  }
  func.func @transform_3(%arg0: i32, %arg1: i32, %arg2: i32) -> (i32, i32, i32) {
    %c0_i32 = arith.constant 0 : i32
    return %arg1, %arg2, %arg0 : i32, i32, i32
  }
}

</mosaic_0001>

<llo_original>
// kernel: disc_block_forward.2
$region0: #{disc_block_forward.2}
  #allocation0 [shape = 'u32[]', space=smem, size = 0x4, offset = 0x4, fixed_abs, tag = 'smem constant byte address 0x4 - core index']
  #allocation1 [shape = 'u32[144,128]{1,0:T(1,128)}', space=vmem, size = 0x12000, scoped, tag = 'internal scratch']
  #allocation2 [shape = 'bf16[3,18,16,4]{3,2,1,0:T(8,128)(2,1)}', space=vmem, size = 0x36000, scoped, tag = 'scratch operand']
  #allocation3 [shape = 'f32[256,128]{1,0:T(8,128)}', space=vmem, size = 0x20000, scoped, tag = 'scratch operand']
  %s0 = inlined_call_operand.vmem [shape: bf16[2,18,18,4], index: 0, kind: input, shape index: {}]
  %s1 = inlined_call_operand.vmem [shape: bf16[9,4,128], index: 1, kind: input, shape index: {}]
  %s2 = inlined_call_operand.vmem [shape: f32[1,128], index: 2, kind: input, shape index: {}]
  %s3 = inlined_call_operand.vmem [shape: bf16[2,256,128], index: 3, kind: output, shape index: {}]
  %s4 = sld [smem:[#allocation0]]
  $region45: #{disc_block_forward.2} parent=0
    _
  %s6 = ssub.s32 1, %s4
  %s7 = scalar_select 0, %s6, %s4
  loop: start=0, step=1, limit=4
  $region2: #{disc_block_forward.2} parent=0 // loop_pre_header
    _
  $region3: #{disc_block_forward.2} parent=0 // loop_header
    %s9 = sphi 0, %s13
    %p10 = scmp.ge.s32.totalorder %s9, 4
    %s16 = sphi 0, %s35
    %s17 = sphi 0, %s31
    %s18 = sphi 0, %s27
    %s19 = sphi 0, %s16
    %s20 = sphi 0, %s17
    %s21 = sphi 0, %s18
    %s22 = sphi 0, %s19
    %s23 = sphi 0, %s20
    %s24 = sphi 0, %s21
    %s38 = sphi 0, %s40
    %s41 = sphi 0, %s38
    %s42 = sphi 0, %s41
    %s58 = sphi 0, %s42
    %s64 = sphi 0, %s66
    %s67 = sphi 0, %s64
    %s68 = sphi 0, %s67
    %s84 = sphi 0, %s68
    %s90 = sphi 0, %s92
    %s93 = sphi 0, %s90
    %s94 = sphi 0, %s93
    %s110 = sphi 0, %s94
    %s120 = sphi 0, %s122
    %s123 = sphi 0, %s120
    %s124 = sphi 0, %s123
    %s140 = sphi 0, %s124
  $region4: #{disc_block_forward.2} parent=0 // loop_header_branch
    %12 = sbr.rel (%p10) target = $region8
  $region5: #{disc_block_forward.2} parent=0 // loop_body
    %s14 = ssub.s32 %s9, 1
    %s15 = ssub.s32 %s9, 2
    %s25 = sadd.s32 1, %s18
    %p26 = scmp.ge.s32.totalorder %s25, 1
    %s27 = scalar_select %p26, 0, %s25
    %s28 = sadd.s32 1, %s17
    %s29 = scalar_select %p26, %s28, %s17
    %p30 = scmp.ge.s32.totalorder %s29, 2
    %s31 = scalar_select %p30, 0, %s29
    %s32 = sadd.s32 1, %s16
    %s33 = scalar_select %p30, %s32, %s16
    %p34 = scmp.ge.s32.totalorder %s33, 1
    %s35 = scalar_select %p34, 0, %s33
    %s36 = ssub.s32 %s17, %s31
    %p37 = scmp.eq.s32.totalorder %s36, 0
    %s39 = sadd.s32 %s38, 1
    %s40 = scalar_select %p37, %s38, %s39
    %p43 = pneg %p37
    %p44 = scmp.eq.s32.totalorder %s9, 1
    %p45 = por %p43, %p44
    %p46 = scmp.ne.s32.totalorder %s38, %s41
    %p47 = scmp.eq.s32.totalorder %s9, 0
    %p48 = por %p46, %p47
    %p49 = scmp.ne.s32.totalorder %s38, %s41
    %p50 = scmp.eq.s32.totalorder %s14, 1
    %p51 = por %p49, %p50
    %p52 = scmp.ne.s32.totalorder %s41, %s42
    %p53 = scmp.eq.s32.totalorder %s14, 0
    %p54 = por %p52, %p53
    %p55 = scmp.ne.s32.totalorder %s41, %s42
    %p56 = scmp.eq.s32.totalorder %s15, 1
    %p57 = por %p55, %p56
    %p59 = scmp.ne.s32.totalorder %s42, %s58
    %p60 = scmp.eq.s32.totalorder %s15, 0
    %p61 = por %p59, %p60
    %s62 = ssub.s32 %s16, %s35
    %p63 = scmp.eq.s32.totalorder %s62, 0
    %s65 = sadd.s32 %s64, 1
    %s66 = scalar_select %p63, %s64, %s65
    %p69 = pneg %p63
    %p70 = scmp.eq.s32.totalorder %s9, 1
    %p71 = por %p69, %p70
    %p72 = scmp.ne.s32.totalorder %s64, %s67
    %p73 = scmp.eq.s32.totalorder %s9, 0
    %p74 = por %p72, %p73
    %p75 = scmp.ne.s32.totalorder %s64, %s67
    %p76 = scmp.eq.s32.totalorder %s14, 1
    %p77 = por %p75, %p76
    %p78 = scmp.ne.s32.totalorder %s67, %s68
    %p79 = scmp.eq.s32.totalorder %s14, 0
    %p80 = por %p78, %p79
    %p81 = scmp.ne.s32.totalorder %s67, %s68
    %p82 = scmp.eq.s32.totalorder %s15, 1
    %p83 = por %p81, %p82
    %p85 = scmp.ne.s32.totalorder %s68, %s84
    %p86 = scmp.eq.s32.totalorder %s15, 0
    %p87 = por %p85, %p86
    %s88 = ssub.s32 %s16, %s35
    %p89 = scmp.eq.s32.totalorder %s88, 0
    %s91 = sadd.s32 %s90, 1
    %s92 = scalar_select %p89, %s90, %s91
    %p95 = pneg %p89
    %p96 = scmp.eq.s32.totalorder %s9, 1
    %p97 = por %p95, %p96
    %p98 = scmp.ne.s32.totalorder %s90, %s93
    %p99 = scmp.eq.s32.totalorder %s9, 0
    %p100 = por %p98, %p99
    %p101 = scmp.ne.s32.totalorder %s90, %s93
    %p102 = scmp.eq.s32.totalorder %s14, 1
    %p103 = por %p101, %p102
    %p104 = scmp.ne.s32.totalorder %s93, %s94
    %p105 = scmp.eq.s32.totalorder %s14, 0
    %p106 = por %p104, %p105
    %p107 = scmp.ne.s32.totalorder %s93, %s94
    %p108 = scmp.eq.s32.totalorder %s15, 1
    %p109 = por %p107, %p108
    %p111 = scmp.ne.s32.totalorder %s94, %s110
    %p112 = scmp.eq.s32.totalorder %s15, 0
    %p113 = por %p111, %p112
    %s114 = ssub.s32 %s17, %s31
    %s115 = ssub.s32 %s18, %s27
    %s116 = sor.u32 %s114, %s115
    %s117 = ssub.s32 %s16, %s35
    %s118 = sor.u32 %s116, %s117
    %p119 = scmp.eq.s32.totalorder %s118, 0
    %s121 = sadd.s32 %s120, 1
    %s122 = scalar_select %p119, %s120, %s121
    %p125 = pneg %p119
    %p126 = scmp.eq.s32.totalorder %s9, 1
    %p127 = por %p125, %p126
    %p128 = scmp.ne.s32.totalorder %s120, %s123
    %p129 = scmp.eq.s32.totalorder %s9, 0
    %p130 = por %p128, %p129
    %p131 = scmp.ne.s32.totalorder %s120, %s123
    %p132 = scmp.eq.s32.totalorder %s14, 1
    %p133 = por %p131, %p132
    %p134 = scmp.ne.s32.totalorder %s123, %s124
    %p135 = scmp.eq.s32.totalorder %s14, 0
    %p136 = por %p134, %p135
    %p137 = scmp.ne.s32.totalorder %s123, %s124
    %p138 = scmp.eq.s32.totalorder %s15, 1
    %p139 = por %p137, %p138
    %p141 = scmp.ne.s32.totalorder %s124, %s140
    %p142 = scmp.eq.s32.totalorder %s15, 0
    %p143 = por %p141, %p142
    %p144 = scmp.le.s32.totalorder 1, %s9
    %p145 = scmp.lt.s32.totalorder %s9, 3
    %p146 = pnand %p144, %p145
    %p147 = pneg %p146
    // Predicated region
    $region9: #{disc_block_forward.2} parent=5 // pred_check
      _
    $region10: #{disc_block_forward.2} parent=5 // pred_check_branch
      %149 = sbr.rel (%p146) target = $region12
    $region11: #{disc_block_forward.2} parent=5 // pred_region
      %s150 = ssub.s32 %s9, 1
      // Predicated region
      $region13: #{disc_block_forward.2} parent=11 // pred_check
        %p151 = pneg %p80
      $region14: #{disc_block_forward.2} parent=11 // pred_check_branch
        %153 = sbr.rel (%p151) target = $region16
      $region15: #{disc_block_forward.2} parent=11 // pred_region
        %p154 = scmp.lt.s32.totalorder %s19, 0
        %s155 = scalar_select %p154, %s19, 0
        %s156 = smul.addr %s155, 2
        %s157 = scalar_lea.vmem %s1, %s156
      $region16: #{disc_block_forward.2} parent=11 // pred_fallthru
        _
      // Predicated region
      $region17: #{disc_block_forward.2} parent=11 // pred_check
        %p158 = pneg %p106
      $region18: #{disc_block_forward.2} parent=11 // pred_check_branch
        %160 = sbr.rel (%p158) target = $region20
      $region19: #{disc_block_forward.2} parent=11 // pred_region
        %p161 = scmp.lt.s32.totalorder %s19, 0
        %s162 = scalar_select %p161, %s19, 0
        %s163 = scalar_lea.vmem %s2, %s162
      $region20: #{disc_block_forward.2} parent=11 // pred_fallthru
        _
    $region12: #{disc_block_forward.2} parent=5 // pred_fallthru
      _
    %p164 = scmp.lt.s32.totalorder %s9, 2
    // Predicated region
    $region21: #{disc_block_forward.2} parent=5 // pred_check
      %p165 = pneg %p164
    $region22: #{disc_block_forward.2} parent=5 // pred_check_branch
      %167 = sbr.rel (%p165) target = $region24
    $region23: #{disc_block_forward.2} parent=5 // pred_region
      // Predicated region
      $region25: #{disc_block_forward.2} parent=23 // pred_check
        %p168 = pneg %p48
      $region26: #{disc_block_forward.2} parent=23 // pred_check_branch
        %170 = sbr.rel (%p168) target = $region28
      $region27: #{disc_block_forward.2} parent=23 // pred_region
        %p171 = scmp.lt.s32.totalorder %s17, 1
        %s172 = scalar_select %p171, %s17, 1
        %s173 = smul.addr %s172, 54
        %s174 = smul.addr %s173, 4
        %s175 = scalar_lea.vmem %s0, %s174
      $region28: #{disc_block_forward.2} parent=23 // pred_fallthru
        _
    $region24: #{disc_block_forward.2} parent=5 // pred_fallthru
      _
    %p176 = scmp.le.s32.totalorder 1, %s9
    %p177 = scmp.lt.s32.totalorder %s9, 3
    %p178 = pnand %p176, %p177
    %p179 = pneg %p178
    // Predicated region
    $region29: #{disc_block_forward.2} parent=5 // pred_check
      _
    $region30: #{disc_block_forward.2} parent=5 // pred_check_branch
      %181 = sbr.rel (%p178) target = $region32
    $region31: #{disc_block_forward.2} parent=5 // pred_region
      %s182 = ssub.s32 %s9, 1
      %p183 = scmp.lt.s32.totalorder %s20, 1
      %s184 = scalar_select %p183, %s20, 1
      %s185 = smul.addr %s184, 54
      %s186 = smul.addr %s185, 4
      %s187 = scalar_lea.vmem %s0, %s186
      %p188 = pneg %p54
      %p189 = pneg %p51
      %p190 = scmp.lt.s32.totalorder %s19, 0
      %s191 = scalar_select %p190, %s19, 0
      %s192 = smul.addr %s191, 2
      %s193 = scalar_lea.vmem %s1, %s192
      %p194 = pneg %p80
      %p195 = pneg %p77
      %p196 = scmp.lt.s32.totalorder %s19, 0
      %s197 = scalar_select %p196, %s19, 0
      %s198 = scalar_lea.vmem %s2, %s197
      %p199 = pneg %p106
      %p200 = pneg %p103
      %p201 = pneg %p136
      %p202 = pneg %p133
      %s203 = smul.u32 32, %s21
      %p204 = scmp.lt.s32.totalorder %s20, 1
      %s205 = scalar_select %p204, %s20, 1
      %p206 = scmp.lt.s32.totalorder %s203, 31
      %s207 = scalar_select %p206, %s203, 31
      %p208 = scmp.lt.s32.totalorder %s19, 0
      %s209 = scalar_select %p208, %s19, 0
      %s210 = sadd.s32 %s209, %s207
      %s211 = smul.addr %s205, 32
      %s212 = sadd.s32 %s210, %s211
      %s213 = smul.addr %s212, 4
      %s214 = scalar_lea.vmem %s3, %s213
      %p215 = scmp.lt.s32.totalorder %s20, 1
      %s216 = scalar_select %p215, %s20, 1
      %s217 = smul.addr %s216, 54
      %s218 = smul.addr %s217, 4
      %s219 = scalar_lea.vmem %s0, %s218
      %p220 = scmp.lt.s32.totalorder %s19, 0
      %s221 = scalar_select %p220, %s19, 0
      %s222 = smul.addr %s221, 2
      %s223 = scalar_lea.vmem %s1, %s222
      %p224 = scmp.lt.s32.totalorder %s19, 0
      %s225 = scalar_select %p224, %s19, 0
      %s226 = scalar_lea.vmem %s2, %s225
      %s227 = smul.u32 32, %s21
      %p228 = scmp.lt.s32.totalorder %s20, 1
      %s229 = scalar_select %p228, %s20, 1
      %p230 = scmp.lt.s32.totalorder %s227, 31
      %s231 = scalar_select %p230, %s227, 31
      %p232 = scmp.lt.s32.totalorder %s19, 0
      %s233 = scalar_select %p232, %s19, 0
      %s234 = sadd.s32 %s233, %s231
      %s235 = smul.addr %s229, 32
      %s236 = sadd.s32 %s234, %s235
      %s237 = smul.addr %s236, 4
      %s238 = scalar_lea.vmem %s3, %s237
      %s239 = smul.u32 32, %s21
      %s241 = smul.u32 %s21, 16
      %s242 = smul.u32 %s241, 3
      %s243 = smul.addr %s242, 4
      %s244 = scalar_lea.vmem %s219, %s243
      %v245 = vld [vmem:[%s244] sm:$0xf]
      %v246 = vld [vmem:[%s244 + $0x4] sm:$0xf]
      %v247 = vld [vmem:[%s244 + $0xc] sm:$0xf]
      %v248 = vld [vmem:[%s244 + $0x10] sm:$0xf]
      %v249 = vld [vmem:[%s244 + $0x18] sm:$0xf]
      %v250 = vld [vmem:[%s244 + $0x1c] sm:$0xf]
      %v251 = vld [vmem:[%s244 + $0x24] sm:$0xf]
      %v252 = vld [vmem:[%s244 + $0x28] sm:$0xf]
      %v253 = vld [vmem:[%s244 + $0x30] sm:$0xf]
      %v254 = vld [vmem:[%s244 + $0x34] sm:$0xf]
      %v255 = vld [vmem:[%s244 + $0x3c] sm:$0xf]
      %v256 = vld [vmem:[%s244 + $0x40] sm:$0xf]
      %v257 = vld [vmem:[%s244 + $0x48] sm:$0xf]
      %v258 = vld [vmem:[%s244 + $0x4c] sm:$0xf]
      %v259 = vld [vmem:[%s244 + $0x54] sm:$0xf]
      %v260 = vld [vmem:[%s244 + $0x58] sm:$0xf]
      %v261 = vld [vmem:[%s244 + $0x60] sm:$0xf]
      %v262 = vld [vmem:[%s244 + $0x64] sm:$0xf]
      %v263 = vld [vmem:[%s244 + $0x6c] sm:$0xf]
      %v264 = vld [vmem:[%s244 + $0x70] sm:$0xf]
      %v265 = vld [vmem:[%s244 + $0x78] sm:$0xf]
      %v266 = vld [vmem:[%s244 + $0x7c] sm:$0xf]
      %v267 = vld [vmem:[%s244 + $0x84] sm:$0xf]
      %v268 = vld [vmem:[%s244 + $0x88] sm:$0xf]
      %v269 = vld [vmem:[%s244 + $0x90] sm:$0xf]
      %v270 = vld [vmem:[%s244 + $0x94] sm:$0xf]
      %v271 = vld [vmem:[%s244 + $0x9c] sm:$0xf]
      %v272 = vld [vmem:[%s244 + $0xa0] sm:$0xf]
      %v273 = vld [vmem:[%s244 + $0xa8] sm:$0xf]
      %v274 = vld [vmem:[%s244 + $0xac] sm:$0xf]
      %v275 = vld [vmem:[%s244 + $0xb4] sm:$0xf]
      %v276 = vld [vmem:[%s244 + $0xb8] sm:$0xf]
      %v277 = vld [vmem:[%s244 + $0xc0] sm:$0xf]
      %v278 = vld [vmem:[%s244 + $0xc4] sm:$0xf]
      %v279 = vld [vmem:[%s244 + $0xcc] sm:$0xf]
      %v280 = vld [vmem:[%s244 + $0xd0] sm:$0xf]
      %vm281 = vcmask 27648
      %282 = vst.msk [vmem:[#allocation2] sm:$0xf] %vm281, %v245
      %283 = vst.msk [vmem:[#allocation2 + $0x4] sm:$0xf] %vm281, %v246
      %284 = vst.msk [vmem:[#allocation2 + $0x8] sm:$0xf] %vm281, %v247
      %285 = vst.msk [vmem:[#allocation2 + $0xc] sm:$0xf] %vm281, %v248
      %286 = vst.msk [vmem:[#allocation2 + $0x10] sm:$0xf] %vm281, %v249
      %287 = vst.msk [vmem:[#allocation2 + $0x14] sm:$0xf] %vm281, %v250
      %288 = vst.msk [vmem:[#allocation2 + $0x18] sm:$0xf] %vm281, %v251
      %289 = vst.msk [vmem:[#allocation2 + $0x1c] sm:$0xf] %vm281, %v252
      %290 = vst.msk [vmem:[#allocation2 + $0x20] sm:$0xf] %vm281, %v253
      %291 = vst.msk [vmem:[#allocation2 + $0x24] sm:$0xf] %vm281, %v254
      %292 = vst.msk [vmem:[#allocation2 + $0x28] sm:$0xf] %vm281, %v255
      %293 = vst.msk [vmem:[#allocation2 + $0x2c] sm:$0xf] %vm281, %v256
      %294 = vst.msk [vmem:[#allocation2 + $0x30] sm:$0xf] %vm281, %v257
      %295 = vst.msk [vmem:[#allocation2 + $0x34] sm:$0xf] %vm281, %v258
      %296 = vst.msk [vmem:[#allocation2 + $0x38] sm:$0xf] %vm281, %v259
      %297 = vst.msk [vmem:[#allocation2 + $0x3c] sm:$0xf] %vm281, %v260
      %298 = vst.msk [vmem:[#allocation2 + $0x40] sm:$0xf] %vm281, %v261
      %299 = vst.msk [vmem:[#allocation2 + $0x44] sm:$0xf] %vm281, %v262
      %300 = vst.msk [vmem:[#allocation2 + $0x48] sm:$0xf] %vm281, %v263
      %301 = vst.msk [vmem:[#allocation2 + $0x4c] sm:$0xf] %vm281, %v264
      %302 = vst.msk [vmem:[#allocation2 + $0x50] sm:$0xf] %vm281, %v265
      %303 = vst.msk [vmem:[#allocation2 + $0x54] sm:$0xf] %vm281, %v266
      %304 = vst.msk [vmem:[#allocation2 + $0x58] sm:$0xf] %vm281, %v267
      %305 = vst.msk [vmem:[#allocation2 + $0x5c] sm:$0xf] %vm281, %v268
      %306 = vst.msk [vmem:[#allocation2 + $0x60] sm:$0xf] %vm281, %v269
      %307 = vst.msk [vmem:[#allocation2 + $0x64] sm:$0xf] %vm281, %v270
      %308 = vst.msk [vmem:[#allocation2 + $0x68] sm:$0xf] %vm281, %v271
      %309 = vst.msk [vmem:[#allocation2 + $0x6c] sm:$0xf] %vm281, %v272
      %310 = vst.msk [vmem:[#allocation2 + $0x70] sm:$0xf] %vm281, %v273
      %311 = vst.msk [vmem:[#allocation2 + $0x74] sm:$0xf] %vm281, %v274
      %312 = vst.msk [vmem:[#allocation2 + $0x78] sm:$0xf] %vm281, %v275
      %313 = vst.msk [vmem:[#allocation2 + $0x7c] sm:$0xf] %vm281, %v276
      %314 = vst.msk [vmem:[#allocation2 + $0x80] sm:$0xf] %vm281, %v277
      %315 = vst.msk [vmem:[#allocation2 + $0x84] sm:$0xf] %vm281, %v278
      %316 = vst.msk [vmem:[#allocation2 + $0x88] sm:$0xf] %vm281, %v279
      %317 = vst.msk [vmem:[#allocation2 + $0x8c] sm:$0xf] %vm281, %v280
      %v318 = vld [vmem:[%s244] sm:$0xf]
      %v319 = vld [vmem:[%s244 + $0x4] sm:$0xf]
      %v320 = vld [vmem:[%s244 + $0x8] sm:$0x1]
      %v321 = vld [vmem:[%s244 + $0xc] sm:$0xf]
      %v322 = vld [vmem:[%s244 + $0x10] sm:$0xf]
      %v323 = vld [vmem:[%s244 + $0x14] sm:$0x1]
      %v324 = vld [vmem:[%s244 + $0x18] sm:$0xf]
      %v325 = vld [vmem:[%s244 + $0x1c] sm:$0xf]
      %v326 = vld [vmem:[%s244 + $0x20] sm:$0x1]
      %v327 = vld [vmem:[%s244 + $0x24] sm:$0xf]
      %v328 = vld [vmem:[%s244 + $0x28] sm:$0xf]
      %v329 = vld [vmem:[%s244 + $0x2c] sm:$0x1]
      %v330 = vld [vmem:[%s244 + $0x30] sm:$0xf]
      %v331 = vld [vmem:[%s244 + $0x34] sm:$0xf]
      %v332 = vld [vmem:[%s244 + $0x38] sm:$0x1]
      %v333 = vld [vmem:[%s244 + $0x3c] sm:$0xf]
      %v334 = vld [vmem:[%s244 + $0x40] sm:$0xf]
      %v335 = vld [vmem:[%s244 + $0x44] sm:$0x1]
      %v336 = vld [vmem:[%s244 + $0x48] sm:$0xf]
      %v337 = vld [vmem:[%s244 + $0x4c] sm:$0xf]
      %v338 = vld [vmem:[%s244 + $0x50] sm:$0x1]
      %v339 = vld [vmem:[%s244 + $0x54] sm:$0xf]
      %v340 = vld [vmem:[%s244 + $0x58] sm:$0xf]
      %v341 = vld [vmem:[%s244 + $0x5c] sm:$0x1]
      %v342 = vld [vmem:[%s244 + $0x60] sm:$0xf]
      %v343 = vld [vmem:[%s244 + $0x64] sm:$0xf]
      %v344 = vld [vmem:[%s244 + $0x68] sm:$0x1]
      %v345 = vld [vmem:[%s244 + $0x6c] sm:$0xf]
      %v346 = vld [vmem:[%s244 + $0x70] sm:$0xf]
      %v347 = vld [vmem:[%s244 + $0x74] sm:$0x1]
      %v348 = vld [vmem:[%s244 + $0x78] sm:$0xf]
      %v349 = vld [vmem:[%s244 + $0x7c] sm:$0xf]
      %v350 = vld [vmem:[%s244 + $0x80] sm:$0x1]
      %v351 = vld [vmem:[%s244 + $0x84] sm:$0xf]
      %v352 = vld [vmem:[%s244 + $0x88] sm:$0xf]
      %v353 = vld [vmem:[%s244 + $0x8c] sm:$0x1]
      %v354 = vld [vmem:[%s244 + $0x90] sm:$0xf]
      %v355 = vld [vmem:[%s244 + $0x94] sm:$0xf]
      %v356 = vld [vmem:[%s244 + $0x98] sm:$0x1]
      %v357 = vld [vmem:[%s244 + $0x9c] sm:$0xf]
      %v358 = vld [vmem:[%s244 + $0xa0] sm:$0xf]
      %v359 = vld [vmem:[%s244 + $0xa4] sm:$0x1]
      %v360 = vld [vmem:[%s244 + $0xa8] sm:$0xf]
      %v361 = vld [vmem:[%s244 + $0xac] sm:$0xf]
      %v362 = vld [vmem:[%s244 + $0xb0] sm:$0x1]
      %v363 = vld [vmem:[%s244 + $0xb4] sm:$0xf]
      %v364 = vld [vmem:[%s244 + $0xb8] sm:$0xf]
      %v365 = vld [vmem:[%s244 + $0xbc] sm:$0x1]
      %v366 = vld [vmem:[%s244 + $0xc0] sm:$0xf]
      %v367 = vld [vmem:[%s244 + $0xc4] sm:$0xf]
      %v368 = vld [vmem:[%s244 + $0xc8] sm:$0x1]
      %v369 = vld [vmem:[%s244 + $0xcc] sm:$0xf]
      %v370 = vld [vmem:[%s244 + $0xd0] sm:$0xf]
      %v371 = vld [vmem:[%s244 + $0xd4] sm:$0x1]
      %vm372 = vsmask.f32 3328
      %vm373 = vsmask.f32 7440
      %vm374 = vmor %vm372, %vm373
      %v376 = vshrl.u32 %v318, 16
      %v378 = vrot.slane %v376, 4
      %v379 = vshll.u32 %v318, 16
      %v381 = vrot.slane %v379, 5
      %v382 = vor.u32 %v378, %v381
      %v383 = vrot.slane %v382, 4
      %v385 = vshll.u32 %v319, 16
      %v387 = vrot.slane %v385, 5
      %v388 = vsel %vm374, %v383, %v387
      %v389 = vshrl.u32 %v319, 16
      %v391 = vrot.slane %v389, 4
      %v392 = vor.u32 %v391, %v387
      %v393 = vrot.slane %v392, 4
      %v395 = vshll.u32 %v320, 16
      %v397 = vrot.slane %v395, 5
      %v398 = vsel %vm374, %v393, %v397
      %v400 = vshrl.u32 %v321, 16
      %v402 = vrot.slane %v400, 4
      %v403 = vshll.u32 %v321, 16
      %v405 = vrot.slane %v403, 5
      %v406 = vor.u32 %v402, %v405
      %v407 = vrot.slane %v406, 4
      %v409 = vshll.u32 %v322, 16
      %v411 = vrot.slane %v409, 5
      %v412 = vsel %vm374, %v407, %v411
      %v413 = vshrl.u32 %v322, 16
      %v415 = vrot.slane %v413, 4
      %v416 = vor.u32 %v415, %v411
      %v417 = vrot.slane %v416, 4
      %v419 = vshll.u32 %v323, 16
      %v421 = vrot.slane %v419, 5
      %v422 = vsel %vm374, %v417, %v421
      %v424 = vshrl.u32 %v324, 16
      %v426 = vrot.slane %v424, 4
      %v427 = vshll.u32 %v324, 16
      %v429 = vrot.slane %v427, 5
      %v430 = vor.u32 %v426, %v429
      %v431 = vrot.slane %v430, 4
      %v433 = vshll.u32 %v325, 16
      %v435 = vrot.slane %v433, 5
      %v436 = vsel %vm374, %v431, %v435
      %v437 = vshrl.u32 %v325, 16
      %v439 = vrot.slane %v437, 4
      %v440 = vor.u32 %v439, %v435
      %v441 = vrot.slane %v440, 4
      %v443 = vshll.u32 %v326, 16
      %v445 = vrot.slane %v443, 5
      %v446 = vsel %vm374, %v441, %v445
      %v448 = vshrl.u32 %v327, 16
      %v450 = vrot.slane %v448, 4
      %v451 = vshll.u32 %v327, 16
      %v453 = vrot.slane %v451, 5
      %v454 = vor.u32 %v450, %v453
      %v455 = vrot.slane %v454, 4
      %v457 = vshll.u32 %v328, 16
      %v459 = vrot.slane %v457, 5
      %v460 = vsel %vm374, %v455, %v459
      %v461 = vshrl.u32 %v328, 16
      %v463 = vrot.slane %v461, 4
      %v464 = vor.u32 %v463, %v459
      %v465 = vrot.slane %v464, 4
      %v467 = vshll.u32 %v329, 16
      %v469 = vrot.slane %v467, 5
      %v470 = vsel %vm374, %v465, %v469
      %v472 = vshrl.u32 %v330, 16
      %v474 = vrot.slane %v472, 4
      %v475 = vshll.u32 %v330, 16
      %v477 = vrot.slane %v475, 5
      %v478 = vor.u32 %v474, %v477
      %v479 = vrot.slane %v478, 4
      %v481 = vshll.u32 %v331, 16
      %v483 = vrot.slane %v481, 5
      %v484 = vsel %vm374, %v479, %v483
      %v485 = vshrl.u32 %v331, 16
      %v487 = vrot.slane %v485, 4
      %v488 = vor.u32 %v487, %v483
      %v489 = vrot.slane %v488, 4
      %v491 = vshll.u32 %v332, 16
      %v493 = vrot.slane %v491, 5
      %v494 = vsel %vm374, %v489, %v493
      %v496 = vshrl.u32 %v333, 16
      %v498 = vrot.slane %v496, 4
      %v499 = vshll.u32 %v333, 16
      %v501 = vrot.slane %v499, 5
      %v502 = vor.u32 %v498, %v501
      %v503 = vrot.slane %v502, 4
      %v505 = vshll.u32 %v334, 16
      %v507 = vrot.slane %v505, 5
      %v508 = vsel %vm374, %v503, %v507
      %v509 = vshrl.u32 %v334, 16
      %v511 = vrot.slane %v509, 4
      %v512 = vor.u32 %v511, %v507
      %v513 = vrot.slane %v512, 4
      %v515 = vshll.u32 %v335, 16
      %v517 = vrot.slane %v515, 5
      %v518 = vsel %vm374, %v513, %v517
      %v520 = vshrl.u32 %v336, 16
      %v522 = vrot.slane %v520, 4
      %v523 = vshll.u32 %v336, 16
      %v525 = vrot.slane %v523, 5
      %v526 = vor.u32 %v522, %v525
      %v527 = vrot.slane %v526, 4
      %v529 = vshll.u32 %v337, 16
      %v531 = vrot.slane %v529, 5
      %v532 = vsel %vm374, %v527, %v531
      %v533 = vshrl.u32 %v337, 16
      %v535 = vrot.slane %v533, 4
      %v536 = vor.u32 %v535, %v531
      %v537 = vrot.slane %v536, 4
      %v539 = vshll.u32 %v338, 16
      %v541 = vrot.slane %v539, 5
      %v542 = vsel %vm374, %v537, %v541
      %v544 = vshrl.u32 %v339, 16
      %v546 = vrot.slane %v544, 4
      %v547 = vshll.u32 %v339, 16
      %v549 = vrot.slane %v547, 5
      %v550 = vor.u32 %v546, %v549
      %v551 = vrot.slane %v550, 4
      %v553 = vshll.u32 %v340, 16
      %v555 = vrot.slane %v553, 5
      %v556 = vsel %vm374, %v551, %v555
      %v557 = vshrl.u32 %v340, 16
      %v559 = vrot.slane %v557, 4
      %v560 = vor.u32 %v559, %v555
      %v561 = vrot.slane %v560, 4
      %v563 = vshll.u32 %v341, 16
      %v565 = vrot.slane %v563, 5
      %v566 = vsel %vm374, %v561, %v565
      %v568 = vshrl.u32 %v342, 16
      %v570 = vrot.slane %v568, 4
      %v571 = vshll.u32 %v342, 16
      %v573 = vrot.slane %v571, 5
      %v574 = vor.u32 %v570, %v573
      %v575 = vrot.slane %v574, 4
      %v577 = vshll.u32 %v343, 16
      %v579 = vrot.slane %v577, 5
      %v580 = vsel %vm374, %v575, %v579
      %v581 = vshrl.u32 %v343, 16
      %v583 = vrot.slane %v581, 4
      %v584 = vor.u32 %v583, %v579
      %v585 = vrot.slane %v584, 4
      %v587 = vshll.u32 %v344, 16
      %v589 = vrot.slane %v587, 5
      %v590 = vsel %vm374, %v585, %v589
      %v592 = vshrl.u32 %v345, 16
      %v594 = vrot.slane %v592, 4
      %v595 = vshll.u32 %v345, 16
      %v597 = vrot.slane %v595, 5
      %v598 = vor.u32 %v594, %v597
      %v599 = vrot.slane %v598, 4
      %v601 = vshll.u32 %v346, 16
      %v603 = vrot.slane %v601, 5
      %v604 = vsel %vm374, %v599, %v603
      %v605 = vshrl.u32 %v346, 16
      %v607 = vrot.slane %v605, 4
      %v608 = vor.u32 %v607, %v603
      %v609 = vrot.slane %v608, 4
      %v611 = vshll.u32 %v347, 16
      %v613 = vrot.slane %v611, 5
      %v614 = vsel %vm374, %v609, %v613
      %v616 = vshrl.u32 %v348, 16
      %v618 = vrot.slane %v616, 4
      %v619 = vshll.u32 %v348, 16
      %v621 = vrot.slane %v619, 5
      %v622 = vor.u32 %v618, %v621
      %v623 = vrot.slane %v622, 4
      %v625 = vshll.u32 %v349, 16
      %v627 = vrot.slane %v625, 5
      %v628 = vsel %vm374, %v623, %v627
      %v629 = vshrl.u32 %v349, 16
      %v631 = vrot.slane %v629, 4
      %v632 = vor.u32 %v631, %v627
      %v633 = vrot.slane %v632, 4
      %v635 = vshll.u32 %v350, 16
      %v637 = vrot.slane %v635, 5
      %v638 = vsel %vm374, %v633, %v637
      %v640 = vshrl.u32 %v351, 16
      %v642 = vrot.slane %v640, 4
      %v643 = vshll.u32 %v351, 16
      %v645 = vrot.slane %v643, 5
      %v646 = vor.u32 %v642, %v645
      %v647 = vrot.slane %v646, 4
      %v649 = vshll.u32 %v352, 16
      %v651 = vrot.slane %v649, 5
      %v652 = vsel %vm374, %v647, %v651
      %v653 = vshrl.u32 %v352, 16
      %v655 = vrot.slane %v653, 4
      %v656 = vor.u32 %v655, %v651
      %v657 = vrot.slane %v656, 4
      %v659 = vshll.u32 %v353, 16
      %v661 = vrot.slane %v659, 5
      %v662 = vsel %vm374, %v657, %v661
      %v664 = vshrl.u32 %v354, 16
      %v666 = vrot.slane %v664, 4
      %v667 = vshll.u32 %v354, 16
      %v669 = vrot.slane %v667, 5
      %v670 = vor.u32 %v666, %v669
      %v671 = vrot.slane %v670, 4
      %v673 = vshll.u32 %v355, 16
      %v675 = vrot.slane %v673, 5
      %v676 = vsel %vm374, %v671, %v675
      %v677 = vshrl.u32 %v355, 16
      %v679 = vrot.slane %v677, 4
      %v680 = vor.u32 %v679, %v675
      %v681 = vrot.slane %v680, 4
      %v683 = vshll.u32 %v356, 16
      %v685 = vrot.slane %v683, 5
      %v686 = vsel %vm374, %v681, %v685
      %v688 = vshrl.u32 %v357, 16
      %v690 = vrot.slane %v688, 4
      %v691 = vshll.u32 %v357, 16
      %v693 = vrot.slane %v691, 5
      %v694 = vor.u32 %v690, %v693
      %v695 = vrot.slane %v694, 4
      %v697 = vshll.u32 %v358, 16
      %v699 = vrot.slane %v697, 5
      %v700 = vsel %vm374, %v695, %v699
      %v701 = vshrl.u32 %v358, 16
      %v703 = vrot.slane %v701, 4
      %v704 = vor.u32 %v703, %v699
      %v705 = vrot.slane %v704, 4
      %v707 = vshll.u32 %v359, 16
      %v709 = vrot.slane %v707, 5
      %v710 = vsel %vm374, %v705, %v709
      %v712 = vshrl.u32 %v360, 16
      %v714 = vrot.slane %v712, 4
      %v715 = vshll.u32 %v360, 16
      %v717 = vrot.slane %v715, 5
      %v718 = vor.u32 %v714, %v717
      %v719 = vrot.slane %v718, 4
      %v721 = vshll.u32 %v361, 16
      %v723 = vrot.slane %v721, 5
      %v724 = vsel %vm374, %v719, %v723
      %v725 = vshrl.u32 %v361, 16
      %v727 = vrot.slane %v725, 4
      %v728 = vor.u32 %v727, %v723
      %v729 = vrot.slane %v728, 4
      %v731 = vshll.u32 %v362, 16
      %v733 = vrot.slane %v731, 5
      %v734 = vsel %vm374, %v729, %v733
      %v736 = vshrl.u32 %v363, 16
      %v738 = vrot.slane %v736, 4
      %v739 = vshll.u32 %v363, 16
      %v741 = vrot.slane %v739, 5
      %v742 = vor.u32 %v738, %v741
      %v743 = vrot.slane %v742, 4
      %v745 = vshll.u32 %v364, 16
      %v747 = vrot.slane %v745, 5
      %v748 = vsel %vm374, %v743, %v747
      %v749 = vshrl.u32 %v364, 16
      %v751 = vrot.slane %v749, 4
      %v752 = vor.u32 %v751, %v747
      %v753 = vrot.slane %v752, 4
      %v755 = vshll.u32 %v365, 16
      %v757 = vrot.slane %v755, 5
      %v758 = vsel %vm374, %v753, %v757
      %v760 = vshrl.u32 %v366, 16
      %v762 = vrot.slane %v760, 4
      %v763 = vshll.u32 %v366, 16
      %v765 = vrot.slane %v763, 5
      %v766 = vor.u32 %v762, %v765
      %v767 = vrot.slane %v766, 4
      %v769 = vshll.u32 %v367, 16
      %v771 = vrot.slane %v769, 5
      %v772 = vsel %vm374, %v767, %v771
      %v773 = vshrl.u32 %v367, 16
      %v775 = vrot.slane %v773, 4
      %v776 = vor.u32 %v775, %v771
      %v777 = vrot.slane %v776, 4
      %v779 = vshll.u32 %v368, 16
      %v781 = vrot.slane %v779, 5
      %v782 = vsel %vm374, %v777, %v781
      %v784 = vshrl.u32 %v369, 16
      %v786 = vrot.slane %v784, 4
      %v787 = vshll.u32 %v369, 16
      %v789 = vrot.slane %v787, 5
      %v790 = vor.u32 %v786, %v789
      %v791 = vrot.slane %v790, 4
      %v793 = vshll.u32 %v370, 16
      %v795 = vrot.slane %v793, 5
      %v796 = vsel %vm374, %v791, %v795
      %v797 = vshrl.u32 %v370, 16
      %v799 = vrot.slane %v797, 4
      %v800 = vor.u32 %v799, %v795
      %v801 = vrot.slane %v800, 4
      %v803 = vshll.u32 %v371, 16
      %v805 = vrot.slane %v803, 5
      %v806 = vsel %vm374, %v801, %v805
      %s843 = scalar_lea.vmem [#allocation2], 144
      %844 = vst.msk [vmem:[%s843] sm:$0xf] %vm281, %v388
      %845 = vst.msk [vmem:[%s843 + $0x4] sm:$0xf] %vm281, %v398
      %846 = vst.msk [vmem:[%s843 + $0x8] sm:$0xf] %vm281, %v412
      %847 = vst.msk [vmem:[%s843 + $0xc] sm:$0xf] %vm281, %v422
      %848 = vst.msk [vmem:[%s843 + $0x10] sm:$0xf] %vm281, %v436
      %849 = vst.msk [vmem:[%s843 + $0x14] sm:$0xf] %vm281, %v446
      %850 = vst.msk [vmem:[%s843 + $0x18] sm:$0xf] %vm281, %v460
      %851 = vst.msk [vmem:[%s843 + $0x1c] sm:$0xf] %vm281, %v470
      %852 = vst.msk [vmem:[%s843 + $0x20] sm:$0xf] %vm281, %v484
      %853 = vst.msk [vmem:[%s843 + $0x24] sm:$0xf] %vm281, %v494
      %854 = vst.msk [vmem:[%s843 + $0x28] sm:$0xf] %vm281, %v508
      %855 = vst.msk [vmem:[%s843 + $0x2c] sm:$0xf] %vm281, %v518
      %856 = vst.msk [vmem:[%s843 + $0x30] sm:$0xf] %vm281, %v532
      %857 = vst.msk [vmem:[%s843 + $0x34] sm:$0xf] %vm281, %v542
      %858 = vst.msk [vmem:[%s843 + $0x38] sm:$0xf] %vm281, %v556
      %859 = vst.msk [vmem:[%s843 + $0x3c] sm:$0xf] %vm281, %v566
      %860 = vst.msk [vmem:[%s843 + $0x40] sm:$0xf] %vm281, %v580
      %861 = vst.msk [vmem:[%s843 + $0x44] sm:$0xf] %vm281, %v590
      %862 = vst.msk [vmem:[%s843 + $0x48] sm:$0xf] %vm281, %v604
      %863 = vst.msk [vmem:[%s843 + $0x4c] sm:$0xf] %vm281, %v614
      %864 = vst.msk [vmem:[%s843 + $0x50] sm:$0xf] %vm281, %v628
      %865 = vst.msk [vmem:[%s843 + $0x54] sm:$0xf] %vm281, %v638
      %866 = vst.msk [vmem:[%s843 + $0x58] sm:$0xf] %vm281, %v652
      %867 = vst.msk [vmem:[%s843 + $0x5c] sm:$0xf] %vm281, %v662
      %868 = vst.msk [vmem:[%s843 + $0x60] sm:$0xf] %vm281, %v676
      %869 = vst.msk [vmem:[%s843 + $0x64] sm:$0xf] %vm281, %v686
      %870 = vst.msk [vmem:[%s843 + $0x68] sm:$0xf] %vm281, %v700
      %871 = vst.msk [vmem:[%s843 + $0x6c] sm:$0xf] %vm281, %v710
      %872 = vst.msk [vmem:[%s843 + $0x70] sm:$0xf] %vm281, %v724
      %873 = vst.msk [vmem:[%s843 + $0x74] sm:$0xf] %vm281, %v734
      %874 = vst.msk [vmem:[%s843 + $0x78] sm:$0xf] %vm281, %v748
      %875 = vst.msk [vmem:[%s843 + $0x7c] sm:$0xf] %vm281, %v758
      %876 = vst.msk [vmem:[%s843 + $0x80] sm:$0xf] %vm281, %v772
      %877 = vst.msk [vmem:[%s843 + $0x84] sm:$0xf] %vm281, %v782
      %878 = vst.msk [vmem:[%s843 + $0x88] sm:$0xf] %vm281, %v796
      %879 = vst.msk [vmem:[%s843 + $0x8c] sm:$0xf] %vm281, %v806
      %v880 = vld [vmem:[%s244] sm:$0xe]
      %v881 = vld [vmem:[%s244 + $0x4] sm:$0xf]
      %v882 = vld [vmem:[%s244 + $0x8] sm:$0x1]
      %v883 = vld [vmem:[%s244 + $0xc] sm:$0xe]
      %v884 = vld [vmem:[%s244 + $0x10] sm:$0xf]
      %v885 = vld [vmem:[%s244 + $0x14] sm:$0x1]
      %v886 = vld [vmem:[%s244 + $0x18] sm:$0xe]
      %v887 = vld [vmem:[%s244 + $0x1c] sm:$0xf]
      %v888 = vld [vmem:[%s244 + $0x20] sm:$0x1]
      %v889 = vld [vmem:[%s244 + $0x24] sm:$0xe]
      %v890 = vld [vmem:[%s244 + $0x28] sm:$0xf]
      %v891 = vld [vmem:[%s244 + $0x2c] sm:$0x1]
      %v892 = vld [vmem:[%s244 + $0x30] sm:$0xe]
      %v893 = vld [vmem:[%s244 + $0x34] sm:$0xf]
      %v894 = vld [vmem:[%s244 + $0x38] sm:$0x1]
      %v895 = vld [vmem:[%s244 + $0x3c] sm:$0xe]
      %v896 = vld [vmem:[%s244 + $0x40] sm:$0xf]
      %v897 = vld [vmem:[%s244 + $0x44] sm:$0x1]
      %v898 = vld [vmem:[%s244 + $0x48] sm:$0xe]
      %v899 = vld [vmem:[%s244 + $0x4c] sm:$0xf]
      %v900 = vld [vmem:[%s244 + $0x50] sm:$0x1]
      %v901 = vld [vmem:[%s244 + $0x54] sm:$0xe]
      %v902 = vld [vmem:[%s244 + $0x58] sm:$0xf]
      %v903 = vld [vmem:[%s244 + $0x5c] sm:$0x1]
      %v904 = vld [vmem:[%s244 + $0x60] sm:$0xe]
      %v905 = vld [vmem:[%s244 + $0x64] sm:$0xf]
      %v906 = vld [vmem:[%s244 + $0x68] sm:$0x1]
      %v907 = vld [vmem:[%s244 + $0x6c] sm:$0xe]
      %v908 = vld [vmem:[%s244 + $0x70] sm:$0xf]
      %v909 = vld [vmem:[%s244 + $0x74] sm:$0x1]
      %v910 = vld [vmem:[%s244 + $0x78] sm:$0xe]
      %v911 = vld [vmem:[%s244 + $0x7c] sm:$0xf]
      %v912 = vld [vmem:[%s244 + $0x80] sm:$0x1]
      %v913 = vld [vmem:[%s244 + $0x84] sm:$0xe]
      %v914 = vld [vmem:[%s244 + $0x88] sm:$0xf]
      %v915 = vld [vmem:[%s244 + $0x8c] sm:$0x1]
      %v916 = vld [vmem:[%s244 + $0x90] sm:$0xe]
      %v917 = vld [vmem:[%s244 + $0x94] sm:$0xf]
      %v918 = vld [vmem:[%s244 + $0x98] sm:$0x1]
      %v919 = vld [vmem:[%s244 + $0x9c] sm:$0xe]
      %v920 = vld [vmem:[%s244 + $0xa0] sm:$0xf]
      %v921 = vld [vmem:[%s244 + $0xa4] sm:$0x1]
      %v922 = vld [vmem:[%s244 + $0xa8] sm:$0xe]
      %v923 = vld [vmem:[%s244 + $0xac] sm:$0xf]
      %v924 = vld [vmem:[%s244 + $0xb0] sm:$0x1]
      %v925 = vld [vmem:[%s244 + $0xb4] sm:$0xe]
      %v926 = vld [vmem:[%s244 + $0xb8] sm:$0xf]
      %v927 = vld [vmem:[%s244 + $0xbc] sm:$0x1]
      %v928 = vld [vmem:[%s244 + $0xc0] sm:$0xe]
      %v929 = vld [vmem:[%s244 + $0xc4] sm:$0xf]
      %v930 = vld [vmem:[%s244 + $0xc8] sm:$0x1]
      %v931 = vld [vmem:[%s244 + $0xcc] sm:$0xe]
      %v932 = vld [vmem:[%s244 + $0xd0] sm:$0xf]
      %v933 = vld [vmem:[%s244 + $0xd4] sm:$0x1]
      %vm988 = vcmask 1042432
      %vm989 = vcmask 1046532
      %vm990 = vmor %vm988, %vm989
      %v991 = vrot.slane %v880, 5
      %v992 = vrot.slane %v991, 4
      %v993 = vrot.slane %v881, 5
      %v994 = vsel %vm990, %v992, %v993
      %v995 = vrot.slane %v993, 4
      %v996 = vrot.slane %v882, 5
      %v997 = vsel %vm990, %v995, %v996
      %v998 = vrot.slane %v883, 5
      %v999 = vrot.slane %v998, 4
      %v1000 = vrot.slane %v884, 5
      %v1001 = vsel %vm990, %v999, %v1000
      %v1002 = vrot.slane %v1000, 4
      %v1003 = vrot.slane %v885, 5
      %v1004 = vsel %vm990, %v1002, %v1003
      %v1005 = vrot.slane %v886, 5
      %v1006 = vrot.slane %v1005, 4
      %v1007 = vrot.slane %v887, 5
      %v1008 = vsel %vm990, %v1006, %v1007
      %v1009 = vrot.slane %v1007, 4
      %v1010 = vrot.slane %v888, 5
      %v1011 = vsel %vm990, %v1009, %v1010
      %v1012 = vrot.slane %v889, 5
      %v1013 = vrot.slane %v1012, 4
      %v1014 = vrot.slane %v890, 5
      %v1015 = vsel %vm990, %v1013, %v1014
      %v1016 = vrot.slane %v1014, 4
      %v1017 = vrot.slane %v891, 5
      %v1018 = vsel %vm990, %v1016, %v1017
      %v1019 = vrot.slane %v892, 5
      %v1020 = vrot.slane %v1019, 4
      %v1021 = vrot.slane %v893, 5
      %v1022 = vsel %vm990, %v1020, %v1021
      %v1023 = vrot.slane %v1021, 4
      %v1024 = vrot.slane %v894, 5
      %v1025 = vsel %vm990, %v1023, %v1024
      %v1026 = vrot.slane %v895, 5
      %v1027 = vrot.slane %v1026, 4
      %v1028 = vrot.slane %v896, 5
      %v1029 = vsel %vm990, %v1027, %v1028
      %v1030 = vrot.slane %v1028, 4
      %v1031 = vrot.slane %v897, 5
      %v1032 = vsel %vm990, %v1030, %v1031
      %v1033 = vrot.slane %v898, 5
      %v1034 = vrot.slane %v1033, 4
      %v1035 = vrot.slane %v899, 5
      %v1036 = vsel %vm990, %v1034, %v1035
      %v1037 = vrot.slane %v1035, 4
      %v1038 = vrot.slane %v900, 5
      %v1039 = vsel %vm990, %v1037, %v1038
      %v1040 = vrot.slane %v901, 5
      %v1041 = vrot.slane %v1040, 4
      %v1042 = vrot.slane %v902, 5
      %v1043 = vsel %vm990, %v1041, %v1042
      %v1044 = vrot.slane %v1042, 4
      %v1045 = vrot.slane %v903, 5
      %v1046 = vsel %vm990, %v1044, %v1045
      %v1047 = vrot.slane %v904, 5
      %v1048 = vrot.slane %v1047, 4
      %v1049 = vrot.slane %v905, 5
      %v1050 = vsel %vm990, %v1048, %v1049
      %v1051 = vrot.slane %v1049, 4
      %v1052 = vrot.slane %v906, 5
      %v1053 = vsel %vm990, %v1051, %v1052
      %v1054 = vrot.slane %v907, 5
      %v1055 = vrot.slane %v1054, 4
      %v1056 = vrot.slane %v908, 5
      %v1057 = vsel %vm990, %v1055, %v1056
      %v1058 = vrot.slane %v1056, 4
      %v1059 = vrot.slane %v909, 5
      %v1060 = vsel %vm990, %v1058, %v1059
      %v1061 = vrot.slane %v910, 5
      %v1062 = vrot.slane %v1061, 4
      %v1063 = vrot.slane %v911, 5
      %v1064 = vsel %vm990, %v1062, %v1063
      %v1065 = vrot.slane %v1063, 4
      %v1066 = vrot.slane %v912, 5
      %v1067 = vsel %vm990, %v1065, %v1066
      %v1068 = vrot.slane %v913, 5
      %v1069 = vrot.slane %v1068, 4
      %v1070 = vrot.slane %v914, 5
      %v1071 = vsel %vm990, %v1069, %v1070
      %v1072 = vrot.slane %v1070, 4
      %v1073 = vrot.slane %v915, 5
      %v1074 = vsel %vm990, %v1072, %v1073
      %v1075 = vrot.slane %v916, 5
      %v1076 = vrot.slane %v1075, 4
      %v1077 = vrot.slane %v917, 5
      %v1078 = vsel %vm990, %v1076, %v1077
      %v1079 = vrot.slane %v1077, 4
      %v1080 = vrot.slane %v918, 5
      %v1081 = vsel %vm990, %v1079, %v1080
      %v1082 = vrot.slane %v919, 5
      %v1083 = vrot.slane %v1082, 4
      %v1084 = vrot.slane %v920, 5
      %v1085 = vsel %vm990, %v1083, %v1084
      %v1086 = vrot.slane %v1084, 4
      %v1087 = vrot.slane %v921, 5
      %v1088 = vsel %vm990, %v1086, %v1087
      %v1089 = vrot.slane %v922, 5
      %v1090 = vrot.slane %v1089, 4
      %v1091 = vrot.slane %v923, 5
      %v1092 = vsel %vm990, %v1090, %v1091
      %v1093 = vrot.slane %v1091, 4
      %v1094 = vrot.slane %v924, 5
      %v1095 = vsel %vm990, %v1093, %v1094
      %v1096 = vrot.slane %v925, 5
      %v1097 = vrot.slane %v1096, 4
      %v1098 = vrot.slane %v926, 5
      %v1099 = vsel %vm990, %v1097, %v1098
      %v1100 = vrot.slane %v1098, 4
      %v1101 = vrot.slane %v927, 5
      %v1102 = vsel %vm990, %v1100, %v1101
      %v1103 = vrot.slane %v928, 5
      %v1104 = vrot.slane %v1103, 4
      %v1105 = vrot.slane %v929, 5
      %v1106 = vsel %vm990, %v1104, %v1105
      %v1107 = vrot.slane %v1105, 4
      %v1108 = vrot.slane %v930, 5
      %v1109 = vsel %vm990, %v1107, %v1108
      %v1110 = vrot.slane %v931, 5
      %v1111 = vrot.slane %v1110, 4
      %v1112 = vrot.slane %v932, 5
      %v1113 = vsel %vm990, %v1111, %v1112
      %v1114 = vrot.slane %v1112, 4
      %v1115 = vrot.slane %v933, 5
      %v1116 = vsel %vm990, %v1114, %v1115
      %s1153 = scalar_lea.vmem [#allocation2], 288
      %1154 = vst.msk [vmem:[%s1153] sm:$0xf] %vm281, %v994
      %1155 = vst.msk [vmem:[%s1153 + $0x4] sm:$0xf] %vm281, %v997
      %1156 = vst.msk [vmem:[%s1153 + $0x8] sm:$0xf] %vm281, %v1001
      %1157 = vst.msk [vmem:[%s1153 + $0xc] sm:$0xf] %vm281, %v1004
      %1158 = vst.msk [vmem:[%s1153 + $0x10] sm:$0xf] %vm281, %v1008
      %1159 = vst.msk [vmem:[%s1153 + $0x14] sm:$0xf] %vm281, %v1011
      %1160 = vst.msk [vmem:[%s1153 + $0x18] sm:$0xf] %vm281, %v1015
      %1161 = vst.msk [vmem:[%s1153 + $0x1c] sm:$0xf] %vm281, %v1018
      %1162 = vst.msk [vmem:[%s1153 + $0x20] sm:$0xf] %vm281, %v1022
      %1163 = vst.msk [vmem:[%s1153 + $0x24] sm:$0xf] %vm281, %v1025
      %1164 = vst.msk [vmem:[%s1153 + $0x28] sm:$0xf] %vm281, %v1029
      %1165 = vst.msk [vmem:[%s1153 + $0x2c] sm:$0xf] %vm281, %v1032
      %1166 = vst.msk [vmem:[%s1153 + $0x30] sm:$0xf] %vm281, %v1036
      %1167 = vst.msk [vmem:[%s1153 + $0x34] sm:$0xf] %vm281, %v1039
      %1168 = vst.msk [vmem:[%s1153 + $0x38] sm:$0xf] %vm281, %v1043
      %1169 = vst.msk [vmem:[%s1153 + $0x3c] sm:$0xf] %vm281, %v1046
      %1170 = vst.msk [vmem:[%s1153 + $0x40] sm:$0xf] %vm281, %v1050
      %1171 = vst.msk [vmem:[%s1153 + $0x44] sm:$0xf] %vm281, %v1053
      %1172 = vst.msk [vmem:[%s1153 + $0x48] sm:$0xf] %vm281, %v1057
      %1173 = vst.msk [vmem:[%s1153 + $0x4c] sm:$0xf] %vm281, %v1060
      %1174 = vst.msk [vmem:[%s1153 + $0x50] sm:$0xf] %vm281, %v1064
      %1175 = vst.msk [vmem:[%s1153 + $0x54] sm:$0xf] %vm281, %v1067
      %1176 = vst.msk [vmem:[%s1153 + $0x58] sm:$0xf] %vm281, %v1071
      %1177 = vst.msk [vmem:[%s1153 + $0x5c] sm:$0xf] %vm281, %v1074
      %1178 = vst.msk [vmem:[%s1153 + $0x60] sm:$0xf] %vm281, %v1078
      %1179 = vst.msk [vmem:[%s1153 + $0x64] sm:$0xf] %vm281, %v1081
      %1180 = vst.msk [vmem:[%s1153 + $0x68] sm:$0xf] %vm281, %v1085
      %1181 = vst.msk [vmem:[%s1153 + $0x6c] sm:$0xf] %vm281, %v1088
      %1182 = vst.msk [vmem:[%s1153 + $0x70] sm:$0xf] %vm281, %v1092
      %1183 = vst.msk [vmem:[%s1153 + $0x74] sm:$0xf] %vm281, %v1095
      %1184 = vst.msk [vmem:[%s1153 + $0x78] sm:$0xf] %vm281, %v1099
      %1185 = vst.msk [vmem:[%s1153 + $0x7c] sm:$0xf] %vm281, %v1102
      %1186 = vst.msk [vmem:[%s1153 + $0x80] sm:$0xf] %vm281, %v1106
      %1187 = vst.msk [vmem:[%s1153 + $0x84] sm:$0xf] %vm281, %v1109
      %1188 = vst.msk [vmem:[%s1153 + $0x88] sm:$0xf] %vm281, %v1113
      %1189 = vst.msk [vmem:[%s1153 + $0x8c] sm:$0xf] %vm281, %v1116
      %v1190 = vld [vmem:[%s226] sm:$0x1]
      %v1191 = vld [vmem:[#allocation2] sm:$0xf]
      %v1192 = vld [vmem:[#allocation2 + $0x4] sm:$0xf]
      %v1193 = vld [vmem:[#allocation2 + $0x8] sm:$0xf]
      %v1194 = vld [vmem:[#allocation2 + $0xc] sm:$0xf]
      %v1195 = vld [vmem:[#allocation2 + $0x10] sm:$0xf]
      %v1196 = vld [vmem:[#allocation2 + $0x14] sm:$0xf]
      %v1197 = vld [vmem:[#allocation2 + $0x18] sm:$0xf]
      %v1198 = vld [vmem:[#allocation2 + $0x1c] sm:$0xf]
      %v1199 = vld [vmem:[#allocation2 + $0x20] sm:$0xf]
      %v1200 = vld [vmem:[#allocation2 + $0x24] sm:$0xf]
      %v1201 = vld [vmem:[#allocation2 + $0x28] sm:$0xf]
      %v1202 = vld [vmem:[#allocation2 + $0x2c] sm:$0xf]
      %v1203 = vld [vmem:[#allocation2 + $0x30] sm:$0xf]
      %v1204 = vld [vmem:[#allocation2 + $0x34] sm:$0xf]
      %v1205 = vld [vmem:[#allocation2 + $0x38] sm:$0xf]
      %v1206 = vld [vmem:[#allocation2 + $0x3c] sm:$0xf]
      %v1207 = vld [vmem:[#allocation2 + $0x40] sm:$0xf]
      %v1208 = vld [vmem:[#allocation2 + $0x44] sm:$0xf]
      %v1209 = vld [vmem:[#allocation2 + $0x48] sm:$0xf]
      %v1210 = vld [vmem:[#allocation2 + $0x4c] sm:$0xf]
      %v1211 = vld [vmem:[#allocation2 + $0x50] sm:$0xf]
      %v1212 = vld [vmem:[#allocation2 + $0x54] sm:$0xf]
      %v1213 = vld [vmem:[#allocation2 + $0x58] sm:$0xf]
      %v1214 = vld [vmem:[#allocation2 + $0x5c] sm:$0xf]
      %v1215 = vld [vmem:[#allocation2 + $0x60] sm:$0xf]
      %v1216 = vld [vmem:[#allocation2 + $0x64] sm:$0xf]
      %v1217 = vld [vmem:[#allocation2 + $0x68] sm:$0xf]
      %v1218 = vld [vmem:[#allocation2 + $0x6c] sm:$0xf]
      %v1219 = vld [vmem:[#allocation2 + $0x70] sm:$0xf]
      %v1220 = vld [vmem:[#allocation2 + $0x74] sm:$0xf]
      %v1221 = vld [vmem:[#allocation2 + $0x78] sm:$0xf]
      %v1222 = vld [vmem:[#allocation2 + $0x7c] sm:$0xf]
      %v1223 = vld [vmem:[%s223] sm:$0x3]
      %v1224 = vld [vmem:[%s843] sm:$0xf]
      %v1225 = vld [vmem:[%s843 + $0x4] sm:$0xf]
      %v1226 = vld [vmem:[%s843 + $0x8] sm:$0xf]
      %v1227 = vld [vmem:[%s843 + $0xc] sm:$0xf]
      %v1228 = vld [vmem:[%s843 + $0x10] sm:$0xf]
      %v1229 = vld [vmem:[%s843 + $0x14] sm:$0xf]
      %v1230 = vld [vmem:[%s843 + $0x18] sm:$0xf]
      %v1231 = vld [vmem:[%s843 + $0x1c] sm:$0xf]
      %v1232 = vld [vmem:[%s843 + $0x20] sm:$0xf]
      %v1233 = vld [vmem:[%s843 + $0x24] sm:$0xf]
      %v1234 = vld [vmem:[%s843 + $0x28] sm:$0xf]
      %v1235 = vld [vmem:[%s843 + $0x2c] sm:$0xf]
      %v1236 = vld [vmem:[%s843 + $0x30] sm:$0xf]
      %v1237 = vld [vmem:[%s843 + $0x34] sm:$0xf]
      %v1238 = vld [vmem:[%s843 + $0x38] sm:$0xf]
      %v1239 = vld [vmem:[%s843 + $0x3c] sm:$0xf]
      %v1240 = vld [vmem:[%s843 + $0x40] sm:$0xf]
      %v1241 = vld [vmem:[%s843 + $0x44] sm:$0xf]
      %v1242 = vld [vmem:[%s843 + $0x48] sm:$0xf]
      %v1243 = vld [vmem:[%s843 + $0x4c] sm:$0xf]
      %v1244 = vld [vmem:[%s843 + $0x50] sm:$0xf]
      %v1245 = vld [vmem:[%s843 + $0x54] sm:$0xf]
      %v1246 = vld [vmem:[%s843 + $0x58] sm:$0xf]
      %v1247 = vld [vmem:[%s843 + $0x5c] sm:$0xf]
      %v1248 = vld [vmem:[%s843 + $0x60] sm:$0xf]
      %v1249 = vld [vmem:[%s843 + $0x64] sm:$0xf]
      %v1250 = vld [vmem:[%s843 + $0x68] sm:$0xf]
      %v1251 = vld [vmem:[%s843 + $0x6c] sm:$0xf]
      %v1252 = vld [vmem:[%s843 + $0x70] sm:$0xf]
      %v1253 = vld [vmem:[%s843 + $0x74] sm:$0xf]
      %v1254 = vld [vmem:[%s843 + $0x78] sm:$0xf]
      %v1255 = vld [vmem:[%s843 + $0x7c] sm:$0xf]
      %s1256 = scalar_lea.vmem %s223, 2
      %v1257 = vld [vmem:[%s1256] sm:$0x3]
      %v1290 = vunpack.c.l.b16 %v1224
      %v1291 = vunpack.c.l.b16 %v1225
      %v1292 = vunpack.c.l.b16 %v1226
      %v1293 = vunpack.c.l.b16 %v1227
      %v1294 = vunpack.c.l.b16 %v1228
      %v1295 = vunpack.c.l.b16 %v1229
      %v1296 = vunpack.c.l.b16 %v1230
      %v1297 = vunpack.c.l.b16 %v1231
      %v1298 = vunpack.c.l.b16 %v1232
      %v1299 = vunpack.c.l.b16 %v1233
      %v1300 = vunpack.c.l.b16 %v1234
      %v1301 = vunpack.c.l.b16 %v1235
      %v1302 = vunpack.c.l.b16 %v1236
      %v1303 = vunpack.c.l.b16 %v1237
      %v1304 = vunpack.c.l.b16 %v1238
      %v1305 = vunpack.c.l.b16 %v1239
      %v1306 = vunpack.c.l.b16 %v1240
      %v1307 = vunpack.c.l.b16 %v1241
      %v1308 = vunpack.c.l.b16 %v1242
      %v1309 = vunpack.c.l.b16 %v1243
      %v1310 = vunpack.c.l.b16 %v1244
      %v1311 = vunpack.c.l.b16 %v1245
      %v1312 = vunpack.c.l.b16 %v1246
      %v1313 = vunpack.c.l.b16 %v1247
      %v1314 = vunpack.c.l.b16 %v1248
      %v1315 = vunpack.c.l.b16 %v1249
      %v1316 = vunpack.c.l.b16 %v1250
      %v1317 = vunpack.c.l.b16 %v1251
      %v1318 = vunpack.c.l.b16 %v1252
      %v1319 = vunpack.c.l.b16 %v1253
      %v1320 = vunpack.c.l.b16 %v1254
      %v1321 = vunpack.c.l.b16 %v1255
      %v1322 = vpack.c.b16 %v1291, %v1290
      %v1323 = vpack.c.b16 %v1293, %v1292
      %v1324 = vpack.c.b16 %v1295, %v1294
      %v1325 = vpack.c.b16 %v1297, %v1296
      %v1326 = vpack.c.b16 %v1299, %v1298
      %v1327 = vpack.c.b16 %v1301, %v1300
      %v1328 = vpack.c.b16 %v1303, %v1302
      %v1329 = vpack.c.b16 %v1305, %v1304
      %v1330 = vpack.c.b16 %v1307, %v1306
      %v1331 = vpack.c.b16 %v1309, %v1308
      %v1332 = vpack.c.b16 %v1311, %v1310
      %v1333 = vpack.c.b16 %v1313, %v1312
      %v1334 = vpack.c.b16 %v1315, %v1314
      %v1335 = vpack.c.b16 %v1317, %v1316
      %v1336 = vpack.c.b16 %v1319, %v1318
      %v1337 = vpack.c.b16 %v1321, %v1320
      %vm1338 = vcmask 31744
      %v1340 = vsel %vm1338, %v1322, 0
      %v1343 = vsel %vm1338, %v1323, 0
      %v1346 = vsel %vm1338, %v1324, 0
      %v1349 = vsel %vm1338, %v1325, 0
      %v1352 = vsel %vm1338, %v1326, 0
      %v1355 = vsel %vm1338, %v1327, 0
      %v1358 = vsel %vm1338, %v1328, 0
      %v1361 = vsel %vm1338, %v1329, 0
      %v1364 = vsel %vm1338, %v1330, 0
      %v1367 = vsel %vm1338, %v1331, 0
      %v1370 = vsel %vm1338, %v1332, 0
      %v1373 = vsel %vm1338, %v1333, 0
      %v1376 = vsel %vm1338, %v1334, 0
      %v1379 = vsel %vm1338, %v1335, 0
      %v1382 = vsel %vm1338, %v1336, 0
      %v1385 = vsel %vm1338, %v1337, 0
      %vm1387 = vcmask 1041408
      %v1389 = vsel %vm1387, %v1257, 0
      %1391 = vmatprep.subr.bf16.mxu0 0
      %1392 = vmatpush1.bf16.msra.mxu0 0
      %1393 = vmatprep.subr.bf16.mxu0 0
      %1394 = vmatpush1.bf16.msra.mxu0 0
      %1395 = vmatprep.subr.bf16.mxu0 0
      %1396 = vmatpush1.bf16.msra.mxu0 0
      %1397 = vmatprep.subr.bf16.mxu0 0
      %1398 = vmatpush1.bf16.msra.mxu0 0
      %1399 = vmatprep.subr.bf16.mxu0 0
      %1400 = vmatpush1.bf16.msra.mxu0 0
      %1401 = vmatprep.subr.bf16.mxu0 0
      %1402 = vmatpush1.bf16.msra.mxu0 0
      %1403 = vmatprep.subr.bf16.mxu0 0
      %1404 = vmatpush1.bf16.msra.mxu0 0
      %1405 = vmatprep.subr.bf16.mxu0 0
      %1406 = vmatpush1.bf16.msra.mxu0 %v1389
      %1407 = vmatprep.subr.bf16.mxu0 0
      %1408 = vmatpush2.bf16.msra.mxu0 0
      %1409 = vmatprep.subr.bf16.mxu0 0
      %1410 = vmatpush2.bf16.msra.mxu0 0
      %1411 = vmatprep.subr.bf16.mxu0 0
      %1412 = vmatpush2.bf16.msra.mxu0 0
      %1413 = vmatprep.subr.bf16.mxu0 0
      %1414 = vmatpush2.bf16.msra.mxu0 0
      %1415 = vmatprep.subr.bf16.mxu0 0
      %1416 = vmatpush2.bf16.msra.mxu0 0
      %1417 = vmatprep.subr.bf16.mxu0 0
      %1418 = vmatpush2.bf16.msra.mxu0 0
      %1419 = vmatprep.subr.bf16.mxu0 0
      %1420 = vmatpush2.bf16.msra.mxu0 0
      %1421 = vmatprep.subr.bf16.mxu0 0
      %1422 = vmatpush2.bf16.msra.mxu0 0
      %1423 = vmatprep.mubr.bf16.mxu0 0
      %1424 = vmatmul.mubr.bf16.gmra.mxu0 %v1340
      %v1425 = vpop.f32.mrf.mxu0
      %v1426 = vadd.f32 0.0, %v1425
      %v1427 = vpop.f32.mrf.mxu0
      %v1428 = vpop.f32.mrf.mxu0
      %v1429 = vadd.f32 0.0, %v1428
      %v1430 = vpop.f32.mrf.mxu0
      %1431 = vmatprep.mubr.bf16.mxu0 0
      %1432 = vmatmul.mubr.bf16.gmra.mxu0 %v1343
      %v1433 = vpop.f32.mrf.mxu0
      %v1434 = vadd.f32 0.0, %v1433
      %v1435 = vpop.f32.mrf.mxu0
      %v1436 = vpop.f32.mrf.mxu0
      %v1437 = vadd.f32 0.0, %v1436
      %v1438 = vpop.f32.mrf.mxu0
      %1439 = vmatprep.mubr.bf16.mxu0 0
      %1440 = vmatmul.mubr.bf16.gmra.mxu0 %v1346
      %v1441 = vpop.f32.mrf.mxu0
      %v1442 = vadd.f32 0.0, %v1441
      %v1443 = vpop.f32.mrf.mxu0
      %v1444 = vpop.f32.mrf.mxu0
      %v1445 = vadd.f32 0.0, %v1444
      %v1446 = vpop.f32.mrf.mxu0
      %1447 = vmatprep.mubr.bf16.mxu0 0
      %1448 = vmatmul.mubr.bf16.gmra.mxu0 %v1349
      %v1449 = vpop.f32.mrf.mxu0
      %v1450 = vadd.f32 0.0, %v1449
      %v1451 = vpop.f32.mrf.mxu0
      %v1452 = vpop.f32.mrf.mxu0
      %v1453 = vadd.f32 0.0, %v1452
      %v1454 = vpop.f32.mrf.mxu0
      %1455 = vmatprep.mubr.bf16.mxu0 0
      %1456 = vmatmul.mubr.bf16.gmra.mxu0 %v1352
      %v1457 = vpop.f32.mrf.mxu0
      %v1458 = vadd.f32 0.0, %v1457
      %v1459 = vpop.f32.mrf.mxu0
      %v1460 = vpop.f32.mrf.mxu0
      %v1461 = vadd.f32 0.0, %v1460
      %v1462 = vpop.f32.mrf.mxu0
      %1463 = vmatprep.mubr.bf16.mxu0 0
      %1464 = vmatmul.mubr.bf16.gmra.mxu0 %v1355
      %v1465 = vpop.f32.mrf.mxu0
      %v1466 = vadd.f32 0.0, %v1465
      %v1467 = vpop.f32.mrf.mxu0
      %v1468 = vpop.f32.mrf.mxu0
      %v1469 = vadd.f32 0.0, %v1468
      %v1470 = vpop.f32.mrf.mxu0
      %1471 = vmatprep.mubr.bf16.mxu0 0
      %1472 = vmatmul.mubr.bf16.gmra.mxu0 %v1358
      %v1473 = vpop.f32.mrf.mxu0
      %v1474 = vadd.f32 0.0, %v1473
      %v1475 = vpop.f32.mrf.mxu0
      %v1476 = vpop.f32.mrf.mxu0
      %v1477 = vadd.f32 0.0, %v1476
      %v1478 = vpop.f32.mrf.mxu0
      %1479 = vmatprep.mubr.bf16.mxu0 0
      %1480 = vmatmul.mubr.bf16.gmra.mxu0 %v1361
      %v1481 = vpop.f32.mrf.mxu0
      %v1482 = vadd.f32 0.0, %v1481
      %v1483 = vpop.f32.mrf.mxu0
      %v1484 = vpop.f32.mrf.mxu0
      %v1485 = vadd.f32 0.0, %v1484
      %v1486 = vpop.f32.mrf.mxu0
      %1487 = vmatprep.mubr.bf16.mxu0 0
      %1488 = vmatmul.mubr.bf16.gmra.mxu0 %v1364
      %v1489 = vpop.f32.mrf.mxu0
      %v1490 = vadd.f32 0.0, %v1489
      %v1491 = vpop.f32.mrf.mxu0
      %v1492 = vpop.f32.mrf.mxu0
      %v1493 = vadd.f32 0.0, %v1492
      %v1494 = vpop.f32.mrf.mxu0
      %1495 = vmatprep.mubr.bf16.mxu0 0
      %1496 = vmatmul.mubr.bf16.gmra.mxu0 %v1367
      %v1497 = vpop.f32.mrf.mxu0
      %v1498 = vadd.f32 0.0, %v1497
      %v1499 = vpop.f32.mrf.mxu0
      %v1500 = vpop.f32.mrf.mxu0
      %v1501 = vadd.f32 0.0, %v1500
      %v1502 = vpop.f32.mrf.mxu0
      %1503 = vmatprep.mubr.bf16.mxu0 0
      %1504 = vmatmul.mubr.bf16.gmra.mxu0 %v1370
      %v1505 = vpop.f32.mrf.mxu0
      %v1506 = vadd.f32 0.0, %v1505
      %v1507 = vpop.f32.mrf.mxu0
      %v1508 = vpop.f32.mrf.mxu0
      %v1509 = vadd.f32 0.0, %v1508
      %v1510 = vpop.f32.mrf.mxu0
      %1511 = vmatprep.mubr.bf16.mxu0 0
      %1512 = vmatmul.mubr.bf16.gmra.mxu0 %v1373
      %v1513 = vpop.f32.mrf.mxu0
      %v1514 = vadd.f32 0.0, %v1513
      %v1515 = vpop.f32.mrf.mxu0
      %v1516 = vpop.f32.mrf.mxu0
      %v1517 = vadd.f32 0.0, %v1516
      %v1518 = vpop.f32.mrf.mxu0
      %1519 = vmatprep.mubr.bf16.mxu0 0
      %1520 = vmatmul.mubr.bf16.gmra.mxu0 %v1376
      %v1521 = vpop.f32.mrf.mxu0
      %v1522 = vadd.f32 0.0, %v1521
      %v1523 = vpop.f32.mrf.mxu0
      %v1524 = vpop.f32.mrf.mxu0
      %v1525 = vadd.f32 0.0, %v1524
      %v1526 = vpop.f32.mrf.mxu0
      %1527 = vmatprep.mubr.bf16.mxu0 0
      %1528 = vmatmul.mubr.bf16.gmra.mxu0 %v1379
      %v1529 = vpop.f32.mrf.mxu0
      %v1530 = vadd.f32 0.0, %v1529
      %v1531 = vpop.f32.mrf.mxu0
      %v1532 = vpop.f32.mrf.mxu0
      %v1533 = vadd.f32 0.0, %v1532
      %v1534 = vpop.f32.mrf.mxu0
      %1535 = vmatprep.mubr.bf16.mxu0 0
      %1536 = vmatmul.mubr.bf16.gmra.mxu0 %v1382
      %v1537 = vpop.f32.mrf.mxu0
      %v1538 = vadd.f32 0.0, %v1537
      %v1539 = vpop.f32.mrf.mxu0
      %v1540 = vpop.f32.mrf.mxu0
      %v1541 = vadd.f32 0.0, %v1540
      %v1542 = vpop.f32.mrf.mxu0
      %1543 = vmatprep.mubr.bf16.mxu0 0
      %1544 = vmatmul.mubr.bf16.gmra.mxu0 %v1385
      %v1545 = vpop.f32.mrf.mxu0
      %v1546 = vadd.f32 0.0, %v1545
      %v1547 = vpop.f32.mrf.mxu0
      %v1548 = vpop.f32.mrf.mxu0
      %v1549 = vadd.f32 0.0, %v1548
      %v1550 = vpop.f32.mrf.mxu0
      %1551 = vdwg.mxu0
      %v1584 = vunpack.c.l.b16 %v1191
      %v1585 = vunpack.c.l.b16 %v1192
      %v1586 = vunpack.c.l.b16 %v1193
      %v1587 = vunpack.c.l.b16 %v1194
      %v1588 = vunpack.c.l.b16 %v1195
      %v1589 = vunpack.c.l.b16 %v1196
      %v1590 = vunpack.c.l.b16 %v1197
      %v1591 = vunpack.c.l.b16 %v1198
      %v1592 = vunpack.c.l.b16 %v1199
      %v1593 = vunpack.c.l.b16 %v1200
      %v1594 = vunpack.c.l.b16 %v1201
      %v1595 = vunpack.c.l.b16 %v1202
      %v1596 = vunpack.c.l.b16 %v1203
      %v1597 = vunpack.c.l.b16 %v1204
      %v1598 = vunpack.c.l.b16 %v1205
      %v1599 = vunpack.c.l.b16 %v1206
      %v1600 = vunpack.c.l.b16 %v1207
      %v1601 = vunpack.c.l.b16 %v1208
      %v1602 = vunpack.c.l.b16 %v1209
      %v1603 = vunpack.c.l.b16 %v1210
      %v1604 = vunpack.c.l.b16 %v1211
      %v1605 = vunpack.c.l.b16 %v1212
      %v1606 = vunpack.c.l.b16 %v1213
      %v1607 = vunpack.c.l.b16 %v1214
      %v1608 = vunpack.c.l.b16 %v1215
      %v1609 = vunpack.c.l.b16 %v1216
      %v1610 = vunpack.c.l.b16 %v1217
      %v1611 = vunpack.c.l.b16 %v1218
      %v1612 = vunpack.c.l.b16 %v1219
      %v1613 = vunpack.c.l.b16 %v1220
      %v1614 = vunpack.c.l.b16 %v1221
      %v1615 = vunpack.c.l.b16 %v1222
      %v1616 = vpack.c.b16 %v1585, %v1584
      %v1617 = vpack.c.b16 %v1587, %v1586
      %v1618 = vpack.c.b16 %v1589, %v1588
      %v1619 = vpack.c.b16 %v1591, %v1590
      %v1620 = vpack.c.b16 %v1593, %v1592
      %v1621 = vpack.c.b16 %v1595, %v1594
      %v1622 = vpack.c.b16 %v1597, %v1596
      %v1623 = vpack.c.b16 %v1599, %v1598
      %v1624 = vpack.c.b16 %v1601, %v1600
      %v1625 = vpack.c.b16 %v1603, %v1602
      %v1626 = vpack.c.b16 %v1605, %v1604
      %v1627 = vpack.c.b16 %v1607, %v1606
      %v1628 = vpack.c.b16 %v1609, %v1608
      %v1629 = vpack.c.b16 %v1611, %v1610
      %v1630 = vpack.c.b16 %v1613, %v1612
      %v1631 = vpack.c.b16 %v1615, %v1614
      %v1633 = vsel %vm1338, %v1616, 0
      %v1636 = vsel %vm1338, %v1617, 0
      %v1639 = vsel %vm1338, %v1618, 0
      %v1642 = vsel %vm1338, %v1619, 0
      %v1645 = vsel %vm1338, %v1620, 0
      %v1648 = vsel %vm1338, %v1621, 0
      %v1651 = vsel %vm1338, %v1622, 0
      %v1654 = vsel %vm1338, %v1623, 0
      %v1657 = vsel %vm1338, %v1624, 0
      %v1660 = vsel %vm1338, %v1625, 0
      %v1663 = vsel %vm1338, %v1626, 0
      %v1666 = vsel %vm1338, %v1627, 0
      %v1669 = vsel %vm1338, %v1628, 0
      %v1672 = vsel %vm1338, %v1629, 0
      %v1675 = vsel %vm1338, %v1630, 0
      %v1678 = vsel %vm1338, %v1631, 0
      %v1681 = vsel %vm1387, %v1223, 0
      %1683 = vmatprep.subr.bf16.mxu0 0
      %1684 = vmatpush1.bf16.msra.mxu0 0
      %1685 = vmatprep.subr.bf16.mxu0 0
      %1686 = vmatpush1.bf16.msra.mxu0 0
      %1687 = vmatprep.subr.bf16.mxu0 0
      %1688 = vmatpush1.bf16.msra.mxu0 0
      %1689 = vmatprep.subr.bf16.mxu0 0
      %1690 = vmatpush1.bf16.msra.mxu0 0
      %1691 = vmatprep.subr.bf16.mxu0 0
      %1692 = vmatpush1.bf16.msra.mxu0 0
      %1693 = vmatprep.subr.bf16.mxu0 0
      %1694 = vmatpush1.bf16.msra.mxu0 0
      %1695 = vmatprep.subr.bf16.mxu0 0
      %1696 = vmatpush1.bf16.msra.mxu0 0
      %1697 = vmatprep.subr.bf16.mxu0 0
      %1698 = vmatpush1.bf16.msra.mxu0 %v1681
      %1699 = vmatprep.subr.bf16.mxu0 0
      %1700 = vmatpush2.bf16.msra.mxu0 0
      %1701 = vmatprep.subr.bf16.mxu0 0
      %1702 = vmatpush2.bf16.msra.mxu0 0
      %1703 = vmatprep.subr.bf16.mxu0 0
      %1704 = vmatpush2.bf16.msra.mxu0 0
      %1705 = vmatprep.subr.bf16.mxu0 0
      %1706 = vmatpush2.bf16.msra.mxu0 0
      %1707 = vmatprep.subr.bf16.mxu0 0
      %1708 = vmatpush2.bf16.msra.mxu0 0
      %1709 = vmatprep.subr.bf16.mxu0 0
      %1710 = vmatpush2.bf16.msra.mxu0 0
      %1711 = vmatprep.subr.bf16.mxu0 0
      %1712 = vmatpush2.bf16.msra.mxu0 0
      %1713 = vmatprep.subr.bf16.mxu0 0
      %1714 = vmatpush2.bf16.msra.mxu0 0
      %1715 = vmatprep.mubr.bf16.mxu0 0
      %1716 = vmatmul.mubr.bf16.gmra.mxu0 %v1633
      %v1717 = vpop.f32.mrf.mxu0
      %v1718 = vadd.f32 %v1426, %v1717
      %v1719 = vpop.f32.mrf.mxu0
      %v1720 = vpop.f32.mrf.mxu0
      %v1721 = vadd.f32 %v1429, %v1720
      %v1722 = vpop.f32.mrf.mxu0
      %1723 = vmatprep.mubr.bf16.mxu0 0
      %1724 = vmatmul.mubr.bf16.gmra.mxu0 %v1636
      %v1725 = vpop.f32.mrf.mxu0
      %v1726 = vadd.f32 %v1434, %v1725
      %v1727 = vpop.f32.mrf.mxu0
      %v1728 = vpop.f32.mrf.mxu0
      %v1729 = vadd.f32 %v1437, %v1728
      %v1730 = vpop.f32.mrf.mxu0
      %1731 = vmatprep.mubr.bf16.mxu0 0
      %1732 = vmatmul.mubr.bf16.gmra.mxu0 %v1639
      %v1733 = vpop.f32.mrf.mxu0
      %v1734 = vadd.f32 %v1442, %v1733
      %v1735 = vpop.f32.mrf.mxu0
      %v1736 = vpop.f32.mrf.mxu0
      %v1737 = vadd.f32 %v1445, %v1736
      %v1738 = vpop.f32.mrf.mxu0
      %1739 = vmatprep.mubr.bf16.mxu0 0
      %1740 = vmatmul.mubr.bf16.gmra.mxu0 %v1642
      %v1741 = vpop.f32.mrf.mxu0
      %v1742 = vadd.f32 %v1450, %v1741
      %v1743 = vpop.f32.mrf.mxu0
      %v1744 = vpop.f32.mrf.mxu0
      %v1745 = vadd.f32 %v1453, %v1744
      %v1746 = vpop.f32.mrf.mxu0
      %1747 = vmatprep.mubr.bf16.mxu0 0
      %1748 = vmatmul.mubr.bf16.gmra.mxu0 %v1645
      %v1749 = vpop.f32.mrf.mxu0
      %v1750 = vadd.f32 %v1458, %v1749
      %v1751 = vpop.f32.mrf.mxu0
      %v1752 = vpop.f32.mrf.mxu0
      %v1753 = vadd.f32 %v1461, %v1752
      %v1754 = vpop.f32.mrf.mxu0
      %1755 = vmatprep.mubr.bf16.mxu0 0
      %1756 = vmatmul.mubr.bf16.gmra.mxu0 %v1648
      %v1757 = vpop.f32.mrf.mxu0
      %v1758 = vadd.f32 %v1466, %v1757
      %v1759 = vpop.f32.mrf.mxu0
      %v1760 = vpop.f32.mrf.mxu0
      %v1761 = vadd.f32 %v1469, %v1760
      %v1762 = vpop.f32.mrf.mxu0
      %1763 = vmatprep.mubr.bf16.mxu0 0
      %1764 = vmatmul.mubr.bf16.gmra.mxu0 %v1651
      %v1765 = vpop.f32.mrf.mxu0
      %v1766 = vadd.f32 %v1474, %v1765
      %v1767 = vpop.f32.mrf.mxu0
      %v1768 = vpop.f32.mrf.mxu0
      %v1769 = vadd.f32 %v1477, %v1768
      %v1770 = vpop.f32.mrf.mxu0
      %1771 = vmatprep.mubr.bf16.mxu0 0
      %1772 = vmatmul.mubr.bf16.gmra.mxu0 %v1654
      %v1773 = vpop.f32.mrf.mxu0
      %v1774 = vadd.f32 %v1482, %v1773
      %v1775 = vpop.f32.mrf.mxu0
      %v1776 = vpop.f32.mrf.mxu0
      %v1777 = vadd.f32 %v1485, %v1776
      %v1778 = vpop.f32.mrf.mxu0
      %1779 = vmatprep.mubr.bf16.mxu0 0
      %1780 = vmatmul.mubr.bf16.gmra.mxu0 %v1657
      %v1781 = vpop.f32.mrf.mxu0
      %v1782 = vadd.f32 %v1490, %v1781
      %v1783 = vpop.f32.mrf.mxu0
      %v1784 = vpop.f32.mrf.mxu0
      %v1785 = vadd.f32 %v1493, %v1784
      %v1786 = vpop.f32.mrf.mxu0
      %1787 = vmatprep.mubr.bf16.mxu0 0
      %1788 = vmatmul.mubr.bf16.gmra.mxu0 %v1660
      %v1789 = vpop.f32.mrf.mxu0
      %v1790 = vadd.f32 %v1498, %v1789
      %v1791 = vpop.f32.mrf.mxu0
      %v1792 = vpop.f32.mrf.mxu0
      %v1793 = vadd.f32 %v1501, %v1792
      %v1794 = vpop.f32.mrf.mxu0
      %1795 = vmatprep.mubr.bf16.mxu0 0
      %1796 = vmatmul.mubr.bf16.gmra.mxu0 %v1663
      %v1797 = vpop.f32.mrf.mxu0
      %v1798 = vadd.f32 %v1506, %v1797
      %v1799 = vpop.f32.mrf.mxu0
      %v1800 = vpop.f32.mrf.mxu0
      %v1801 = vadd.f32 %v1509, %v1800
      %v1802 = vpop.f32.mrf.mxu0
      %1803 = vmatprep.mubr.bf16.mxu0 0
      %1804 = vmatmul.mubr.bf16.gmra.mxu0 %v1666
      %v1805 = vpop.f32.mrf.mxu0
      %v1806 = vadd.f32 %v1514, %v1805
      %v1807 = vpop.f32.mrf.mxu0
      %v1808 = vpop.f32.mrf.mxu0
      %v1809 = vadd.f32 %v1517, %v1808
      %v1810 = vpop.f32.mrf.mxu0
      %1811 = vmatprep.mubr.bf16.mxu0 0
      %1812 = vmatmul.mubr.bf16.gmra.mxu0 %v1669
      %v1813 = vpop.f32.mrf.mxu0
      %v1814 = vadd.f32 %v1522, %v1813
      %v1815 = vpop.f32.mrf.mxu0
      %v1816 = vpop.f32.mrf.mxu0
      %v1817 = vadd.f32 %v1525, %v1816
      %v1818 = vpop.f32.mrf.mxu0
      %1819 = vmatprep.mubr.bf16.mxu0 0
      %1820 = vmatmul.mubr.bf16.gmra.mxu0 %v1672
      %v1821 = vpop.f32.mrf.mxu0
      %v1822 = vadd.f32 %v1530, %v1821
      %v1823 = vpop.f32.mrf.mxu0
      %v1824 = vpop.f32.mrf.mxu0
      %v1825 = vadd.f32 %v1533, %v1824
      %v1826 = vpop.f32.mrf.mxu0
      %1827 = vmatprep.mubr.bf16.mxu0 0
      %1828 = vmatmul.mubr.bf16.gmra.mxu0 %v1675
      %v1829 = vpop.f32.mrf.mxu0
      %v1830 = vadd.f32 %v1538, %v1829
      %v1831 = vpop.f32.mrf.mxu0
      %v1832 = vpop.f32.mrf.mxu0
      %v1833 = vadd.f32 %v1541, %v1832
      %v1834 = vpop.f32.mrf.mxu0
      %1835 = vmatprep.mubr.bf16.mxu0 0
      %1836 = vmatmul.mubr.bf16.gmra.mxu0 %v1678
      %v1837 = vpop.f32.mrf.mxu0
      %v1838 = vadd.f32 %v1546, %v1837
      %v1839 = vpop.f32.mrf.mxu0
      %v1840 = vpop.f32.mrf.mxu0
      %v1841 = vadd.f32 %v1549, %v1840
      %v1842 = vpop.f32.mrf.mxu0
      %1843 = vdwg.mxu0
      %v1844 = vld [vmem:[%s1153] sm:$0xf]
      %v1845 = vld [vmem:[%s1153 + $0x4] sm:$0xf]
      %v1846 = vld [vmem:[%s1153 + $0x8] sm:$0xf]
      %v1847 = vld [vmem:[%s1153 + $0xc] sm:$0xf]
      %v1848 = vld [vmem:[%s1153 + $0x10] sm:$0xf]
      %v1849 = vld [vmem:[%s1153 + $0x14] sm:$0xf]
      %v1850 = vld [vmem:[%s1153 + $0x18] sm:$0xf]
      %v1851 = vld [vmem:[%s1153 + $0x1c] sm:$0xf]
      %v1852 = vld [vmem:[%s1153 + $0x20] sm:$0xf]
      %v1853 = vld [vmem:[%s1153 + $0x24] sm:$0xf]
      %v1854 = vld [vmem:[%s1153 + $0x28] sm:$0xf]
      %v1855 = vld [vmem:[%s1153 + $0x2c] sm:$0xf]
      %v1856 = vld [vmem:[%s1153 + $0x30] sm:$0xf]
      %v1857 = vld [vmem:[%s1153 + $0x34] sm:$0xf]
      %v1858 = vld [vmem:[%s1153 + $0x38] sm:$0xf]
      %v1859 = vld [vmem:[%s1153 + $0x3c] sm:$0xf]
      %v1860 = vld [vmem:[%s1153 + $0x40] sm:$0xf]
      %v1861 = vld [vmem:[%s1153 + $0x44] sm:$0xf]
      %v1862 = vld [vmem:[%s1153 + $0x48] sm:$0xf]
      %v1863 = vld [vmem:[%s1153 + $0x4c] sm:$0xf]
      %v1864 = vld [vmem:[%s1153 + $0x50] sm:$0xf]
      %v1865 = vld [vmem:[%s1153 + $0x54] sm:$0xf]
      %v1866 = vld [vmem:[%s1153 + $0x58] sm:$0xf]
      %v1867 = vld [vmem:[%s1153 + $0x5c] sm:$0xf]
      %v1868 = vld [vmem:[%s1153 + $0x60] sm:$0xf]
      %v1869 = vld [vmem:[%s1153 + $0x64] sm:$0xf]
      %v1870 = vld [vmem:[%s1153 + $0x68] sm:$0xf]
      %v1871 = vld [vmem:[%s1153 + $0x6c] sm:$0xf]
      %v1872 = vld [vmem:[%s1153 + $0x70] sm:$0xf]
      %v1873 = vld [vmem:[%s1153 + $0x74] sm:$0xf]
      %v1874 = vld [vmem:[%s1153 + $0x78] sm:$0xf]
      %v1875 = vld [vmem:[%s1153 + $0x7c] sm:$0xf]
      %s1876 = scalar_lea.vmem %s223, 4
      %v1877 = vld [vmem:[%s1876] sm:$0x3]
      %v1910 = vunpack.c.l.b16 %v1844
      %v1911 = vunpack.c.l.b16 %v1845
      %v1912 = vunpack.c.l.b16 %v1846
      %v1913 = vunpack.c.l.b16 %v1847
      %v1914 = vunpack.c.l.b16 %v1848
      %v1915 = vunpack.c.l.b16 %v1849
      %v1916 = vunpack.c.l.b16 %v1850
      %v1917 = vunpack.c.l.b16 %v1851
      %v1918 = vunpack.c.l.b16 %v1852
      %v1919 = vunpack.c.l.b16 %v1853
      %v1920 = vunpack.c.l.b16 %v1854
      %v1921 = vunpack.c.l.b16 %v1855
      %v1922 = vunpack.c.l.b16 %v1856
      %v1923 = vunpack.c.l.b16 %v1857
      %v1924 = vunpack.c.l.b16 %v1858
      %v1925 = vunpack.c.l.b16 %v1859
      %v1926 = vunpack.c.l.b16 %v1860
      %v1927 = vunpack.c.l.b16 %v1861
      %v1928 = vunpack.c.l.b16 %v1862
      %v1929 = vunpack.c.l.b16 %v1863
      %v1930 = vunpack.c.l.b16 %v1864
      %v1931 = vunpack.c.l.b16 %v1865
      %v1932 = vunpack.c.l.b16 %v1866
      %v1933 = vunpack.c.l.b16 %v1867
      %v1934 = vunpack.c.l.b16 %v1868
      %v1935 = vunpack.c.l.b16 %v1869
      %v1936 = vunpack.c.l.b16 %v1870
      %v1937 = vunpack.c.l.b16 %v1871
      %v1938 = vunpack.c.l.b16 %v1872
      %v1939 = vunpack.c.l.b16 %v1873
      %v1940 = vunpack.c.l.b16 %v1874
      %v1941 = vunpack.c.l.b16 %v1875
      %v1942 = vpack.c.b16 %v1911, %v1910
      %v1943 = vpack.c.b16 %v1913, %v1912
      %v1944 = vpack.c.b16 %v1915, %v1914
      %v1945 = vpack.c.b16 %v1917, %v1916
      %v1946 = vpack.c.b16 %v1919, %v1918
      %v1947 = vpack.c.b16 %v1921, %v1920
      %v1948 = vpack.c.b16 %v1923, %v1922
      %v1949 = vpack.c.b16 %v1925, %v1924
      %v1950 = vpack.c.b16 %v1927, %v1926
      %v1951 = vpack.c.b16 %v1929, %v1928
      %v1952 = vpack.c.b16 %v1931, %v1930
      %v1953 = vpack.c.b16 %v1933, %v1932
      %v1954 = vpack.c.b16 %v1935, %v1934
      %v1955 = vpack.c.b16 %v1937, %v1936
      %v1956 = vpack.c.b16 %v1939, %v1938
      %v1957 = vpack.c.b16 %v1941, %v1940
      %v1959 = vsel %vm1338, %v1942, 0
      %v1962 = vsel %vm1338, %v1943, 0
      %v1965 = vsel %vm1338, %v1944, 0
      %v1968 = vsel %vm1338, %v1945, 0
      %v1971 = vsel %vm1338, %v1946, 0
      %v1974 = vsel %vm1338, %v1947, 0
      %v1977 = vsel %vm1338, %v1948, 0
      %v1980 = vsel %vm1338, %v1949, 0
      %v1983 = vsel %vm1338, %v1950, 0
      %v1986 = vsel %vm1338, %v1951, 0
      %v1989 = vsel %vm1338, %v1952, 0
      %v1992 = vsel %vm1338, %v1953, 0
      %v1995 = vsel %vm1338, %v1954, 0
      %v1998 = vsel %vm1338, %v1955, 0
      %v2001 = vsel %vm1338, %v1956, 0
      %v2004 = vsel %vm1338, %v1957, 0
      %v2007 = vsel %vm1387, %v1877, 0
      %2009 = vmatprep.subr.bf16.mxu0 0
      %2010 = vmatpush1.bf16.msra.mxu0 0
      %2011 = vmatprep.subr.bf16.mxu0 0
      %2012 = vmatpush1.bf16.msra.mxu0 0
      %2013 = vmatprep.subr.bf16.mxu0 0
      %2014 = vmatpush1.bf16.msra.mxu0 0
      %2015 = vmatprep.subr.bf16.mxu0 0
      %2016 = vmatpush1.bf16.msra.mxu0 0
      %2017 = vmatprep.subr.bf16.mxu0 0
      %2018 = vmatpush1.bf16.msra.mxu0 0
      %2019 = vmatprep.subr.bf16.mxu0 0
      %2020 = vmatpush1.bf16.msra.mxu0 0
      %2021 = vmatprep.subr.bf16.mxu0 0
      %2022 = vmatpush1.bf16.msra.mxu0 0
      %2023 = vmatprep.subr.bf16.mxu0 0
      %2024 = vmatpush1.bf16.msra.mxu0 %v2007
      %2025 = vmatprep.subr.bf16.mxu0 0
      %2026 = vmatpush2.bf16.msra.mxu0 0
      %2027 = vmatprep.subr.bf16.mxu0 0
      %2028 = vmatpush2.bf16.msra.mxu0 0
      %2029 = vmatprep.subr.bf16.mxu0 0
      %2030 = vmatpush2.bf16.msra.mxu0 0
      %2031 = vmatprep.subr.bf16.mxu0 0
      %2032 = vmatpush2.bf16.msra.mxu0 0
      %2033 = vmatprep.subr.bf16.mxu0 0
      %2034 = vmatpush2.bf16.msra.mxu0 0
      %2035 = vmatprep.subr.bf16.mxu0 0
      %2036 = vmatpush2.bf16.msra.mxu0 0
      %2037 = vmatprep.subr.bf16.mxu0 0
      %2038 = vmatpush2.bf16.msra.mxu0 0
      %2039 = vmatprep.subr.bf16.mxu0 0
      %2040 = vmatpush2.bf16.msra.mxu0 0
      %2041 = vmatprep.mubr.bf16.mxu0 0
      %2042 = vmatmul.mubr.bf16.gmra.mxu0 %v1959
      %v2043 = vpop.f32.mrf.mxu0
      %v2044 = vadd.f32 0.0, %v2043
      %v2045 = vpop.f32.mrf.mxu0
      %v2046 = vpop.f32.mrf.mxu0
      %v2047 = vadd.f32 0.0, %v2046
      %v2048 = vpop.f32.mrf.mxu0
      %2049 = vmatprep.mubr.bf16.mxu0 0
      %2050 = vmatmul.mubr.bf16.gmra.mxu0 %v1962
      %v2051 = vpop.f32.mrf.mxu0
      %v2052 = vadd.f32 0.0, %v2051
      %v2053 = vpop.f32.mrf.mxu0
      %v2054 = vpop.f32.mrf.mxu0
      %v2055 = vadd.f32 0.0, %v2054
      %v2056 = vpop.f32.mrf.mxu0
      %2057 = vmatprep.mubr.bf16.mxu0 0
      %2058 = vmatmul.mubr.bf16.gmra.mxu0 %v1965
      %v2059 = vpop.f32.mrf.mxu0
      %v2060 = vadd.f32 0.0, %v2059
      %v2061 = vpop.f32.mrf.mxu0
      %v2062 = vpop.f32.mrf.mxu0
      %v2063 = vadd.f32 0.0, %v2062
      %v2064 = vpop.f32.mrf.mxu0
      %2065 = vmatprep.mubr.bf16.mxu0 0
      %2066 = vmatmul.mubr.bf16.gmra.mxu0 %v1968
      %v2067 = vpop.f32.mrf.mxu0
      %v2068 = vadd.f32 0.0, %v2067
      %v2069 = vpop.f32.mrf.mxu0
      %v2070 = vpop.f32.mrf.mxu0
      %v2071 = vadd.f32 0.0, %v2070
      %v2072 = vpop.f32.mrf.mxu0
      %2073 = vmatprep.mubr.bf16.mxu0 0
      %2074 = vmatmul.mubr.bf16.gmra.mxu0 %v1971
      %v2075 = vpop.f32.mrf.mxu0
      %v2076 = vadd.f32 0.0, %v2075
      %v2077 = vpop.f32.mrf.mxu0
      %v2078 = vpop.f32.mrf.mxu0
      %v2079 = vadd.f32 0.0, %v2078
      %v2080 = vpop.f32.mrf.mxu0
      %2081 = vmatprep.mubr.bf16.mxu0 0
      %2082 = vmatmul.mubr.bf16.gmra.mxu0 %v1974
      %v2083 = vpop.f32.mrf.mxu0
      %v2084 = vadd.f32 0.0, %v2083
      %v2085 = vpop.f32.mrf.mxu0
      %v2086 = vpop.f32.mrf.mxu0
      %v2087 = vadd.f32 0.0, %v2086
      %v2088 = vpop.f32.mrf.mxu0
      %2089 = vmatprep.mubr.bf16.mxu0 0
      %2090 = vmatmul.mubr.bf16.gmra.mxu0 %v1977
      %v2091 = vpop.f32.mrf.mxu0
      %v2092 = vadd.f32 0.0, %v2091
      %v2093 = vpop.f32.mrf.mxu0
      %v2094 = vpop.f32.mrf.mxu0
      %v2095 = vadd.f32 0.0, %v2094
      %v2096 = vpop.f32.mrf.mxu0
      %2097 = vmatprep.mubr.bf16.mxu0 0
      %2098 = vmatmul.mubr.bf16.gmra.mxu0 %v1980
      %v2099 = vpop.f32.mrf.mxu0
      %v2100 = vadd.f32 0.0, %v2099
      %v2101 = vpop.f32.mrf.mxu0
      %v2102 = vpop.f32.mrf.mxu0
      %v2103 = vadd.f32 0.0, %v2102
      %v2104 = vpop.f32.mrf.mxu0
      %2105 = vmatprep.mubr.bf16.mxu0 0
      %2106 = vmatmul.mubr.bf16.gmra.mxu0 %v1983
      %v2107 = vpop.f32.mrf.mxu0
      %v2108 = vadd.f32 0.0, %v2107
      %v2109 = vpop.f32.mrf.mxu0
      %v2110 = vpop.f32.mrf.mxu0
      %v2111 = vadd.f32 0.0, %v2110
      %v2112 = vpop.f32.mrf.mxu0
      %2113 = vmatprep.mubr.bf16.mxu0 0
      %2114 = vmatmul.mubr.bf16.gmra.mxu0 %v1986
      %v2115 = vpop.f32.mrf.mxu0
      %v2116 = vadd.f32 0.0, %v2115
      %v2117 = vpop.f32.mrf.mxu0
      %v2118 = vpop.f32.mrf.mxu0
      %v2119 = vadd.f32 0.0, %v2118
      %v2120 = vpop.f32.mrf.mxu0
      %2121 = vmatprep.mubr.bf16.mxu0 0
      %2122 = vmatmul.mubr.bf16.gmra.mxu0 %v1989
      %v2123 = vpop.f32.mrf.mxu0
      %v2124 = vadd.f32 0.0, %v2123
      %v2125 = vpop.f32.mrf.mxu0
      %v2126 = vpop.f32.mrf.mxu0
      %v2127 = vadd.f32 0.0, %v2126
      %v2128 = vpop.f32.mrf.mxu0
      %2129 = vmatprep.mubr.bf16.mxu0 0
      %2130 = vmatmul.mubr.bf16.gmra.mxu0 %v1992
      %v2131 = vpop.f32.mrf.mxu0
      %v2132 = vadd.f32 0.0, %v2131
      %v2133 = vpop.f32.mrf.mxu0
      %v2134 = vpop.f32.mrf.mxu0
      %v2135 = vadd.f32 0.0, %v2134
      %v2136 = vpop.f32.mrf.mxu0
      %2137 = vmatprep.mubr.bf16.mxu0 0
      %2138 = vmatmul.mubr.bf16.gmra.mxu0 %v1995
      %v2139 = vpop.f32.mrf.mxu0
      %v2140 = vadd.f32 0.0, %v2139
      %v2141 = vpop.f32.mrf.mxu0
      %v2142 = vpop.f32.mrf.mxu0
      %v2143 = vadd.f32 0.0, %v2142
      %v2144 = vpop.f32.mrf.mxu0
      %2145 = vmatprep.mubr.bf16.mxu0 0
      %2146 = vmatmul.mubr.bf16.gmra.mxu0 %v1998
      %v2147 = vpop.f32.mrf.mxu0
      %v2148 = vadd.f32 0.0, %v2147
      %v2149 = vpop.f32.mrf.mxu0
      %v2150 = vpop.f32.mrf.mxu0
      %v2151 = vadd.f32 0.0, %v2150
      %v2152 = vpop.f32.mrf.mxu0
      %2153 = vmatprep.mubr.bf16.mxu0 0
      %2154 = vmatmul.mubr.bf16.gmra.mxu0 %v2001
      %v2155 = vpop.f32.mrf.mxu0
      %v2156 = vadd.f32 0.0, %v2155
      %v2157 = vpop.f32.mrf.mxu0
      %v2158 = vpop.f32.mrf.mxu0
      %v2159 = vadd.f32 0.0, %v2158
      %v2160 = vpop.f32.mrf.mxu0
      %2161 = vmatprep.mubr.bf16.mxu0 0
      %2162 = vmatmul.mubr.bf16.gmra.mxu0 %v2004
      %v2163 = vpop.f32.mrf.mxu0
      %v2164 = vadd.f32 0.0, %v2163
      %v2165 = vpop.f32.mrf.mxu0
      %v2166 = vpop.f32.mrf.mxu0
      %v2167 = vadd.f32 0.0, %v2166
      %v2168 = vpop.f32.mrf.mxu0
      %2169 = vdwg.mxu0
      %v2170 = vadd.f32 %v1718, %v2044
      %v2171 = vadd.f32 %v1721, %v2047
      %v2172 = vadd.f32 %v1726, %v2052
      %v2173 = vadd.f32 %v1729, %v2055
      %v2174 = vadd.f32 %v1734, %v2060
      %v2175 = vadd.f32 %v1737, %v2063
      %v2176 = vadd.f32 %v1742, %v2068
      %v2177 = vadd.f32 %v1745, %v2071
      %v2178 = vadd.f32 %v1750, %v2076
      %v2179 = vadd.f32 %v1753, %v2079
      %v2180 = vadd.f32 %v1758, %v2084
      %v2181 = vadd.f32 %v1761, %v2087
      %v2182 = vadd.f32 %v1766, %v2092
      %v2183 = vadd.f32 %v1769, %v2095
      %v2184 = vadd.f32 %v1774, %v2100
      %v2185 = vadd.f32 %v1777, %v2103
      %v2186 = vadd.f32 %v1782, %v2108
      %v2187 = vadd.f32 %v1785, %v2111
      %v2188 = vadd.f32 %v1790, %v2116
      %v2189 = vadd.f32 %v1793, %v2119
      %v2190 = vadd.f32 %v1798, %v2124
      %v2191 = vadd.f32 %v1801, %v2127
      %v2192 = vadd.f32 %v1806, %v2132
      %v2193 = vadd.f32 %v1809, %v2135
      %v2194 = vadd.f32 %v1814, %v2140
      %v2195 = vadd.f32 %v1817, %v2143
      %v2196 = vadd.f32 %v1822, %v2148
      %v2197 = vadd.f32 %v1825, %v2151
      %v2198 = vadd.f32 %v1830, %v2156
      %v2199 = vadd.f32 %v1833, %v2159
      %v2200 = vadd.f32 %v1838, %v2164
      %v2201 = vadd.f32 %v1841, %v2167
      %v2203 = vlaneseq
      %v2204 = vshrl.u32 %v2203, 7
      %v2205 = vsub.s32 0, %v2204
      %v2206 = vrot.slane %v1190, %v2205
      %v2208 = vadd.f32 %v2170, %v2206
      %v2209 = vadd.f32 %v2171, %v2206
      %v2210 = vadd.f32 %v2172, %v2206
      %v2211 = vadd.f32 %v2173, %v2206
      %v2212 = vadd.f32 %v2174, %v2206
      %v2213 = vadd.f32 %v2175, %v2206
      %v2214 = vadd.f32 %v2176, %v2206
      %v2215 = vadd.f32 %v2177, %v2206
      %v2216 = vadd.f32 %v2178, %v2206
      %v2217 = vadd.f32 %v2179, %v2206
      %v2218 = vadd.f32 %v2180, %v2206
      %v2219 = vadd.f32 %v2181, %v2206
      %v2220 = vadd.f32 %v2182, %v2206
      %v2221 = vadd.f32 %v2183, %v2206
      %v2222 = vadd.f32 %v2184, %v2206
      %v2223 = vadd.f32 %v2185, %v2206
      %v2224 = vadd.f32 %v2186, %v2206
      %v2225 = vadd.f32 %v2187, %v2206
      %v2226 = vadd.f32 %v2188, %v2206
      %v2227 = vadd.f32 %v2189, %v2206
      %v2228 = vadd.f32 %v2190, %v2206
      %v2229 = vadd.f32 %v2191, %v2206
      %v2230 = vadd.f32 %v2192, %v2206
      %v2231 = vadd.f32 %v2193, %v2206
      %v2232 = vadd.f32 %v2194, %v2206
      %v2233 = vadd.f32 %v2195, %v2206
      %v2234 = vadd.f32 %v2196, %v2206
      %v2235 = vadd.f32 %v2197, %v2206
      %v2236 = vadd.f32 %v2198, %v2206
      %v2237 = vadd.f32 %v2199, %v2206
      %v2238 = vadd.f32 %v2200, %v2206
      %v2239 = vadd.f32 %v2201, %v2206
      %2240 = vst [vmem:[#allocation3] sm:$0xff] %v2208
      %2241 = vst [vmem:[#allocation3 + $0x8] sm:$0xff] %v2209
      %2242 = vst [vmem:[#allocation3 + $0x10] sm:$0xff] %v2210
      %2243 = vst [vmem:[#allocation3 + $0x18] sm:$0xff] %v2211
      %2244 = vst [vmem:[#allocation3 + $0x20] sm:$0xff] %v2212
      %2245 = vst [vmem:[#allocation3 + $0x28] sm:$0xff] %v2213
      %2246 = vst [vmem:[#allocation3 + $0x30] sm:$0xff] %v2214
      %2247 = vst [vmem:[#allocation3 + $0x38] sm:$0xff] %v2215
      %2248 = vst [vmem:[#allocation3 + $0x40] sm:$0xff] %v2216
      %2249 = vst [vmem:[#allocation3 + $0x48] sm:$0xff] %v2217
      %2250 = vst [vmem:[#allocation3 + $0x50] sm:$0xff] %v2218
      %2251 = vst [vmem:[#allocation3 + $0x58] sm:$0xff] %v2219
      %2252 = vst [vmem:[#allocation3 + $0x60] sm:$0xff] %v2220
      %2253 = vst [vmem:[#allocation3 + $0x68] sm:$0xff] %v2221
      %2254 = vst [vmem:[#allocation3 + $0x70] sm:$0xff] %v2222
      %2255 = vst [vmem:[#allocation3 + $0x78] sm:$0xff] %v2223
      %2256 = vst [vmem:[#allocation3 + $0x80] sm:$0xff] %v2224
      %2257 = vst [vmem:[#allocation3 + $0x88] sm:$0xff] %v2225
      %2258 = vst [vmem:[#allocation3 + $0x90] sm:$0xff] %v2226
      %2259 = vst [vmem:[#allocation3 + $0x98] sm:$0xff] %v2227
      %2260 = vst [vmem:[#allocation3 + $0xa0] sm:$0xff] %v2228
      %2261 = vst [vmem:[#allocation3 + $0xa8] sm:$0xff] %v2229
      %2262 = vst [vmem:[#allocation3 + $0xb0] sm:$0xff] %v2230
      %2263 = vst [vmem:[#allocation3 + $0xb8] sm:$0xff] %v2231
      %2264 = vst [vmem:[#allocation3 + $0xc0] sm:$0xff] %v2232
      %2265 = vst [vmem:[#allocation3 + $0xc8] sm:$0xff] %v2233
      %2266 = vst [vmem:[#allocation3 + $0xd0] sm:$0xff] %v2234
      %2267 = vst [vmem:[#allocation3 + $0xd8] sm:$0xff] %v2235
      %2268 = vst [vmem:[#allocation3 + $0xe0] sm:$0xff] %v2236
      %2269 = vst [vmem:[#allocation3 + $0xe8] sm:$0xff] %v2237
      %2270 = vst [vmem:[#allocation3 + $0xf0] sm:$0xff] %v2238
      %2271 = vst [vmem:[#allocation3 + $0xf8] sm:$0xff] %v2239
      %s2272 = scalar_lea.vmem [#allocation2], 8
      %v2273 = vld [vmem:[%s2272] sm:$0xf]
      %v2274 = vld [vmem:[%s2272 + $0x4] sm:$0xf]
      %v2275 = vld [vmem:[%s2272 + $0x8] sm:$0xf]
      %v2276 = vld [vmem:[%s2272 + $0xc] sm:$0xf]
      %v2277 = vld [vmem:[%s2272 + $0x10] sm:$0xf]
      %v2278 = vld [vmem:[%s2272 + $0x14] sm:$0xf]
      %v2279 = vld [vmem:[%s2272 + $0x18] sm:$0xf]
      %v2280 = vld [vmem:[%s2272 + $0x1c] sm:$0xf]
      %v2281 = vld [vmem:[%s2272 + $0x20] sm:$0xf]
      %v2282 = vld [vmem:[%s2272 + $0x24] sm:$0xf]
      %v2283 = vld [vmem:[%s2272 + $0x28] sm:$0xf]
      %v2284 = vld [vmem:[%s2272 + $0x2c] sm:$0xf]
      %v2285 = vld [vmem:[%s2272 + $0x30] sm:$0xf]
      %v2286 = vld [vmem:[%s2272 + $0x34] sm:$0xf]
      %v2287 = vld [vmem:[%s2272 + $0x38] sm:$0xf]
      %v2288 = vld [vmem:[%s2272 + $0x3c] sm:$0xf]
      %v2289 = vld [vmem:[%s2272 + $0x40] sm:$0xf]
      %v2290 = vld [vmem:[%s2272 + $0x44] sm:$0xf]
      %v2291 = vld [vmem:[%s2272 + $0x48] sm:$0xf]
      %v2292 = vld [vmem:[%s2272 + $0x4c] sm:$0xf]
      %v2293 = vld [vmem:[%s2272 + $0x50] sm:$0xf]
      %v2294 = vld [vmem:[%s2272 + $0x54] sm:$0xf]
      %v2295 = vld [vmem:[%s2272 + $0x58] sm:$0xf]
      %v2296 = vld [vmem:[%s2272 + $0x5c] sm:$0xf]
      %v2297 = vld [vmem:[%s2272 + $0x60] sm:$0xf]
      %v2298 = vld [vmem:[%s2272 + $0x64] sm:$0xf]
      %v2299 = vld [vmem:[%s2272 + $0x68] sm:$0xf]
      %v2300 = vld [vmem:[%s2272 + $0x6c] sm:$0xf]
      %v2301 = vld [vmem:[%s2272 + $0x70] sm:$0xf]
      %v2302 = vld [vmem:[%s2272 + $0x74] sm:$0xf]
      %v2303 = vld [vmem:[%s2272 + $0x78] sm:$0xf]
      %v2304 = vld [vmem:[%s2272 + $0x7c] sm:$0xf]
      %s2305 = scalar_lea.vmem %s223, 6
      %v2306 = vld [vmem:[%s2305] sm:$0x3]
      %s2307 = scalar_lea.vmem [#allocation2], 152
      %v2308 = vld [vmem:[%s2307] sm:$0xf]
      %v2309 = vld [vmem:[%s2307 + $0x4] sm:$0xf]
      %v2310 = vld [vmem:[%s2307 + $0x8] sm:$0xf]
      %v2311 = vld [vmem:[%s2307 + $0xc] sm:$0xf]
      %v2312 = vld [vmem:[%s2307 + $0x10] sm:$0xf]
      %v2313 = vld [vmem:[%s2307 + $0x14] sm:$0xf]
      %v2314 = vld [vmem:[%s2307 + $0x18] sm:$0xf]
      %v2315 = vld [vmem:[%s2307 + $0x1c] sm:$0xf]
      %v2316 = vld [vmem:[%s2307 + $0x20] sm:$0xf]
      %v2317 = vld [vmem:[%s2307 + $0x24] sm:$0xf]
      %v2318 = vld [vmem:[%s2307 + $0x28] sm:$0xf]
      %v2319 = vld [vmem:[%s2307 + $0x2c] sm:$0xf]
      %v2320 = vld [vmem:[%s2307 + $0x30] sm:$0xf]
      %v2321 = vld [vmem:[%s2307 + $0x34] sm:$0xf]
      %v2322 = vld [vmem:[%s2307 + $0x38] sm:$0xf]
      %v2323 = vld [vmem:[%s2307 + $0x3c] sm:$0xf]
      %v2324 = vld [vmem:[%s2307 + $0x40] sm:$0xf]
      %v2325 = vld [vmem:[%s2307 + $0x44] sm:$0xf]
      %v2326 = vld [vmem:[%s2307 + $0x48] sm:$0xf]
      %v2327 = vld [vmem:[%s2307 + $0x4c] sm:$0xf]
      %v2328 = vld [vmem:[%s2307 + $0x50] sm:$0xf]
      %v2329 = vld [vmem:[%s2307 + $0x54] sm:$0xf]
      %v2330 = vld [vmem:[%s2307 + $0x58] sm:$0xf]
      %v2331 = vld [vmem:[%s2307 + $0x5c] sm:$0xf]
      %v2332 = vld [vmem:[%s2307 + $0x60] sm:$0xf]
      %v2333 = vld [vmem:[%s2307 + $0x64] sm:$0xf]
      %v2334 = vld [vmem:[%s2307 + $0x68] sm:$0xf]
      %v2335 = vld [vmem:[%s2307 + $0x6c] sm:$0xf]
      %v2336 = vld [vmem:[%s2307 + $0x70] sm:$0xf]
      %v2337 = vld [vmem:[%s2307 + $0x74] sm:$0xf]
      %v2338 = vld [vmem:[%s2307 + $0x78] sm:$0xf]
      %v2339 = vld [vmem:[%s2307 + $0x7c] sm:$0xf]
      %s2340 = scalar_lea.vmem %s223, 8
      %v2341 = vld [vmem:[%s2340] sm:$0x3]
      %v2374 = vunpack.c.l.b16 %v2308
      %v2375 = vunpack.c.l.b16 %v2309
      %v2376 = vunpack.c.l.b16 %v2310
      %v2377 = vunpack.c.l.b16 %v2311
      %v2378 = vunpack.c.l.b16 %v2312
      %v2379 = vunpack.c.l.b16 %v2313
      %v2380 = vunpack.c.l.b16 %v2314
      %v2381 = vunpack.c.l.b16 %v2315
      %v2382 = vunpack.c.l.b16 %v2316
      %v2383 = vunpack.c.l.b16 %v2317
      %v2384 = vunpack.c.l.b16 %v2318
      %v2385 = vunpack.c.l.b16 %v2319
      %v2386 = vunpack.c.l.b16 %v2320
      %v2387 = vunpack.c.l.b16 %v2321
      %v2388 = vunpack.c.l.b16 %v2322
      %v2389 = vunpack.c.l.b16 %v2323
      %v2390 = vunpack.c.l.b16 %v2324
      %v2391 = vunpack.c.l.b16 %v2325
      %v2392 = vunpack.c.l.b16 %v2326
      %v2393 = vunpack.c.l.b16 %v2327
      %v2394 = vunpack.c.l.b16 %v2328
      %v2395 = vunpack.c.l.b16 %v2329
      %v2396 = vunpack.c.l.b16 %v2330
      %v2397 = vunpack.c.l.b16 %v2331
      %v2398 = vunpack.c.l.b16 %v2332
      %v2399 = vunpack.c.l.b16 %v2333
      %v2400 = vunpack.c.l.b16 %v2334
      %v2401 = vunpack.c.l.b16 %v2335
      %v2402 = vunpack.c.l.b16 %v2336
      %v2403 = vunpack.c.l.b16 %v2337
      %v2404 = vunpack.c.l.b16 %v2338
      %v2405 = vunpack.c.l.b16 %v2339
      %v2406 = vpack.c.b16 %v2375, %v2374
      %v2407 = vpack.c.b16 %v2377, %v2376
      %v2408 = vpack.c.b16 %v2379, %v2378
      %v2409 = vpack.c.b16 %v2381, %v2380
      %v2410 = vpack.c.b16 %v2383, %v2382
      %v2411 = vpack.c.b16 %v2385, %v2384
      %v2412 = vpack.c.b16 %v2387, %v2386
      %v2413 = vpack.c.b16 %v2389, %v2388
      %v2414 = vpack.c.b16 %v2391, %v2390
      %v2415 = vpack.c.b16 %v2393, %v2392
      %v2416 = vpack.c.b16 %v2395, %v2394
      %v2417 = vpack.c.b16 %v2397, %v2396
      %v2418 = vpack.c.b16 %v2399, %v2398
      %v2419 = vpack.c.b16 %v2401, %v2400
      %v2420 = vpack.c.b16 %v2403, %v2402
      %v2421 = vpack.c.b16 %v2405, %v2404
      %v2423 = vsel %vm1338, %v2406, 0
      %v2426 = vsel %vm1338, %v2407, 0
      %v2429 = vsel %vm1338, %v2408, 0
      %v2432 = vsel %vm1338, %v2409, 0
      %v2435 = vsel %vm1338, %v2410, 0
      %v2438 = vsel %vm1338, %v2411, 0
      %v2441 = vsel %vm1338, %v2412, 0
      %v2444 = vsel %vm1338, %v2413, 0
      %v2447 = vsel %vm1338, %v2414, 0
      %v2450 = vsel %vm1338, %v2415, 0
      %v2453 = vsel %vm1338, %v2416, 0
      %v2456 = vsel %vm1338, %v2417, 0
      %v2459 = vsel %vm1338, %v2418, 0
      %v2462 = vsel %vm1338, %v2419, 0
      %v2465 = vsel %vm1338, %v2420, 0
      %v2468 = vsel %vm1338, %v2421, 0
      %v2471 = vsel %vm1387, %v2341, 0
      %2473 = vmatprep.subr.bf16.mxu0 0
      %2474 = vmatpush1.bf16.msra.mxu0 0
      %2475 = vmatprep.subr.bf16.mxu0 0
      %2476 = vmatpush1.bf16.msra.mxu0 0
      %2477 = vmatprep.subr.bf16.mxu0 0
      %2478 = vmatpush1.bf16.msra.mxu0 0
      %2479 = vmatprep.subr.bf16.mxu0 0
      %2480 = vmatpush1.bf16.msra.mxu0 0
      %2481 = vmatprep.subr.bf16.mxu0 0
      %2482 = vmatpush1.bf16.msra.mxu0 0
      %2483 = vmatprep.subr.bf16.mxu0 0
      %2484 = vmatpush1.bf16.msra.mxu0 0
      %2485 = vmatprep.subr.bf16.mxu0 0
      %2486 = vmatpush1.bf16.msra.mxu0 0
      %2487 = vmatprep.subr.bf16.mxu0 0
      %2488 = vmatpush1.bf16.msra.mxu0 %v2471
      %2489 = vmatprep.subr.bf16.mxu0 0
      %2490 = vmatpush2.bf16.msra.mxu0 0
      %2491 = vmatprep.subr.bf16.mxu0 0
      %2492 = vmatpush2.bf16.msra.mxu0 0
      %2493 = vmatprep.subr.bf16.mxu0 0
      %2494 = vmatpush2.bf16.msra.mxu0 0
      %2495 = vmatprep.subr.bf16.mxu0 0
      %2496 = vmatpush2.bf16.msra.mxu0 0
      %2497 = vmatprep.subr.bf16.mxu0 0
      %2498 = vmatpush2.bf16.msra.mxu0 0
      %2499 = vmatprep.subr.bf16.mxu0 0
      %2500 = vmatpush2.bf16.msra.mxu0 0
      %2501 = vmatprep.subr.bf16.mxu0 0
      %2502 = vmatpush2.bf16.msra.mxu0 0
      %2503 = vmatprep.subr.bf16.mxu0 0
      %2504 = vmatpush2.bf16.msra.mxu0 0
      %2505 = vmatprep.mubr.bf16.mxu0 0
      %2506 = vmatmul.mubr.bf16.gmra.mxu0 %v2423
      %v2507 = vpop.f32.mrf.mxu0
      %v2508 = vadd.f32 0.0, %v2507
      %v2509 = vpop.f32.mrf.mxu0
      %v2510 = vpop.f32.mrf.mxu0
      %v2511 = vadd.f32 0.0, %v2510
      %v2512 = vpop.f32.mrf.mxu0
      %2513 = vmatprep.mubr.bf16.mxu0 0
      %2514 = vmatmul.mubr.bf16.gmra.mxu0 %v2426
      %v2515 = vpop.f32.mrf.mxu0
      %v2516 = vadd.f32 0.0, %v2515
      %v2517 = vpop.f32.mrf.mxu0
      %v2518 = vpop.f32.mrf.mxu0
      %v2519 = vadd.f32 0.0, %v2518
      %v2520 = vpop.f32.mrf.mxu0
      %2521 = vmatprep.mubr.bf16.mxu0 0
      %2522 = vmatmul.mubr.bf16.gmra.mxu0 %v2429
      %v2523 = vpop.f32.mrf.mxu0
      %v2524 = vadd.f32 0.0, %v2523
      %v2525 = vpop.f32.mrf.mxu0
      %v2526 = vpop.f32.mrf.mxu0
      %v2527 = vadd.f32 0.0, %v2526
      %v2528 = vpop.f32.mrf.mxu0
      %2529 = vmatprep.mubr.bf16.mxu0 0
      %2530 = vmatmul.mubr.bf16.gmra.mxu0 %v2432
      %v2531 = vpop.f32.mrf.mxu0
      %v2532 = vadd.f32 0.0, %v2531
      %v2533 = vpop.f32.mrf.mxu0
      %v2534 = vpop.f32.mrf.mxu0
      %v2535 = vadd.f32 0.0, %v2534
      %v2536 = vpop.f32.mrf.mxu0
      %2537 = vmatprep.mubr.bf16.mxu0 0
      %2538 = vmatmul.mubr.bf16.gmra.mxu0 %v2435
      %v2539 = vpop.f32.mrf.mxu0
      %v2540 = vadd.f32 0.0, %v2539
      %v2541 = vpop.f32.mrf.mxu0
      %v2542 = vpop.f32.mrf.mxu0
      %v2543 = vadd.f32 0.0, %v2542
      %v2544 = vpop.f32.mrf.mxu0
      %2545 = vmatprep.mubr.bf16.mxu0 0
      %2546 = vmatmul.mubr.bf16.gmra.mxu0 %v2438
      %v2547 = vpop.f32.mrf.mxu0
      %v2548 = vadd.f32 0.0, %v2547
      %v2549 = vpop.f32.mrf.mxu0
      %v2550 = vpop.f32.mrf.mxu0
      %v2551 = vadd.f32 0.0, %v2550
      %v2552 = vpop.f32.mrf.mxu0
      %2553 = vmatprep.mubr.bf16.mxu0 0
      %2554 = vmatmul.mubr.bf16.gmra.mxu0 %v2441
      %v2555 = vpop.f32.mrf.mxu0
      %v2556 = vadd.f32 0.0, %v2555
      %v2557 = vpop.f32.mrf.mxu0
      %v2558 = vpop.f32.mrf.mxu0
      %v2559 = vadd.f32 0.0, %v2558
      %v2560 = vpop.f32.mrf.mxu0
      %2561 = vmatprep.mubr.bf16.mxu0 0
      %2562 = vmatmul.mubr.bf16.gmra.mxu0 %v2444
      %v2563 = vpop.f32.mrf.mxu0
      %v2564 = vadd.f32 0.0, %v2563
      %v2565 = vpop.f32.mrf.mxu0
      %v2566 = vpop.f32.mrf.mxu0
      %v2567 = vadd.f32 0.0, %v2566
      %v2568 = vpop.f32.mrf.mxu0
      %2569 = vmatprep.mubr.bf16.mxu0 0
      %2570 = vmatmul.mubr.bf16.gmra.mxu0 %v2447
      %v2571 = vpop.f32.mrf.mxu0
      %v2572 = vadd.f32 0.0, %v2571
      %v2573 = vpop.f32.mrf.mxu0
      %v2574 = vpop.f32.mrf.mxu0
      %v2575 = vadd.f32 0.0, %v2574
      %v2576 = vpop.f32.mrf.mxu0
      %2577 = vmatprep.mubr.bf16.mxu0 0
      %2578 = vmatmul.mubr.bf16.gmra.mxu0 %v2450
      %v2579 = vpop.f32.mrf.mxu0
      %v2580 = vadd.f32 0.0, %v2579
      %v2581 = vpop.f32.mrf.mxu0
      %v2582 = vpop.f32.mrf.mxu0
      %v2583 = vadd.f32 0.0, %v2582
      %v2584 = vpop.f32.mrf.mxu0
      %2585 = vmatprep.mubr.bf16.mxu0 0
      %2586 = vmatmul.mubr.bf16.gmra.mxu0 %v2453
      %v2587 = vpop.f32.mrf.mxu0
      %v2588 = vadd.f32 0.0, %v2587
      %v2589 = vpop.f32.mrf.mxu0
      %v2590 = vpop.f32.mrf.mxu0
      %v2591 = vadd.f32 0.0, %v2590
      %v2592 = vpop.f32.mrf.mxu0
      %2593 = vmatprep.mubr.bf16.mxu0 0
      %2594 = vmatmul.mubr.bf16.gmra.mxu0 %v2456
      %v2595 = vpop.f32.mrf.mxu0
      %v2596 = vadd.f32 0.0, %v2595
      %v2597 = vpop.f32.mrf.mxu0
      %v2598 = vpop.f32.mrf.mxu0
      %v2599 = vadd.f32 0.0, %v2598
      %v2600 = vpop.f32.mrf.mxu0
      %2601 = vmatprep.mubr.bf16.mxu0 0
      %2602 = vmatmul.mubr.bf16.gmra.mxu0 %v2459
      %v2603 = vpop.f32.mrf.mxu0
      %v2604 = vadd.f32 0.0, %v2603
      %v2605 = vpop.f32.mrf.mxu0
      %v2606 = vpop.f32.mrf.mxu0
      %v2607 = vadd.f32 0.0, %v2606
      %v2608 = vpop.f32.mrf.mxu0
      %2609 = vmatprep.mubr.bf16.mxu0 0
      %2610 = vmatmul.mubr.bf16.gmra.mxu0 %v2462
      %v2611 = vpop.f32.mrf.mxu0
      %v2612 = vadd.f32 0.0, %v2611
      %v2613 = vpop.f32.mrf.mxu0
      %v2614 = vpop.f32.mrf.mxu0
      %v2615 = vadd.f32 0.0, %v2614
      %v2616 = vpop.f32.mrf.mxu0
      %2617 = vmatprep.mubr.bf16.mxu0 0
      %2618 = vmatmul.mubr.bf16.gmra.mxu0 %v2465
      %v2619 = vpop.f32.mrf.mxu0
      %v2620 = vadd.f32 0.0, %v2619
      %v2621 = vpop.f32.mrf.mxu0
      %v2622 = vpop.f32.mrf.mxu0
      %v2623 = vadd.f32 0.0, %v2622
      %v2624 = vpop.f32.mrf.mxu0
      %2625 = vmatprep.mubr.bf16.mxu0 0
      %2626 = vmatmul.mubr.bf16.gmra.mxu0 %v2468
      %v2627 = vpop.f32.mrf.mxu0
      %v2628 = vadd.f32 0.0, %v2627
      %v2629 = vpop.f32.mrf.mxu0
      %v2630 = vpop.f32.mrf.mxu0
      %v2631 = vadd.f32 0.0, %v2630
      %v2632 = vpop.f32.mrf.mxu0
      %2633 = vdwg.mxu0
      %v2666 = vunpack.c.l.b16 %v2273
      %v2667 = vunpack.c.l.b16 %v2274
      %v2668 = vunpack.c.l.b16 %v2275
      %v2669 = vunpack.c.l.b16 %v2276
      %v2670 = vunpack.c.l.b16 %v2277
      %v2671 = vunpack.c.l.b16 %v2278
      %v2672 = vunpack.c.l.b16 %v2279
      %v2673 = vunpack.c.l.b16 %v2280
      %v2674 = vunpack.c.l.b16 %v2281
      %v2675 = vunpack.c.l.b16 %v2282
      %v2676 = vunpack.c.l.b16 %v2283
      %v2677 = vunpack.c.l.b16 %v2284
      %v2678 = vunpack.c.l.b16 %v2285
      %v2679 = vunpack.c.l.b16 %v2286
      %v2680 = vunpack.c.l.b16 %v2287
      %v2681 = vunpack.c.l.b16 %v2288
      %v2682 = vunpack.c.l.b16 %v2289
      %v2683 = vunpack.c.l.b16 %v2290
      %v2684 = vunpack.c.l.b16 %v2291
      %v2685 = vunpack.c.l.b16 %v2292
      %v2686 = vunpack.c.l.b16 %v2293
      %v2687 = vunpack.c.l.b16 %v2294
      %v2688 = vunpack.c.l.b16 %v2295
      %v2689 = vunpack.c.l.b16 %v2296
      %v2690 = vunpack.c.l.b16 %v2297
      %v2691 = vunpack.c.l.b16 %v2298
      %v2692 = vunpack.c.l.b16 %v2299
      %v2693 = vunpack.c.l.b16 %v2300
      %v2694 = vunpack.c.l.b16 %v2301
      %v2695 = vunpack.c.l.b16 %v2302
      %v2696 = vunpack.c.l.b16 %v2303
      %v2697 = vunpack.c.l.b16 %v2304
      %v2698 = vpack.c.b16 %v2667, %v2666
      %v2699 = vpack.c.b16 %v2669, %v2668
      %v2700 = vpack.c.b16 %v2671, %v2670
      %v2701 = vpack.c.b16 %v2673, %v2672
      %v2702 = vpack.c.b16 %v2675, %v2674
      %v2703 = vpack.c.b16 %v2677, %v2676
      %v2704 = vpack.c.b16 %v2679, %v2678
      %v2705 = vpack.c.b16 %v2681, %v2680
      %v2706 = vpack.c.b16 %v2683, %v2682
      %v2707 = vpack.c.b16 %v2685, %v2684
      %v2708 = vpack.c.b16 %v2687, %v2686
      %v2709 = vpack.c.b16 %v2689, %v2688
      %v2710 = vpack.c.b16 %v2691, %v2690
      %v2711 = vpack.c.b16 %v2693, %v2692
      %v2712 = vpack.c.b16 %v2695, %v2694
      %v2713 = vpack.c.b16 %v2697, %v2696
      %v2715 = vsel %vm1338, %v2698, 0
      %v2718 = vsel %vm1338, %v2699, 0
      %v2721 = vsel %vm1338, %v2700, 0
      %v2724 = vsel %vm1338, %v2701, 0
      %v2727 = vsel %vm1338, %v2702, 0
      %v2730 = vsel %vm1338, %v2703, 0
      %v2733 = vsel %vm1338, %v2704, 0
      %v2736 = vsel %vm1338, %v2705, 0
      %v2739 = vsel %vm1338, %v2706, 0
      %v2742 = vsel %vm1338, %v2707, 0
      %v2745 = vsel %vm1338, %v2708, 0
      %v2748 = vsel %vm1338, %v2709, 0
      %v2751 = vsel %vm1338, %v2710, 0
      %v2754 = vsel %vm1338, %v2711, 0
      %v2757 = vsel %vm1338, %v2712, 0
      %v2760 = vsel %vm1338, %v2713, 0
      %v2763 = vsel %vm1387, %v2306, 0
      %2765 = vmatprep.subr.bf16.mxu0 0
      %2766 = vmatpush1.bf16.msra.mxu0 0
      %2767 = vmatprep.subr.bf16.mxu0 0
      %2768 = vmatpush1.bf16.msra.mxu0 0
      %2769 = vmatprep.subr.bf16.mxu0 0
      %2770 = vmatpush1.bf16.msra.mxu0 0
      %2771 = vmatprep.subr.bf16.mxu0 0
      %2772 = vmatpush1.bf16.msra.mxu0 0
      %2773 = vmatprep.subr.bf16.mxu0 0
      %2774 = vmatpush1.bf16.msra.mxu0 0
      %2775 = vmatprep.subr.bf16.mxu0 0
      %2776 = vmatpush1.bf16.msra.mxu0 0
      %2777 = vmatprep.subr.bf16.mxu0 0
      %2778 = vmatpush1.bf16.msra.mxu0 0
      %2779 = vmatprep.subr.bf16.mxu0 0
      %2780 = vmatpush1.bf16.msra.mxu0 %v2763
      %2781 = vmatprep.subr.bf16.mxu0 0
      %2782 = vmatpush2.bf16.msra.mxu0 0
      %2783 = vmatprep.subr.bf16.mxu0 0
      %2784 = vmatpush2.bf16.msra.mxu0 0
      %2785 = vmatprep.subr.bf16.mxu0 0
      %2786 = vmatpush2.bf16.msra.mxu0 0
      %2787 = vmatprep.subr.bf16.mxu0 0
      %2788 = vmatpush2.bf16.msra.mxu0 0
      %2789 = vmatprep.subr.bf16.mxu0 0
      %2790 = vmatpush2.bf16.msra.mxu0 0
      %2791 = vmatprep.subr.bf16.mxu0 0
      %2792 = vmatpush2.bf16.msra.mxu0 0
      %2793 = vmatprep.subr.bf16.mxu0 0
      %2794 = vmatpush2.bf16.msra.mxu0 0
      %2795 = vmatprep.subr.bf16.mxu0 0
      %2796 = vmatpush2.bf16.msra.mxu0 0
      %2797 = vmatprep.mubr.bf16.mxu0 0
      %2798 = vmatmul.mubr.bf16.gmra.mxu0 %v2715
      %v2799 = vpop.f32.mrf.mxu0
      %v2800 = vadd.f32 %v2508, %v2799
      %v2801 = vpop.f32.mrf.mxu0
      %v2802 = vpop.f32.mrf.mxu0
      %v2803 = vadd.f32 %v2511, %v2802
      %v2804 = vpop.f32.mrf.mxu0
      %2805 = vmatprep.mubr.bf16.mxu0 0
      %2806 = vmatmul.mubr.bf16.gmra.mxu0 %v2718
      %v2807 = vpop.f32.mrf.mxu0
      %v2808 = vadd.f32 %v2516, %v2807
      %v2809 = vpop.f32.mrf.mxu0
      %v2810 = vpop.f32.mrf.mxu0
      %v2811 = vadd.f32 %v2519, %v2810
      %v2812 = vpop.f32.mrf.mxu0
      %2813 = vmatprep.mubr.bf16.mxu0 0
      %2814 = vmatmul.mubr.bf16.gmra.mxu0 %v2721
      %v2815 = vpop.f32.mrf.mxu0
      %v2816 = vadd.f32 %v2524, %v2815
      %v2817 = vpop.f32.mrf.mxu0
      %v2818 = vpop.f32.mrf.mxu0
      %v2819 = vadd.f32 %v2527, %v2818
      %v2820 = vpop.f32.mrf.mxu0
      %2821 = vmatprep.mubr.bf16.mxu0 0
      %2822 = vmatmul.mubr.bf16.gmra.mxu0 %v2724
      %v2823 = vpop.f32.mrf.mxu0
      %v2824 = vadd.f32 %v2532, %v2823
      %v2825 = vpop.f32.mrf.mxu0
      %v2826 = vpop.f32.mrf.mxu0
      %v2827 = vadd.f32 %v2535, %v2826
      %v2828 = vpop.f32.mrf.mxu0
      %2829 = vmatprep.mubr.bf16.mxu0 0
      %2830 = vmatmul.mubr.bf16.gmra.mxu0 %v2727
      %v2831 = vpop.f32.mrf.mxu0
      %v2832 = vadd.f32 %v2540, %v2831
      %v2833 = vpop.f32.mrf.mxu0
      %v2834 = vpop.f32.mrf.mxu0
      %v2835 = vadd.f32 %v2543, %v2834
      %v2836 = vpop.f32.mrf.mxu0
      %2837 = vmatprep.mubr.bf16.mxu0 0
      %2838 = vmatmul.mubr.bf16.gmra.mxu0 %v2730
      %v2839 = vpop.f32.mrf.mxu0
      %v2840 = vadd.f32 %v2548, %v2839
      %v2841 = vpop.f32.mrf.mxu0
      %v2842 = vpop.f32.mrf.mxu0
      %v2843 = vadd.f32 %v2551, %v2842
      %v2844 = vpop.f32.mrf.mxu0
      %2845 = vmatprep.mubr.bf16.mxu0 0
      %2846 = vmatmul.mubr.bf16.gmra.mxu0 %v2733
      %v2847 = vpop.f32.mrf.mxu0
      %v2848 = vadd.f32 %v2556, %v2847
      %v2849 = vpop.f32.mrf.mxu0
      %v2850 = vpop.f32.mrf.mxu0
      %v2851 = vadd.f32 %v2559, %v2850
      %v2852 = vpop.f32.mrf.mxu0
      %2853 = vmatprep.mubr.bf16.mxu0 0
      %2854 = vmatmul.mubr.bf16.gmra.mxu0 %v2736
      %v2855 = vpop.f32.mrf.mxu0
      %v2856 = vadd.f32 %v2564, %v2855
      %v2857 = vpop.f32.mrf.mxu0
      %v2858 = vpop.f32.mrf.mxu0
      %v2859 = vadd.f32 %v2567, %v2858
      %v2860 = vpop.f32.mrf.mxu0
      %2861 = vmatprep.mubr.bf16.mxu0 0
      %2862 = vmatmul.mubr.bf16.gmra.mxu0 %v2739
      %v2863 = vpop.f32.mrf.mxu0
      %v2864 = vadd.f32 %v2572, %v2863
      %v2865 = vpop.f32.mrf.mxu0
      %v2866 = vpop.f32.mrf.mxu0
      %v2867 = vadd.f32 %v2575, %v2866
      %v2868 = vpop.f32.mrf.mxu0
      %2869 = vmatprep.mubr.bf16.mxu0 0
      %2870 = vmatmul.mubr.bf16.gmra.mxu0 %v2742
      %v2871 = vpop.f32.mrf.mxu0
      %v2872 = vadd.f32 %v2580, %v2871
      %v2873 = vpop.f32.mrf.mxu0
      %v2874 = vpop.f32.mrf.mxu0
      %v2875 = vadd.f32 %v2583, %v2874
      %v2876 = vpop.f32.mrf.mxu0
      %2877 = vmatprep.mubr.bf16.mxu0 0
      %2878 = vmatmul.mubr.bf16.gmra.mxu0 %v2745
      %v2879 = vpop.f32.mrf.mxu0
      %v2880 = vadd.f32 %v2588, %v2879
      %v2881 = vpop.f32.mrf.mxu0
      %v2882 = vpop.f32.mrf.mxu0
      %v2883 = vadd.f32 %v2591, %v2882
      %v2884 = vpop.f32.mrf.mxu0
      %2885 = vmatprep.mubr.bf16.mxu0 0
      %2886 = vmatmul.mubr.bf16.gmra.mxu0 %v2748
      %v2887 = vpop.f32.mrf.mxu0
      %v2888 = vadd.f32 %v2596, %v2887
      %v2889 = vpop.f32.mrf.mxu0
      %v2890 = vpop.f32.mrf.mxu0
      %v2891 = vadd.f32 %v2599, %v2890
      %v2892 = vpop.f32.mrf.mxu0
      %2893 = vmatprep.mubr.bf16.mxu0 0
      %2894 = vmatmul.mubr.bf16.gmra.mxu0 %v2751
      %v2895 = vpop.f32.mrf.mxu0
      %v2896 = vadd.f32 %v2604, %v2895
      %v2897 = vpop.f32.mrf.mxu0
      %v2898 = vpop.f32.mrf.mxu0
      %v2899 = vadd.f32 %v2607, %v2898
      %v2900 = vpop.f32.mrf.mxu0
      %2901 = vmatprep.mubr.bf16.mxu0 0
      %2902 = vmatmul.mubr.bf16.gmra.mxu0 %v2754
      %v2903 = vpop.f32.mrf.mxu0
      %v2904 = vadd.f32 %v2612, %v2903
      %v2905 = vpop.f32.mrf.mxu0
      %v2906 = vpop.f32.mrf.mxu0
      %v2907 = vadd.f32 %v2615, %v2906
      %v2908 = vpop.f32.mrf.mxu0
      %2909 = vmatprep.mubr.bf16.mxu0 0
      %2910 = vmatmul.mubr.bf16.gmra.mxu0 %v2757
      %v2911 = vpop.f32.mrf.mxu0
      %v2912 = vadd.f32 %v2620, %v2911
      %v2913 = vpop.f32.mrf.mxu0
      %v2914 = vpop.f32.mrf.mxu0
      %v2915 = vadd.f32 %v2623, %v2914
      %v2916 = vpop.f32.mrf.mxu0
      %2917 = vmatprep.mubr.bf16.mxu0 0
      %2918 = vmatmul.mubr.bf16.gmra.mxu0 %v2760
      %v2919 = vpop.f32.mrf.mxu0
      %v2920 = vadd.f32 %v2628, %v2919
      %v2921 = vpop.f32.mrf.mxu0
      %v2922 = vpop.f32.mrf.mxu0
      %v2923 = vadd.f32 %v2631, %v2922
      %v2924 = vpop.f32.mrf.mxu0
      %2925 = vdwg.mxu0
      %s2926 = scalar_lea.vmem [#allocation2], 296
      %v2927 = vld [vmem:[%s2926] sm:$0xf]
      %v2928 = vld [vmem:[%s2926 + $0x4] sm:$0xf]
      %v2929 = vld [vmem:[%s2926 + $0x8] sm:$0xf]
      %v2930 = vld [vmem:[%s2926 + $0xc] sm:$0xf]
      %v2931 = vld [vmem:[%s2926 + $0x10] sm:$0xf]
      %v2932 = vld [vmem:[%s2926 + $0x14] sm:$0xf]
      %v2933 = vld [vmem:[%s2926 + $0x18] sm:$0xf]
      %v2934 = vld [vmem:[%s2926 + $0x1c] sm:$0xf]
      %v2935 = vld [vmem:[%s2926 + $0x20] sm:$0xf]
      %v2936 = vld [vmem:[%s2926 + $0x24] sm:$0xf]
      %v2937 = vld [vmem:[%s2926 + $0x28] sm:$0xf]
      %v2938 = vld [vmem:[%s2926 + $0x2c] sm:$0xf]
      %v2939 = vld [vmem:[%s2926 + $0x30] sm:$0xf]
      %v2940 = vld [vmem:[%s2926 + $0x34] sm:$0xf]
      %v2941 = vld [vmem:[%s2926 + $0x38] sm:$0xf]
      %v2942 = vld [vmem:[%s2926 + $0x3c] sm:$0xf]
      %v2943 = vld [vmem:[%s2926 + $0x40] sm:$0xf]
      %v2944 = vld [vmem:[%s2926 + $0x44] sm:$0xf]
      %v2945 = vld [vmem:[%s2926 + $0x48] sm:$0xf]
      %v2946 = vld [vmem:[%s2926 + $0x4c] sm:$0xf]
      %v2947 = vld [vmem:[%s2926 + $0x50] sm:$0xf]
      %v2948 = vld [vmem:[%s2926 + $0x54] sm:$0xf]
      %v2949 = vld [vmem:[%s2926 + $0x58] sm:$0xf]
      %v2950 = vld [vmem:[%s2926 + $0x5c] sm:$0xf]
      %v2951 = vld [vmem:[%s2926 + $0x60] sm:$0xf]
      %v2952 = vld [vmem:[%s2926 + $0x64] sm:$0xf]
      %v2953 = vld [vmem:[%s2926 + $0x68] sm:$0xf]
      %v2954 = vld [vmem:[%s2926 + $0x6c] sm:$0xf]
      %v2955 = vld [vmem:[%s2926 + $0x70] sm:$0xf]
      %v2956 = vld [vmem:[%s2926 + $0x74] sm:$0xf]
      %v2957 = vld [vmem:[%s2926 + $0x78] sm:$0xf]
      %v2958 = vld [vmem:[%s2926 + $0x7c] sm:$0xf]
      %s2959 = scalar_lea.vmem %s223, 10
      %v2960 = vld [vmem:[%s2959] sm:$0x3]
      %v2993 = vunpack.c.l.b16 %v2927
      %v2994 = vunpack.c.l.b16 %v2928
      %v2995 = vunpack.c.l.b16 %v2929
      %v2996 = vunpack.c.l.b16 %v2930
      %v2997 = vunpack.c.l.b16 %v2931
      %v2998 = vunpack.c.l.b16 %v2932
      %v2999 = vunpack.c.l.b16 %v2933
      %v3000 = vunpack.c.l.b16 %v2934
      %v3001 = vunpack.c.l.b16 %v2935
      %v3002 = vunpack.c.l.b16 %v2936
      %v3003 = vunpack.c.l.b16 %v2937
      %v3004 = vunpack.c.l.b16 %v2938
      %v3005 = vunpack.c.l.b16 %v2939
      %v3006 = vunpack.c.l.b16 %v2940
      %v3007 = vunpack.c.l.b16 %v2941
      %v3008 = vunpack.c.l.b16 %v2942
      %v3009 = vunpack.c.l.b16 %v2943
      %v3010 = vunpack.c.l.b16 %v2944
      %v3011 = vunpack.c.l.b16 %v2945
      %v3012 = vunpack.c.l.b16 %v2946
      %v3013 = vunpack.c.l.b16 %v2947
      %v3014 = vunpack.c.l.b16 %v2948
      %v3015 = vunpack.c.l.b16 %v2949
      %v3016 = vunpack.c.l.b16 %v2950
      %v3017 = vunpack.c.l.b16 %v2951
      %v3018 = vunpack.c.l.b16 %v2952
      %v3019 = vunpack.c.l.b16 %v2953
      %v3020 = vunpack.c.l.b16 %v2954
      %v3021 = vunpack.c.l.b16 %v2955
      %v3022 = vunpack.c.l.b16 %v2956
      %v3023 = vunpack.c.l.b16 %v2957
      %v3024 = vunpack.c.l.b16 %v2958
      %v3025 = vpack.c.b16 %v2994, %v2993
      %v3026 = vpack.c.b16 %v2996, %v2995
      %v3027 = vpack.c.b16 %v2998, %v2997
      %v3028 = vpack.c.b16 %v3000, %v2999
      %v3029 = vpack.c.b16 %v3002, %v3001
      %v3030 = vpack.c.b16 %v3004, %v3003
      %v3031 = vpack.c.b16 %v3006, %v3005
      %v3032 = vpack.c.b16 %v3008, %v3007
      %v3033 = vpack.c.b16 %v3010, %v3009
      %v3034 = vpack.c.b16 %v3012, %v3011
      %v3035 = vpack.c.b16 %v3014, %v3013
      %v3036 = vpack.c.b16 %v3016, %v3015
      %v3037 = vpack.c.b16 %v3018, %v3017
      %v3038 = vpack.c.b16 %v3020, %v3019
      %v3039 = vpack.c.b16 %v3022, %v3021
      %v3040 = vpack.c.b16 %v3024, %v3023
      %v3042 = vsel %vm1338, %v3025, 0
      %v3045 = vsel %vm1338, %v3026, 0
      %v3048 = vsel %vm1338, %v3027, 0
      %v3051 = vsel %vm1338, %v3028, 0
      %v3054 = vsel %vm1338, %v3029, 0
      %v3057 = vsel %vm1338, %v3030, 0
      %v3060 = vsel %vm1338, %v3031, 0
      %v3063 = vsel %vm1338, %v3032, 0
      %v3066 = vsel %vm1338, %v3033, 0
      %v3069 = vsel %vm1338, %v3034, 0
      %v3072 = vsel %vm1338, %v3035, 0
      %v3075 = vsel %vm1338, %v3036, 0
      %v3078 = vsel %vm1338, %v3037, 0
      %v3081 = vsel %vm1338, %v3038, 0
      %v3084 = vsel %vm1338, %v3039, 0
      %v3087 = vsel %vm1338, %v3040, 0
      %v3090 = vsel %vm1387, %v2960, 0
      %3092 = vmatprep.subr.bf16.mxu0 0
      %3093 = vmatpush1.bf16.msra.mxu0 0
      %3094 = vmatprep.subr.bf16.mxu0 0
      %3095 = vmatpush1.bf16.msra.mxu0 0
      %3096 = vmatprep.subr.bf16.mxu0 0
      %3097 = vmatpush1.bf16.msra.mxu0 0
      %3098 = vmatprep.subr.bf16.mxu0 0
      %3099 = vmatpush1.bf16.msra.mxu0 0
      %3100 = vmatprep.subr.bf16.mxu0 0
      %3101 = vmatpush1.bf16.msra.mxu0 0
      %3102 = vmatprep.subr.bf16.mxu0 0
      %3103 = vmatpush1.bf16.msra.mxu0 0
      %3104 = vmatprep.subr.bf16.mxu0 0
      %3105 = vmatpush1.bf16.msra.mxu0 0
      %3106 = vmatprep.subr.bf16.mxu0 0
      %3107 = vmatpush1.bf16.msra.mxu0 %v3090
      %3108 = vmatprep.subr.bf16.mxu0 0
      %3109 = vmatpush2.bf16.msra.mxu0 0
      %3110 = vmatprep.subr.bf16.mxu0 0
      %3111 = vmatpush2.bf16.msra.mxu0 0
      %3112 = vmatprep.subr.bf16.mxu0 0
      %3113 = vmatpush2.bf16.msra.mxu0 0
      %3114 = vmatprep.subr.bf16.mxu0 0
      %3115 = vmatpush2.bf16.msra.mxu0 0
      %3116 = vmatprep.subr.bf16.mxu0 0
      %3117 = vmatpush2.bf16.msra.mxu0 0
      %3118 = vmatprep.subr.bf16.mxu0 0
      %3119 = vmatpush2.bf16.msra.mxu0 0
      %3120 = vmatprep.subr.bf16.mxu0 0
      %3121 = vmatpush2.bf16.msra.mxu0 0
      %3122 = vmatprep.subr.bf16.mxu0 0
      %3123 = vmatpush2.bf16.msra.mxu0 0
      %3124 = vmatprep.mubr.bf16.mxu0 0
      %3125 = vmatmul.mubr.bf16.gmra.mxu0 %v3042
      %v3126 = vpop.f32.mrf.mxu0
      %v3127 = vadd.f32 0.0, %v3126
      %v3128 = vpop.f32.mrf.mxu0
      %v3129 = vpop.f32.mrf.mxu0
      %v3130 = vadd.f32 0.0, %v3129
      %v3131 = vpop.f32.mrf.mxu0
      %3132 = vmatprep.mubr.bf16.mxu0 0
      %3133 = vmatmul.mubr.bf16.gmra.mxu0 %v3045
      %v3134 = vpop.f32.mrf.mxu0
      %v3135 = vadd.f32 0.0, %v3134
      %v3136 = vpop.f32.mrf.mxu0
      %v3137 = vpop.f32.mrf.mxu0
      %v3138 = vadd.f32 0.0, %v3137
      %v3139 = vpop.f32.mrf.mxu0
      %3140 = vmatprep.mubr.bf16.mxu0 0
      %3141 = vmatmul.mubr.bf16.gmra.mxu0 %v3048
      %v3142 = vpop.f32.mrf.mxu0
      %v3143 = vadd.f32 0.0, %v3142
      %v3144 = vpop.f32.mrf.mxu0
      %v3145 = vpop.f32.mrf.mxu0
      %v3146 = vadd.f32 0.0, %v3145
      %v3147 = vpop.f32.mrf.mxu0
      %3148 = vmatprep.mubr.bf16.mxu0 0
      %3149 = vmatmul.mubr.bf16.gmra.mxu0 %v3051
      %v3150 = vpop.f32.mrf.mxu0
      %v3151 = vadd.f32 0.0, %v3150
      %v3152 = vpop.f32.mrf.mxu0
      %v3153 = vpop.f32.mrf.mxu0
      %v3154 = vadd.f32 0.0, %v3153
      %v3155 = vpop.f32.mrf.mxu0
      %3156 = vmatprep.mubr.bf16.mxu0 0
      %3157 = vmatmul.mubr.bf16.gmra.mxu0 %v3054
      %v3158 = vpop.f32.mrf.mxu0
      %v3159 = vadd.f32 0.0, %v3158
      %v3160 = vpop.f32.mrf.mxu0
      %v3161 = vpop.f32.mrf.mxu0
      %v3162 = vadd.f32 0.0, %v3161
      %v3163 = vpop.f32.mrf.mxu0
      %3164 = vmatprep.mubr.bf16.mxu0 0
      %3165 = vmatmul.mubr.bf16.gmra.mxu0 %v3057
      %v3166 = vpop.f32.mrf.mxu0
      %v3167 = vadd.f32 0.0, %v3166
      %v3168 = vpop.f32.mrf.mxu0
      %v3169 = vpop.f32.mrf.mxu0
      %v3170 = vadd.f32 0.0, %v3169
      %v3171 = vpop.f32.mrf.mxu0
      %3172 = vmatprep.mubr.bf16.mxu0 0
      %3173 = vmatmul.mubr.bf16.gmra.mxu0 %v3060
      %v3174 = vpop.f32.mrf.mxu0
      %v3175 = vadd.f32 0.0, %v3174
      %v3176 = vpop.f32.mrf.mxu0
      %v3177 = vpop.f32.mrf.mxu0
      %v3178 = vadd.f32 0.0, %v3177
      %v3179 = vpop.f32.mrf.mxu0
      %3180 = vmatprep.mubr.bf16.mxu0 0
      %3181 = vmatmul.mubr.bf16.gmra.mxu0 %v3063
      %v3182 = vpop.f32.mrf.mxu0
      %v3183 = vadd.f32 0.0, %v3182
      %v3184 = vpop.f32.mrf.mxu0
      %v3185 = vpop.f32.mrf.mxu0
      %v3186 = vadd.f32 0.0, %v3185
      %v3187 = vpop.f32.mrf.mxu0
      %3188 = vmatprep.mubr.bf16.mxu0 0
      %3189 = vmatmul.mubr.bf16.gmra.mxu0 %v3066
      %v3190 = vpop.f32.mrf.mxu0
      %v3191 = vadd.f32 0.0, %v3190
      %v3192 = vpop.f32.mrf.mxu0
      %v3193 = vpop.f32.mrf.mxu0
      %v3194 = vadd.f32 0.0, %v3193
      %v3195 = vpop.f32.mrf.mxu0
      %3196 = vmatprep.mubr.bf16.mxu0 0
      %3197 = vmatmul.mubr.bf16.gmra.mxu0 %v3069
      %v3198 = vpop.f32.mrf.mxu0
      %v3199 = vadd.f32 0.0, %v3198
      %v3200 = vpop.f32.mrf.mxu0
      %v3201 = vpop.f32.mrf.mxu0
      %v3202 = vadd.f32 0.0, %v3201
      %v3203 = vpop.f32.mrf.mxu0
      %3204 = vmatprep.mubr.bf16.mxu0 0
      %3205 = vmatmul.mubr.bf16.gmra.mxu0 %v3072
      %v3206 = vpop.f32.mrf.mxu0
      %v3207 = vadd.f32 0.0, %v3206
      %v3208 = vpop.f32.mrf.mxu0
      %v3209 = vpop.f32.mrf.mxu0
      %v3210 = vadd.f32 0.0, %v3209
      %v3211 = vpop.f32.mrf.mxu0
      %3212 = vmatprep.mubr.bf16.mxu0 0
      %3213 = vmatmul.mubr.bf16.gmra.mxu0 %v3075
      %v3214 = vpop.f32.mrf.mxu0
      %v3215 = vadd.f32 0.0, %v3214
      %v3216 = vpop.f32.mrf.mxu0
      %v3217 = vpop.f32.mrf.mxu0
      %v3218 = vadd.f32 0.0, %v3217
      %v3219 = vpop.f32.mrf.mxu0
      %3220 = vmatprep.mubr.bf16.mxu0 0
      %3221 = vmatmul.mubr.bf16.gmra.mxu0 %v3078
      %v3222 = vpop.f32.mrf.mxu0
      %v3223 = vadd.f32 0.0, %v3222
      %v3224 = vpop.f32.mrf.mxu0
      %v3225 = vpop.f32.mrf.mxu0
      %v3226 = vadd.f32 0.0, %v3225
      %v3227 = vpop.f32.mrf.mxu0
      %3228 = vmatprep.mubr.bf16.mxu0 0
      %3229 = vmatmul.mubr.bf16.gmra.mxu0 %v3081
      %v3230 = vpop.f32.mrf.mxu0
      %v3231 = vadd.f32 0.0, %v3230
      %v3232 = vpop.f32.mrf.mxu0
      %v3233 = vpop.f32.mrf.mxu0
      %v3234 = vadd.f32 0.0, %v3233
      %v3235 = vpop.f32.mrf.mxu0
      %3236 = vmatprep.mubr.bf16.mxu0 0
      %3237 = vmatmul.mubr.bf16.gmra.mxu0 %v3084
      %v3238 = vpop.f32.mrf.mxu0
      %v3239 = vadd.f32 0.0, %v3238
      %v3240 = vpop.f32.mrf.mxu0
      %v3241 = vpop.f32.mrf.mxu0
      %v3242 = vadd.f32 0.0, %v3241
      %v3243 = vpop.f32.mrf.mxu0
      %3244 = vmatprep.mubr.bf16.mxu0 0
      %3245 = vmatmul.mubr.bf16.gmra.mxu0 %v3087
      %v3246 = vpop.f32.mrf.mxu0
      %v3247 = vadd.f32 0.0, %v3246
      %v3248 = vpop.f32.mrf.mxu0
      %v3249 = vpop.f32.mrf.mxu0
      %v3250 = vadd.f32 0.0, %v3249
      %v3251 = vpop.f32.mrf.mxu0
      %3252 = vdwg.mxu0
      %v3253 = vadd.f32 %v2800, %v3127
      %v3254 = vadd.f32 %v2803, %v3130
      %v3255 = vadd.f32 %v2808, %v3135
      %v3256 = vadd.f32 %v2811, %v3138
      %v3257 = vadd.f32 %v2816, %v3143
      %v3258 = vadd.f32 %v2819, %v3146
      %v3259 = vadd.f32 %v2824, %v3151
      %v3260 = vadd.f32 %v2827, %v3154
      %v3261 = vadd.f32 %v2832, %v3159
      %v3262 = vadd.f32 %v2835, %v3162
      %v3263 = vadd.f32 %v2840, %v3167
      %v3264 = vadd.f32 %v2843, %v3170
      %v3265 = vadd.f32 %v2848, %v3175
      %v3266 = vadd.f32 %v2851, %v3178
      %v3267 = vadd.f32 %v2856, %v3183
      %v3268 = vadd.f32 %v2859, %v3186
      %v3269 = vadd.f32 %v2864, %v3191
      %v3270 = vadd.f32 %v2867, %v3194
      %v3271 = vadd.f32 %v2872, %v3199
      %v3272 = vadd.f32 %v2875, %v3202
      %v3273 = vadd.f32 %v2880, %v3207
      %v3274 = vadd.f32 %v2883, %v3210
      %v3275 = vadd.f32 %v2888, %v3215
      %v3276 = vadd.f32 %v2891, %v3218
      %v3277 = vadd.f32 %v2896, %v3223
      %v3278 = vadd.f32 %v2899, %v3226
      %v3279 = vadd.f32 %v2904, %v3231
      %v3280 = vadd.f32 %v2907, %v3234
      %v3281 = vadd.f32 %v2912, %v3239
      %v3282 = vadd.f32 %v2915, %v3242
      %v3283 = vadd.f32 %v2920, %v3247
      %v3284 = vadd.f32 %v2923, %v3250
      %v3285 = vld [vmem:[#allocation3] sm:$0xff]
      %v3286 = vld [vmem:[#allocation3 + $0x8] sm:$0xff]
      %v3287 = vld [vmem:[#allocation3 + $0x10] sm:$0xff]
      %v3288 = vld [vmem:[#allocation3 + $0x18] sm:$0xff]
      %v3289 = vld [vmem:[#allocation3 + $0x20] sm:$0xff]
      %v3290 = vld [vmem:[#allocation3 + $0x28] sm:$0xff]
      %v3291 = vld [vmem:[#allocation3 + $0x30] sm:$0xff]
      %v3292 = vld [vmem:[#allocation3 + $0x38] sm:$0xff]
      %v3293 = vld [vmem:[#allocation3 + $0x40] sm:$0xff]
      %v3294 = vld [vmem:[#allocation3 + $0x48] sm:$0xff]
      %v3295 = vld [vmem:[#allocation3 + $0x50] sm:$0xff]
      %v3296 = vld [vmem:[#allocation3 + $0x58] sm:$0xff]
      %v3297 = vld [vmem:[#allocation3 + $0x60] sm:$0xff]
      %v3298 = vld [vmem:[#allocation3 + $0x68] sm:$0xff]
      %v3299 = vld [vmem:[#allocation3 + $0x70] sm:$0xff]
      %v3300 = vld [vmem:[#allocation3 + $0x78] sm:$0xff]
      %v3301 = vld [vmem:[#allocation3 + $0x80] sm:$0xff]
      %v3302 = vld [vmem:[#allocation3 + $0x88] sm:$0xff]
      %v3303 = vld [vmem:[#allocation3 + $0x90] sm:$0xff]
      %v3304 = vld [vmem:[#allocation3 + $0x98] sm:$0xff]
      %v3305 = vld [vmem:[#allocation3 + $0xa0] sm:$0xff]
      %v3306 = vld [vmem:[#allocation3 + $0xa8] sm:$0xff]
      %v3307 = vld [vmem:[#allocation3 + $0xb0] sm:$0xff]
      %v3308 = vld [vmem:[#allocation3 + $0xb8] sm:$0xff]
      %v3309 = vld [vmem:[#allocation3 + $0xc0] sm:$0xff]
      %v3310 = vld [vmem:[#allocation3 + $0xc8] sm:$0xff]
      %v3311 = vld [vmem:[#allocation3 + $0xd0] sm:$0xff]
      %v3312 = vld [vmem:[#allocation3 + $0xd8] sm:$0xff]
      %v3313 = vld [vmem:[#allocation3 + $0xe0] sm:$0xff]
      %v3314 = vld [vmem:[#allocation3 + $0xe8] sm:$0xff]
      %v3315 = vld [vmem:[#allocation3 + $0xf0] sm:$0xff]
      %v3316 = vld [vmem:[#allocation3 + $0xf8] sm:$0xff]
      %v3317 = vadd.f32 %v3285, %v3253
      %v3318 = vadd.f32 %v3286, %v3254
      %v3319 = vadd.f32 %v3287, %v3255
      %v3320 = vadd.f32 %v3288, %v3256
      %v3321 = vadd.f32 %v3289, %v3257
      %v3322 = vadd.f32 %v3290, %v3258
      %v3323 = vadd.f32 %v3291, %v3259
      %v3324 = vadd.f32 %v3292, %v3260
      %v3325 = vadd.f32 %v3293, %v3261
      %v3326 = vadd.f32 %v3294, %v3262
      %v3327 = vadd.f32 %v3295, %v3263
      %v3328 = vadd.f32 %v3296, %v3264
      %v3329 = vadd.f32 %v3297, %v3265
      %v3330 = vadd.f32 %v3298, %v3266
      %v3331 = vadd.f32 %v3299, %v3267
      %v3332 = vadd.f32 %v3300, %v3268
      %v3333 = vadd.f32 %v3301, %v3269
      %v3334 = vadd.f32 %v3302, %v3270
      %v3335 = vadd.f32 %v3303, %v3271
      %v3336 = vadd.f32 %v3304, %v3272
      %v3337 = vadd.f32 %v3305, %v3273
      %v3338 = vadd.f32 %v3306, %v3274
      %v3339 = vadd.f32 %v3307, %v3275
      %v3340 = vadd.f32 %v3308, %v3276
      %v3341 = vadd.f32 %v3309, %v3277
      %v3342 = vadd.f32 %v3310, %v3278
      %v3343 = vadd.f32 %v3311, %v3279
      %v3344 = vadd.f32 %v3312, %v3280
      %v3345 = vadd.f32 %v3313, %v3281
      %v3346 = vadd.f32 %v3314, %v3282
      %v3347 = vadd.f32 %v3315, %v3283
      %v3348 = vadd.f32 %v3316, %v3284
      %3349 = vst [vmem:[#allocation3] sm:$0xff] %v3317
      %3350 = vst [vmem:[#allocation3 + $0x8] sm:$0xff] %v3318
      %3351 = vst [vmem:[#allocation3 + $0x10] sm:$0xff] %v3319
      %3352 = vst [vmem:[#allocation3 + $0x18] sm:$0xff] %v3320
      %3353 = vst [vmem:[#allocation3 + $0x20] sm:$0xff] %v3321
      %3354 = vst [vmem:[#allocation3 + $0x28] sm:$0xff] %v3322
      %3355 = vst [vmem:[#allocation3 + $0x30] sm:$0xff] %v3323
      %3356 = vst [vmem:[#allocation3 + $0x38] sm:$0xff] %v3324
      %3357 = vst [vmem:[#allocation3 + $0x40] sm:$0xff] %v3325
      %3358 = vst [vmem:[#allocation3 + $0x48] sm:$0xff] %v3326
      %3359 = vst [vmem:[#allocation3 + $0x50] sm:$0xff] %v3327
      %3360 = vst [vmem:[#allocation3 + $0x58] sm:$0xff] %v3328
      %3361 = vst [vmem:[#allocation3 + $0x60] sm:$0xff] %v3329
      %3362 = vst [vmem:[#allocation3 + $0x68] sm:$0xff] %v3330
      %3363 = vst [vmem:[#allocation3 + $0x70] sm:$0xff] %v3331
      %3364 = vst [vmem:[#allocation3 + $0x78] sm:$0xff] %v3332
      %3365 = vst [vmem:[#allocation3 + $0x80] sm:$0xff] %v3333
      %3366 = vst [vmem:[#allocation3 + $0x88] sm:$0xff] %v3334
      %3367 = vst [vmem:[#allocation3 + $0x90] sm:$0xff] %v3335
      %3368 = vst [vmem:[#allocation3 + $0x98] sm:$0xff] %v3336
      %3369 = vst [vmem:[#allocation3 + $0xa0] sm:$0xff] %v3337
      %3370 = vst [vmem:[#allocation3 + $0xa8] sm:$0xff] %v3338
      %3371 = vst [vmem:[#allocation3 + $0xb0] sm:$0xff] %v3339
      %3372 = vst [vmem:[#allocation3 + $0xb8] sm:$0xff] %v3340
      %3373 = vst [vmem:[#allocation3 + $0xc0] sm:$0xff] %v3341
      %3374 = vst [vmem:[#allocation3 + $0xc8] sm:$0xff] %v3342
      %3375 = vst [vmem:[#allocation3 + $0xd0] sm:$0xff] %v3343
      %3376 = vst [vmem:[#allocation3 + $0xd8] sm:$0xff] %v3344
      %3377 = vst [vmem:[#allocation3 + $0xe0] sm:$0xff] %v3345
      %3378 = vst [vmem:[#allocation3 + $0xe8] sm:$0xff] %v3346
      %3379 = vst [vmem:[#allocation3 + $0xf0] sm:$0xff] %v3347
      %3380 = vst [vmem:[#allocation3 + $0xf8] sm:$0xff] %v3348
      %s3381 = scalar_lea.vmem [#allocation2], 16
      %v3382 = vld [vmem:[%s3381] sm:$0xf]
      %v3383 = vld [vmem:[%s3381 + $0x4] sm:$0xf]
      %v3384 = vld [vmem:[%s3381 + $0x8] sm:$0xf]
      %v3385 = vld [vmem:[%s3381 + $0xc] sm:$0xf]
      %v3386 = vld [vmem:[%s3381 + $0x10] sm:$0xf]
      %v3387 = vld [vmem:[%s3381 + $0x14] sm:$0xf]
      %v3388 = vld [vmem:[%s3381 + $0x18] sm:$0xf]
      %v3389 = vld [vmem:[%s3381 + $0x1c] sm:$0xf]
      %v3390 = vld [vmem:[%s3381 + $0x20] sm:$0xf]
      %v3391 = vld [vmem:[%s3381 + $0x24] sm:$0xf]
      %v3392 = vld [vmem:[%s3381 + $0x28] sm:$0xf]
      %v3393 = vld [vmem:[%s3381 + $0x2c] sm:$0xf]
      %v3394 = vld [vmem:[%s3381 + $0x30] sm:$0xf]
      %v3395 = vld [vmem:[%s3381 + $0x34] sm:$0xf]
      %v3396 = vld [vmem:[%s3381 + $0x38] sm:$0xf]
      %v3397 = vld [vmem:[%s3381 + $0x3c] sm:$0xf]
      %v3398 = vld [vmem:[%s3381 + $0x40] sm:$0xf]
      %v3399 = vld [vmem:[%s3381 + $0x44] sm:$0xf]
      %v3400 = vld [vmem:[%s3381 + $0x48] sm:$0xf]
      %v3401 = vld [vmem:[%s3381 + $0x4c] sm:$0xf]
      %v3402 = vld [vmem:[%s3381 + $0x50] sm:$0xf]
      %v3403 = vld [vmem:[%s3381 + $0x54] sm:$0xf]
      %v3404 = vld [vmem:[%s3381 + $0x58] sm:$0xf]
      %v3405 = vld [vmem:[%s3381 + $0x5c] sm:$0xf]
      %v3406 = vld [vmem:[%s3381 + $0x60] sm:$0xf]
      %v3407 = vld [vmem:[%s3381 + $0x64] sm:$0xf]
      %v3408 = vld [vmem:[%s3381 + $0x68] sm:$0xf]
      %v3409 = vld [vmem:[%s3381 + $0x6c] sm:$0xf]
      %v3410 = vld [vmem:[%s3381 + $0x70] sm:$0xf]
      %v3411 = vld [vmem:[%s3381 + $0x74] sm:$0xf]
      %v3412 = vld [vmem:[%s3381 + $0x78] sm:$0xf]
      %v3413 = vld [vmem:[%s3381 + $0x7c] sm:$0xf]
      %s3414 = scalar_lea.vmem %s223, 12
      %v3415 = vld [vmem:[%s3414] sm:$0x3]
      %s3416 = scalar_lea.vmem [#allocation2], 160
      %v3417 = vld [vmem:[%s3416] sm:$0xf]
      %v3418 = vld [vmem:[%s3416 + $0x4] sm:$0xf]
      %v3419 = vld [vmem:[%s3416 + $0x8] sm:$0xf]
      %v3420 = vld [vmem:[%s3416 + $0xc] sm:$0xf]
      %v3421 = vld [vmem:[%s3416 + $0x10] sm:$0xf]
      %v3422 = vld [vmem:[%s3416 + $0x14] sm:$0xf]
      %v3423 = vld [vmem:[%s3416 + $0x18] sm:$0xf]
      %v3424 = vld [vmem:[%s3416 + $0x1c] sm:$0xf]
      %v3425 = vld [vmem:[%s3416 + $0x20] sm:$0xf]
      %v3426 = vld [vmem:[%s3416 + $0x24] sm:$0xf]
      %v3427 = vld [vmem:[%s3416 + $0x28] sm:$0xf]
      %v3428 = vld [vmem:[%s3416 + $0x2c] sm:$0xf]
      %v3429 = vld [vmem:[%s3416 + $0x30] sm:$0xf]
      %v3430 = vld [vmem:[%s3416 + $0x34] sm:$0xf]
      %v3431 = vld [vmem:[%s3416 + $0x38] sm:$0xf]
      %v3432 = vld [vmem:[%s3416 + $0x3c] sm:$0xf]
      %v3433 = vld [vmem:[%s3416 + $0x40] sm:$0xf]
      %v3434 = vld [vmem:[%s3416 + $0x44] sm:$0xf]
      %v3435 = vld [vmem:[%s3416 + $0x48] sm:$0xf]
      %v3436 = vld [vmem:[%s3416 + $0x4c] sm:$0xf]
      %v3437 = vld [vmem:[%s3416 + $0x50] sm:$0xf]
      %v3438 = vld [vmem:[%s3416 + $0x54] sm:$0xf]
      %v3439 = vld [vmem:[%s3416 + $0x58] sm:$0xf]
      %v3440 = vld [vmem:[%s3416 + $0x5c] sm:$0xf]
      %v3441 = vld [vmem:[%s3416 + $0x60] sm:$0xf]
      %v3442 = vld [vmem:[%s3416 + $0x64] sm:$0xf]
      %v3443 = vld [vmem:[%s3416 + $0x68] sm:$0xf]
      %v3444 = vld [vmem:[%s3416 + $0x6c] sm:$0xf]
      %v3445 = vld [vmem:[%s3416 + $0x70] sm:$0xf]
      %v3446 = vld [vmem:[%s3416 + $0x74] sm:$0xf]
      %v3447 = vld [vmem:[%s3416 + $0x78] sm:$0xf]
      %v3448 = vld [vmem:[%s3416 + $0x7c] sm:$0xf]
      %s3449 = scalar_lea.vmem %s223, 14
      %v3450 = vld [vmem:[%s3449] sm:$0x3]
      %v3483 = vunpack.c.l.b16 %v3417
      %v3484 = vunpack.c.l.b16 %v3418
      %v3485 = vunpack.c.l.b16 %v3419
      %v3486 = vunpack.c.l.b16 %v3420
      %v3487 = vunpack.c.l.b16 %v3421
      %v3488 = vunpack.c.l.b16 %v3422
      %v3489 = vunpack.c.l.b16 %v3423
      %v3490 = vunpack.c.l.b16 %v3424
      %v3491 = vunpack.c.l.b16 %v3425
      %v3492 = vunpack.c.l.b16 %v3426
      %v3493 = vunpack.c.l.b16 %v3427
      %v3494 = vunpack.c.l.b16 %v3428
      %v3495 = vunpack.c.l.b16 %v3429
      %v3496 = vunpack.c.l.b16 %v3430
      %v3497 = vunpack.c.l.b16 %v3431
      %v3498 = vunpack.c.l.b16 %v3432
      %v3499 = vunpack.c.l.b16 %v3433
      %v3500 = vunpack.c.l.b16 %v3434
      %v3501 = vunpack.c.l.b16 %v3435
      %v3502 = vunpack.c.l.b16 %v3436
      %v3503 = vunpack.c.l.b16 %v3437
      %v3504 = vunpack.c.l.b16 %v3438
      %v3505 = vunpack.c.l.b16 %v3439
      %v3506 = vunpack.c.l.b16 %v3440
      %v3507 = vunpack.c.l.b16 %v3441
      %v3508 = vunpack.c.l.b16 %v3442
      %v3509 = vunpack.c.l.b16 %v3443
      %v3510 = vunpack.c.l.b16 %v3444
      %v3511 = vunpack.c.l.b16 %v3445
      %v3512 = vunpack.c.l.b16 %v3446
      %v3513 = vunpack.c.l.b16 %v3447
      %v3514 = vunpack.c.l.b16 %v3448
      %v3515 = vpack.c.b16 %v3484, %v3483
      %v3516 = vpack.c.b16 %v3486, %v3485
      %v3517 = vpack.c.b16 %v3488, %v3487
      %v3518 = vpack.c.b16 %v3490, %v3489
      %v3519 = vpack.c.b16 %v3492, %v3491
      %v3520 = vpack.c.b16 %v3494, %v3493
      %v3521 = vpack.c.b16 %v3496, %v3495
      %v3522 = vpack.c.b16 %v3498, %v3497
      %v3523 = vpack.c.b16 %v3500, %v3499
      %v3524 = vpack.c.b16 %v3502, %v3501
      %v3525 = vpack.c.b16 %v3504, %v3503
      %v3526 = vpack.c.b16 %v3506, %v3505
      %v3527 = vpack.c.b16 %v3508, %v3507
      %v3528 = vpack.c.b16 %v3510, %v3509
      %v3529 = vpack.c.b16 %v3512, %v3511
      %v3530 = vpack.c.b16 %v3514, %v3513
      %v3532 = vsel %vm1338, %v3515, 0
      %v3535 = vsel %vm1338, %v3516, 0
      %v3538 = vsel %vm1338, %v3517, 0
      %v3541 = vsel %vm1338, %v3518, 0
      %v3544 = vsel %vm1338, %v3519, 0
      %v3547 = vsel %vm1338, %v3520, 0
      %v3550 = vsel %vm1338, %v3521, 0
      %v3553 = vsel %vm1338, %v3522, 0
      %v3556 = vsel %vm1338, %v3523, 0
      %v3559 = vsel %vm1338, %v3524, 0
      %v3562 = vsel %vm1338, %v3525, 0
      %v3565 = vsel %vm1338, %v3526, 0
      %v3568 = vsel %vm1338, %v3527, 0
      %v3571 = vsel %vm1338, %v3528, 0
      %v3574 = vsel %vm1338, %v3529, 0
      %v3577 = vsel %vm1338, %v3530, 0
      %v3580 = vsel %vm1387, %v3450, 0
      %3582 = vmatprep.subr.bf16.mxu0 0
      %3583 = vmatpush1.bf16.msra.mxu0 0
      %3584 = vmatprep.subr.bf16.mxu0 0
      %3585 = vmatpush1.bf16.msra.mxu0 0
      %3586 = vmatprep.subr.bf16.mxu0 0
      %3587 = vmatpush1.bf16.msra.mxu0 0
      %3588 = vmatprep.subr.bf16.mxu0 0
      %3589 = vmatpush1.bf16.msra.mxu0 0
      %3590 = vmatprep.subr.bf16.mxu0 0
      %3591 = vmatpush1.bf16.msra.mxu0 0
      %3592 = vmatprep.subr.bf16.mxu0 0
      %3593 = vmatpush1.bf16.msra.mxu0 0
      %3594 = vmatprep.subr.bf16.mxu0 0
      %3595 = vmatpush1.bf16.msra.mxu0 0
      %3596 = vmatprep.subr.bf16.mxu0 0
      %3597 = vmatpush1.bf16.msra.mxu0 %v3580
      %3598 = vmatprep.subr.bf16.mxu0 0
      %3599 = vmatpush2.bf16.msra.mxu0 0
      %3600 = vmatprep.subr.bf16.mxu0 0
      %3601 = vmatpush2.bf16.msra.mxu0 0
      %3602 = vmatprep.subr.bf16.mxu0 0
      %3603 = vmatpush2.bf16.msra.mxu0 0
      %3604 = vmatprep.subr.bf16.mxu0 0
      %3605 = vmatpush2.bf16.msra.mxu0 0
      %3606 = vmatprep.subr.bf16.mxu0 0
      %3607 = vmatpush2.bf16.msra.mxu0 0
      %3608 = vmatprep.subr.bf16.mxu0 0
      %3609 = vmatpush2.bf16.msra.mxu0 0
      %3610 = vmatprep.subr.bf16.mxu0 0
      %3611 = vmatpush2.bf16.msra.mxu0 0
      %3612 = vmatprep.subr.bf16.mxu0 0
      %3613 = vmatpush2.bf16.msra.mxu0 0
      %3614 = vmatprep.mubr.bf16.mxu0 0
      %3615 = vmatmul.mubr.bf16.gmra.mxu0 %v3532
      %v3616 = vpop.f32.mrf.mxu0
      %v3617 = vadd.f32 0.0, %v3616
      %v3618 = vpop.f32.mrf.mxu0
      %v3619 = vpop.f32.mrf.mxu0
      %v3620 = vadd.f32 0.0, %v3619
      %v3621 = vpop.f32.mrf.mxu0
      %3622 = vmatprep.mubr.bf16.mxu0 0
      %3623 = vmatmul.mubr.bf16.gmra.mxu0 %v3535
      %v3624 = vpop.f32.mrf.mxu0
      %v3625 = vadd.f32 0.0, %v3624
      %v3626 = vpop.f32.mrf.mxu0
      %v3627 = vpop.f32.mrf.mxu0
      %v3628 = vadd.f32 0.0, %v3627
      %v3629 = vpop.f32.mrf.mxu0
      %3630 = vmatprep.mubr.bf16.mxu0 0
      %3631 = vmatmul.mubr.bf16.gmra.mxu0 %v3538
      %v3632 = vpop.f32.mrf.mxu0
      %v3633 = vadd.f32 0.0, %v3632
      %v3634 = vpop.f32.mrf.mxu0
      %v3635 = vpop.f32.mrf.mxu0
      %v3636 = vadd.f32 0.0, %v3635
      %v3637 = vpop.f32.mrf.mxu0
      %3638 = vmatprep.mubr.bf16.mxu0 0
      %3639 = vmatmul.mubr.bf16.gmra.mxu0 %v3541
      %v3640 = vpop.f32.mrf.mxu0
      %v3641 = vadd.f32 0.0, %v3640
      %v3642 = vpop.f32.mrf.mxu0
      %v3643 = vpop.f32.mrf.mxu0
      %v3644 = vadd.f32 0.0, %v3643
      %v3645 = vpop.f32.mrf.mxu0
      %3646 = vmatprep.mubr.bf16.mxu0 0
      %3647 = vmatmul.mubr.bf16.gmra.mxu0 %v3544
      %v3648 = vpop.f32.mrf.mxu0
      %v3649 = vadd.f32 0.0, %v3648
      %v3650 = vpop.f32.mrf.mxu0
      %v3651 = vpop.f32.mrf.mxu0
      %v3652 = vadd.f32 0.0, %v3651
      %v3653 = vpop.f32.mrf.mxu0
      %3654 = vmatprep.mubr.bf16.mxu0 0
      %3655 = vmatmul.mubr.bf16.gmra.mxu0 %v3547
      %v3656 = vpop.f32.mrf.mxu0
      %v3657 = vadd.f32 0.0, %v3656
      %v3658 = vpop.f32.mrf.mxu0
      %v3659 = vpop.f32.mrf.mxu0
      %v3660 = vadd.f32 0.0, %v3659
      %v3661 = vpop.f32.mrf.mxu0
      %3662 = vmatprep.mubr.bf16.mxu0 0
      %3663 = vmatmul.mubr.bf16.gmra.mxu0 %v3550
      %v3664 = vpop.f32.mrf.mxu0
      %v3665 = vadd.f32 0.0, %v3664
      %v3666 = vpop.f32.mrf.mxu0
      %v3667 = vpop.f32.mrf.mxu0
      %v3668 = vadd.f32 0.0, %v3667
      %v3669 = vpop.f32.mrf.mxu0
      %3670 = vmatprep.mubr.bf16.mxu0 0
      %3671 = vmatmul.mubr.bf16.gmra.mxu0 %v3553
      %v3672 = vpop.f32.mrf.mxu0
      %v3673 = vadd.f32 0.0, %v3672
      %v3674 = vpop.f32.mrf.mxu0
      %v3675 = vpop.f32.mrf.mxu0
      %v3676 = vadd.f32 0.0, %v3675
      %v3677 = vpop.f32.mrf.mxu0
      %3678 = vmatprep.mubr.bf16.mxu0 0
      %3679 = vmatmul.mubr.bf16.gmra.mxu0 %v3556
      %v3680 = vpop.f32.mrf.mxu0
      %v3681 = vadd.f32 0.0, %v3680
      %v3682 = vpop.f32.mrf.mxu0
      %v3683 = vpop.f32.mrf.mxu0
      %v3684 = vadd.f32 0.0, %v3683
      %v3685 = vpop.f32.mrf.mxu0
      %3686 = vmatprep.mubr.bf16.mxu0 0
      %3687 = vmatmul.mubr.bf16.gmra.mxu0 %v3559
      %v3688 = vpop.f32.mrf.mxu0
      %v3689 = vadd.f32 0.0, %v3688
      %v3690 = vpop.f32.mrf.mxu0
      %v3691 = vpop.f32.mrf.mxu0
      %v3692 = vadd.f32 0.0, %v3691
      %v3693 = vpop.f32.mrf.mxu0
      %3694 = vmatprep.mubr.bf16.mxu0 0
      %3695 = vmatmul.mubr.bf16.gmra.mxu0 %v3562
      %v3696 = vpop.f32.mrf.mxu0
      %v3697 = vadd.f32 0.0, %v3696
      %v3698 = vpop.f32.mrf.mxu0
      %v3699 = vpop.f32.mrf.mxu0
      %v3700 = vadd.f32 0.0, %v3699
      %v3701 = vpop.f32.mrf.mxu0
      %3702 = vmatprep.mubr.bf16.mxu0 0
      %3703 = vmatmul.mubr.bf16.gmra.mxu0 %v3565
      %v3704 = vpop.f32.mrf.mxu0
      %v3705 = vadd.f32 0.0, %v3704
      %v3706 = vpop.f32.mrf.mxu0
      %v3707 = vpop.f32.mrf.mxu0
      %v3708 = vadd.f32 0.0, %v3707
      %v3709 = vpop.f32.mrf.mxu0
      %3710 = vmatprep.mubr.bf16.mxu0 0
      %3711 = vmatmul.mubr.bf16.gmra.mxu0 %v3568
      %v3712 = vpop.f32.mrf.mxu0
      %v3713 = vadd.f32 0.0, %v3712
      %v3714 = vpop.f32.mrf.mxu0
      %v3715 = vpop.f32.mrf.mxu0
      %v3716 = vadd.f32 0.0, %v3715
      %v3717 = vpop.f32.mrf.mxu0
      %3718 = vmatprep.mubr.bf16.mxu0 0
      %3719 = vmatmul.mubr.bf16.gmra.mxu0 %v3571
      %v3720 = vpop.f32.mrf.mxu0
      %v3721 = vadd.f32 0.0, %v3720
      %v3722 = vpop.f32.mrf.mxu0
      %v3723 = vpop.f32.mrf.mxu0
      %v3724 = vadd.f32 0.0, %v3723
      %v3725 = vpop.f32.mrf.mxu0
      %3726 = vmatprep.mubr.bf16.mxu0 0
      %3727 = vmatmul.mubr.bf16.gmra.mxu0 %v3574
      %v3728 = vpop.f32.mrf.mxu0
      %v3729 = vadd.f32 0.0, %v3728
      %v3730 = vpop.f32.mrf.mxu0
      %v3731 = vpop.f32.mrf.mxu0
      %v3732 = vadd.f32 0.0, %v3731
      %v3733 = vpop.f32.mrf.mxu0
      %3734 = vmatprep.mubr.bf16.mxu0 0
      %3735 = vmatmul.mubr.bf16.gmra.mxu0 %v3577
      %v3736 = vpop.f32.mrf.mxu0
      %v3737 = vadd.f32 0.0, %v3736
      %v3738 = vpop.f32.mrf.mxu0
      %v3739 = vpop.f32.mrf.mxu0
      %v3740 = vadd.f32 0.0, %v3739
      %v3741 = vpop.f32.mrf.mxu0
      %3742 = vdwg.mxu0
      %v3775 = vunpack.c.l.b16 %v3382
      %v3776 = vunpack.c.l.b16 %v3383
      %v3777 = vunpack.c.l.b16 %v3384
      %v3778 = vunpack.c.l.b16 %v3385
      %v3779 = vunpack.c.l.b16 %v3386
      %v3780 = vunpack.c.l.b16 %v3387
      %v3781 = vunpack.c.l.b16 %v3388
      %v3782 = vunpack.c.l.b16 %v3389
      %v3783 = vunpack.c.l.b16 %v3390
      %v3784 = vunpack.c.l.b16 %v3391
      %v3785 = vunpack.c.l.b16 %v3392
      %v3786 = vunpack.c.l.b16 %v3393
      %v3787 = vunpack.c.l.b16 %v3394
      %v3788 = vunpack.c.l.b16 %v3395
      %v3789 = vunpack.c.l.b16 %v3396
      %v3790 = vunpack.c.l.b16 %v3397
      %v3791 = vunpack.c.l.b16 %v3398
      %v3792 = vunpack.c.l.b16 %v3399
      %v3793 = vunpack.c.l.b16 %v3400
      %v3794 = vunpack.c.l.b16 %v3401
      %v3795 = vunpack.c.l.b16 %v3402
      %v3796 = vunpack.c.l.b16 %v3403
      %v3797 = vunpack.c.l.b16 %v3404
      %v3798 = vunpack.c.l.b16 %v3405
      %v3799 = vunpack.c.l.b16 %v3406
      %v3800 = vunpack.c.l.b16 %v3407
      %v3801 = vunpack.c.l.b16 %v3408
      %v3802 = vunpack.c.l.b16 %v3409
      %v3803 = vunpack.c.l.b16 %v3410
      %v3804 = vunpack.c.l.b16 %v3411
      %v3805 = vunpack.c.l.b16 %v3412
      %v3806 = vunpack.c.l.b16 %v3413
      %v3807 = vpack.c.b16 %v3776, %v3775
      %v3808 = vpack.c.b16 %v3778, %v3777
      %v3809 = vpack.c.b16 %v3780, %v3779
      %v3810 = vpack.c.b16 %v3782, %v3781
      %v3811 = vpack.c.b16 %v3784, %v3783
      %v3812 = vpack.c.b16 %v3786, %v3785
      %v3813 = vpack.c.b16 %v3788, %v3787
      %v3814 = vpack.c.b16 %v3790, %v3789
      %v3815 = vpack.c.b16 %v3792, %v3791
      %v3816 = vpack.c.b16 %v3794, %v3793
      %v3817 = vpack.c.b16 %v3796, %v3795
      %v3818 = vpack.c.b16 %v3798, %v3797
      %v3819 = vpack.c.b16 %v3800, %v3799
      %v3820 = vpack.c.b16 %v3802, %v3801
      %v3821 = vpack.c.b16 %v3804, %v3803
      %v3822 = vpack.c.b16 %v3806, %v3805
      %v3824 = vsel %vm1338, %v3807, 0
      %v3827 = vsel %vm1338, %v3808, 0
      %v3830 = vsel %vm1338, %v3809, 0
      %v3833 = vsel %vm1338, %v3810, 0
      %v3836 = vsel %vm1338, %v3811, 0
      %v3839 = vsel %vm1338, %v3812, 0
      %v3842 = vsel %vm1338, %v3813, 0
      %v3845 = vsel %vm1338, %v3814, 0
      %v3848 = vsel %vm1338, %v3815, 0
      %v3851 = vsel %vm1338, %v3816, 0
      %v3854 = vsel %vm1338, %v3817, 0
      %v3857 = vsel %vm1338, %v3818, 0
      %v3860 = vsel %vm1338, %v3819, 0
      %v3863 = vsel %vm1338, %v3820, 0
      %v3866 = vsel %vm1338, %v3821, 0
      %v3869 = vsel %vm1338, %v3822, 0
      %v3872 = vsel %vm1387, %v3415, 0
      %3874 = vmatprep.subr.bf16.mxu0 0
      %3875 = vmatpush1.bf16.msra.mxu0 0
      %3876 = vmatprep.subr.bf16.mxu0 0
      %3877 = vmatpush1.bf16.msra.mxu0 0
      %3878 = vmatprep.subr.bf16.mxu0 0
      %3879 = vmatpush1.bf16.msra.mxu0 0
      %3880 = vmatprep.subr.bf16.mxu0 0
      %3881 = vmatpush1.bf16.msra.mxu0 0
      %3882 = vmatprep.subr.bf16.mxu0 0
      %3883 = vmatpush1.bf16.msra.mxu0 0
      %3884 = vmatprep.subr.bf16.mxu0 0
      %3885 = vmatpush1.bf16.msra.mxu0 0
      %3886 = vmatprep.subr.bf16.mxu0 0
      %3887 = vmatpush1.bf16.msra.mxu0 0
      %3888 = vmatprep.subr.bf16.mxu0 0
      %3889 = vmatpush1.bf16.msra.mxu0 %v3872
      %3890 = vmatprep.subr.bf16.mxu0 0
      %3891 = vmatpush2.bf16.msra.mxu0 0
      %3892 = vmatprep.subr.bf16.mxu0 0
      %3893 = vmatpush2.bf16.msra.mxu0 0
      %3894 = vmatprep.subr.bf16.mxu0 0
      %3895 = vmatpush2.bf16.msra.mxu0 0
      %3896 = vmatprep.subr.bf16.mxu0 0
      %3897 = vmatpush2.bf16.msra.mxu0 0
      %3898 = vmatprep.subr.bf16.mxu0 0
      %3899 = vmatpush2.bf16.msra.mxu0 0
      %3900 = vmatprep.subr.bf16.mxu0 0
      %3901 = vmatpush2.bf16.msra.mxu0 0
      %3902 = vmatprep.subr.bf16.mxu0 0
      %3903 = vmatpush2.bf16.msra.mxu0 0
      %3904 = vmatprep.subr.bf16.mxu0 0
      %3905 = vmatpush2.bf16.msra.mxu0 0
      %3906 = vmatprep.mubr.bf16.mxu0 0
      %3907 = vmatmul.mubr.bf16.gmra.mxu0 %v3824
      %v3908 = vpop.f32.mrf.mxu0
      %v3909 = vadd.f32 %v3617, %v3908
      %v3910 = vpop.f32.mrf.mxu0
      %v3911 = vpop.f32.mrf.mxu0
      %v3912 = vadd.f32 %v3620, %v3911
      %v3913 = vpop.f32.mrf.mxu0
      %3914 = vmatprep.mubr.bf16.mxu0 0
      %3915 = vmatmul.mubr.bf16.gmra.mxu0 %v3827
      %v3916 = vpop.f32.mrf.mxu0
      %v3917 = vadd.f32 %v3625, %v3916
      %v3918 = vpop.f32.mrf.mxu0
      %v3919 = vpop.f32.mrf.mxu0
      %v3920 = vadd.f32 %v3628, %v3919
      %v3921 = vpop.f32.mrf.mxu0
      %3922 = vmatprep.mubr.bf16.mxu0 0
      %3923 = vmatmul.mubr.bf16.gmra.mxu0 %v3830
      %v3924 = vpop.f32.mrf.mxu0
      %v3925 = vadd.f32 %v3633, %v3924
      %v3926 = vpop.f32.mrf.mxu0
      %v3927 = vpop.f32.mrf.mxu0
      %v3928 = vadd.f32 %v3636, %v3927
      %v3929 = vpop.f32.mrf.mxu0
      %3930 = vmatprep.mubr.bf16.mxu0 0
      %3931 = vmatmul.mubr.bf16.gmra.mxu0 %v3833
      %v3932 = vpop.f32.mrf.mxu0
      %v3933 = vadd.f32 %v3641, %v3932
      %v3934 = vpop.f32.mrf.mxu0
      %v3935 = vpop.f32.mrf.mxu0
      %v3936 = vadd.f32 %v3644, %v3935
      %v3937 = vpop.f32.mrf.mxu0
      %3938 = vmatprep.mubr.bf16.mxu0 0
      %3939 = vmatmul.mubr.bf16.gmra.mxu0 %v3836
      %v3940 = vpop.f32.mrf.mxu0
      %v3941 = vadd.f32 %v3649, %v3940
      %v3942 = vpop.f32.mrf.mxu0
      %v3943 = vpop.f32.mrf.mxu0
      %v3944 = vadd.f32 %v3652, %v3943
      %v3945 = vpop.f32.mrf.mxu0
      %3946 = vmatprep.mubr.bf16.mxu0 0
      %3947 = vmatmul.mubr.bf16.gmra.mxu0 %v3839
      %v3948 = vpop.f32.mrf.mxu0
      %v3949 = vadd.f32 %v3657, %v3948
      %v3950 = vpop.f32.mrf.mxu0
      %v3951 = vpop.f32.mrf.mxu0
      %v3952 = vadd.f32 %v3660, %v3951
      %v3953 = vpop.f32.mrf.mxu0
      %3954 = vmatprep.mubr.bf16.mxu0 0
      %3955 = vmatmul.mubr.bf16.gmra.mxu0 %v3842
      %v3956 = vpop.f32.mrf.mxu0
      %v3957 = vadd.f32 %v3665, %v3956
      %v3958 = vpop.f32.mrf.mxu0
      %v3959 = vpop.f32.mrf.mxu0
      %v3960 = vadd.f32 %v3668, %v3959
      %v3961 = vpop.f32.mrf.mxu0
      %3962 = vmatprep.mubr.bf16.mxu0 0
      %3963 = vmatmul.mubr.bf16.gmra.mxu0 %v3845
      %v3964 = vpop.f32.mrf.mxu0
      %v3965 = vadd.f32 %v3673, %v3964
      %v3966 = vpop.f32.mrf.mxu0
      %v3967 = vpop.f32.mrf.mxu0
      %v3968 = vadd.f32 %v3676, %v3967
      %v3969 = vpop.f32.mrf.mxu0
      %3970 = vmatprep.mubr.bf16.mxu0 0
      %3971 = vmatmul.mubr.bf16.gmra.mxu0 %v3848
      %v3972 = vpop.f32.mrf.mxu0
      %v3973 = vadd.f32 %v3681, %v3972
      %v3974 = vpop.f32.mrf.mxu0
      %v3975 = vpop.f32.mrf.mxu0
      %v3976 = vadd.f32 %v3684, %v3975
      %v3977 = vpop.f32.mrf.mxu0
      %3978 = vmatprep.mubr.bf16.mxu0 0
      %3979 = vmatmul.mubr.bf16.gmra.mxu0 %v3851
      %v3980 = vpop.f32.mrf.mxu0
      %v3981 = vadd.f32 %v3689, %v3980
      %v3982 = vpop.f32.mrf.mxu0
      %v3983 = vpop.f32.mrf.mxu0
      %v3984 = vadd.f32 %v3692, %v3983
      %v3985 = vpop.f32.mrf.mxu0
      %3986 = vmatprep.mubr.bf16.mxu0 0
      %3987 = vmatmul.mubr.bf16.gmra.mxu0 %v3854
      %v3988 = vpop.f32.mrf.mxu0
      %v3989 = vadd.f32 %v3697, %v3988
      %v3990 = vpop.f32.mrf.mxu0
      %v3991 = vpop.f32.mrf.mxu0
      %v3992 = vadd.f32 %v3700, %v3991
      %v3993 = vpop.f32.mrf.mxu0
      %3994 = vmatprep.mubr.bf16.mxu0 0
      %3995 = vmatmul.mubr.bf16.gmra.mxu0 %v3857
      %v3996 = vpop.f32.mrf.mxu0
      %v3997 = vadd.f32 %v3705, %v3996
      %v3998 = vpop.f32.mrf.mxu0
      %v3999 = vpop.f32.mrf.mxu0
      %v4000 = vadd.f32 %v3708, %v3999
      %v4001 = vpop.f32.mrf.mxu0
      %4002 = vmatprep.mubr.bf16.mxu0 0
      %4003 = vmatmul.mubr.bf16.gmra.mxu0 %v3860
      %v4004 = vpop.f32.mrf.mxu0
      %v4005 = vadd.f32 %v3713, %v4004
      %v4006 = vpop.f32.mrf.mxu0
      %v4007 = vpop.f32.mrf.mxu0
      %v4008 = vadd.f32 %v3716, %v4007
      %v4009 = vpop.f32.mrf.mxu0
      %4010 = vmatprep.mubr.bf16.mxu0 0
      %4011 = vmatmul.mubr.bf16.gmra.mxu0 %v3863
      %v4012 = vpop.f32.mrf.mxu0
      %v4013 = vadd.f32 %v3721, %v4012
      %v4014 = vpop.f32.mrf.mxu0
      %v4015 = vpop.f32.mrf.mxu0
      %v4016 = vadd.f32 %v3724, %v4015
      %v4017 = vpop.f32.mrf.mxu0
      %4018 = vmatprep.mubr.bf16.mxu0 0
      %4019 = vmatmul.mubr.bf16.gmra.mxu0 %v3866
      %v4020 = vpop.f32.mrf.mxu0
      %v4021 = vadd.f32 %v3729, %v4020
      %v4022 = vpop.f32.mrf.mxu0
      %v4023 = vpop.f32.mrf.mxu0
      %v4024 = vadd.f32 %v3732, %v4023
      %v4025 = vpop.f32.mrf.mxu0
      %4026 = vmatprep.mubr.bf16.mxu0 0
      %4027 = vmatmul.mubr.bf16.gmra.mxu0 %v3869
      %v4028 = vpop.f32.mrf.mxu0
      %v4029 = vadd.f32 %v3737, %v4028
      %v4030 = vpop.f32.mrf.mxu0
      %v4031 = vpop.f32.mrf.mxu0
      %v4032 = vadd.f32 %v3740, %v4031
      %v4033 = vpop.f32.mrf.mxu0
      %4034 = vdwg.mxu0
      %s4035 = scalar_lea.vmem [#allocation2], 304
      %v4036 = vld [vmem:[%s4035] sm:$0xf]
      %v4037 = vld [vmem:[%s4035 + $0x4] sm:$0xf]
      %v4038 = vld [vmem:[%s4035 + $0x8] sm:$0xf]
      %v4039 = vld [vmem:[%s4035 + $0xc] sm:$0xf]
      %v4040 = vld [vmem:[%s4035 + $0x10] sm:$0xf]
      %v4041 = vld [vmem:[%s4035 + $0x14] sm:$0xf]
      %v4042 = vld [vmem:[%s4035 + $0x18] sm:$0xf]
      %v4043 = vld [vmem:[%s4035 + $0x1c] sm:$0xf]
      %v4044 = vld [vmem:[%s4035 + $0x20] sm:$0xf]
      %v4045 = vld [vmem:[%s4035 + $0x24] sm:$0xf]
      %v4046 = vld [vmem:[%s4035 + $0x28] sm:$0xf]
      %v4047 = vld [vmem:[%s4035 + $0x2c] sm:$0xf]
      %v4048 = vld [vmem:[%s4035 + $0x30] sm:$0xf]
      %v4049 = vld [vmem:[%s4035 + $0x34] sm:$0xf]
      %v4050 = vld [vmem:[%s4035 + $0x38] sm:$0xf]
      %v4051 = vld [vmem:[%s4035 + $0x3c] sm:$0xf]
      %v4052 = vld [vmem:[%s4035 + $0x40] sm:$0xf]
      %v4053 = vld [vmem:[%s4035 + $0x44] sm:$0xf]
      %v4054 = vld [vmem:[%s4035 + $0x48] sm:$0xf]
      %v4055 = vld [vmem:[%s4035 + $0x4c] sm:$0xf]
      %v4056 = vld [vmem:[%s4035 + $0x50] sm:$0xf]
      %v4057 = vld [vmem:[%s4035 + $0x54] sm:$0xf]
      %v4058 = vld [vmem:[%s4035 + $0x58] sm:$0xf]
      %v4059 = vld [vmem:[%s4035 + $0x5c] sm:$0xf]
      %v4060 = vld [vmem:[%s4035 + $0x60] sm:$0xf]
      %v4061 = vld [vmem:[%s4035 + $0x64] sm:$0xf]
      %v4062 = vld [vmem:[%s4035 + $0x68] sm:$0xf]
      %v4063 = vld [vmem:[%s4035 + $0x6c] sm:$0xf]
      %v4064 = vld [vmem:[%s4035 + $0x70] sm:$0xf]
      %v4065 = vld [vmem:[%s4035 + $0x74] sm:$0xf]
      %v4066 = vld [vmem:[%s4035 + $0x78] sm:$0xf]
      %v4067 = vld [vmem:[%s4035 + $0x7c] sm:$0xf]
      %s4068 = scalar_lea.vmem %s223, 16
      %v4069 = vld [vmem:[%s4068] sm:$0x3]
      %v4102 = vunpack.c.l.b16 %v4036
      %v4103 = vunpack.c.l.b16 %v4037
      %v4104 = vunpack.c.l.b16 %v4038
      %v4105 = vunpack.c.l.b16 %v4039
      %v4106 = vunpack.c.l.b16 %v4040
      %v4107 = vunpack.c.l.b16 %v4041
      %v4108 = vunpack.c.l.b16 %v4042
      %v4109 = vunpack.c.l.b16 %v4043
      %v4110 = vunpack.c.l.b16 %v4044
      %v4111 = vunpack.c.l.b16 %v4045
      %v4112 = vunpack.c.l.b16 %v4046
      %v4113 = vunpack.c.l.b16 %v4047
      %v4114 = vunpack.c.l.b16 %v4048
      %v4115 = vunpack.c.l.b16 %v4049
      %v4116 = vunpack.c.l.b16 %v4050
      %v4117 = vunpack.c.l.b16 %v4051
      %v4118 = vunpack.c.l.b16 %v4052
      %v4119 = vunpack.c.l.b16 %v4053
      %v4120 = vunpack.c.l.b16 %v4054
      %v4121 = vunpack.c.l.b16 %v4055
      %v4122 = vunpack.c.l.b16 %v4056
      %v4123 = vunpack.c.l.b16 %v4057
      %v4124 = vunpack.c.l.b16 %v4058
      %v4125 = vunpack.c.l.b16 %v4059
      %v4126 = vunpack.c.l.b16 %v4060
      %v4127 = vunpack.c.l.b16 %v4061
      %v4128 = vunpack.c.l.b16 %v4062
      %v4129 = vunpack.c.l.b16 %v4063
      %v4130 = vunpack.c.l.b16 %v4064
      %v4131 = vunpack.c.l.b16 %v4065
      %v4132 = vunpack.c.l.b16 %v4066
      %v4133 = vunpack.c.l.b16 %v4067
      %v4134 = vpack.c.b16 %v4103, %v4102
      %v4135 = vpack.c.b16 %v4105, %v4104
      %v4136 = vpack.c.b16 %v4107, %v4106
      %v4137 = vpack.c.b16 %v4109, %v4108
      %v4138 = vpack.c.b16 %v4111, %v4110
      %v4139 = vpack.c.b16 %v4113, %v4112
      %v4140 = vpack.c.b16 %v4115, %v4114
      %v4141 = vpack.c.b16 %v4117, %v4116
      %v4142 = vpack.c.b16 %v4119, %v4118
      %v4143 = vpack.c.b16 %v4121, %v4120
      %v4144 = vpack.c.b16 %v4123, %v4122
      %v4145 = vpack.c.b16 %v4125, %v4124
      %v4146 = vpack.c.b16 %v4127, %v4126
      %v4147 = vpack.c.b16 %v4129, %v4128
      %v4148 = vpack.c.b16 %v4131, %v4130
      %v4149 = vpack.c.b16 %v4133, %v4132
      %v4151 = vsel %vm1338, %v4134, 0
      %v4154 = vsel %vm1338, %v4135, 0
      %v4157 = vsel %vm1338, %v4136, 0
      %v4160 = vsel %vm1338, %v4137, 0
      %v4163 = vsel %vm1338, %v4138, 0
      %v4166 = vsel %vm1338, %v4139, 0
      %v4169 = vsel %vm1338, %v4140, 0
      %v4172 = vsel %vm1338, %v4141, 0
      %v4175 = vsel %vm1338, %v4142, 0
      %v4178 = vsel %vm1338, %v4143, 0
      %v4181 = vsel %vm1338, %v4144, 0
      %v4184 = vsel %vm1338, %v4145, 0
      %v4187 = vsel %vm1338, %v4146, 0
      %v4190 = vsel %vm1338, %v4147, 0
      %v4193 = vsel %vm1338, %v4148, 0
      %v4196 = vsel %vm1338, %v4149, 0
      %v4199 = vsel %vm1387, %v4069, 0
      %4201 = vmatprep.subr.bf16.mxu0 0
      %4202 = vmatpush1.bf16.msra.mxu0 0
      %4203 = vmatprep.subr.bf16.mxu0 0
      %4204 = vmatpush1.bf16.msra.mxu0 0
      %4205 = vmatprep.subr.bf16.mxu0 0
      %4206 = vmatpush1.bf16.msra.mxu0 0
      %4207 = vmatprep.subr.bf16.mxu0 0
      %4208 = vmatpush1.bf16.msra.mxu0 0
      %4209 = vmatprep.subr.bf16.mxu0 0
      %4210 = vmatpush1.bf16.msra.mxu0 0
      %4211 = vmatprep.subr.bf16.mxu0 0
      %4212 = vmatpush1.bf16.msra.mxu0 0
      %4213 = vmatprep.subr.bf16.mxu0 0
      %4214 = vmatpush1.bf16.msra.mxu0 0
      %4215 = vmatprep.subr.bf16.mxu0 0
      %4216 = vmatpush1.bf16.msra.mxu0 %v4199
      %4217 = vmatprep.subr.bf16.mxu0 0
      %4218 = vmatpush2.bf16.msra.mxu0 0
      %4219 = vmatprep.subr.bf16.mxu0 0
      %4220 = vmatpush2.bf16.msra.mxu0 0
      %4221 = vmatprep.subr.bf16.mxu0 0
      %4222 = vmatpush2.bf16.msra.mxu0 0
      %4223 = vmatprep.subr.bf16.mxu0 0
      %4224 = vmatpush2.bf16.msra.mxu0 0
      %4225 = vmatprep.subr.bf16.mxu0 0
      %4226 = vmatpush2.bf16.msra.mxu0 0
      %4227 = vmatprep.subr.bf16.mxu0 0
      %4228 = vmatpush2.bf16.msra.mxu0 0
      %4229 = vmatprep.subr.bf16.mxu0 0
      %4230 = vmatpush2.bf16.msra.mxu0 0
      %4231 = vmatprep.subr.bf16.mxu0 0
      %4232 = vmatpush2.bf16.msra.mxu0 0
      %4233 = vmatprep.mubr.bf16.mxu0 0
      %4234 = vmatmul.mubr.bf16.gmra.mxu0 %v4151
      %v4235 = vpop.f32.mrf.mxu0
      %v4236 = vadd.f32 0.0, %v4235
      %v4237 = vpop.f32.mrf.mxu0
      %v4238 = vpop.f32.mrf.mxu0
      %v4239 = vadd.f32 0.0, %v4238
      %v4240 = vpop.f32.mrf.mxu0
      %4241 = vmatprep.mubr.bf16.mxu0 0
      %4242 = vmatmul.mubr.bf16.gmra.mxu0 %v4154
      %v4243 = vpop.f32.mrf.mxu0
      %v4244 = vadd.f32 0.0, %v4243
      %v4245 = vpop.f32.mrf.mxu0
      %v4246 = vpop.f32.mrf.mxu0
      %v4247 = vadd.f32 0.0, %v4246
      %v4248 = vpop.f32.mrf.mxu0
      %4249 = vmatprep.mubr.bf16.mxu0 0
      %4250 = vmatmul.mubr.bf16.gmra.mxu0 %v4157
      %v4251 = vpop.f32.mrf.mxu0
      %v4252 = vadd.f32 0.0, %v4251
      %v4253 = vpop.f32.mrf.mxu0
      %v4254 = vpop.f32.mrf.mxu0
      %v4255 = vadd.f32 0.0, %v4254
      %v4256 = vpop.f32.mrf.mxu0
      %4257 = vmatprep.mubr.bf16.mxu0 0
      %4258 = vmatmul.mubr.bf16.gmra.mxu0 %v4160
      %v4259 = vpop.f32.mrf.mxu0
      %v4260 = vadd.f32 0.0, %v4259
      %v4261 = vpop.f32.mrf.mxu0
      %v4262 = vpop.f32.mrf.mxu0
      %v4263 = vadd.f32 0.0, %v4262
      %v4264 = vpop.f32.mrf.mxu0
      %4265 = vmatprep.mubr.bf16.mxu0 0
      %4266 = vmatmul.mubr.bf16.gmra.mxu0 %v4163
      %v4267 = vpop.f32.mrf.mxu0
      %v4268 = vadd.f32 0.0, %v4267
      %v4269 = vpop.f32.mrf.mxu0
      %v4270 = vpop.f32.mrf.mxu0
      %v4271 = vadd.f32 0.0, %v4270
      %v4272 = vpop.f32.mrf.mxu0
      %4273 = vmatprep.mubr.bf16.mxu0 0
      %4274 = vmatmul.mubr.bf16.gmra.mxu0 %v4166
      %v4275 = vpop.f32.mrf.mxu0
      %v4276 = vadd.f32 0.0, %v4275
      %v4277 = vpop.f32.mrf.mxu0
      %v4278 = vpop.f32.mrf.mxu0
      %v4279 = vadd.f32 0.0, %v4278
      %v4280 = vpop.f32.mrf.mxu0
      %4281 = vmatprep.mubr.bf16.mxu0 0
      %4282 = vmatmul.mubr.bf16.gmra.mxu0 %v4169
      %v4283 = vpop.f32.mrf.mxu0
      %v4284 = vadd.f32 0.0, %v4283
      %v4285 = vpop.f32.mrf.mxu0
      %v4286 = vpop.f32.mrf.mxu0
      %v4287 = vadd.f32 0.0, %v4286
      %v4288 = vpop.f32.mrf.mxu0
      %4289 = vmatprep.mubr.bf16.mxu0 0
      %4290 = vmatmul.mubr.bf16.gmra.mxu0 %v4172
      %v4291 = vpop.f32.mrf.mxu0
      %v4292 = vadd.f32 0.0, %v4291
      %v4293 = vpop.f32.mrf.mxu0
      %v4294 = vpop.f32.mrf.mxu0
      %v4295 = vadd.f32 0.0, %v4294
      %v4296 = vpop.f32.mrf.mxu0
      %4297 = vmatprep.mubr.bf16.mxu0 0
      %4298 = vmatmul.mubr.bf16.gmra.mxu0 %v4175
      %v4299 = vpop.f32.mrf.mxu0
      %v4300 = vadd.f32 0.0, %v4299
      %v4301 = vpop.f32.mrf.mxu0
      %v4302 = vpop.f32.mrf.mxu0
      %v4303 = vadd.f32 0.0, %v4302
      %v4304 = vpop.f32.mrf.mxu0
      %4305 = vmatprep.mubr.bf16.mxu0 0
      %4306 = vmatmul.mubr.bf16.gmra.mxu0 %v4178
      %v4307 = vpop.f32.mrf.mxu0
      %v4308 = vadd.f32 0.0, %v4307
      %v4309 = vpop.f32.mrf.mxu0
      %v4310 = vpop.f32.mrf.mxu0
      %v4311 = vadd.f32 0.0, %v4310
      %v4312 = vpop.f32.mrf.mxu0
      %4313 = vmatprep.mubr.bf16.mxu0 0
      %4314 = vmatmul.mubr.bf16.gmra.mxu0 %v4181
      %v4315 = vpop.f32.mrf.mxu0
      %v4316 = vadd.f32 0.0, %v4315
      %v4317 = vpop.f32.mrf.mxu0
      %v4318 = vpop.f32.mrf.mxu0
      %v4319 = vadd.f32 0.0, %v4318
      %v4320 = vpop.f32.mrf.mxu0
      %4321 = vmatprep.mubr.bf16.mxu0 0
      %4322 = vmatmul.mubr.bf16.gmra.mxu0 %v4184
      %v4323 = vpop.f32.mrf.mxu0
      %v4324 = vadd.f32 0.0, %v4323
      %v4325 = vpop.f32.mrf.mxu0
      %v4326 = vpop.f32.mrf.mxu0
      %v4327 = vadd.f32 0.0, %v4326
      %v4328 = vpop.f32.mrf.mxu0
      %4329 = vmatprep.mubr.bf16.mxu0 0
      %4330 = vmatmul.mubr.bf16.gmra.mxu0 %v4187
      %v4331 = vpop.f32.mrf.mxu0
      %v4332 = vadd.f32 0.0, %v4331
      %v4333 = vpop.f32.mrf.mxu0
      %v4334 = vpop.f32.mrf.mxu0
      %v4335 = vadd.f32 0.0, %v4334
      %v4336 = vpop.f32.mrf.mxu0
      %4337 = vmatprep.mubr.bf16.mxu0 0
      %4338 = vmatmul.mubr.bf16.gmra.mxu0 %v4190
      %v4339 = vpop.f32.mrf.mxu0
      %v4340 = vadd.f32 0.0, %v4339
      %v4341 = vpop.f32.mrf.mxu0
      %v4342 = vpop.f32.mrf.mxu0
      %v4343 = vadd.f32 0.0, %v4342
      %v4344 = vpop.f32.mrf.mxu0
      %4345 = vmatprep.mubr.bf16.mxu0 0
      %4346 = vmatmul.mubr.bf16.gmra.mxu0 %v4193
      %v4347 = vpop.f32.mrf.mxu0
      %v4348 = vadd.f32 0.0, %v4347
      %v4349 = vpop.f32.mrf.mxu0
      %v4350 = vpop.f32.mrf.mxu0
      %v4351 = vadd.f32 0.0, %v4350
      %v4352 = vpop.f32.mrf.mxu0
      %4353 = vmatprep.mubr.bf16.mxu0 0
      %4354 = vmatmul.mubr.bf16.gmra.mxu0 %v4196
      %v4355 = vpop.f32.mrf.mxu0
      %v4356 = vadd.f32 0.0, %v4355
      %v4357 = vpop.f32.mrf.mxu0
      %v4358 = vpop.f32.mrf.mxu0
      %v4359 = vadd.f32 0.0, %v4358
      %v4360 = vpop.f32.mrf.mxu0
      %4361 = vdwg.mxu0
      %v4362 = vadd.f32 %v3909, %v4236
      %v4363 = vadd.f32 %v3912, %v4239
      %v4364 = vadd.f32 %v3917, %v4244
      %v4365 = vadd.f32 %v3920, %v4247
      %v4366 = vadd.f32 %v3925, %v4252
      %v4367 = vadd.f32 %v3928, %v4255
      %v4368 = vadd.f32 %v3933, %v4260
      %v4369 = vadd.f32 %v3936, %v4263
      %v4370 = vadd.f32 %v3941, %v4268
      %v4371 = vadd.f32 %v3944, %v4271
      %v4372 = vadd.f32 %v3949, %v4276
      %v4373 = vadd.f32 %v3952, %v4279
      %v4374 = vadd.f32 %v3957, %v4284
      %v4375 = vadd.f32 %v3960, %v4287
      %v4376 = vadd.f32 %v3965, %v4292
      %v4377 = vadd.f32 %v3968, %v4295
      %v4378 = vadd.f32 %v3973, %v4300
      %v4379 = vadd.f32 %v3976, %v4303
      %v4380 = vadd.f32 %v3981, %v4308
      %v4381 = vadd.f32 %v3984, %v4311
      %v4382 = vadd.f32 %v3989, %v4316
      %v4383 = vadd.f32 %v3992, %v4319
      %v4384 = vadd.f32 %v3997, %v4324
      %v4385 = vadd.f32 %v4000, %v4327
      %v4386 = vadd.f32 %v4005, %v4332
      %v4387 = vadd.f32 %v4008, %v4335
      %v4388 = vadd.f32 %v4013, %v4340
      %v4389 = vadd.f32 %v4016, %v4343
      %v4390 = vadd.f32 %v4021, %v4348
      %v4391 = vadd.f32 %v4024, %v4351
      %v4392 = vadd.f32 %v4029, %v4356
      %v4393 = vadd.f32 %v4032, %v4359
      %v4394 = vld [vmem:[#allocation3] sm:$0xff]
      %v4395 = vld [vmem:[#allocation3 + $0x8] sm:$0xff]
      %v4396 = vld [vmem:[#allocation3 + $0x10] sm:$0xff]
      %v4397 = vld [vmem:[#allocation3 + $0x18] sm:$0xff]
      %v4398 = vld [vmem:[#allocation3 + $0x20] sm:$0xff]
      %v4399 = vld [vmem:[#allocation3 + $0x28] sm:$0xff]
      %v4400 = vld [vmem:[#allocation3 + $0x30] sm:$0xff]
      %v4401 = vld [vmem:[#allocation3 + $0x38] sm:$0xff]
      %v4402 = vld [vmem:[#allocation3 + $0x40] sm:$0xff]
      %v4403 = vld [vmem:[#allocation3 + $0x48] sm:$0xff]
      %v4404 = vld [vmem:[#allocation3 + $0x50] sm:$0xff]
      %v4405 = vld [vmem:[#allocation3 + $0x58] sm:$0xff]
      %v4406 = vld [vmem:[#allocation3 + $0x60] sm:$0xff]
      %v4407 = vld [vmem:[#allocation3 + $0x68] sm:$0xff]
      %v4408 = vld [vmem:[#allocation3 + $0x70] sm:$0xff]
      %v4409 = vld [vmem:[#allocation3 + $0x78] sm:$0xff]
      %v4410 = vld [vmem:[#allocation3 + $0x80] sm:$0xff]
      %v4411 = vld [vmem:[#allocation3 + $0x88] sm:$0xff]
      %v4412 = vld [vmem:[#allocation3 + $0x90] sm:$0xff]
      %v4413 = vld [vmem:[#allocation3 + $0x98] sm:$0xff]
      %v4414 = vld [vmem:[#allocation3 + $0xa0] sm:$0xff]
      %v4415 = vld [vmem:[#allocation3 + $0xa8] sm:$0xff]
      %v4416 = vld [vmem:[#allocation3 + $0xb0] sm:$0xff]
      %v4417 = vld [vmem:[#allocation3 + $0xb8] sm:$0xff]
      %v4418 = vld [vmem:[#allocation3 + $0xc0] sm:$0xff]
      %v4419 = vld [vmem:[#allocation3 + $0xc8] sm:$0xff]
      %v4420 = vld [vmem:[#allocation3 + $0xd0] sm:$0xff]
      %v4421 = vld [vmem:[#allocation3 + $0xd8] sm:$0xff]
      %v4422 = vld [vmem:[#allocation3 + $0xe0] sm:$0xff]
      %v4423 = vld [vmem:[#allocation3 + $0xe8] sm:$0xff]
      %v4424 = vld [vmem:[#allocation3 + $0xf0] sm:$0xff]
      %v4425 = vld [vmem:[#allocation3 + $0xf8] sm:$0xff]
      %v4426 = vadd.f32 %v4394, %v4362
      %v4427 = vadd.f32 %v4395, %v4363
      %v4428 = vadd.f32 %v4396, %v4364
      %v4429 = vadd.f32 %v4397, %v4365
      %v4430 = vadd.f32 %v4398, %v4366
      %v4431 = vadd.f32 %v4399, %v4367
      %v4432 = vadd.f32 %v4400, %v4368
      %v4433 = vadd.f32 %v4401, %v4369
      %v4434 = vadd.f32 %v4402, %v4370
      %v4435 = vadd.f32 %v4403, %v4371
      %v4436 = vadd.f32 %v4404, %v4372
      %v4437 = vadd.f32 %v4405, %v4373
      %v4438 = vadd.f32 %v4406, %v4374
      %v4439 = vadd.f32 %v4407, %v4375
      %v4440 = vadd.f32 %v4408, %v4376
      %v4441 = vadd.f32 %v4409, %v4377
      %v4442 = vadd.f32 %v4410, %v4378
      %v4443 = vadd.f32 %v4411, %v4379
      %v4444 = vadd.f32 %v4412, %v4380
      %v4445 = vadd.f32 %v4413, %v4381
      %v4446 = vadd.f32 %v4414, %v4382
      %v4447 = vadd.f32 %v4415, %v4383
      %v4448 = vadd.f32 %v4416, %v4384
      %v4449 = vadd.f32 %v4417, %v4385
      %v4450 = vadd.f32 %v4418, %v4386
      %v4451 = vadd.f32 %v4419, %v4387
      %v4452 = vadd.f32 %v4420, %v4388
      %v4453 = vadd.f32 %v4421, %v4389
      %v4454 = vadd.f32 %v4422, %v4390
      %v4455 = vadd.f32 %v4423, %v4391
      %v4456 = vadd.f32 %v4424, %v4392
      %v4457 = vadd.f32 %v4425, %v4393
      %4458 = vst [vmem:[#allocation3] sm:$0xff] %v4426
      %4459 = vst [vmem:[#allocation3 + $0x8] sm:$0xff] %v4427
      %4460 = vst [vmem:[#allocation3 + $0x10] sm:$0xff] %v4428
      %4461 = vst [vmem:[#allocation3 + $0x18] sm:$0xff] %v4429
      %4462 = vst [vmem:[#allocation3 + $0x20] sm:$0xff] %v4430
      %4463 = vst [vmem:[#allocation3 + $0x28] sm:$0xff] %v4431
      %4464 = vst [vmem:[#allocation3 + $0x30] sm:$0xff] %v4432
      %4465 = vst [vmem:[#allocation3 + $0x38] sm:$0xff] %v4433
      %4466 = vst [vmem:[#allocation3 + $0x40] sm:$0xff] %v4434
      %4467 = vst [vmem:[#allocation3 + $0x48] sm:$0xff] %v4435
      %4468 = vst [vmem:[#allocation3 + $0x50] sm:$0xff] %v4436
      %4469 = vst [vmem:[#allocation3 + $0x58] sm:$0xff] %v4437
      %4470 = vst [vmem:[#allocation3 + $0x60] sm:$0xff] %v4438
      %4471 = vst [vmem:[#allocation3 + $0x68] sm:$0xff] %v4439
      %4472 = vst [vmem:[#allocation3 + $0x70] sm:$0xff] %v4440
      %4473 = vst [vmem:[#allocation3 + $0x78] sm:$0xff] %v4441
      %4474 = vst [vmem:[#allocation3 + $0x80] sm:$0xff] %v4442
      %4475 = vst [vmem:[#allocation3 + $0x88] sm:$0xff] %v4443
      %4476 = vst [vmem:[#allocation3 + $0x90] sm:$0xff] %v4444
      %4477 = vst [vmem:[#allocation3 + $0x98] sm:$0xff] %v4445
      %4478 = vst [vmem:[#allocation3 + $0xa0] sm:$0xff] %v4446
      %4479 = vst [vmem:[#allocation3 + $0xa8] sm:$0xff] %v4447
      %4480 = vst [vmem:[#allocation3 + $0xb0] sm:$0xff] %v4448
      %4481 = vst [vmem:[#allocation3 + $0xb8] sm:$0xff] %v4449
      %4482 = vst [vmem:[#allocation3 + $0xc0] sm:$0xff] %v4450
      %4483 = vst [vmem:[#allocation3 + $0xc8] sm:$0xff] %v4451
      %4484 = vst [vmem:[#allocation3 + $0xd0] sm:$0xff] %v4452
      %4485 = vst [vmem:[#allocation3 + $0xd8] sm:$0xff] %v4453
      %4486 = vst [vmem:[#allocation3 + $0xe0] sm:$0xff] %v4454
      %4487 = vst [vmem:[#allocation3 + $0xe8] sm:$0xff] %v4455
      %4488 = vst [vmem:[#allocation3 + $0xf0] sm:$0xff] %v4456
      %4489 = vst [vmem:[#allocation3 + $0xf8] sm:$0xff] %v4457
      %v4490 = vld [vmem:[#allocation3] sm:$0xff]
      %v4491 = vld [vmem:[#allocation3 + $0x8] sm:$0xff]
      %v4492 = vld [vmem:[#allocation3 + $0x10] sm:$0xff]
      %v4493 = vld [vmem:[#allocation3 + $0x18] sm:$0xff]
      %v4494 = vld [vmem:[#allocation3 + $0x20] sm:$0xff]
      %v4495 = vld [vmem:[#allocation3 + $0x28] sm:$0xff]
      %v4496 = vld [vmem:[#allocation3 + $0x30] sm:$0xff]
      %v4497 = vld [vmem:[#allocation3 + $0x38] sm:$0xff]
      %v4498 = vld [vmem:[#allocation3 + $0x40] sm:$0xff]
      %v4499 = vld [vmem:[#allocation3 + $0x48] sm:$0xff]
      %v4500 = vld [vmem:[#allocation3 + $0x50] sm:$0xff]
      %v4501 = vld [vmem:[#allocation3 + $0x58] sm:$0xff]
      %v4502 = vld [vmem:[#allocation3 + $0x60] sm:$0xff]
      %v4503 = vld [vmem:[#allocation3 + $0x68] sm:$0xff]
      %v4504 = vld [vmem:[#allocation3 + $0x70] sm:$0xff]
      %v4505 = vld [vmem:[#allocation3 + $0x78] sm:$0xff]
      %v4506 = vld [vmem:[#allocation3 + $0x80] sm:$0xff]
      %v4507 = vld [vmem:[#allocation3 + $0x88] sm:$0xff]
      %v4508 = vld [vmem:[#allocation3 + $0x90] sm:$0xff]
      %v4509 = vld [vmem:[#allocation3 + $0x98] sm:$0xff]
      %v4510 = vld [vmem:[#allocation3 + $0xa0] sm:$0xff]
      %v4511 = vld [vmem:[#allocation3 + $0xa8] sm:$0xff]
      %v4512 = vld [vmem:[#allocation3 + $0xb0] sm:$0xff]
      %v4513 = vld [vmem:[#allocation3 + $0xb8] sm:$0xff]
      %v4514 = vld [vmem:[#allocation3 + $0xc0] sm:$0xff]
      %v4515 = vld [vmem:[#allocation3 + $0xc8] sm:$0xff]
      %v4516 = vld [vmem:[#allocation3 + $0xd0] sm:$0xff]
      %v4517 = vld [vmem:[#allocation3 + $0xd8] sm:$0xff]
      %v4518 = vld [vmem:[#allocation3 + $0xe0] sm:$0xff]
      %v4519 = vld [vmem:[#allocation3 + $0xe8] sm:$0xff]
      %v4520 = vld [vmem:[#allocation3 + $0xf0] sm:$0xff]
      %v4521 = vld [vmem:[#allocation3 + $0xf8] sm:$0xff]
      %v4522 = vmul.f32 %v4490, 0.1
      %v4523 = vmul.f32 %v4491, 0.1
      %v4524 = vmul.f32 %v4492, 0.1
      %v4525 = vmul.f32 %v4493, 0.1
      %v4526 = vmul.f32 %v4494, 0.1
      %v4527 = vmul.f32 %v4495, 0.1
      %v4528 = vmul.f32 %v4496, 0.1
      %v4529 = vmul.f32 %v4497, 0.1
      %v4530 = vmul.f32 %v4498, 0.1
      %v4531 = vmul.f32 %v4499, 0.1
      %v4532 = vmul.f32 %v4500, 0.1
      %v4533 = vmul.f32 %v4501, 0.1
      %v4534 = vmul.f32 %v4502, 0.1
      %v4535 = vmul.f32 %v4503, 0.1
      %v4536 = vmul.f32 %v4504, 0.1
      %v4537 = vmul.f32 %v4505, 0.1
      %v4538 = vmul.f32 %v4506, 0.1
      %v4539 = vmul.f32 %v4507, 0.1
      %v4540 = vmul.f32 %v4508, 0.1
      %v4541 = vmul.f32 %v4509, 0.1
      %v4542 = vmul.f32 %v4510, 0.1
      %v4543 = vmul.f32 %v4511, 0.1
      %v4544 = vmul.f32 %v4512, 0.1
      %v4545 = vmul.f32 %v4513, 0.1
      %v4546 = vmul.f32 %v4514, 0.1
      %v4547 = vmul.f32 %v4515, 0.1
      %v4548 = vmul.f32 %v4516, 0.1
      %v4549 = vmul.f32 %v4517, 0.1
      %v4550 = vmul.f32 %v4518, 0.1
      %v4551 = vmul.f32 %v4519, 0.1
      %v4552 = vmul.f32 %v4520, 0.1
      %v4553 = vmul.f32 %v4521, 0.1
      %v4554 = vmax.f32 %v4490, %v4522
      %v4555 = vmax.f32 %v4491, %v4523
      %v4556 = vmax.f32 %v4492, %v4524
      %v4557 = vmax.f32 %v4493, %v4525
      %v4558 = vmax.f32 %v4494, %v4526
      %v4559 = vmax.f32 %v4495, %v4527
      %v4560 = vmax.f32 %v4496, %v4528
      %v4561 = vmax.f32 %v4497, %v4529
      %v4562 = vmax.f32 %v4498, %v4530
      %v4563 = vmax.f32 %v4499, %v4531
      %v4564 = vmax.f32 %v4500, %v4532
      %v4565 = vmax.f32 %v4501, %v4533
      %v4566 = vmax.f32 %v4502, %v4534
      %v4567 = vmax.f32 %v4503, %v4535
      %v4568 = vmax.f32 %v4504, %v4536
      %v4569 = vmax.f32 %v4505, %v4537
      %v4570 = vmax.f32 %v4506, %v4538
      %v4571 = vmax.f32 %v4507, %v4539
      %v4572 = vmax.f32 %v4508, %v4540
      %v4573 = vmax.f32 %v4509, %v4541
      %v4574 = vmax.f32 %v4510, %v4542
      %v4575 = vmax.f32 %v4511, %v4543
      %v4576 = vmax.f32 %v4512, %v4544
      %v4577 = vmax.f32 %v4513, %v4545
      %v4578 = vmax.f32 %v4514, %v4546
      %v4579 = vmax.f32 %v4515, %v4547
      %v4580 = vmax.f32 %v4516, %v4548
      %v4581 = vmax.f32 %v4517, %v4549
      %v4582 = vmax.f32 %v4518, %v4550
      %v4583 = vmax.f32 %v4519, %v4551
      %v4584 = vmax.f32 %v4520, %v4552
      %v4585 = vmax.f32 %v4521, %v4553
      %v4586 = vpack.c.bf16 %v4555, %v4554
      %v4587 = vpack.c.bf16 %v4557, %v4556
      %v4588 = vpack.c.bf16 %v4559, %v4558
      %v4589 = vpack.c.bf16 %v4561, %v4560
      %v4590 = vpack.c.bf16 %v4563, %v4562
      %v4591 = vpack.c.bf16 %v4565, %v4564
      %v4592 = vpack.c.bf16 %v4567, %v4566
      %v4593 = vpack.c.bf16 %v4569, %v4568
      %v4594 = vpack.c.bf16 %v4571, %v4570
      %v4595 = vpack.c.bf16 %v4573, %v4572
      %v4596 = vpack.c.bf16 %v4575, %v4574
      %v4597 = vpack.c.bf16 %v4577, %v4576
      %v4598 = vpack.c.bf16 %v4579, %v4578
      %v4599 = vpack.c.bf16 %v4581, %v4580
      %v4600 = vpack.c.bf16 %v4583, %v4582
      %v4601 = vpack.c.bf16 %v4585, %v4584
      %v4618 = vunpack.c.l.b16 %v4586
      %v4619 = vunpack.c.h.b16 %v4586
      %v4620 = vunpack.c.l.b16 %v4587
      %v4621 = vunpack.c.h.b16 %v4587
      %v4622 = vunpack.c.l.b16 %v4588
      %v4623 = vunpack.c.h.b16 %v4588
      %v4624 = vunpack.c.l.b16 %v4589
      %v4625 = vunpack.c.h.b16 %v4589
      %v4626 = vunpack.c.l.b16 %v4590
      %v4627 = vunpack.c.h.b16 %v4590
      %v4628 = vunpack.c.l.b16 %v4591
      %v4629 = vunpack.c.h.b16 %v4591
      %v4630 = vunpack.c.l.b16 %v4592
      %v4631 = vunpack.c.h.b16 %v4592
      %v4632 = vunpack.c.l.b16 %v4593
      %v4633 = vunpack.c.h.b16 %v4593
      %v4634 = vunpack.c.l.b16 %v4594
      %v4635 = vunpack.c.h.b16 %v4594
      %v4636 = vunpack.c.l.b16 %v4595
      %v4637 = vunpack.c.h.b16 %v4595
      %v4638 = vunpack.c.l.b16 %v4596
      %v4639 = vunpack.c.h.b16 %v4596
      %v4640 = vunpack.c.l.b16 %v4597
      %v4641 = vunpack.c.h.b16 %v4597
      %v4642 = vunpack.c.l.b16 %v4598
      %v4643 = vunpack.c.h.b16 %v4598
      %v4644 = vunpack.c.l.b16 %v4599
      %v4645 = vunpack.c.h.b16 %v4599
      %v4646 = vunpack.c.l.b16 %v4600
      %v4647 = vunpack.c.h.b16 %v4600
      %v4648 = vunpack.c.l.b16 %v4601
      %v4649 = vunpack.c.h.b16 %v4601
      %v4650 = vpack.c.b16 %v4618, %v4618
      %v4651 = vpack.c.b16 %v4619, %v4619
      %v4652 = vpack.c.b16 %v4620, %v4620
      %v4653 = vpack.c.b16 %v4621, %v4621
      %v4654 = vpack.c.b16 %v4622, %v4622
      %v4655 = vpack.c.b16 %v4623, %v4623
      %v4656 = vpack.c.b16 %v4624, %v4624
      %v4657 = vpack.c.b16 %v4625, %v4625
      %v4658 = vpack.c.b16 %v4626, %v4626
      %v4659 = vpack.c.b16 %v4627, %v4627
      %v4660 = vpack.c.b16 %v4628, %v4628
      %v4661 = vpack.c.b16 %v4629, %v4629
      %v4662 = vpack.c.b16 %v4630, %v4630
      %v4663 = vpack.c.b16 %v4631, %v4631
      %v4664 = vpack.c.b16 %v4632, %v4632
      %v4665 = vpack.c.b16 %v4633, %v4633
      %v4666 = vpack.c.b16 %v4634, %v4634
      %v4667 = vpack.c.b16 %v4635, %v4635
      %v4668 = vpack.c.b16 %v4636, %v4636
      %v4669 = vpack.c.b16 %v4637, %v4637
      %v4670 = vpack.c.b16 %v4638, %v4638
      %v4671 = vpack.c.b16 %v4639, %v4639
      %v4672 = vpack.c.b16 %v4640, %v4640
      %v4673 = vpack.c.b16 %v4641, %v4641
      %v4674 = vpack.c.b16 %v4642, %v4642
      %v4675 = vpack.c.b16 %v4643, %v4643
      %v4676 = vpack.c.b16 %v4644, %v4644
      %v4677 = vpack.c.b16 %v4645, %v4645
      %v4678 = vpack.c.b16 %v4646, %v4646
      %v4679 = vpack.c.b16 %v4647, %v4647
      %v4680 = vpack.c.b16 %v4648, %v4648
      %v4681 = vpack.c.b16 %v4649, %v4649
      %4714 = vst [vmem:[%s238] sm:$0xf] %v4650
      %4715 = vst [vmem:[%s238 + $0x4] sm:$0xf] %v4651
      %4716 = vst [vmem:[%s238 + $0x8] sm:$0xf] %v4652
      %4717 = vst [vmem:[%s238 + $0xc] sm:$0xf] %v4653
      %4718 = vst [vmem:[%s238 + $0x10] sm:$0xf] %v4654
      %4719 = vst [vmem:[%s238 + $0x14] sm:$0xf] %v4655
      %4720 = vst [vmem:[%s238 + $0x18] sm:$0xf] %v4656
      %4721 = vst [vmem:[%s238 + $0x1c] sm:$0xf] %v4657
      %4722 = vst [vmem:[%s238 + $0x20] sm:$0xf] %v4658
      %4723 = vst [vmem:[%s238 + $0x24] sm:$0xf] %v4659
      %4724 = vst [vmem:[%s238 + $0x28] sm:$0xf] %v4660
      %4725 = vst [vmem:[%s238 + $0x2c] sm:$0xf] %v4661
      %4726 = vst [vmem:[%s238 + $0x30] sm:$0xf] %v4662
      %4727 = vst [vmem:[%s238 + $0x34] sm:$0xf] %v4663
      %4728 = vst [vmem:[%s238 + $0x38] sm:$0xf] %v4664
      %4729 = vst [vmem:[%s238 + $0x3c] sm:$0xf] %v4665
      %4730 = vst [vmem:[%s238 + $0x40] sm:$0xf] %v4666
      %4731 = vst [vmem:[%s238 + $0x44] sm:$0xf] %v4667
      %4732 = vst [vmem:[%s238 + $0x48] sm:$0xf] %v4668
      %4733 = vst [vmem:[%s238 + $0x4c] sm:$0xf] %v4669
      %4734 = vst [vmem:[%s238 + $0x50] sm:$0xf] %v4670
      %4735 = vst [vmem:[%s238 + $0x54] sm:$0xf] %v4671
      %4736 = vst [vmem:[%s238 + $0x58] sm:$0xf] %v4672
      %4737 = vst [vmem:[%s238 + $0x5c] sm:$0xf] %v4673
      %4738 = vst [vmem:[%s238 + $0x60] sm:$0xf] %v4674
      %4739 = vst [vmem:[%s238 + $0x64] sm:$0xf] %v4675
      %4740 = vst [vmem:[%s238 + $0x68] sm:$0xf] %v4676
      %4741 = vst [vmem:[%s238 + $0x6c] sm:$0xf] %v4677
      %4742 = vst [vmem:[%s238 + $0x70] sm:$0xf] %v4678
      %4743 = vst [vmem:[%s238 + $0x74] sm:$0xf] %v4679
      %4744 = vst [vmem:[%s238 + $0x78] sm:$0xf] %v4680
      %4745 = vst [vmem:[%s238 + $0x7c] sm:$0xf] %v4681
      %s4746 = smul.u32 32, %s21
      %p4747 = scmp.lt.s32.totalorder %s20, 1
      %s4748 = scalar_select %p4747, %s20, 1
      %p4749 = scmp.lt.s32.totalorder %s4746, 31
      %s4750 = scalar_select %p4749, %s4746, 31
      %p4751 = scmp.lt.s32.totalorder %s19, 0
      %s4752 = scalar_select %p4751, %s19, 0
      %s4753 = sadd.s32 %s4752, %s4750
      %s4754 = smul.addr %s4748, 32
      %s4755 = sadd.s32 %s4753, %s4754
      %s4756 = smul.addr %s4755, 4
      %s4757 = scalar_lea.vmem %s3, %s4756
      // Predicated region
      $region33: #{disc_block_forward.2} parent=31 // pred_check
        %p4758 = pneg %p133
      $region34: #{disc_block_forward.2} parent=31 // pred_check_branch
        %4760 = sbr.rel (%p4758) target = $region36
      $region35: #{disc_block_forward.2} parent=31 // pred_region
        %s4761 = smul.u32 32, %s21
      $region36: #{disc_block_forward.2} parent=31 // pred_fallthru
        _
    $region32: #{disc_block_forward.2} parent=5 // pred_fallthru
      _
    %p4762 = scmp.le.s32.totalorder 2, %s9
    // Predicated region
    $region37: #{disc_block_forward.2} parent=5 // pred_check
      %p4763 = pneg %p4762
    $region38: #{disc_block_forward.2} parent=5 // pred_check_branch
      %4765 = sbr.rel (%p4763) target = $region40
    $region39: #{disc_block_forward.2} parent=5 // pred_region
      %s4766 = ssub.s32 %s9, 2
      // Predicated region
      $region41: #{disc_block_forward.2} parent=39 // pred_check
        %p4767 = pneg %p139
      $region42: #{disc_block_forward.2} parent=39 // pred_check_branch
        %4769 = sbr.rel (%p4767) target = $region44
      $region43: #{disc_block_forward.2} parent=39 // pred_region
        %s4770 = smul.u32 32, %s24
        %p4771 = scmp.lt.s32.totalorder %s23, 1
        %s4772 = scalar_select %p4771, %s23, 1
        %p4773 = scmp.lt.s32.totalorder %s4770, 31
        %s4774 = scalar_select %p4773, %s4770, 31
        %p4775 = scmp.lt.s32.totalorder %s22, 0
        %s4776 = scalar_select %p4775, %s22, 0
        %s4777 = sadd.s32 %s4776, %s4774
        %s4778 = smul.addr %s4772, 32
        %s4779 = sadd.s32 %s4777, %s4778
        %s4780 = smul.addr %s4779, 4
        %s4781 = scalar_lea.vmem %s3, %s4780
      $region44: #{disc_block_forward.2} parent=39 // pred_fallthru
        _
    $region40: #{disc_block_forward.2} parent=5 // pred_fallthru
      _
  $region6: #{disc_block_forward.2} parent=0 // loop_footer
    %s13 = sadd.s32 1, %s9
  $region7: #{disc_block_forward.2} parent=0 // loop_footer_branch
    %8 = sbr.rel target = $region3
  $region8: #{disc_block_forward.2} parent=0 // loop_exit
    _

// kernel: disc_block_forward.3
$region0: #{disc_block_forward.3}
  #allocation0 [shape = 'u32[]', space=smem, size = 0x4, offset = 0x4, fixed_abs, tag = 'smem constant byte address 0x4 - core index']
  #allocation1 [shape = 'u32[144,128]{1,0:T(1,128)}', space=vmem, size = 0x12000, scoped, tag = 'internal scratch']
  #allocation2 [shape = 'bf16[2,9,8,512]{3,2,1,0:T(8,128)(2,1)}', space=vmem, size = 0x24000, scoped, tag = 'scratch operand']
  #allocation3 [shape = 'f32[64,128]{1,0:T(8,128)}', space=vmem, size = 0x8000, scoped, tag = 'scratch operand']
  %s0 = inlined_call_operand.vmem [shape: bf16[2,9,9,512], index: 0, kind: input, shape index: {}]
  %s1 = inlined_call_operand.vmem [shape: bf16[4,512,128], index: 1, kind: input, shape index: {}]
  %s2 = inlined_call_operand.vmem [shape: f32[1,128], index: 2, kind: input, shape index: {}]
  %s3 = inlined_call_operand.vmem [shape: f32[2,64,128], index: 3, kind: output, shape index: {}]
  %s4 = sld [smem:[#allocation0]]
  $region45: #{disc_block_forward.3} parent=0
    _
  %s6 = ssub.s32 1, %s4
  %s7 = scalar_select 0, %s6, %s4
  loop: start=0, step=1, limit=4
  $region2: #{disc_block_forward.3} parent=0 // loop_pre_header
    _
  $region3: #{disc_block_forward.3} parent=0 // loop_header
    %s9 = sphi 0, %s13
    %p10 = scmp.ge.s32.totalorder %s9, 4
    %s16 = sphi 0, %s35
    %s17 = sphi 0, %s31
    %s18 = sphi 0, %s27
    %s19 = sphi 0, %s16
    %s20 = sphi 0, %s17
    %s21 = sphi 0, %s18
    %s22 = sphi 0, %s19
    %s23 = sphi 0, %s20
    %s24 = sphi 0, %s21
    %s38 = sphi 0, %s40
    %s41 = sphi 0, %s38
    %s42 = sphi 0, %s41
    %s58 = sphi 0, %s42
    %s64 = sphi 0, %s66
    %s67 = sphi 0, %s64
    %s68 = sphi 0, %s67
    %s84 = sphi 0, %s68
    %s90 = sphi 0, %s92
    %s93 = sphi 0, %s90
    %s94 = sphi 0, %s93
    %s110 = sphi 0, %s94
    %s120 = sphi 0, %s122
    %s123 = sphi 0, %s120
    %s124 = sphi 0, %s123
    %s140 = sphi 0, %s124
  $region4: #{disc_block_forward.3} parent=0 // loop_header_branch
    %12 = sbr.rel (%p10) target = $region8
  $region5: #{disc_block_forward.3} parent=0 // loop_body
    %s14 = ssub.s32 %s9, 1
    %s15 = ssub.s32 %s9, 2
    %s25 = sadd.s32 1, %s18
    %p26 = scmp.ge.s32.totalorder %s25, 1
    %s27 = scalar_select %p26, 0, %s25
    %s28 = sadd.s32 1, %s17
    %s29 = scalar_select %p26, %s28, %s17
    %p30 = scmp.ge.s32.totalorder %s29, 2
    %s31 = scalar_select %p30, 0, %s29
    %s32 = sadd.s32 1, %s16
    %s33 = scalar_select %p30, %s32, %s16
    %p34 = scmp.ge.s32.totalorder %s33, 1
    %s35 = scalar_select %p34, 0, %s33
    %s36 = ssub.s32 %s17, %s31
    %p37 = scmp.eq.s32.totalorder %s36, 0
    %s39 = sadd.s32 %s38, 1
    %s40 = scalar_select %p37, %s38, %s39
    %p43 = pneg %p37
    %p44 = scmp.eq.s32.totalorder %s9, 1
    %p45 = por %p43, %p44
    %p46 = scmp.ne.s32.totalorder %s38, %s41
    %p47 = scmp.eq.s32.totalorder %s9, 0
    %p48 = por %p46, %p47
    %p49 = scmp.ne.s32.totalorder %s38, %s41
    %p50 = scmp.eq.s32.totalorder %s14, 1
    %p51 = por %p49, %p50
    %p52 = scmp.ne.s32.totalorder %s41, %s42
    %p53 = scmp.eq.s32.totalorder %s14, 0
    %p54 = por %p52, %p53
    %p55 = scmp.ne.s32.totalorder %s41, %s42
    %p56 = scmp.eq.s32.totalorder %s15, 1
    %p57 = por %p55, %p56
    %p59 = scmp.ne.s32.totalorder %s42, %s58
    %p60 = scmp.eq.s32.totalorder %s15, 0
    %p61 = por %p59, %p60
    %s62 = ssub.s32 %s16, %s35
    %p63 = scmp.eq.s32.totalorder %s62, 0
    %s65 = sadd.s32 %s64, 1
    %s66 = scalar_select %p63, %s64, %s65
    %p69 = pneg %p63
    %p70 = scmp.eq.s32.totalorder %s9, 1
    %p71 = por %p69, %p70
    %p72 = scmp.ne.s32.totalorder %s64, %s67
    %p73 = scmp.eq.s32.totalorder %s9, 0
    %p74 = por %p72, %p73
    %p75 = scmp.ne.s32.totalorder %s64, %s67
    %p76 = scmp.eq.s32.totalorder %s14, 1
    %p77 = por %p75, %p76
    %p78 = scmp.ne.s32.totalorder %s67, %s68
    %p79 = scmp.eq.s32.totalorder %s14, 0
    %p80 = por %p78, %p79
    %p81 = scmp.ne.s32.totalorder %s67, %s68
    %p82 = scmp.eq.s32.totalorder %s15, 1
    %p83 = por %p81, %p82
    %p85 = scmp.ne.s32.totalorder %s68, %s84
    %p86 = scmp.eq.s32.totalorder %s15, 0
    %p87 = por %p85, %p86
    %s88 = ssub.s32 %s16, %s35
    %p89 = scmp.eq.s32.totalorder %s88, 0
    %s91 = sadd.s32 %s90, 1
    %s92 = scalar_select %p89, %s90, %s91
    %p95 = pneg %p89
    %p96 = scmp.eq.s32.totalorder %s9, 1
    %p97 = por %p95, %p96
    %p98 = scmp.ne.s32.totalorder %s90, %s93
    %p99 = scmp.eq.s32.totalorder %s9, 0
    %p100 = por %p98, %p99
    %p101 = scmp.ne.s32.totalorder %s90, %s93
    %p102 = scmp.eq.s32.totalorder %s14, 1
    %p103 = por %p101, %p102
    %p104 = scmp.ne.s32.totalorder %s93, %s94
    %p105 = scmp.eq.s32.totalorder %s14, 0
    %p106 = por %p104, %p105
    %p107 = scmp.ne.s32.totalorder %s93, %s94
    %p108 = scmp.eq.s32.totalorder %s15, 1
    %p109 = por %p107, %p108
    %p111 = scmp.ne.s32.totalorder %s94, %s110
    %p112 = scmp.eq.s32.totalorder %s15, 0
    %p113 = por %p111, %p112
    %s114 = ssub.s32 %s17, %s31
    %s115 = ssub.s32 %s18, %s27
    %s116 = sor.u32 %s114, %s115
    %s117 = ssub.s32 %s16, %s35
    %s118 = sor.u32 %s116, %s117
    %p119 = scmp.eq.s32.totalorder %s118, 0
    %s121 = sadd.s32 %s120, 1
    %s122 = scalar_select %p119, %s120, %s121
    %p125 = pneg %p119
    %p126 = scmp.eq.s32.totalorder %s9, 1
    %p127 = por %p125, %p126
    %p128 = scmp.ne.s32.totalorder %s120, %s123
    %p129 = scmp.eq.s32.totalorder %s9, 0
    %p130 = por %p128, %p129
    %p131 = scmp.ne.s32.totalorder %s120, %s123
    %p132 = scmp.eq.s32.totalorder %s14, 1
    %p133 = por %p131, %p132
    %p134 = scmp.ne.s32.totalorder %s123, %s124
    %p135 = scmp.eq.s32.totalorder %s14, 0
    %p136 = por %p134, %p135
    %p137 = scmp.ne.s32.totalorder %s123, %s124
    %p138 = scmp.eq.s32.totalorder %s15, 1
    %p139 = por %p137, %p138
    %p141 = scmp.ne.s32.totalorder %s124, %s140
    %p142 = scmp.eq.s32.totalorder %s15, 0
    %p143 = por %p141, %p142
    %p144 = scmp.le.s32.totalorder 1, %s9
    %p145 = scmp.lt.s32.totalorder %s9, 3
    %p146 = pnand %p144, %p145
    %p147 = pneg %p146
    // Predicated region
    $region9: #{disc_block_forward.3} parent=5 // pred_check
      _
    $region10: #{disc_block_forward.3} parent=5 // pred_check_branch
      %149 = sbr.rel (%p146) target = $region12
    $region11: #{disc_block_forward.3} parent=5 // pred_region
      %s150 = ssub.s32 %s9, 1
      // Predicated region
      $region13: #{disc_block_forward.3} parent=11 // pred_check
        %p151 = pneg %p80
      $region14: #{disc_block_forward.3} parent=11 // pred_check_branch
        %153 = sbr.rel (%p151) target = $region16
      $region15: #{disc_block_forward.3} parent=11 // pred_region
        %p154 = scmp.lt.s32.totalorder %s19, 0
        %s155 = scalar_select %p154, %s19, 0
        %s156 = smul.addr %s155, 4
        %s157 = scalar_lea.vmem %s1, %s156
      $region16: #{disc_block_forward.3} parent=11 // pred_fallthru
        _
      // Predicated region
      $region17: #{disc_block_forward.3} parent=11 // pred_check
        %p158 = pneg %p106
      $region18: #{disc_block_forward.3} parent=11 // pred_check_branch
        %160 = sbr.rel (%p158) target = $region20
      $region19: #{disc_block_forward.3} parent=11 // pred_region
        %p161 = scmp.lt.s32.totalorder %s19, 0
        %s162 = scalar_select %p161, %s19, 0
        %s163 = scalar_lea.vmem %s2, %s162
      $region20: #{disc_block_forward.3} parent=11 // pred_fallthru
        _
    $region12: #{disc_block_forward.3} parent=5 // pred_fallthru
      _
    %p164 = scmp.lt.s32.totalorder %s9, 2
    // Predicated region
    $region21: #{disc_block_forward.3} parent=5 // pred_check
      %p165 = pneg %p164
    $region22: #{disc_block_forward.3} parent=5 // pred_check_branch
      %167 = sbr.rel (%p165) target = $region24
    $region23: #{disc_block_forward.3} parent=5 // pred_region
      // Predicated region
      $region25: #{disc_block_forward.3} parent=23 // pred_check
        %p168 = pneg %p48
      $region26: #{disc_block_forward.3} parent=23 // pred_check_branch
        %170 = sbr.rel (%p168) target = $region28
      $region27: #{disc_block_forward.3} parent=23 // pred_region
        %p171 = scmp.lt.s32.totalorder %s17, 1
        %s172 = scalar_select %p171, %s17, 1
        %s173 = smul.addr %s172, 72
        %s174 = smul.addr %s173, 4
        %s175 = scalar_lea.vmem %s0, %s174
      $region28: #{disc_block_forward.3} parent=23 // pred_fallthru
        _
    $region24: #{disc_block_forward.3} parent=5 // pred_fallthru
      _
    %p176 = scmp.le.s32.totalorder 1, %s9
    %p177 = scmp.lt.s32.totalorder %s9, 3
    %p178 = pnand %p176, %p177
    %p179 = pneg %p178
    // Predicated region
    $region29: #{disc_block_forward.3} parent=5 // pred_check
      _
    $region30: #{disc_block_forward.3} parent=5 // pred_check_branch
      %181 = sbr.rel (%p178) target = $region32
    $region31: #{disc_block_forward.3} parent=5 // pred_region
      %s182 = ssub.s32 %s9, 1
      %p183 = scmp.lt.s32.totalorder %s20, 1
      %s184 = scalar_select %p183, %s20, 1
      %s185 = smul.addr %s184, 72
      %s186 = smul.addr %s185, 4
      %s187 = scalar_lea.vmem %s0, %s186
      %p188 = pneg %p54
      %p189 = pneg %p51
      %p190 = scmp.lt.s32.totalorder %s19, 0
      %s191 = scalar_select %p190, %s19, 0
      %s192 = smul.addr %s191, 4
      %s193 = scalar_lea.vmem %s1, %s192
      %p194 = pneg %p80
      %p195 = pneg %p77
      %p196 = scmp.lt.s32.totalorder %s19, 0
      %s197 = scalar_select %p196, %s19, 0
      %s198 = scalar_lea.vmem %s2, %s197
      %p199 = pneg %p106
      %p200 = pneg %p103
      %p201 = pneg %p136
      %p202 = pneg %p133
      %s203 = smul.u32 8, %s21
      %p204 = scmp.lt.s32.totalorder %s20, 1
      %s205 = scalar_select %p204, %s20, 1
      %p206 = scmp.lt.s32.totalorder %s203, 7
      %s207 = scalar_select %p206, %s203, 7
      %p208 = scmp.lt.s32.totalorder %s19, 0
      %s209 = scalar_select %p208, %s19, 0
      %s210 = sadd.s32 %s209, %s207
      %s211 = smul.addr %s205, 8
      %s212 = sadd.s32 %s210, %s211
      %s213 = smul.addr %s212, 8
      %s214 = scalar_lea.vmem %s3, %s213
      %p215 = scmp.lt.s32.totalorder %s20, 1
      %s216 = scalar_select %p215, %s20, 1
      %s217 = smul.addr %s216, 72
      %s218 = smul.addr %s217, 4
      %s219 = scalar_lea.vmem %s0, %s218
      %p220 = scmp.lt.s32.totalorder %s19, 0
      %s221 = scalar_select %p220, %s19, 0
      %s222 = smul.addr %s221, 4
      %s223 = scalar_lea.vmem %s1, %s222
      %p224 = scmp.lt.s32.totalorder %s19, 0
      %s225 = scalar_select %p224, %s19, 0
      %s226 = scalar_lea.vmem %s2, %s225
      %s227 = smul.u32 8, %s21
      %p228 = scmp.lt.s32.totalorder %s20, 1
      %s229 = scalar_select %p228, %s20, 1
      %p230 = scmp.lt.s32.totalorder %s227, 7
      %s231 = scalar_select %p230, %s227, 7
      %p232 = scmp.lt.s32.totalorder %s19, 0
      %s233 = scalar_select %p232, %s19, 0
      %s234 = sadd.s32 %s233, %s231
      %s235 = smul.addr %s229, 8
      %s236 = sadd.s32 %s234, %s235
      %s237 = smul.addr %s236, 8
      %s238 = scalar_lea.vmem %s3, %s237
      %s239 = smul.u32 8, %s21
      %s241 = smul.u32 %s21, 8
      %s242 = smul.u32 %s241, 8
      %s243 = smul.addr %s242, 4
      %s244 = scalar_lea.vmem %s219, %s243
      %v245 = vld [vmem:[%s244] sm:$0xff]
      %v246 = vld [vmem:[%s244 + $0x8] sm:$0xff]
      %v247 = vld [vmem:[%s244 + $0x20] sm:$0xff]
      %v248 = vld [vmem:[%s244 + $0x28] sm:$0xff]
      %v249 = vld [vmem:[%s244 + $0x40] sm:$0xff]
      %v250 = vld [vmem:[%s244 + $0x48] sm:$0xff]
      %v251 = vld [vmem:[%s244 + $0x60] sm:$0xff]
      %v252 = vld [vmem:[%s244 + $0x68] sm:$0xff]
      %v253 = vld [vmem:[%s244 + $0x80] sm:$0xff]
      %v254 = vld [vmem:[%s244 + $0x88] sm:$0xff]
      %v255 = vld [vmem:[%s244 + $0xa0] sm:$0xff]
      %v256 = vld [vmem:[%s244 + $0xa8] sm:$0xff]
      %v257 = vld [vmem:[%s244 + $0xc0] sm:$0xff]
      %v258 = vld [vmem:[%s244 + $0xc8] sm:$0xff]
      %v259 = vld [vmem:[%s244 + $0xe0] sm:$0xff]
      %v260 = vld [vmem:[%s244 + $0xe8] sm:$0xff]
      %v261 = vld [vmem:[%s244 + $0x100] sm:$0xff]
      %v262 = vld [vmem:[%s244 + $0x108] sm:$0xff]
      %263 = vst [vmem:[#allocation2] sm:$0xff] %v245
      %264 = vst [vmem:[#allocation2 + $0x8] sm:$0xff] %v246
      %265 = vst [vmem:[#allocation2 + $0x10] sm:$0xff] %v247
      %266 = vst [vmem:[#allocation2 + $0x18] sm:$0xff] %v248
      %267 = vst [vmem:[#allocation2 + $0x20] sm:$0xff] %v249
      %268 = vst [vmem:[#allocation2 + $0x28] sm:$0xff] %v250
      %269 = vst [vmem:[#allocation2 + $0x30] sm:$0xff] %v251
      %270 = vst [vmem:[#allocation2 + $0x38] sm:$0xff] %v252
      %271 = vst [vmem:[#allocation2 + $0x40] sm:$0xff] %v253
      %272 = vst [vmem:[#allocation2 + $0x48] sm:$0xff] %v254
      %273 = vst [vmem:[#allocation2 + $0x50] sm:$0xff] %v255
      %274 = vst [vmem:[#allocation2 + $0x58] sm:$0xff] %v256
      %275 = vst [vmem:[#allocation2 + $0x60] sm:$0xff] %v257
      %276 = vst [vmem:[#allocation2 + $0x68] sm:$0xff] %v258
      %277 = vst [vmem:[#allocation2 + $0x70] sm:$0xff] %v259
      %278 = vst [vmem:[#allocation2 + $0x78] sm:$0xff] %v260
      %279 = vst [vmem:[#allocation2 + $0x80] sm:$0xff] %v261
      %280 = vst [vmem:[#allocation2 + $0x88] sm:$0xff] %v262
      %v281 = vld [vmem:[%s244] sm:$0xff]
      %v282 = vld [vmem:[%s244 + $0x8] sm:$0xff]
      %v283 = vld [vmem:[%s244 + $0x10] sm:$0x11]
      %v284 = vld [vmem:[%s244 + $0x18] sm:$0x11]
      %v285 = vld [vmem:[%s244 + $0x20] sm:$0xff]
      %v286 = vld [vmem:[%s244 + $0x28] sm:$0xff]
      %v287 = vld [vmem:[%s244 + $0x30] sm:$0x11]
      %v288 = vld [vmem:[%s244 + $0x38] sm:$0x11]
      %v289 = vld [vmem:[%s244 + $0x40] sm:$0xff]
      %v290 = vld [vmem:[%s244 + $0x48] sm:$0xff]
      %v291 = vld [vmem:[%s244 + $0x50] sm:$0x11]
      %v292 = vld [vmem:[%s244 + $0x58] sm:$0x11]
      %v293 = vld [vmem:[%s244 + $0x60] sm:$0xff]
      %v294 = vld [vmem:[%s244 + $0x68] sm:$0xff]
      %v295 = vld [vmem:[%s244 + $0x70] sm:$0x11]
      %v296 = vld [vmem:[%s244 + $0x78] sm:$0x11]
      %v297 = vld [vmem:[%s244 + $0x80] sm:$0xff]
      %v298 = vld [vmem:[%s244 + $0x88] sm:$0xff]
      %v299 = vld [vmem:[%s244 + $0x90] sm:$0x11]
      %v300 = vld [vmem:[%s244 + $0x98] sm:$0x11]
      %v301 = vld [vmem:[%s244 + $0xa0] sm:$0xff]
      %v302 = vld [vmem:[%s244 + $0xa8] sm:$0xff]
      %v303 = vld [vmem:[%s244 + $0xb0] sm:$0x11]
      %v304 = vld [vmem:[%s244 + $0xb8] sm:$0x11]
      %v305 = vld [vmem:[%s244 + $0xc0] sm:$0xff]
      %v306 = vld [vmem:[%s244 + $0xc8] sm:$0xff]
      %v307 = vld [vmem:[%s244 + $0xd0] sm:$0x11]
      %v308 = vld [vmem:[%s244 + $0xd8] sm:$0x11]
      %v309 = vld [vmem:[%s244 + $0xe0] sm:$0xff]
      %v310 = vld [vmem:[%s244 + $0xe8] sm:$0xff]
      %v311 = vld [vmem:[%s244 + $0xf0] sm:$0x11]
      %v312 = vld [vmem:[%s244 + $0xf8] sm:$0x11]
      %v313 = vld [vmem:[%s244 + $0x100] sm:$0xff]
      %v314 = vld [vmem:[%s244 + $0x108] sm:$0xff]
      %v315 = vld [vmem:[%s244 + $0x110] sm:$0x11]
      %v316 = vld [vmem:[%s244 + $0x118] sm:$0x11]
      %vm317 = vsmask.f32 3328
      %vm318 = vsmask.f32 7440
      %vm319 = vmor %vm317, %vm318
      %v321 = vshrl.u32 %v281, 16
      %v323 = vrot.slane %v321, 4
      %v324 = vshll.u32 %v281, 16
      %v326 = vrot.slane %v324, 5
      %v327 = vor.u32 %v323, %v326
      %v328 = vrot.slane %v327, 4
      %v330 = vshll.u32 %v283, 16
      %v332 = vrot.slane %v330, 5
      %v333 = vsel %vm319, %v328, %v332
      %v335 = vshrl.u32 %v282, 16
      %v337 = vrot.slane %v335, 4
      %v338 = vshll.u32 %v282, 16
      %v340 = vrot.slane %v338, 5
      %v341 = vor.u32 %v337, %v340
      %v342 = vrot.slane %v341, 4
      %v344 = vshll.u32 %v284, 16
      %v346 = vrot.slane %v344, 5
      %v347 = vsel %vm319, %v342, %v346
      %v349 = vshrl.u32 %v285, 16
      %v351 = vrot.slane %v349, 4
      %v352 = vshll.u32 %v285, 16
      %v354 = vrot.slane %v352, 5
      %v355 = vor.u32 %v351, %v354
      %v356 = vrot.slane %v355, 4
      %v358 = vshll.u32 %v287, 16
      %v360 = vrot.slane %v358, 5
      %v361 = vsel %vm319, %v356, %v360
      %v363 = vshrl.u32 %v286, 16
      %v365 = vrot.slane %v363, 4
      %v366 = vshll.u32 %v286, 16
      %v368 = vrot.slane %v366, 5
      %v369 = vor.u32 %v365, %v368
      %v370 = vrot.slane %v369, 4
      %v372 = vshll.u32 %v288, 16
      %v374 = vrot.slane %v372, 5
      %v375 = vsel %vm319, %v370, %v374
      %v377 = vshrl.u32 %v289, 16
      %v379 = vrot.slane %v377, 4
      %v380 = vshll.u32 %v289, 16
      %v382 = vrot.slane %v380, 5
      %v383 = vor.u32 %v379, %v382
      %v384 = vrot.slane %v383, 4
      %v386 = vshll.u32 %v291, 16
      %v388 = vrot.slane %v386, 5
      %v389 = vsel %vm319, %v384, %v388
      %v391 = vshrl.u32 %v290, 16
      %v393 = vrot.slane %v391, 4
      %v394 = vshll.u32 %v290, 16
      %v396 = vrot.slane %v394, 5
      %v397 = vor.u32 %v393, %v396
      %v398 = vrot.slane %v397, 4
      %v400 = vshll.u32 %v292, 16
      %v402 = vrot.slane %v400, 5
      %v403 = vsel %vm319, %v398, %v402
      %v405 = vshrl.u32 %v293, 16
      %v407 = vrot.slane %v405, 4
      %v408 = vshll.u32 %v293, 16
      %v410 = vrot.slane %v408, 5
      %v411 = vor.u32 %v407, %v410
      %v412 = vrot.slane %v411, 4
      %v414 = vshll.u32 %v295, 16
      %v416 = vrot.slane %v414, 5
      %v417 = vsel %vm319, %v412, %v416
      %v419 = vshrl.u32 %v294, 16
      %v421 = vrot.slane %v419, 4
      %v422 = vshll.u32 %v294, 16
      %v424 = vrot.slane %v422, 5
      %v425 = vor.u32 %v421, %v424
      %v426 = vrot.slane %v425, 4
      %v428 = vshll.u32 %v296, 16
      %v430 = vrot.slane %v428, 5
      %v431 = vsel %vm319, %v426, %v430
      %v433 = vshrl.u32 %v297, 16
      %v435 = vrot.slane %v433, 4
      %v436 = vshll.u32 %v297, 16
      %v438 = vrot.slane %v436, 5
      %v439 = vor.u32 %v435, %v438
      %v440 = vrot.slane %v439, 4
      %v442 = vshll.u32 %v299, 16
      %v444 = vrot.slane %v442, 5
      %v445 = vsel %vm319, %v440, %v444
      %v447 = vshrl.u32 %v298, 16
      %v449 = vrot.slane %v447, 4
      %v450 = vshll.u32 %v298, 16
      %v452 = vrot.slane %v450, 5
      %v453 = vor.u32 %v449, %v452
      %v454 = vrot.slane %v453, 4
      %v456 = vshll.u32 %v300, 16
      %v458 = vrot.slane %v456, 5
      %v459 = vsel %vm319, %v454, %v458
      %v461 = vshrl.u32 %v301, 16
      %v463 = vrot.slane %v461, 4
      %v464 = vshll.u32 %v301, 16
      %v466 = vrot.slane %v464, 5
      %v467 = vor.u32 %v463, %v466
      %v468 = vrot.slane %v467, 4
      %v470 = vshll.u32 %v303, 16
      %v472 = vrot.slane %v470, 5
      %v473 = vsel %vm319, %v468, %v472
      %v475 = vshrl.u32 %v302, 16
      %v477 = vrot.slane %v475, 4
      %v478 = vshll.u32 %v302, 16
      %v480 = vrot.slane %v478, 5
      %v481 = vor.u32 %v477, %v480
      %v482 = vrot.slane %v481, 4
      %v484 = vshll.u32 %v304, 16
      %v486 = vrot.slane %v484, 5
      %v487 = vsel %vm319, %v482, %v486
      %v489 = vshrl.u32 %v305, 16
      %v491 = vrot.slane %v489, 4
      %v492 = vshll.u32 %v305, 16
      %v494 = vrot.slane %v492, 5
      %v495 = vor.u32 %v491, %v494
      %v496 = vrot.slane %v495, 4
      %v498 = vshll.u32 %v307, 16
      %v500 = vrot.slane %v498, 5
      %v501 = vsel %vm319, %v496, %v500
      %v503 = vshrl.u32 %v306, 16
      %v505 = vrot.slane %v503, 4
      %v506 = vshll.u32 %v306, 16
      %v508 = vrot.slane %v506, 5
      %v509 = vor.u32 %v505, %v508
      %v510 = vrot.slane %v509, 4
      %v512 = vshll.u32 %v308, 16
      %v514 = vrot.slane %v512, 5
      %v515 = vsel %vm319, %v510, %v514
      %v517 = vshrl.u32 %v309, 16
      %v519 = vrot.slane %v517, 4
      %v520 = vshll.u32 %v309, 16
      %v522 = vrot.slane %v520, 5
      %v523 = vor.u32 %v519, %v522
      %v524 = vrot.slane %v523, 4
      %v526 = vshll.u32 %v311, 16
      %v528 = vrot.slane %v526, 5
      %v529 = vsel %vm319, %v524, %v528
      %v531 = vshrl.u32 %v310, 16
      %v533 = vrot.slane %v531, 4
      %v534 = vshll.u32 %v310, 16
      %v536 = vrot.slane %v534, 5
      %v537 = vor.u32 %v533, %v536
      %v538 = vrot.slane %v537, 4
      %v540 = vshll.u32 %v312, 16
      %v542 = vrot.slane %v540, 5
      %v543 = vsel %vm319, %v538, %v542
      %v545 = vshrl.u32 %v313, 16
      %v547 = vrot.slane %v545, 4
      %v548 = vshll.u32 %v313, 16
      %v550 = vrot.slane %v548, 5
      %v551 = vor.u32 %v547, %v550
      %v552 = vrot.slane %v551, 4
      %v554 = vshll.u32 %v315, 16
      %v556 = vrot.slane %v554, 5
      %v557 = vsel %vm319, %v552, %v556
      %v559 = vshrl.u32 %v314, 16
      %v561 = vrot.slane %v559, 4
      %v562 = vshll.u32 %v314, 16
      %v564 = vrot.slane %v562, 5
      %v565 = vor.u32 %v561, %v564
      %v566 = vrot.slane %v565, 4
      %v568 = vshll.u32 %v316, 16
      %v570 = vrot.slane %v568, 5
      %v571 = vsel %vm319, %v566, %v570
      %s590 = scalar_lea.vmem [#allocation2], 144
      %591 = vst [vmem:[%s590] sm:$0xff] %v333
      %592 = vst [vmem:[%s590 + $0x8] sm:$0xff] %v347
      %593 = vst [vmem:[%s590 + $0x10] sm:$0xff] %v361
      %594 = vst [vmem:[%s590 + $0x18] sm:$0xff] %v375
      %595 = vst [vmem:[%s590 + $0x20] sm:$0xff] %v389
      %596 = vst [vmem:[%s590 + $0x28] sm:$0xff] %v403
      %597 = vst [vmem:[%s590 + $0x30] sm:$0xff] %v417
      %598 = vst [vmem:[%s590 + $0x38] sm:$0xff] %v431
      %599 = vst [vmem:[%s590 + $0x40] sm:$0xff] %v445
      %600 = vst [vmem:[%s590 + $0x48] sm:$0xff] %v459
      %601 = vst [vmem:[%s590 + $0x50] sm:$0xff] %v473
      %602 = vst [vmem:[%s590 + $0x58] sm:$0xff] %v487
      %603 = vst [vmem:[%s590 + $0x60] sm:$0xff] %v501
      %604 = vst [vmem:[%s590 + $0x68] sm:$0xff] %v515
      %605 = vst [vmem:[%s590 + $0x70] sm:$0xff] %v529
      %606 = vst [vmem:[%s590 + $0x78] sm:$0xff] %v543
      %607 = vst [vmem:[%s590 + $0x80] sm:$0xff] %v557
      %608 = vst [vmem:[%s590 + $0x88] sm:$0xff] %v571
      %v609 = vld [vmem:[%s226] sm:$0x1]
      %v610 = vld [vmem:[#allocation2] sm:$0xff]
      %v611 = vld [vmem:[#allocation2 + $0x8] sm:$0xff]
      %v612 = vld [vmem:[#allocation2 + $0x10] sm:$0xff]
      %v613 = vld [vmem:[#allocation2 + $0x18] sm:$0xff]
      %v614 = vld [vmem:[#allocation2 + $0x20] sm:$0xff]
      %v615 = vld [vmem:[#allocation2 + $0x28] sm:$0xff]
      %v616 = vld [vmem:[#allocation2 + $0x30] sm:$0xff]
      %v617 = vld [vmem:[#allocation2 + $0x38] sm:$0xff]
      %v618 = vld [vmem:[#allocation2 + $0x40] sm:$0xff]
      %v619 = vld [vmem:[#allocation2 + $0x48] sm:$0xff]
      %v620 = vld [vmem:[#allocation2 + $0x50] sm:$0xff]
      %v621 = vld [vmem:[#allocation2 + $0x58] sm:$0xff]
      %v622 = vld [vmem:[#allocation2 + $0x60] sm:$0xff]
      %v623 = vld [vmem:[#allocation2 + $0x68] sm:$0xff]
      %v624 = vld [vmem:[#allocation2 + $0x70] sm:$0xff]
      %v625 = vld [vmem:[#allocation2 + $0x78] sm:$0xff]
      %v626 = vld [vmem:[%s223] sm:$0xf]
      %v627 = vld [vmem:[%s223 + $0x4] sm:$0xf]
      %v628 = vld [vmem:[%s223 + $0x8] sm:$0xf]
      %v629 = vld [vmem:[%s223 + $0xc] sm:$0xf]
      %v630 = vld [vmem:[%s223 + $0x10] sm:$0xf]
      %v631 = vld [vmem:[%s223 + $0x14] sm:$0xf]
      %v632 = vld [vmem:[%s223 + $0x18] sm:$0xf]
      %v633 = vld [vmem:[%s223 + $0x1c] sm:$0xf]
      %v634 = vld [vmem:[%s223 + $0x20] sm:$0xf]
      %v635 = vld [vmem:[%s223 + $0x24] sm:$0xf]
      %v636 = vld [vmem:[%s223 + $0x28] sm:$0xf]
      %v637 = vld [vmem:[%s223 + $0x2c] sm:$0xf]
      %v638 = vld [vmem:[%s223 + $0x30] sm:$0xf]
      %v639 = vld [vmem:[%s223 + $0x34] sm:$0xf]
      %v640 = vld [vmem:[%s223 + $0x38] sm:$0xf]
      %v641 = vld [vmem:[%s223 + $0x3c] sm:$0xf]
      %v642 = vld [vmem:[%s223 + $0x40] sm:$0xf]
      %v643 = vld [vmem:[%s223 + $0x44] sm:$0xf]
      %v644 = vld [vmem:[%s223 + $0x48] sm:$0xf]
      %v645 = vld [vmem:[%s223 + $0x4c] sm:$0xf]
      %v646 = vld [vmem:[%s223 + $0x50] sm:$0xf]
      %v647 = vld [vmem:[%s223 + $0x54] sm:$0xf]
      %v648 = vld [vmem:[%s223 + $0x58] sm:$0xf]
      %v649 = vld [vmem:[%s223 + $0x5c] sm:$0xf]
      %v650 = vld [vmem:[%s223 + $0x60] sm:$0xf]
      %v651 = vld [vmem:[%s223 + $0x64] sm:$0xf]
      %v652 = vld [vmem:[%s223 + $0x68] sm:$0xf]
      %v653 = vld [vmem:[%s223 + $0x6c] sm:$0xf]
      %v654 = vld [vmem:[%s223 + $0x70] sm:$0xf]
      %v655 = vld [vmem:[%s223 + $0x74] sm:$0xf]
      %v656 = vld [vmem:[%s223 + $0x78] sm:$0xf]
      %v657 = vld [vmem:[%s223 + $0x7c] sm:$0xf]
      %v658 = vld [vmem:[%s223 + $0x80] sm:$0xf]
      %v659 = vld [vmem:[%s223 + $0x84] sm:$0xf]
      %v660 = vld [vmem:[%s223 + $0x88] sm:$0xf]
      %v661 = vld [vmem:[%s223 + $0x8c] sm:$0xf]
      %v662 = vld [vmem:[%s223 + $0x90] sm:$0xf]
      %v663 = vld [vmem:[%s223 + $0x94] sm:$0xf]
      %v664 = vld [vmem:[%s223 + $0x98] sm:$0xf]
      %v665 = vld [vmem:[%s223 + $0x9c] sm:$0xf]
      %v666 = vld [vmem:[%s223 + $0xa0] sm:$0xf]
      %v667 = vld [vmem:[%s223 + $0xa4] sm:$0xf]
      %v668 = vld [vmem:[%s223 + $0xa8] sm:$0xf]
      %v669 = vld [vmem:[%s223 + $0xac] sm:$0xf]
      %v670 = vld [vmem:[%s223 + $0xb0] sm:$0xf]
      %v671 = vld [vmem:[%s223 + $0xb4] sm:$0xf]
      %v672 = vld [vmem:[%s223 + $0xb8] sm:$0xf]
      %v673 = vld [vmem:[%s223 + $0xbc] sm:$0xf]
      %v674 = vld [vmem:[%s223 + $0xc0] sm:$0xf]
      %v675 = vld [vmem:[%s223 + $0xc4] sm:$0xf]
      %v676 = vld [vmem:[%s223 + $0xc8] sm:$0xf]
      %v677 = vld [vmem:[%s223 + $0xcc] sm:$0xf]
      %v678 = vld [vmem:[%s223 + $0xd0] sm:$0xf]
      %v679 = vld [vmem:[%s223 + $0xd4] sm:$0xf]
      %v680 = vld [vmem:[%s223 + $0xd8] sm:$0xf]
      %v681 = vld [vmem:[%s223 + $0xdc] sm:$0xf]
      %v682 = vld [vmem:[%s223 + $0xe0] sm:$0xf]
      %v683 = vld [vmem:[%s223 + $0xe4] sm:$0xf]
      %v684 = vld [vmem:[%s223 + $0xe8] sm:$0xf]
      %v685 = vld [vmem:[%s223 + $0xec] sm:$0xf]
      %v686 = vld [vmem:[%s223 + $0xf0] sm:$0xf]
      %v687 = vld [vmem:[%s223 + $0xf4] sm:$0xf]
      %v688 = vld [vmem:[%s223 + $0xf8] sm:$0xf]
      %v689 = vld [vmem:[%s223 + $0xfc] sm:$0xf]
      %v690 = vld [vmem:[%s590] sm:$0xff]
      %v691 = vld [vmem:[%s590 + $0x8] sm:$0xff]
      %v692 = vld [vmem:[%s590 + $0x10] sm:$0xff]
      %v693 = vld [vmem:[%s590 + $0x18] sm:$0xff]
      %v694 = vld [vmem:[%s590 + $0x20] sm:$0xff]
      %v695 = vld [vmem:[%s590 + $0x28] sm:$0xff]
      %v696 = vld [vmem:[%s590 + $0x30] sm:$0xff]
      %v697 = vld [vmem:[%s590 + $0x38] sm:$0xff]
      %v698 = vld [vmem:[%s590 + $0x40] sm:$0xff]
      %v699 = vld [vmem:[%s590 + $0x48] sm:$0xff]
      %v700 = vld [vmem:[%s590 + $0x50] sm:$0xff]
      %v701 = vld [vmem:[%s590 + $0x58] sm:$0xff]
      %v702 = vld [vmem:[%s590 + $0x60] sm:$0xff]
      %v703 = vld [vmem:[%s590 + $0x68] sm:$0xff]
      %v704 = vld [vmem:[%s590 + $0x70] sm:$0xff]
      %v705 = vld [vmem:[%s590 + $0x78] sm:$0xff]
      %s706 = scalar_lea.vmem %s223, 256
      %v707 = vld [vmem:[%s706] sm:$0xf]
      %v708 = vld [vmem:[%s706 + $0x4] sm:$0xf]
      %v709 = vld [vmem:[%s706 + $0x8] sm:$0xf]
      %v710 = vld [vmem:[%s706 + $0xc] sm:$0xf]
      %v711 = vld [vmem:[%s706 + $0x10] sm:$0xf]
      %v712 = vld [vmem:[%s706 + $0x14] sm:$0xf]
      %v713 = vld [vmem:[%s706 + $0x18] sm:$0xf]
      %v714 = vld [vmem:[%s706 + $0x1c] sm:$0xf]
      %v715 = vld [vmem:[%s706 + $0x20] sm:$0xf]
      %v716 = vld [vmem:[%s706 + $0x24] sm:$0xf]
      %v717 = vld [vmem:[%s706 + $0x28] sm:$0xf]
      %v718 = vld [vmem:[%s706 + $0x2c] sm:$0xf]
      %v719 = vld [vmem:[%s706 + $0x30] sm:$0xf]
      %v720 = vld [vmem:[%s706 + $0x34] sm:$0xf]
      %v721 = vld [vmem:[%s706 + $0x38] sm:$0xf]
      %v722 = vld [vmem:[%s706 + $0x3c] sm:$0xf]
      %v723 = vld [vmem:[%s706 + $0x40] sm:$0xf]
      %v724 = vld [vmem:[%s706 + $0x44] sm:$0xf]
      %v725 = vld [vmem:[%s706 + $0x48] sm:$0xf]
      %v726 = vld [vmem:[%s706 + $0x4c] sm:$0xf]
      %v727 = vld [vmem:[%s706 + $0x50] sm:$0xf]
      %v728 = vld [vmem:[%s706 + $0x54] sm:$0xf]
      %v729 = vld [vmem:[%s706 + $0x58] sm:$0xf]
      %v730 = vld [vmem:[%s706 + $0x5c] sm:$0xf]
      %v731 = vld [vmem:[%s706 + $0x60] sm:$0xf]
      %v732 = vld [vmem:[%s706 + $0x64] sm:$0xf]
      %v733 = vld [vmem:[%s706 + $0x68] sm:$0xf]
      %v734 = vld [vmem:[%s706 + $0x6c] sm:$0xf]
      %v735 = vld [vmem:[%s706 + $0x70] sm:$0xf]
      %v736 = vld [vmem:[%s706 + $0x74] sm:$0xf]
      %v737 = vld [vmem:[%s706 + $0x78] sm:$0xf]
      %v738 = vld [vmem:[%s706 + $0x7c] sm:$0xf]
      %v739 = vld [vmem:[%s706 + $0x80] sm:$0xf]
      %v740 = vld [vmem:[%s706 + $0x84] sm:$0xf]
      %v741 = vld [vmem:[%s706 + $0x88] sm:$0xf]
      %v742 = vld [vmem:[%s706 + $0x8c] sm:$0xf]
      %v743 = vld [vmem:[%s706 + $0x90] sm:$0xf]
      %v744 = vld [vmem:[%s706 + $0x94] sm:$0xf]
      %v745 = vld [vmem:[%s706 + $0x98] sm:$0xf]
      %v746 = vld [vmem:[%s706 + $0x9c] sm:$0xf]
      %v747 = vld [vmem:[%s706 + $0xa0] sm:$0xf]
      %v748 = vld [vmem:[%s706 + $0xa4] sm:$0xf]
      %v749 = vld [vmem:[%s706 + $0xa8] sm:$0xf]
      %v750 = vld [vmem:[%s706 + $0xac] sm:$0xf]
      %v751 = vld [vmem:[%s706 + $0xb0] sm:$0xf]
      %v752 = vld [vmem:[%s706 + $0xb4] sm:$0xf]
      %v753 = vld [vmem:[%s706 + $0xb8] sm:$0xf]
      %v754 = vld [vmem:[%s706 + $0xbc] sm:$0xf]
      %v755 = vld [vmem:[%s706 + $0xc0] sm:$0xf]
      %v756 = vld [vmem:[%s706 + $0xc4] sm:$0xf]
      %v757 = vld [vmem:[%s706 + $0xc8] sm:$0xf]
      %v758 = vld [vmem:[%s706 + $0xcc] sm:$0xf]
      %v759 = vld [vmem:[%s706 + $0xd0] sm:$0xf]
      %v760 = vld [vmem:[%s706 + $0xd4] sm:$0xf]
      %v761 = vld [vmem:[%s706 + $0xd8] sm:$0xf]
      %v762 = vld [vmem:[%s706 + $0xdc] sm:$0xf]
      %v763 = vld [vmem:[%s706 + $0xe0] sm:$0xf]
      %v764 = vld [vmem:[%s706 + $0xe4] sm:$0xf]
      %v765 = vld [vmem:[%s706 + $0xe8] sm:$0xf]
      %v766 = vld [vmem:[%s706 + $0xec] sm:$0xf]
      %v767 = vld [vmem:[%s706 + $0xf0] sm:$0xf]
      %v768 = vld [vmem:[%s706 + $0xf4] sm:$0xf]
      %v769 = vld [vmem:[%s706 + $0xf8] sm:$0xf]
      %v770 = vld [vmem:[%s706 + $0xfc] sm:$0xf]
      %v787 = vunpack.c.l.b16 %v690
      %v788 = vunpack.c.h.b16 %v690
      %v789 = vunpack.c.l.b16 %v691
      %v790 = vunpack.c.h.b16 %v691
      %v791 = vunpack.c.l.b16 %v692
      %v792 = vunpack.c.h.b16 %v692
      %v793 = vunpack.c.l.b16 %v693
      %v794 = vunpack.c.h.b16 %v693
      %v795 = vunpack.c.l.b16 %v694
      %v796 = vunpack.c.h.b16 %v694
      %v797 = vunpack.c.l.b16 %v695
      %v798 = vunpack.c.h.b16 %v695
      %v799 = vunpack.c.l.b16 %v696
      %v800 = vunpack.c.h.b16 %v696
      %v801 = vunpack.c.l.b16 %v697
      %v802 = vunpack.c.h.b16 %v697
      %v803 = vunpack.c.l.b16 %v698
      %v804 = vunpack.c.h.b16 %v698
      %v805 = vunpack.c.l.b16 %v699
      %v806 = vunpack.c.h.b16 %v699
      %v807 = vunpack.c.l.b16 %v700
      %v808 = vunpack.c.h.b16 %v700
      %v809 = vunpack.c.l.b16 %v701
      %v810 = vunpack.c.h.b16 %v701
      %v811 = vunpack.c.l.b16 %v702
      %v812 = vunpack.c.h.b16 %v702
      %v813 = vunpack.c.l.b16 %v703
      %v814 = vunpack.c.h.b16 %v703
      %v815 = vunpack.c.l.b16 %v704
      %v816 = vunpack.c.h.b16 %v704
      %v817 = vunpack.c.l.b16 %v705
      %v818 = vunpack.c.h.b16 %v705
      %v819 = vpack.c.b16 %v791, %v787
      %v820 = vpack.c.b16 %v792, %v788
      %v821 = vpack.c.b16 %v793, %v789
      %v822 = vpack.c.b16 %v794, %v790
      %v823 = vpack.c.b16 %v799, %v795
      %v824 = vpack.c.b16 %v800, %v796
      %v825 = vpack.c.b16 %v801, %v797
      %v826 = vpack.c.b16 %v802, %v798
      %v827 = vpack.c.b16 %v807, %v803
      %v828 = vpack.c.b16 %v808, %v804
      %v829 = vpack.c.b16 %v809, %v805
      %v830 = vpack.c.b16 %v810, %v806
      %v831 = vpack.c.b16 %v815, %v811
      %v832 = vpack.c.b16 %v816, %v812
      %v833 = vpack.c.b16 %v817, %v813
      %v834 = vpack.c.b16 %v818, %v814
      %v915 = vunpack.c.l.b16 %v707
      %v916 = vunpack.c.l.b16 %v708
      %v917 = vunpack.c.l.b16 %v709
      %v918 = vunpack.c.l.b16 %v710
      %v919 = vunpack.c.l.b16 %v711
      %v920 = vunpack.c.l.b16 %v712
      %v921 = vunpack.c.l.b16 %v713
      %v922 = vunpack.c.l.b16 %v714
      %v923 = vunpack.c.l.b16 %v715
      %v924 = vunpack.c.l.b16 %v716
      %v925 = vunpack.c.l.b16 %v717
      %v926 = vunpack.c.l.b16 %v718
      %v927 = vunpack.c.l.b16 %v719
      %v928 = vunpack.c.l.b16 %v720
      %v929 = vunpack.c.l.b16 %v721
      %v930 = vunpack.c.l.b16 %v722
      %v931 = vunpack.c.l.b16 %v723
      %v932 = vunpack.c.l.b16 %v724
      %v933 = vunpack.c.l.b16 %v725
      %v934 = vunpack.c.l.b16 %v726
      %v935 = vunpack.c.l.b16 %v727
      %v936 = vunpack.c.l.b16 %v728
      %v937 = vunpack.c.l.b16 %v729
      %v938 = vunpack.c.l.b16 %v730
      %v939 = vunpack.c.l.b16 %v731
      %v940 = vunpack.c.l.b16 %v732
      %v941 = vunpack.c.l.b16 %v733
      %v942 = vunpack.c.l.b16 %v734
      %v943 = vunpack.c.l.b16 %v735
      %v944 = vunpack.c.l.b16 %v736
      %v945 = vunpack.c.l.b16 %v737
      %v946 = vunpack.c.l.b16 %v738
      %v947 = vunpack.c.l.b16 %v739
      %v948 = vunpack.c.l.b16 %v740
      %v949 = vunpack.c.l.b16 %v741
      %v950 = vunpack.c.l.b16 %v742
      %v951 = vunpack.c.l.b16 %v743
      %v952 = vunpack.c.l.b16 %v744
      %v953 = vunpack.c.l.b16 %v745
      %v954 = vunpack.c.l.b16 %v746
      %v955 = vunpack.c.l.b16 %v747
      %v956 = vunpack.c.l.b16 %v748
      %v957 = vunpack.c.l.b16 %v749
      %v958 = vunpack.c.l.b16 %v750
      %v959 = vunpack.c.l.b16 %v751
      %v960 = vunpack.c.l.b16 %v752
      %v961 = vunpack.c.l.b16 %v753
      %v962 = vunpack.c.l.b16 %v754
      %v963 = vunpack.c.l.b16 %v755
      %v964 = vunpack.c.l.b16 %v756
      %v965 = vunpack.c.l.b16 %v757
      %v966 = vunpack.c.l.b16 %v758
      %v967 = vunpack.c.l.b16 %v759
      %v968 = vunpack.c.l.b16 %v760
      %v969 = vunpack.c.l.b16 %v761
      %v970 = vunpack.c.l.b16 %v762
      %v971 = vunpack.c.l.b16 %v763
      %v972 = vunpack.c.l.b16 %v764
      %v973 = vunpack.c.l.b16 %v765
      %v974 = vunpack.c.l.b16 %v766
      %v975 = vunpack.c.l.b16 %v767
      %v976 = vunpack.c.l.b16 %v768
      %v977 = vunpack.c.l.b16 %v769
      %v978 = vunpack.c.l.b16 %v770
      %v979 = vpack.c.b16 %v916, %v915
      %v980 = vpack.c.b16 %v918, %v917
      %v981 = vpack.c.b16 %v920, %v919
      %v982 = vpack.c.b16 %v922, %v921
      %v983 = vpack.c.b16 %v924, %v923
      %v984 = vpack.c.b16 %v926, %v925
      %v985 = vpack.c.b16 %v928, %v927
      %v986 = vpack.c.b16 %v930, %v929
      %v987 = vpack.c.b16 %v932, %v931
      %v988 = vpack.c.b16 %v934, %v933
      %v989 = vpack.c.b16 %v936, %v935
      %v990 = vpack.c.b16 %v938, %v937
      %v991 = vpack.c.b16 %v940, %v939
      %v992 = vpack.c.b16 %v942, %v941
      %v993 = vpack.c.b16 %v944, %v943
      %v994 = vpack.c.b16 %v946, %v945
      %v995 = vpack.c.b16 %v948, %v947
      %v996 = vpack.c.b16 %v950, %v949
      %v997 = vpack.c.b16 %v952, %v951
      %v998 = vpack.c.b16 %v954, %v953
      %v999 = vpack.c.b16 %v956, %v955
      %v1000 = vpack.c.b16 %v958, %v957
      %v1001 = vpack.c.b16 %v960, %v959
      %v1002 = vpack.c.b16 %v962, %v961
      %v1003 = vpack.c.b16 %v964, %v963
      %v1004 = vpack.c.b16 %v966, %v965
      %v1005 = vpack.c.b16 %v968, %v967
      %v1006 = vpack.c.b16 %v970, %v969
      %v1007 = vpack.c.b16 %v972, %v971
      %v1008 = vpack.c.b16 %v974, %v973
      %v1009 = vpack.c.b16 %v976, %v975
      %v1010 = vpack.c.b16 %v978, %v977
      %1043 = vmatprep.subr.bf16.mxu0 0
      %1044 = vmatpush1.bf16.msra.mxu0 %v986
      %1045 = vmatprep.subr.bf16.mxu0 0
      %1046 = vmatpush1.bf16.msra.mxu0 %v985
      %1047 = vmatprep.subr.bf16.mxu0 0
      %1048 = vmatpush1.bf16.msra.mxu0 %v984
      %1049 = vmatprep.subr.bf16.mxu0 0
      %1050 = vmatpush1.bf16.msra.mxu0 %v983
      %1051 = vmatprep.subr.bf16.mxu0 0
      %1052 = vmatpush1.bf16.msra.mxu0 %v982
      %1053 = vmatprep.subr.bf16.mxu0 0
      %1054 = vmatpush1.bf16.msra.mxu0 %v981
      %1055 = vmatprep.subr.bf16.mxu0 0
      %1056 = vmatpush1.bf16.msra.mxu0 %v980
      %1057 = vmatprep.subr.bf16.mxu0 0
      %1058 = vmatpush1.bf16.msra.mxu0 %v979
      %1059 = vmatprep.subr.bf16.mxu0 0
      %1060 = vmatpush2.bf16.msra.mxu0 %v994
      %1061 = vmatprep.subr.bf16.mxu0 0
      %1062 = vmatpush2.bf16.msra.mxu0 %v993
      %1063 = vmatprep.subr.bf16.mxu0 0
      %1064 = vmatpush2.bf16.msra.mxu0 %v992
      %1065 = vmatprep.subr.bf16.mxu0 0
      %1066 = vmatpush2.bf16.msra.mxu0 %v991
      %1067 = vmatprep.subr.bf16.mxu0 0
      %1068 = vmatpush2.bf16.msra.mxu0 %v990
      %1069 = vmatprep.subr.bf16.mxu0 0
      %1070 = vmatpush2.bf16.msra.mxu0 %v989
      %1071 = vmatprep.subr.bf16.mxu0 0
      %1072 = vmatpush2.bf16.msra.mxu0 %v988
      %1073 = vmatprep.subr.bf16.mxu0 0
      %1074 = vmatpush2.bf16.msra.mxu0 %v987
      %1075 = vmatprep.mubr.bf16.mxu0 %v820
      %1076 = vmatmul.mubr.bf16.gmra.mxu0 %v819
      %v1077 = vpop.f32.mrf.mxu0
      %v1078 = vadd.f32 0.0, %v1077
      %v1079 = vpop.f32.mrf.mxu0
      %v1080 = vpop.f32.mrf.mxu0
      %v1081 = vadd.f32 0.0, %v1080
      %v1082 = vpop.f32.mrf.mxu0
      %1083 = vmatprep.mubr.bf16.mxu0 %v824
      %1084 = vmatmul.mubr.bf16.gmra.mxu0 %v823
      %v1085 = vpop.f32.mrf.mxu0
      %v1086 = vadd.f32 0.0, %v1085
      %v1087 = vpop.f32.mrf.mxu0
      %v1088 = vpop.f32.mrf.mxu0
      %v1089 = vadd.f32 0.0, %v1088
      %v1090 = vpop.f32.mrf.mxu0
      %1091 = vmatprep.mubr.bf16.mxu0 %v828
      %1092 = vmatmul.mubr.bf16.gmra.mxu0 %v827
      %v1093 = vpop.f32.mrf.mxu0
      %v1094 = vadd.f32 0.0, %v1093
      %v1095 = vpop.f32.mrf.mxu0
      %v1096 = vpop.f32.mrf.mxu0
      %v1097 = vadd.f32 0.0, %v1096
      %v1098 = vpop.f32.mrf.mxu0
      %1099 = vmatprep.mubr.bf16.mxu0 %v832
      %1100 = vmatmul.mubr.bf16.gmra.mxu0 %v831
      %v1101 = vpop.f32.mrf.mxu0
      %v1102 = vadd.f32 0.0, %v1101
      %v1103 = vpop.f32.mrf.mxu0
      %v1104 = vpop.f32.mrf.mxu0
      %v1105 = vadd.f32 0.0, %v1104
      %v1106 = vpop.f32.mrf.mxu0
      %1107 = vdwg.mxu0
      %1108 = vmatprep.subr.bf16.mxu0 0
      %1109 = vmatpush1.bf16.msra.mxu0 %v1002
      %1110 = vmatprep.subr.bf16.mxu0 0
      %1111 = vmatpush1.bf16.msra.mxu0 %v1001
      %1112 = vmatprep.subr.bf16.mxu0 0
      %1113 = vmatpush1.bf16.msra.mxu0 %v1000
      %1114 = vmatprep.subr.bf16.mxu0 0
      %1115 = vmatpush1.bf16.msra.mxu0 %v999
      %1116 = vmatprep.subr.bf16.mxu0 0
      %1117 = vmatpush1.bf16.msra.mxu0 %v998
      %1118 = vmatprep.subr.bf16.mxu0 0
      %1119 = vmatpush1.bf16.msra.mxu0 %v997
      %1120 = vmatprep.subr.bf16.mxu0 0
      %1121 = vmatpush1.bf16.msra.mxu0 %v996
      %1122 = vmatprep.subr.bf16.mxu0 0
      %1123 = vmatpush1.bf16.msra.mxu0 %v995
      %1124 = vmatprep.subr.bf16.mxu0 0
      %1125 = vmatpush2.bf16.msra.mxu0 %v1010
      %1126 = vmatprep.subr.bf16.mxu0 0
      %1127 = vmatpush2.bf16.msra.mxu0 %v1009
      %1128 = vmatprep.subr.bf16.mxu0 0
      %1129 = vmatpush2.bf16.msra.mxu0 %v1008
      %1130 = vmatprep.subr.bf16.mxu0 0
      %1131 = vmatpush2.bf16.msra.mxu0 %v1007
      %1132 = vmatprep.subr.bf16.mxu0 0
      %1133 = vmatpush2.bf16.msra.mxu0 %v1006
      %1134 = vmatprep.subr.bf16.mxu0 0
      %1135 = vmatpush2.bf16.msra.mxu0 %v1005
      %1136 = vmatprep.subr.bf16.mxu0 0
      %1137 = vmatpush2.bf16.msra.mxu0 %v1004
      %1138 = vmatprep.subr.bf16.mxu0 0
      %1139 = vmatpush2.bf16.msra.mxu0 %v1003
      %1140 = vmatprep.mubr.bf16.mxu0 %v822
      %1141 = vmatmul.mubr.bf16.gmra.mxu0 %v821
      %v1142 = vpop.f32.mrf.mxu0
      %v1143 = vadd.f32 %v1078, %v1142
      %v1144 = vpop.f32.mrf.mxu0
      %v1145 = vpop.f32.mrf.mxu0
      %v1146 = vadd.f32 %v1081, %v1145
      %v1147 = vpop.f32.mrf.mxu0
      %1148 = vmatprep.mubr.bf16.mxu0 %v826
      %1149 = vmatmul.mubr.bf16.gmra.mxu0 %v825
      %v1150 = vpop.f32.mrf.mxu0
      %v1151 = vadd.f32 %v1086, %v1150
      %v1152 = vpop.f32.mrf.mxu0
      %v1153 = vpop.f32.mrf.mxu0
      %v1154 = vadd.f32 %v1089, %v1153
      %v1155 = vpop.f32.mrf.mxu0
      %1156 = vmatprep.mubr.bf16.mxu0 %v830
      %1157 = vmatmul.mubr.bf16.gmra.mxu0 %v829
      %v1158 = vpop.f32.mrf.mxu0
      %v1159 = vadd.f32 %v1094, %v1158
      %v1160 = vpop.f32.mrf.mxu0
      %v1161 = vpop.f32.mrf.mxu0
      %v1162 = vadd.f32 %v1097, %v1161
      %v1163 = vpop.f32.mrf.mxu0
      %1164 = vmatprep.mubr.bf16.mxu0 %v834
      %1165 = vmatmul.mubr.bf16.gmra.mxu0 %v833
      %v1166 = vpop.f32.mrf.mxu0
      %v1167 = vadd.f32 %v1102, %v1166
      %v1168 = vpop.f32.mrf.mxu0
      %v1169 = vpop.f32.mrf.mxu0
      %v1170 = vadd.f32 %v1105, %v1169
      %v1171 = vpop.f32.mrf.mxu0
      %1172 = vdwg.mxu0
      %v1189 = vunpack.c.l.b16 %v610
      %v1190 = vunpack.c.h.b16 %v610
      %v1191 = vunpack.c.l.b16 %v611
      %v1192 = vunpack.c.h.b16 %v611
      %v1193 = vunpack.c.l.b16 %v612
      %v1194 = vunpack.c.h.b16 %v612
      %v1195 = vunpack.c.l.b16 %v613
      %v1196 = vunpack.c.h.b16 %v613
      %v1197 = vunpack.c.l.b16 %v614
      %v1198 = vunpack.c.h.b16 %v614
      %v1199 = vunpack.c.l.b16 %v615
      %v1200 = vunpack.c.h.b16 %v615
      %v1201 = vunpack.c.l.b16 %v616
      %v1202 = vunpack.c.h.b16 %v616
      %v1203 = vunpack.c.l.b16 %v617
      %v1204 = vunpack.c.h.b16 %v617
      %v1205 = vunpack.c.l.b16 %v618
      %v1206 = vunpack.c.h.b16 %v618
      %v1207 = vunpack.c.l.b16 %v619
      %v1208 = vunpack.c.h.b16 %v619
      %v1209 = vunpack.c.l.b16 %v620
      %v1210 = vunpack.c.h.b16 %v620
      %v1211 = vunpack.c.l.b16 %v621
      %v1212 = vunpack.c.h.b16 %v621
      %v1213 = vunpack.c.l.b16 %v622
      %v1214 = vunpack.c.h.b16 %v622
      %v1215 = vunpack.c.l.b16 %v623
      %v1216 = vunpack.c.h.b16 %v623
      %v1217 = vunpack.c.l.b16 %v624
      %v1218 = vunpack.c.h.b16 %v624
      %v1219 = vunpack.c.l.b16 %v625
      %v1220 = vunpack.c.h.b16 %v625
      %v1221 = vpack.c.b16 %v1193, %v1189
      %v1222 = vpack.c.b16 %v1194, %v1190
      %v1223 = vpack.c.b16 %v1195, %v1191
      %v1224 = vpack.c.b16 %v1196, %v1192
      %v1225 = vpack.c.b16 %v1201, %v1197
      %v1226 = vpack.c.b16 %v1202, %v1198
      %v1227 = vpack.c.b16 %v1203, %v1199
      %v1228 = vpack.c.b16 %v1204, %v1200
      %v1229 = vpack.c.b16 %v1209, %v1205
      %v1230 = vpack.c.b16 %v1210, %v1206
      %v1231 = vpack.c.b16 %v1211, %v1207
      %v1232 = vpack.c.b16 %v1212, %v1208
      %v1233 = vpack.c.b16 %v1217, %v1213
      %v1234 = vpack.c.b16 %v1218, %v1214
      %v1235 = vpack.c.b16 %v1219, %v1215
      %v1236 = vpack.c.b16 %v1220, %v1216
      %v1317 = vunpack.c.l.b16 %v626
      %v1318 = vunpack.c.l.b16 %v627
      %v1319 = vunpack.c.l.b16 %v628
      %v1320 = vunpack.c.l.b16 %v629
      %v1321 = vunpack.c.l.b16 %v630
      %v1322 = vunpack.c.l.b16 %v631
      %v1323 = vunpack.c.l.b16 %v632
      %v1324 = vunpack.c.l.b16 %v633
      %v1325 = vunpack.c.l.b16 %v634
      %v1326 = vunpack.c.l.b16 %v635
      %v1327 = vunpack.c.l.b16 %v636
      %v1328 = vunpack.c.l.b16 %v637
      %v1329 = vunpack.c.l.b16 %v638
      %v1330 = vunpack.c.l.b16 %v639
      %v1331 = vunpack.c.l.b16 %v640
      %v1332 = vunpack.c.l.b16 %v641
      %v1333 = vunpack.c.l.b16 %v642
      %v1334 = vunpack.c.l.b16 %v643
      %v1335 = vunpack.c.l.b16 %v644
      %v1336 = vunpack.c.l.b16 %v645
      %v1337 = vunpack.c.l.b16 %v646
      %v1338 = vunpack.c.l.b16 %v647
      %v1339 = vunpack.c.l.b16 %v648
      %v1340 = vunpack.c.l.b16 %v649
      %v1341 = vunpack.c.l.b16 %v650
      %v1342 = vunpack.c.l.b16 %v651
      %v1343 = vunpack.c.l.b16 %v652
      %v1344 = vunpack.c.l.b16 %v653
      %v1345 = vunpack.c.l.b16 %v654
      %v1346 = vunpack.c.l.b16 %v655
      %v1347 = vunpack.c.l.b16 %v656
      %v1348 = vunpack.c.l.b16 %v657
      %v1349 = vunpack.c.l.b16 %v658
      %v1350 = vunpack.c.l.b16 %v659
      %v1351 = vunpack.c.l.b16 %v660
      %v1352 = vunpack.c.l.b16 %v661
      %v1353 = vunpack.c.l.b16 %v662
      %v1354 = vunpack.c.l.b16 %v663
      %v1355 = vunpack.c.l.b16 %v664
      %v1356 = vunpack.c.l.b16 %v665
      %v1357 = vunpack.c.l.b16 %v666
      %v1358 = vunpack.c.l.b16 %v667
      %v1359 = vunpack.c.l.b16 %v668
      %v1360 = vunpack.c.l.b16 %v669
      %v1361 = vunpack.c.l.b16 %v670
      %v1362 = vunpack.c.l.b16 %v671
      %v1363 = vunpack.c.l.b16 %v672
      %v1364 = vunpack.c.l.b16 %v673
      %v1365 = vunpack.c.l.b16 %v674
      %v1366 = vunpack.c.l.b16 %v675
      %v1367 = vunpack.c.l.b16 %v676
      %v1368 = vunpack.c.l.b16 %v677
      %v1369 = vunpack.c.l.b16 %v678
      %v1370 = vunpack.c.l.b16 %v679
      %v1371 = vunpack.c.l.b16 %v680
      %v1372 = vunpack.c.l.b16 %v681
      %v1373 = vunpack.c.l.b16 %v682
      %v1374 = vunpack.c.l.b16 %v683
      %v1375 = vunpack.c.l.b16 %v684
      %v1376 = vunpack.c.l.b16 %v685
      %v1377 = vunpack.c.l.b16 %v686
      %v1378 = vunpack.c.l.b16 %v687
      %v1379 = vunpack.c.l.b16 %v688
      %v1380 = vunpack.c.l.b16 %v689
      %v1381 = vpack.c.b16 %v1318, %v1317
      %v1382 = vpack.c.b16 %v1320, %v1319
      %v1383 = vpack.c.b16 %v1322, %v1321
      %v1384 = vpack.c.b16 %v1324, %v1323
      %v1385 = vpack.c.b16 %v1326, %v1325
      %v1386 = vpack.c.b16 %v1328, %v1327
      %v1387 = vpack.c.b16 %v1330, %v1329
      %v1388 = vpack.c.b16 %v1332, %v1331
      %v1389 = vpack.c.b16 %v1334, %v1333
      %v1390 = vpack.c.b16 %v1336, %v1335
      %v1391 = vpack.c.b16 %v1338, %v1337
      %v1392 = vpack.c.b16 %v1340, %v1339
      %v1393 = vpack.c.b16 %v1342, %v1341
      %v1394 = vpack.c.b16 %v1344, %v1343
      %v1395 = vpack.c.b16 %v1346, %v1345
      %v1396 = vpack.c.b16 %v1348, %v1347
      %v1397 = vpack.c.b16 %v1350, %v1349
      %v1398 = vpack.c.b16 %v1352, %v1351
      %v1399 = vpack.c.b16 %v1354, %v1353
      %v1400 = vpack.c.b16 %v1356, %v1355
      %v1401 = vpack.c.b16 %v1358, %v1357
      %v1402 = vpack.c.b16 %v1360, %v1359
      %v1403 = vpack.c.b16 %v1362, %v1361
      %v1404 = vpack.c.b16 %v1364, %v1363
      %v1405 = vpack.c.b16 %v1366, %v1365
      %v1406 = vpack.c.b16 %v1368, %v1367
      %v1407 = vpack.c.b16 %v1370, %v1369
      %v1408 = vpack.c.b16 %v1372, %v1371
      %v1409 = vpack.c.b16 %v1374, %v1373
      %v1410 = vpack.c.b16 %v1376, %v1375
      %v1411 = vpack.c.b16 %v1378, %v1377
      %v1412 = vpack.c.b16 %v1380, %v1379
      %1445 = vmatprep.subr.bf16.mxu0 0
      %1446 = vmatpush1.bf16.msra.mxu0 %v1388
      %1447 = vmatprep.subr.bf16.mxu0 0
      %1448 = vmatpush1.bf16.msra.mxu0 %v1387
      %1449 = vmatprep.subr.bf16.mxu0 0
      %1450 = vmatpush1.bf16.msra.mxu0 %v1386
      %1451 = vmatprep.subr.bf16.mxu0 0
      %1452 = vmatpush1.bf16.msra.mxu0 %v1385
      %1453 = vmatprep.subr.bf16.mxu0 0
      %1454 = vmatpush1.bf16.msra.mxu0 %v1384
      %1455 = vmatprep.subr.bf16.mxu0 0
      %1456 = vmatpush1.bf16.msra.mxu0 %v1383
      %1457 = vmatprep.subr.bf16.mxu0 0
      %1458 = vmatpush1.bf16.msra.mxu0 %v1382
      %1459 = vmatprep.subr.bf16.mxu0 0
      %1460 = vmatpush1.bf16.msra.mxu0 %v1381
      %1461 = vmatprep.subr.bf16.mxu0 0
      %1462 = vmatpush2.bf16.msra.mxu0 %v1396
      %1463 = vmatprep.subr.bf16.mxu0 0
      %1464 = vmatpush2.bf16.msra.mxu0 %v1395
      %1465 = vmatprep.subr.bf16.mxu0 0
      %1466 = vmatpush2.bf16.msra.mxu0 %v1394
      %1467 = vmatprep.subr.bf16.mxu0 0
      %1468 = vmatpush2.bf16.msra.mxu0 %v1393
      %1469 = vmatprep.subr.bf16.mxu0 0
      %1470 = vmatpush2.bf16.msra.mxu0 %v1392
      %1471 = vmatprep.subr.bf16.mxu0 0
      %1472 = vmatpush2.bf16.msra.mxu0 %v1391
      %1473 = vmatprep.subr.bf16.mxu0 0
      %1474 = vmatpush2.bf16.msra.mxu0 %v1390
      %1475 = vmatprep.subr.bf16.mxu0 0
      %1476 = vmatpush2.bf16.msra.mxu0 %v1389
      %1477 = vmatprep.mubr.bf16.mxu0 %v1222
      %1478 = vmatmul.mubr.bf16.gmra.mxu0 %v1221
      %v1479 = vpop.f32.mrf.mxu0
      %v1480 = vadd.f32 %v1143, %v1479
      %v1481 = vpop.f32.mrf.mxu0
      %v1482 = vpop.f32.mrf.mxu0
      %v1483 = vadd.f32 %v1146, %v1482
      %v1484 = vpop.f32.mrf.mxu0
      %1485 = vmatprep.mubr.bf16.mxu0 %v1226
      %1486 = vmatmul.mubr.bf16.gmra.mxu0 %v1225
      %v1487 = vpop.f32.mrf.mxu0
      %v1488 = vadd.f32 %v1151, %v1487
      %v1489 = vpop.f32.mrf.mxu0
      %v1490 = vpop.f32.mrf.mxu0
      %v1491 = vadd.f32 %v1154, %v1490
      %v1492 = vpop.f32.mrf.mxu0
      %1493 = vmatprep.mubr.bf16.mxu0 %v1230
      %1494 = vmatmul.mubr.bf16.gmra.mxu0 %v1229
      %v1495 = vpop.f32.mrf.mxu0
      %v1496 = vadd.f32 %v1159, %v1495
      %v1497 = vpop.f32.mrf.mxu0
      %v1498 = vpop.f32.mrf.mxu0
      %v1499 = vadd.f32 %v1162, %v1498
      %v1500 = vpop.f32.mrf.mxu0
      %1501 = vmatprep.mubr.bf16.mxu0 %v1234
      %1502 = vmatmul.mubr.bf16.gmra.mxu0 %v1233
      %v1503 = vpop.f32.mrf.mxu0
      %v1504 = vadd.f32 %v1167, %v1503
      %v1505 = vpop.f32.mrf.mxu0
      %v1506 = vpop.f32.mrf.mxu0
      %v1507 = vadd.f32 %v1170, %v1506
      %v1508 = vpop.f32.mrf.mxu0
      %1509 = vdwg.mxu0
      %1510 = vmatprep.subr.bf16.mxu0 0
      %1511 = vmatpush1.bf16.msra.mxu0 %v1404
      %1512 = vmatprep.subr.bf16.mxu0 0
      %1513 = vmatpush1.bf16.msra.mxu0 %v1403
      %1514 = vmatprep.subr.bf16.mxu0 0
      %1515 = vmatpush1.bf16.msra.mxu0 %v1402
      %1516 = vmatprep.subr.bf16.mxu0 0
      %1517 = vmatpush1.bf16.msra.mxu0 %v1401
      %1518 = vmatprep.subr.bf16.mxu0 0
      %1519 = vmatpush1.bf16.msra.mxu0 %v1400
      %1520 = vmatprep.subr.bf16.mxu0 0
      %1521 = vmatpush1.bf16.msra.mxu0 %v1399
      %1522 = vmatprep.subr.bf16.mxu0 0
      %1523 = vmatpush1.bf16.msra.mxu0 %v1398
      %1524 = vmatprep.subr.bf16.mxu0 0
      %1525 = vmatpush1.bf16.msra.mxu0 %v1397
      %1526 = vmatprep.subr.bf16.mxu0 0
      %1527 = vmatpush2.bf16.msra.mxu0 %v1412
      %1528 = vmatprep.subr.bf16.mxu0 0
      %1529 = vmatpush2.bf16.msra.mxu0 %v1411
      %1530 = vmatprep.subr.bf16.mxu0 0
      %1531 = vmatpush2.bf16.msra.mxu0 %v1410
      %1532 = vmatprep.subr.bf16.mxu0 0
      %1533 = vmatpush2.bf16.msra.mxu0 %v1409
      %1534 = vmatprep.subr.bf16.mxu0 0
      %1535 = vmatpush2.bf16.msra.mxu0 %v1408
      %1536 = vmatprep.subr.bf16.mxu0 0
      %1537 = vmatpush2.bf16.msra.mxu0 %v1407
      %1538 = vmatprep.subr.bf16.mxu0 0
      %1539 = vmatpush2.bf16.msra.mxu0 %v1406
      %1540 = vmatprep.subr.bf16.mxu0 0
      %1541 = vmatpush2.bf16.msra.mxu0 %v1405
      %1542 = vmatprep.mubr.bf16.mxu0 %v1224
      %1543 = vmatmul.mubr.bf16.gmra.mxu0 %v1223
      %v1544 = vpop.f32.mrf.mxu0
      %v1545 = vadd.f32 %v1480, %v1544
      %v1546 = vpop.f32.mrf.mxu0
      %v1547 = vpop.f32.mrf.mxu0
      %v1548 = vadd.f32 %v1483, %v1547
      %v1549 = vpop.f32.mrf.mxu0
      %1550 = vmatprep.mubr.bf16.mxu0 %v1228
      %1551 = vmatmul.mubr.bf16.gmra.mxu0 %v1227
      %v1552 = vpop.f32.mrf.mxu0
      %v1553 = vadd.f32 %v1488, %v1552
      %v1554 = vpop.f32.mrf.mxu0
      %v1555 = vpop.f32.mrf.mxu0
      %v1556 = vadd.f32 %v1491, %v1555
      %v1557 = vpop.f32.mrf.mxu0
      %1558 = vmatprep.mubr.bf16.mxu0 %v1232
      %1559 = vmatmul.mubr.bf16.gmra.mxu0 %v1231
      %v1560 = vpop.f32.mrf.mxu0
      %v1561 = vadd.f32 %v1496, %v1560
      %v1562 = vpop.f32.mrf.mxu0
      %v1563 = vpop.f32.mrf.mxu0
      %v1564 = vadd.f32 %v1499, %v1563
      %v1565 = vpop.f32.mrf.mxu0
      %1566 = vmatprep.mubr.bf16.mxu0 %v1236
      %1567 = vmatmul.mubr.bf16.gmra.mxu0 %v1235
      %v1568 = vpop.f32.mrf.mxu0
      %v1569 = vadd.f32 %v1504, %v1568
      %v1570 = vpop.f32.mrf.mxu0
      %v1571 = vpop.f32.mrf.mxu0
      %v1572 = vadd.f32 %v1507, %v1571
      %v1573 = vpop.f32.mrf.mxu0
      %1574 = vdwg.mxu0
      %v1576 = vlaneseq
      %v1577 = vshrl.u32 %v1576, 7
      %v1578 = vsub.s32 0, %v1577
      %v1579 = vrot.slane %v609, %v1578
      %v1581 = vadd.f32 %v1545, %v1579
      %v1582 = vadd.f32 %v1548, %v1579
      %v1583 = vadd.f32 %v1553, %v1579
      %v1584 = vadd.f32 %v1556, %v1579
      %v1585 = vadd.f32 %v1561, %v1579
      %v1586 = vadd.f32 %v1564, %v1579
      %v1587 = vadd.f32 %v1569, %v1579
      %v1588 = vadd.f32 %v1572, %v1579
      %1589 = vst [vmem:[#allocation3] sm:$0xff] %v1581
      %1590 = vst [vmem:[#allocation3 + $0x8] sm:$0xff] %v1582
      %1591 = vst [vmem:[#allocation3 + $0x10] sm:$0xff] %v1583
      %1592 = vst [vmem:[#allocation3 + $0x18] sm:$0xff] %v1584
      %1593 = vst [vmem:[#allocation3 + $0x20] sm:$0xff] %v1585
      %1594 = vst [vmem:[#allocation3 + $0x28] sm:$0xff] %v1586
      %1595 = vst [vmem:[#allocation3 + $0x30] sm:$0xff] %v1587
      %1596 = vst [vmem:[#allocation3 + $0x38] sm:$0xff] %v1588
      %s1597 = scalar_lea.vmem [#allocation2], 16
      %v1598 = vld [vmem:[%s1597] sm:$0xff]
      %v1599 = vld [vmem:[%s1597 + $0x8] sm:$0xff]
      %v1600 = vld [vmem:[%s1597 + $0x10] sm:$0xff]
      %v1601 = vld [vmem:[%s1597 + $0x18] sm:$0xff]
      %v1602 = vld [vmem:[%s1597 + $0x20] sm:$0xff]
      %v1603 = vld [vmem:[%s1597 + $0x28] sm:$0xff]
      %v1604 = vld [vmem:[%s1597 + $0x30] sm:$0xff]
      %v1605 = vld [vmem:[%s1597 + $0x38] sm:$0xff]
      %v1606 = vld [vmem:[%s1597 + $0x40] sm:$0xff]
      %v1607 = vld [vmem:[%s1597 + $0x48] sm:$0xff]
      %v1608 = vld [vmem:[%s1597 + $0x50] sm:$0xff]
      %v1609 = vld [vmem:[%s1597 + $0x58] sm:$0xff]
      %v1610 = vld [vmem:[%s1597 + $0x60] sm:$0xff]
      %v1611 = vld [vmem:[%s1597 + $0x68] sm:$0xff]
      %v1612 = vld [vmem:[%s1597 + $0x70] sm:$0xff]
      %v1613 = vld [vmem:[%s1597 + $0x78] sm:$0xff]
      %s1614 = scalar_lea.vmem %s223, 512
      %v1615 = vld [vmem:[%s1614] sm:$0xf]
      %v1616 = vld [vmem:[%s1614 + $0x4] sm:$0xf]
      %v1617 = vld [vmem:[%s1614 + $0x8] sm:$0xf]
      %v1618 = vld [vmem:[%s1614 + $0xc] sm:$0xf]
      %v1619 = vld [vmem:[%s1614 + $0x10] sm:$0xf]
      %v1620 = vld [vmem:[%s1614 + $0x14] sm:$0xf]
      %v1621 = vld [vmem:[%s1614 + $0x18] sm:$0xf]
      %v1622 = vld [vmem:[%s1614 + $0x1c] sm:$0xf]
      %v1623 = vld [vmem:[%s1614 + $0x20] sm:$0xf]
      %v1624 = vld [vmem:[%s1614 + $0x24] sm:$0xf]
      %v1625 = vld [vmem:[%s1614 + $0x28] sm:$0xf]
      %v1626 = vld [vmem:[%s1614 + $0x2c] sm:$0xf]
      %v1627 = vld [vmem:[%s1614 + $0x30] sm:$0xf]
      %v1628 = vld [vmem:[%s1614 + $0x34] sm:$0xf]
      %v1629 = vld [vmem:[%s1614 + $0x38] sm:$0xf]
      %v1630 = vld [vmem:[%s1614 + $0x3c] sm:$0xf]
      %v1631 = vld [vmem:[%s1614 + $0x40] sm:$0xf]
      %v1632 = vld [vmem:[%s1614 + $0x44] sm:$0xf]
      %v1633 = vld [vmem:[%s1614 + $0x48] sm:$0xf]
      %v1634 = vld [vmem:[%s1614 + $0x4c] sm:$0xf]
      %v1635 = vld [vmem:[%s1614 + $0x50] sm:$0xf]
      %v1636 = vld [vmem:[%s1614 + $0x54] sm:$0xf]
      %v1637 = vld [vmem:[%s1614 + $0x58] sm:$0xf]
      %v1638 = vld [vmem:[%s1614 + $0x5c] sm:$0xf]
      %v1639 = vld [vmem:[%s1614 + $0x60] sm:$0xf]
      %v1640 = vld [vmem:[%s1614 + $0x64] sm:$0xf]
      %v1641 = vld [vmem:[%s1614 + $0x68] sm:$0xf]
      %v1642 = vld [vmem:[%s1614 + $0x6c] sm:$0xf]
      %v1643 = vld [vmem:[%s1614 + $0x70] sm:$0xf]
      %v1644 = vld [vmem:[%s1614 + $0x74] sm:$0xf]
      %v1645 = vld [vmem:[%s1614 + $0x78] sm:$0xf]
      %v1646 = vld [vmem:[%s1614 + $0x7c] sm:$0xf]
      %v1647 = vld [vmem:[%s1614 + $0x80] sm:$0xf]
      %v1648 = vld [vmem:[%s1614 + $0x84] sm:$0xf]
      %v1649 = vld [vmem:[%s1614 + $0x88] sm:$0xf]
      %v1650 = vld [vmem:[%s1614 + $0x8c] sm:$0xf]
      %v1651 = vld [vmem:[%s1614 + $0x90] sm:$0xf]
      %v1652 = vld [vmem:[%s1614 + $0x94] sm:$0xf]
      %v1653 = vld [vmem:[%s1614 + $0x98] sm:$0xf]
      %v1654 = vld [vmem:[%s1614 + $0x9c] sm:$0xf]
      %v1655 = vld [vmem:[%s1614 + $0xa0] sm:$0xf]
      %v1656 = vld [vmem:[%s1614 + $0xa4] sm:$0xf]
      %v1657 = vld [vmem:[%s1614 + $0xa8] sm:$0xf]
      %v1658 = vld [vmem:[%s1614 + $0xac] sm:$0xf]
      %v1659 = vld [vmem:[%s1614 + $0xb0] sm:$0xf]
      %v1660 = vld [vmem:[%s1614 + $0xb4] sm:$0xf]
      %v1661 = vld [vmem:[%s1614 + $0xb8] sm:$0xf]
      %v1662 = vld [vmem:[%s1614 + $0xbc] sm:$0xf]
      %v1663 = vld [vmem:[%s1614 + $0xc0] sm:$0xf]
      %v1664 = vld [vmem:[%s1614 + $0xc4] sm:$0xf]
      %v1665 = vld [vmem:[%s1614 + $0xc8] sm:$0xf]
      %v1666 = vld [vmem:[%s1614 + $0xcc] sm:$0xf]
      %v1667 = vld [vmem:[%s1614 + $0xd0] sm:$0xf]
      %v1668 = vld [vmem:[%s1614 + $0xd4] sm:$0xf]
      %v1669 = vld [vmem:[%s1614 + $0xd8] sm:$0xf]
      %v1670 = vld [vmem:[%s1614 + $0xdc] sm:$0xf]
      %v1671 = vld [vmem:[%s1614 + $0xe0] sm:$0xf]
      %v1672 = vld [vmem:[%s1614 + $0xe4] sm:$0xf]
      %v1673 = vld [vmem:[%s1614 + $0xe8] sm:$0xf]
      %v1674 = vld [vmem:[%s1614 + $0xec] sm:$0xf]
      %v1675 = vld [vmem:[%s1614 + $0xf0] sm:$0xf]
      %v1676 = vld [vmem:[%s1614 + $0xf4] sm:$0xf]
      %v1677 = vld [vmem:[%s1614 + $0xf8] sm:$0xf]
      %v1678 = vld [vmem:[%s1614 + $0xfc] sm:$0xf]
      %s1679 = scalar_lea.vmem [#allocation2], 160
      %v1680 = vld [vmem:[%s1679] sm:$0xff]
      %v1681 = vld [vmem:[%s1679 + $0x8] sm:$0xff]
      %v1682 = vld [vmem:[%s1679 + $0x10] sm:$0xff]
      %v1683 = vld [vmem:[%s1679 + $0x18] sm:$0xff]
      %v1684 = vld [vmem:[%s1679 + $0x20] sm:$0xff]
      %v1685 = vld [vmem:[%s1679 + $0x28] sm:$0xff]
      %v1686 = vld [vmem:[%s1679 + $0x30] sm:$0xff]
      %v1687 = vld [vmem:[%s1679 + $0x38] sm:$0xff]
      %v1688 = vld [vmem:[%s1679 + $0x40] sm:$0xff]
      %v1689 = vld [vmem:[%s1679 + $0x48] sm:$0xff]
      %v1690 = vld [vmem:[%s1679 + $0x50] sm:$0xff]
      %v1691 = vld [vmem:[%s1679 + $0x58] sm:$0xff]
      %v1692 = vld [vmem:[%s1679 + $0x60] sm:$0xff]
      %v1693 = vld [vmem:[%s1679 + $0x68] sm:$0xff]
      %v1694 = vld [vmem:[%s1679 + $0x70] sm:$0xff]
      %v1695 = vld [vmem:[%s1679 + $0x78] sm:$0xff]
      %s1696 = scalar_lea.vmem %s223, 768
      %v1697 = vld [vmem:[%s1696] sm:$0xf]
      %v1698 = vld [vmem:[%s1696 + $0x4] sm:$0xf]
      %v1699 = vld [vmem:[%s1696 + $0x8] sm:$0xf]
      %v1700 = vld [vmem:[%s1696 + $0xc] sm:$0xf]
      %v1701 = vld [vmem:[%s1696 + $0x10] sm:$0xf]
      %v1702 = vld [vmem:[%s1696 + $0x14] sm:$0xf]
      %v1703 = vld [vmem:[%s1696 + $0x18] sm:$0xf]
      %v1704 = vld [vmem:[%s1696 + $0x1c] sm:$0xf]
      %v1705 = vld [vmem:[%s1696 + $0x20] sm:$0xf]
      %v1706 = vld [vmem:[%s1696 + $0x24] sm:$0xf]
      %v1707 = vld [vmem:[%s1696 + $0x28] sm:$0xf]
      %v1708 = vld [vmem:[%s1696 + $0x2c] sm:$0xf]
      %v1709 = vld [vmem:[%s1696 + $0x30] sm:$0xf]
      %v1710 = vld [vmem:[%s1696 + $0x34] sm:$0xf]
      %v1711 = vld [vmem:[%s1696 + $0x38] sm:$0xf]
      %v1712 = vld [vmem:[%s1696 + $0x3c] sm:$0xf]
      %v1713 = vld [vmem:[%s1696 + $0x40] sm:$0xf]
      %v1714 = vld [vmem:[%s1696 + $0x44] sm:$0xf]
      %v1715 = vld [vmem:[%s1696 + $0x48] sm:$0xf]
      %v1716 = vld [vmem:[%s1696 + $0x4c] sm:$0xf]
      %v1717 = vld [vmem:[%s1696 + $0x50] sm:$0xf]
      %v1718 = vld [vmem:[%s1696 + $0x54] sm:$0xf]
      %v1719 = vld [vmem:[%s1696 + $0x58] sm:$0xf]
      %v1720 = vld [vmem:[%s1696 + $0x5c] sm:$0xf]
      %v1721 = vld [vmem:[%s1696 + $0x60] sm:$0xf]
      %v1722 = vld [vmem:[%s1696 + $0x64] sm:$0xf]
      %v1723 = vld [vmem:[%s1696 + $0x68] sm:$0xf]
      %v1724 = vld [vmem:[%s1696 + $0x6c] sm:$0xf]
      %v1725 = vld [vmem:[%s1696 + $0x70] sm:$0xf]
      %v1726 = vld [vmem:[%s1696 + $0x74] sm:$0xf]
      %v1727 = vld [vmem:[%s1696 + $0x78] sm:$0xf]
      %v1728 = vld [vmem:[%s1696 + $0x7c] sm:$0xf]
      %v1729 = vld [vmem:[%s1696 + $0x80] sm:$0xf]
      %v1730 = vld [vmem:[%s1696 + $0x84] sm:$0xf]
      %v1731 = vld [vmem:[%s1696 + $0x88] sm:$0xf]
      %v1732 = vld [vmem:[%s1696 + $0x8c] sm:$0xf]
      %v1733 = vld [vmem:[%s1696 + $0x90] sm:$0xf]
      %v1734 = vld [vmem:[%s1696 + $0x94] sm:$0xf]
      %v1735 = vld [vmem:[%s1696 + $0x98] sm:$0xf]
      %v1736 = vld [vmem:[%s1696 + $0x9c] sm:$0xf]
      %v1737 = vld [vmem:[%s1696 + $0xa0] sm:$0xf]
      %v1738 = vld [vmem:[%s1696 + $0xa4] sm:$0xf]
      %v1739 = vld [vmem:[%s1696 + $0xa8] sm:$0xf]
      %v1740 = vld [vmem:[%s1696 + $0xac] sm:$0xf]
      %v1741 = vld [vmem:[%s1696 + $0xb0] sm:$0xf]
      %v1742 = vld [vmem:[%s1696 + $0xb4] sm:$0xf]
      %v1743 = vld [vmem:[%s1696 + $0xb8] sm:$0xf]
      %v1744 = vld [vmem:[%s1696 + $0xbc] sm:$0xf]
      %v1745 = vld [vmem:[%s1696 + $0xc0] sm:$0xf]
      %v1746 = vld [vmem:[%s1696 + $0xc4] sm:$0xf]
      %v1747 = vld [vmem:[%s1696 + $0xc8] sm:$0xf]
      %v1748 = vld [vmem:[%s1696 + $0xcc] sm:$0xf]
      %v1749 = vld [vmem:[%s1696 + $0xd0] sm:$0xf]
      %v1750 = vld [vmem:[%s1696 + $0xd4] sm:$0xf]
      %v1751 = vld [vmem:[%s1696 + $0xd8] sm:$0xf]
      %v1752 = vld [vmem:[%s1696 + $0xdc] sm:$0xf]
      %v1753 = vld [vmem:[%s1696 + $0xe0] sm:$0xf]
      %v1754 = vld [vmem:[%s1696 + $0xe4] sm:$0xf]
      %v1755 = vld [vmem:[%s1696 + $0xe8] sm:$0xf]
      %v1756 = vld [vmem:[%s1696 + $0xec] sm:$0xf]
      %v1757 = vld [vmem:[%s1696 + $0xf0] sm:$0xf]
      %v1758 = vld [vmem:[%s1696 + $0xf4] sm:$0xf]
      %v1759 = vld [vmem:[%s1696 + $0xf8] sm:$0xf]
      %v1760 = vld [vmem:[%s1696 + $0xfc] sm:$0xf]
      %v1777 = vunpack.c.l.b16 %v1680
      %v1778 = vunpack.c.h.b16 %v1680
      %v1779 = vunpack.c.l.b16 %v1681
      %v1780 = vunpack.c.h.b16 %v1681
      %v1781 = vunpack.c.l.b16 %v1682
      %v1782 = vunpack.c.h.b16 %v1682
      %v1783 = vunpack.c.l.b16 %v1683
      %v1784 = vunpack.c.h.b16 %v1683
      %v1785 = vunpack.c.l.b16 %v1684
      %v1786 = vunpack.c.h.b16 %v1684
      %v1787 = vunpack.c.l.b16 %v1685
      %v1788 = vunpack.c.h.b16 %v1685
      %v1789 = vunpack.c.l.b16 %v1686
      %v1790 = vunpack.c.h.b16 %v1686
      %v1791 = vunpack.c.l.b16 %v1687
      %v1792 = vunpack.c.h.b16 %v1687
      %v1793 = vunpack.c.l.b16 %v1688
      %v1794 = vunpack.c.h.b16 %v1688
      %v1795 = vunpack.c.l.b16 %v1689
      %v1796 = vunpack.c.h.b16 %v1689
      %v1797 = vunpack.c.l.b16 %v1690
      %v1798 = vunpack.c.h.b16 %v1690
      %v1799 = vunpack.c.l.b16 %v1691
      %v1800 = vunpack.c.h.b16 %v1691
      %v1801 = vunpack.c.l.b16 %v1692
      %v1802 = vunpack.c.h.b16 %v1692
      %v1803 = vunpack.c.l.b16 %v1693
      %v1804 = vunpack.c.h.b16 %v1693
      %v1805 = vunpack.c.l.b16 %v1694
      %v1806 = vunpack.c.h.b16 %v1694
      %v1807 = vunpack.c.l.b16 %v1695
      %v1808 = vunpack.c.h.b16 %v1695
      %v1809 = vpack.c.b16 %v1781, %v1777
      %v1810 = vpack.c.b16 %v1782, %v1778
      %v1811 = vpack.c.b16 %v1783, %v1779
      %v1812 = vpack.c.b16 %v1784, %v1780
      %v1813 = vpack.c.b16 %v1789, %v1785
      %v1814 = vpack.c.b16 %v1790, %v1786
      %v1815 = vpack.c.b16 %v1791, %v1787
      %v1816 = vpack.c.b16 %v1792, %v1788
      %v1817 = vpack.c.b16 %v1797, %v1793
      %v1818 = vpack.c.b16 %v1798, %v1794
      %v1819 = vpack.c.b16 %v1799, %v1795
      %v1820 = vpack.c.b16 %v1800, %v1796
      %v1821 = vpack.c.b16 %v1805, %v1801
      %v1822 = vpack.c.b16 %v1806, %v1802
      %v1823 = vpack.c.b16 %v1807, %v1803
      %v1824 = vpack.c.b16 %v1808, %v1804
      %v1905 = vunpack.c.l.b16 %v1697
      %v1906 = vunpack.c.l.b16 %v1698
      %v1907 = vunpack.c.l.b16 %v1699
      %v1908 = vunpack.c.l.b16 %v1700
      %v1909 = vunpack.c.l.b16 %v1701
      %v1910 = vunpack.c.l.b16 %v1702
      %v1911 = vunpack.c.l.b16 %v1703
      %v1912 = vunpack.c.l.b16 %v1704
      %v1913 = vunpack.c.l.b16 %v1705
      %v1914 = vunpack.c.l.b16 %v1706
      %v1915 = vunpack.c.l.b16 %v1707
      %v1916 = vunpack.c.l.b16 %v1708
      %v1917 = vunpack.c.l.b16 %v1709
      %v1918 = vunpack.c.l.b16 %v1710
      %v1919 = vunpack.c.l.b16 %v1711
      %v1920 = vunpack.c.l.b16 %v1712
      %v1921 = vunpack.c.l.b16 %v1713
      %v1922 = vunpack.c.l.b16 %v1714
      %v1923 = vunpack.c.l.b16 %v1715
      %v1924 = vunpack.c.l.b16 %v1716
      %v1925 = vunpack.c.l.b16 %v1717
      %v1926 = vunpack.c.l.b16 %v1718
      %v1927 = vunpack.c.l.b16 %v1719
      %v1928 = vunpack.c.l.b16 %v1720
      %v1929 = vunpack.c.l.b16 %v1721
      %v1930 = vunpack.c.l.b16 %v1722
      %v1931 = vunpack.c.l.b16 %v1723
      %v1932 = vunpack.c.l.b16 %v1724
      %v1933 = vunpack.c.l.b16 %v1725
      %v1934 = vunpack.c.l.b16 %v1726
      %v1935 = vunpack.c.l.b16 %v1727
      %v1936 = vunpack.c.l.b16 %v1728
      %v1937 = vunpack.c.l.b16 %v1729
      %v1938 = vunpack.c.l.b16 %v1730
      %v1939 = vunpack.c.l.b16 %v1731
      %v1940 = vunpack.c.l.b16 %v1732
      %v1941 = vunpack.c.l.b16 %v1733
      %v1942 = vunpack.c.l.b16 %v1734
      %v1943 = vunpack.c.l.b16 %v1735
      %v1944 = vunpack.c.l.b16 %v1736
      %v1945 = vunpack.c.l.b16 %v1737
      %v1946 = vunpack.c.l.b16 %v1738
      %v1947 = vunpack.c.l.b16 %v1739
      %v1948 = vunpack.c.l.b16 %v1740
      %v1949 = vunpack.c.l.b16 %v1741
      %v1950 = vunpack.c.l.b16 %v1742
      %v1951 = vunpack.c.l.b16 %v1743
      %v1952 = vunpack.c.l.b16 %v1744
      %v1953 = vunpack.c.l.b16 %v1745
      %v1954 = vunpack.c.l.b16 %v1746
      %v1955 = vunpack.c.l.b16 %v1747
      %v1956 = vunpack.c.l.b16 %v1748
      %v1957 = vunpack.c.l.b16 %v1749
      %v1958 = vunpack.c.l.b16 %v1750
      %v1959 = vunpack.c.l.b16 %v1751
      %v1960 = vunpack.c.l.b16 %v1752
      %v1961 = vunpack.c.l.b16 %v1753
      %v1962 = vunpack.c.l.b16 %v1754
      %v1963 = vunpack.c.l.b16 %v1755
      %v1964 = vunpack.c.l.b16 %v1756
      %v1965 = vunpack.c.l.b16 %v1757
      %v1966 = vunpack.c.l.b16 %v1758
      %v1967 = vunpack.c.l.b16 %v1759
      %v1968 = vunpack.c.l.b16 %v1760
      %v1969 = vpack.c.b16 %v1906, %v1905
      %v1970 = vpack.c.b16 %v1908, %v1907
      %v1971 = vpack.c.b16 %v1910, %v1909
      %v1972 = vpack.c.b16 %v1912, %v1911
      %v1973 = vpack.c.b16 %v1914, %v1913
      %v1974 = vpack.c.b16 %v1916, %v1915
      %v1975 = vpack.c.b16 %v1918, %v1917
      %v1976 = vpack.c.b16 %v1920, %v1919
      %v1977 = vpack.c.b16 %v1922, %v1921
      %v1978 = vpack.c.b16 %v1924, %v1923
      %v1979 = vpack.c.b16 %v1926, %v1925
      %v1980 = vpack.c.b16 %v1928, %v1927
      %v1981 = vpack.c.b16 %v1930, %v1929
      %v1982 = vpack.c.b16 %v1932, %v1931
      %v1983 = vpack.c.b16 %v1934, %v1933
      %v1984 = vpack.c.b16 %v1936, %v1935
      %v1985 = vpack.c.b16 %v1938, %v1937
      %v1986 = vpack.c.b16 %v1940, %v1939
      %v1987 = vpack.c.b16 %v1942, %v1941
      %v1988 = vpack.c.b16 %v1944, %v1943
      %v1989 = vpack.c.b16 %v1946, %v1945
      %v1990 = vpack.c.b16 %v1948, %v1947
      %v1991 = vpack.c.b16 %v1950, %v1949
      %v1992 = vpack.c.b16 %v1952, %v1951
      %v1993 = vpack.c.b16 %v1954, %v1953
      %v1994 = vpack.c.b16 %v1956, %v1955
      %v1995 = vpack.c.b16 %v1958, %v1957
      %v1996 = vpack.c.b16 %v1960, %v1959
      %v1997 = vpack.c.b16 %v1962, %v1961
      %v1998 = vpack.c.b16 %v1964, %v1963
      %v1999 = vpack.c.b16 %v1966, %v1965
      %v2000 = vpack.c.b16 %v1968, %v1967
      %2033 = vmatprep.subr.bf16.mxu0 0
      %2034 = vmatpush1.bf16.msra.mxu0 %v1976
      %2035 = vmatprep.subr.bf16.mxu0 0
      %2036 = vmatpush1.bf16.msra.mxu0 %v1975
      %2037 = vmatprep.subr.bf16.mxu0 0
      %2038 = vmatpush1.bf16.msra.mxu0 %v1974
      %2039 = vmatprep.subr.bf16.mxu0 0
      %2040 = vmatpush1.bf16.msra.mxu0 %v1973
      %2041 = vmatprep.subr.bf16.mxu0 0
      %2042 = vmatpush1.bf16.msra.mxu0 %v1972
      %2043 = vmatprep.subr.bf16.mxu0 0
      %2044 = vmatpush1.bf16.msra.mxu0 %v1971
      %2045 = vmatprep.subr.bf16.mxu0 0
      %2046 = vmatpush1.bf16.msra.mxu0 %v1970
      %2047 = vmatprep.subr.bf16.mxu0 0
      %2048 = vmatpush1.bf16.msra.mxu0 %v1969
      %2049 = vmatprep.subr.bf16.mxu0 0
      %2050 = vmatpush2.bf16.msra.mxu0 %v1984
      %2051 = vmatprep.subr.bf16.mxu0 0
      %2052 = vmatpush2.bf16.msra.mxu0 %v1983
      %2053 = vmatprep.subr.bf16.mxu0 0
      %2054 = vmatpush2.bf16.msra.mxu0 %v1982
      %2055 = vmatprep.subr.bf16.mxu0 0
      %2056 = vmatpush2.bf16.msra.mxu0 %v1981
      %2057 = vmatprep.subr.bf16.mxu0 0
      %2058 = vmatpush2.bf16.msra.mxu0 %v1980
      %2059 = vmatprep.subr.bf16.mxu0 0
      %2060 = vmatpush2.bf16.msra.mxu0 %v1979
      %2061 = vmatprep.subr.bf16.mxu0 0
      %2062 = vmatpush2.bf16.msra.mxu0 %v1978
      %2063 = vmatprep.subr.bf16.mxu0 0
      %2064 = vmatpush2.bf16.msra.mxu0 %v1977
      %2065 = vmatprep.mubr.bf16.mxu0 %v1810
      %2066 = vmatmul.mubr.bf16.gmra.mxu0 %v1809
      %v2067 = vpop.f32.mrf.mxu0
      %v2068 = vadd.f32 0.0, %v2067
      %v2069 = vpop.f32.mrf.mxu0
      %v2070 = vpop.f32.mrf.mxu0
      %v2071 = vadd.f32 0.0, %v2070
      %v2072 = vpop.f32.mrf.mxu0
      %2073 = vmatprep.mubr.bf16.mxu0 %v1814
      %2074 = vmatmul.mubr.bf16.gmra.mxu0 %v1813
      %v2075 = vpop.f32.mrf.mxu0
      %v2076 = vadd.f32 0.0, %v2075
      %v2077 = vpop.f32.mrf.mxu0
      %v2078 = vpop.f32.mrf.mxu0
      %v2079 = vadd.f32 0.0, %v2078
      %v2080 = vpop.f32.mrf.mxu0
      %2081 = vmatprep.mubr.bf16.mxu0 %v1818
      %2082 = vmatmul.mubr.bf16.gmra.mxu0 %v1817
      %v2083 = vpop.f32.mrf.mxu0
      %v2084 = vadd.f32 0.0, %v2083
      %v2085 = vpop.f32.mrf.mxu0
      %v2086 = vpop.f32.mrf.mxu0
      %v2087 = vadd.f32 0.0, %v2086
      %v2088 = vpop.f32.mrf.mxu0
      %2089 = vmatprep.mubr.bf16.mxu0 %v1822
      %2090 = vmatmul.mubr.bf16.gmra.mxu0 %v1821
      %v2091 = vpop.f32.mrf.mxu0
      %v2092 = vadd.f32 0.0, %v2091
      %v2093 = vpop.f32.mrf.mxu0
      %v2094 = vpop.f32.mrf.mxu0
      %v2095 = vadd.f32 0.0, %v2094
      %v2096 = vpop.f32.mrf.mxu0
      %2097 = vdwg.mxu0
      %2098 = vmatprep.subr.bf16.mxu0 0
      %2099 = vmatpush1.bf16.msra.mxu0 %v1992
      %2100 = vmatprep.subr.bf16.mxu0 0
      %2101 = vmatpush1.bf16.msra.mxu0 %v1991
      %2102 = vmatprep.subr.bf16.mxu0 0
      %2103 = vmatpush1.bf16.msra.mxu0 %v1990
      %2104 = vmatprep.subr.bf16.mxu0 0
      %2105 = vmatpush1.bf16.msra.mxu0 %v1989
      %2106 = vmatprep.subr.bf16.mxu0 0
      %2107 = vmatpush1.bf16.msra.mxu0 %v1988
      %2108 = vmatprep.subr.bf16.mxu0 0
      %2109 = vmatpush1.bf16.msra.mxu0 %v1987
      %2110 = vmatprep.subr.bf16.mxu0 0
      %2111 = vmatpush1.bf16.msra.mxu0 %v1986
      %2112 = vmatprep.subr.bf16.mxu0 0
      %2113 = vmatpush1.bf16.msra.mxu0 %v1985
      %2114 = vmatprep.subr.bf16.mxu0 0
      %2115 = vmatpush2.bf16.msra.mxu0 %v2000
      %2116 = vmatprep.subr.bf16.mxu0 0
      %2117 = vmatpush2.bf16.msra.mxu0 %v1999
      %2118 = vmatprep.subr.bf16.mxu0 0
      %2119 = vmatpush2.bf16.msra.mxu0 %v1998
      %2120 = vmatprep.subr.bf16.mxu0 0
      %2121 = vmatpush2.bf16.msra.mxu0 %v1997
      %2122 = vmatprep.subr.bf16.mxu0 0
      %2123 = vmatpush2.bf16.msra.mxu0 %v1996
      %2124 = vmatprep.subr.bf16.mxu0 0
      %2125 = vmatpush2.bf16.msra.mxu0 %v1995
      %2126 = vmatprep.subr.bf16.mxu0 0
      %2127 = vmatpush2.bf16.msra.mxu0 %v1994
      %2128 = vmatprep.subr.bf16.mxu0 0
      %2129 = vmatpush2.bf16.msra.mxu0 %v1993
      %2130 = vmatprep.mubr.bf16.mxu0 %v1812
      %2131 = vmatmul.mubr.bf16.gmra.mxu0 %v1811
      %v2132 = vpop.f32.mrf.mxu0
      %v2133 = vadd.f32 %v2068, %v2132
      %v2134 = vpop.f32.mrf.mxu0
      %v2135 = vpop.f32.mrf.mxu0
      %v2136 = vadd.f32 %v2071, %v2135
      %v2137 = vpop.f32.mrf.mxu0
      %2138 = vmatprep.mubr.bf16.mxu0 %v1816
      %2139 = vmatmul.mubr.bf16.gmra.mxu0 %v1815
      %v2140 = vpop.f32.mrf.mxu0
      %v2141 = vadd.f32 %v2076, %v2140
      %v2142 = vpop.f32.mrf.mxu0
      %v2143 = vpop.f32.mrf.mxu0
      %v2144 = vadd.f32 %v2079, %v2143
      %v2145 = vpop.f32.mrf.mxu0
      %2146 = vmatprep.mubr.bf16.mxu0 %v1820
      %2147 = vmatmul.mubr.bf16.gmra.mxu0 %v1819
      %v2148 = vpop.f32.mrf.mxu0
      %v2149 = vadd.f32 %v2084, %v2148
      %v2150 = vpop.f32.mrf.mxu0
      %v2151 = vpop.f32.mrf.mxu0
      %v2152 = vadd.f32 %v2087, %v2151
      %v2153 = vpop.f32.mrf.mxu0
      %2154 = vmatprep.mubr.bf16.mxu0 %v1824
      %2155 = vmatmul.mubr.bf16.gmra.mxu0 %v1823
      %v2156 = vpop.f32.mrf.mxu0
      %v2157 = vadd.f32 %v2092, %v2156
      %v2158 = vpop.f32.mrf.mxu0
      %v2159 = vpop.f32.mrf.mxu0
      %v2160 = vadd.f32 %v2095, %v2159
      %v2161 = vpop.f32.mrf.mxu0
      %2162 = vdwg.mxu0
      %v2179 = vunpack.c.l.b16 %v1598
      %v2180 = vunpack.c.h.b16 %v1598
      %v2181 = vunpack.c.l.b16 %v1599
      %v2182 = vunpack.c.h.b16 %v1599
      %v2183 = vunpack.c.l.b16 %v1600
      %v2184 = vunpack.c.h.b16 %v1600
      %v2185 = vunpack.c.l.b16 %v1601
      %v2186 = vunpack.c.h.b16 %v1601
      %v2187 = vunpack.c.l.b16 %v1602
      %v2188 = vunpack.c.h.b16 %v1602
      %v2189 = vunpack.c.l.b16 %v1603
      %v2190 = vunpack.c.h.b16 %v1603
      %v2191 = vunpack.c.l.b16 %v1604
      %v2192 = vunpack.c.h.b16 %v1604
      %v2193 = vunpack.c.l.b16 %v1605
      %v2194 = vunpack.c.h.b16 %v1605
      %v2195 = vunpack.c.l.b16 %v1606
      %v2196 = vunpack.c.h.b16 %v1606
      %v2197 = vunpack.c.l.b16 %v1607
      %v2198 = vunpack.c.h.b16 %v1607
      %v2199 = vunpack.c.l.b16 %v1608
      %v2200 = vunpack.c.h.b16 %v1608
      %v2201 = vunpack.c.l.b16 %v1609
      %v2202 = vunpack.c.h.b16 %v1609
      %v2203 = vunpack.c.l.b16 %v1610
      %v2204 = vunpack.c.h.b16 %v1610
      %v2205 = vunpack.c.l.b16 %v1611
      %v2206 = vunpack.c.h.b16 %v1611
      %v2207 = vunpack.c.l.b16 %v1612
      %v2208 = vunpack.c.h.b16 %v1612
      %v2209 = vunpack.c.l.b16 %v1613
      %v2210 = vunpack.c.h.b16 %v1613
      %v2211 = vpack.c.b16 %v2183, %v2179
      %v2212 = vpack.c.b16 %v2184, %v2180
      %v2213 = vpack.c.b16 %v2185, %v2181
      %v2214 = vpack.c.b16 %v2186, %v2182
      %v2215 = vpack.c.b16 %v2191, %v2187
      %v2216 = vpack.c.b16 %v2192, %v2188
      %v2217 = vpack.c.b16 %v2193, %v2189
      %v2218 = vpack.c.b16 %v2194, %v2190
      %v2219 = vpack.c.b16 %v2199, %v2195
      %v2220 = vpack.c.b16 %v2200, %v2196
      %v2221 = vpack.c.b16 %v2201, %v2197
      %v2222 = vpack.c.b16 %v2202, %v2198
      %v2223 = vpack.c.b16 %v2207, %v2203
      %v2224 = vpack.c.b16 %v2208, %v2204
      %v2225 = vpack.c.b16 %v2209, %v2205
      %v2226 = vpack.c.b16 %v2210, %v2206
      %v2307 = vunpack.c.l.b16 %v1615
      %v2308 = vunpack.c.l.b16 %v1616
      %v2309 = vunpack.c.l.b16 %v1617
      %v2310 = vunpack.c.l.b16 %v1618
      %v2311 = vunpack.c.l.b16 %v1619
      %v2312 = vunpack.c.l.b16 %v1620
      %v2313 = vunpack.c.l.b16 %v1621
      %v2314 = vunpack.c.l.b16 %v1622
      %v2315 = vunpack.c.l.b16 %v1623
      %v2316 = vunpack.c.l.b16 %v1624
      %v2317 = vunpack.c.l.b16 %v1625
      %v2318 = vunpack.c.l.b16 %v1626
      %v2319 = vunpack.c.l.b16 %v1627
      %v2320 = vunpack.c.l.b16 %v1628
      %v2321 = vunpack.c.l.b16 %v1629
      %v2322 = vunpack.c.l.b16 %v1630
      %v2323 = vunpack.c.l.b16 %v1631
      %v2324 = vunpack.c.l.b16 %v1632
      %v2325 = vunpack.c.l.b16 %v1633
      %v2326 = vunpack.c.l.b16 %v1634
      %v2327 = vunpack.c.l.b16 %v1635
      %v2328 = vunpack.c.l.b16 %v1636
      %v2329 = vunpack.c.l.b16 %v1637
      %v2330 = vunpack.c.l.b16 %v1638
      %v2331 = vunpack.c.l.b16 %v1639
      %v2332 = vunpack.c.l.b16 %v1640
      %v2333 = vunpack.c.l.b16 %v1641
      %v2334 = vunpack.c.l.b16 %v1642
      %v2335 = vunpack.c.l.b16 %v1643
      %v2336 = vunpack.c.l.b16 %v1644
      %v2337 = vunpack.c.l.b16 %v1645
      %v2338 = vunpack.c.l.b16 %v1646
      %v2339 = vunpack.c.l.b16 %v1647
      %v2340 = vunpack.c.l.b16 %v1648
      %v2341 = vunpack.c.l.b16 %v1649
      %v2342 = vunpack.c.l.b16 %v1650
      %v2343 = vunpack.c.l.b16 %v1651
      %v2344 = vunpack.c.l.b16 %v1652
      %v2345 = vunpack.c.l.b16 %v1653
      %v2346 = vunpack.c.l.b16 %v1654
      %v2347 = vunpack.c.l.b16 %v1655
      %v2348 = vunpack.c.l.b16 %v1656
      %v2349 = vunpack.c.l.b16 %v1657
      %v2350 = vunpack.c.l.b16 %v1658
      %v2351 = vunpack.c.l.b16 %v1659
      %v2352 = vunpack.c.l.b16 %v1660
      %v2353 = vunpack.c.l.b16 %v1661
      %v2354 = vunpack.c.l.b16 %v1662
      %v2355 = vunpack.c.l.b16 %v1663
      %v2356 = vunpack.c.l.b16 %v1664
      %v2357 = vunpack.c.l.b16 %v1665
      %v2358 = vunpack.c.l.b16 %v1666
      %v2359 = vunpack.c.l.b16 %v1667
      %v2360 = vunpack.c.l.b16 %v1668
      %v2361 = vunpack.c.l.b16 %v1669
      %v2362 = vunpack.c.l.b16 %v1670
      %v2363 = vunpack.c.l.b16 %v1671
      %v2364 = vunpack.c.l.b16 %v1672
      %v2365 = vunpack.c.l.b16 %v1673
      %v2366 = vunpack.c.l.b16 %v1674
      %v2367 = vunpack.c.l.b16 %v1675
      %v2368 = vunpack.c.l.b16 %v1676
      %v2369 = vunpack.c.l.b16 %v1677
      %v2370 = vunpack.c.l.b16 %v1678
      %v2371 = vpack.c.b16 %v2308, %v2307
      %v2372 = vpack.c.b16 %v2310, %v2309
      %v2373 = vpack.c.b16 %v2312, %v2311
      %v2374 = vpack.c.b16 %v2314, %v2313
      %v2375 = vpack.c.b16 %v2316, %v2315
      %v2376 = vpack.c.b16 %v2318, %v2317
      %v2377 = vpack.c.b16 %v2320, %v2319
      %v2378 = vpack.c.b16 %v2322, %v2321
      %v2379 = vpack.c.b16 %v2324, %v2323
      %v2380 = vpack.c.b16 %v2326, %v2325
      %v2381 = vpack.c.b16 %v2328, %v2327
      %v2382 = vpack.c.b16 %v2330, %v2329
      %v2383 = vpack.c.b16 %v2332, %v2331
      %v2384 = vpack.c.b16 %v2334, %v2333
      %v2385 = vpack.c.b16 %v2336, %v2335
      %v2386 = vpack.c.b16 %v2338, %v2337
      %v2387 = vpack.c.b16 %v2340, %v2339
      %v2388 = vpack.c.b16 %v2342, %v2341
      %v2389 = vpack.c.b16 %v2344, %v2343
      %v2390 = vpack.c.b16 %v2346, %v2345
      %v2391 = vpack.c.b16 %v2348, %v2347
      %v2392 = vpack.c.b16 %v2350, %v2349
      %v2393 = vpack.c.b16 %v2352, %v2351
      %v2394 = vpack.c.b16 %v2354, %v2353
      %v2395 = vpack.c.b16 %v2356, %v2355
      %v2396 = vpack.c.b16 %v2358, %v2357
      %v2397 = vpack.c.b16 %v2360, %v2359
      %v2398 = vpack.c.b16 %v2362, %v2361
      %v2399 = vpack.c.b16 %v2364, %v2363
      %v2400 = vpack.c.b16 %v2366, %v2365
      %v2401 = vpack.c.b16 %v2368, %v2367
      %v2402 = vpack.c.b16 %v2370, %v2369
      %2435 = vmatprep.subr.bf16.mxu0 0
      %2436 = vmatpush1.bf16.msra.mxu0 %v2378
      %2437 = vmatprep.subr.bf16.mxu0 0
      %2438 = vmatpush1.bf16.msra.mxu0 %v2377
      %2439 = vmatprep.subr.bf16.mxu0 0
      %2440 = vmatpush1.bf16.msra.mxu0 %v2376
      %2441 = vmatprep.subr.bf16.mxu0 0
      %2442 = vmatpush1.bf16.msra.mxu0 %v2375
      %2443 = vmatprep.subr.bf16.mxu0 0
      %2444 = vmatpush1.bf16.msra.mxu0 %v2374
      %2445 = vmatprep.subr.bf16.mxu0 0
      %2446 = vmatpush1.bf16.msra.mxu0 %v2373
      %2447 = vmatprep.subr.bf16.mxu0 0
      %2448 = vmatpush1.bf16.msra.mxu0 %v2372
      %2449 = vmatprep.subr.bf16.mxu0 0
      %2450 = vmatpush1.bf16.msra.mxu0 %v2371
      %2451 = vmatprep.subr.bf16.mxu0 0
      %2452 = vmatpush2.bf16.msra.mxu0 %v2386
      %2453 = vmatprep.subr.bf16.mxu0 0
      %2454 = vmatpush2.bf16.msra.mxu0 %v2385
      %2455 = vmatprep.subr.bf16.mxu0 0
      %2456 = vmatpush2.bf16.msra.mxu0 %v2384
      %2457 = vmatprep.subr.bf16.mxu0 0
      %2458 = vmatpush2.bf16.msra.mxu0 %v2383
      %2459 = vmatprep.subr.bf16.mxu0 0
      %2460 = vmatpush2.bf16.msra.mxu0 %v2382
      %2461 = vmatprep.subr.bf16.mxu0 0
      %2462 = vmatpush2.bf16.msra.mxu0 %v2381
      %2463 = vmatprep.subr.bf16.mxu0 0
      %2464 = vmatpush2.bf16.msra.mxu0 %v2380
      %2465 = vmatprep.subr.bf16.mxu0 0
      %2466 = vmatpush2.bf16.msra.mxu0 %v2379
      %2467 = vmatprep.mubr.bf16.mxu0 %v2212
      %2468 = vmatmul.mubr.bf16.gmra.mxu0 %v2211
      %v2469 = vpop.f32.mrf.mxu0
      %v2470 = vadd.f32 %v2133, %v2469
      %v2471 = vpop.f32.mrf.mxu0
      %v2472 = vpop.f32.mrf.mxu0
      %v2473 = vadd.f32 %v2136, %v2472
      %v2474 = vpop.f32.mrf.mxu0
      %2475 = vmatprep.mubr.bf16.mxu0 %v2216
      %2476 = vmatmul.mubr.bf16.gmra.mxu0 %v2215
      %v2477 = vpop.f32.mrf.mxu0
      %v2478 = vadd.f32 %v2141, %v2477
      %v2479 = vpop.f32.mrf.mxu0
      %v2480 = vpop.f32.mrf.mxu0
      %v2481 = vadd.f32 %v2144, %v2480
      %v2482 = vpop.f32.mrf.mxu0
      %2483 = vmatprep.mubr.bf16.mxu0 %v2220
      %2484 = vmatmul.mubr.bf16.gmra.mxu0 %v2219
      %v2485 = vpop.f32.mrf.mxu0
      %v2486 = vadd.f32 %v2149, %v2485
      %v2487 = vpop.f32.mrf.mxu0
      %v2488 = vpop.f32.mrf.mxu0
      %v2489 = vadd.f32 %v2152, %v2488
      %v2490 = vpop.f32.mrf.mxu0
      %2491 = vmatprep.mubr.bf16.mxu0 %v2224
      %2492 = vmatmul.mubr.bf16.gmra.mxu0 %v2223
      %v2493 = vpop.f32.mrf.mxu0
      %v2494 = vadd.f32 %v2157, %v2493
      %v2495 = vpop.f32.mrf.mxu0
      %v2496 = vpop.f32.mrf.mxu0
      %v2497 = vadd.f32 %v2160, %v2496
      %v2498 = vpop.f32.mrf.mxu0
      %2499 = vdwg.mxu0
      %2500 = vmatprep.subr.bf16.mxu0 0
      %2501 = vmatpush1.bf16.msra.mxu0 %v2394
      %2502 = vmatprep.subr.bf16.mxu0 0
      %2503 = vmatpush1.bf16.msra.mxu0 %v2393
      %2504 = vmatprep.subr.bf16.mxu0 0
      %2505 = vmatpush1.bf16.msra.mxu0 %v2392
      %2506 = vmatprep.subr.bf16.mxu0 0
      %2507 = vmatpush1.bf16.msra.mxu0 %v2391
      %2508 = vmatprep.subr.bf16.mxu0 0
      %2509 = vmatpush1.bf16.msra.mxu0 %v2390
      %2510 = vmatprep.subr.bf16.mxu0 0
      %2511 = vmatpush1.bf16.msra.mxu0 %v2389
      %2512 = vmatprep.subr.bf16.mxu0 0
      %2513 = vmatpush1.bf16.msra.mxu0 %v2388
      %2514 = vmatprep.subr.bf16.mxu0 0
      %2515 = vmatpush1.bf16.msra.mxu0 %v2387
      %2516 = vmatprep.subr.bf16.mxu0 0
      %2517 = vmatpush2.bf16.msra.mxu0 %v2402
      %2518 = vmatprep.subr.bf16.mxu0 0
      %2519 = vmatpush2.bf16.msra.mxu0 %v2401
      %2520 = vmatprep.subr.bf16.mxu0 0
      %2521 = vmatpush2.bf16.msra.mxu0 %v2400
      %2522 = vmatprep.subr.bf16.mxu0 0
      %2523 = vmatpush2.bf16.msra.mxu0 %v2399
      %2524 = vmatprep.subr.bf16.mxu0 0
      %2525 = vmatpush2.bf16.msra.mxu0 %v2398
      %2526 = vmatprep.subr.bf16.mxu0 0
      %2527 = vmatpush2.bf16.msra.mxu0 %v2397
      %2528 = vmatprep.subr.bf16.mxu0 0
      %2529 = vmatpush2.bf16.msra.mxu0 %v2396
      %2530 = vmatprep.subr.bf16.mxu0 0
      %2531 = vmatpush2.bf16.msra.mxu0 %v2395
      %2532 = vmatprep.mubr.bf16.mxu0 %v2214
      %2533 = vmatmul.mubr.bf16.gmra.mxu0 %v2213
      %v2534 = vpop.f32.mrf.mxu0
      %v2535 = vadd.f32 %v2470, %v2534
      %v2536 = vpop.f32.mrf.mxu0
      %v2537 = vpop.f32.mrf.mxu0
      %v2538 = vadd.f32 %v2473, %v2537
      %v2539 = vpop.f32.mrf.mxu0
      %2540 = vmatprep.mubr.bf16.mxu0 %v2218
      %2541 = vmatmul.mubr.bf16.gmra.mxu0 %v2217
      %v2542 = vpop.f32.mrf.mxu0
      %v2543 = vadd.f32 %v2478, %v2542
      %v2544 = vpop.f32.mrf.mxu0
      %v2545 = vpop.f32.mrf.mxu0
      %v2546 = vadd.f32 %v2481, %v2545
      %v2547 = vpop.f32.mrf.mxu0
      %2548 = vmatprep.mubr.bf16.mxu0 %v2222
      %2549 = vmatmul.mubr.bf16.gmra.mxu0 %v2221
      %v2550 = vpop.f32.mrf.mxu0
      %v2551 = vadd.f32 %v2486, %v2550
      %v2552 = vpop.f32.mrf.mxu0
      %v2553 = vpop.f32.mrf.mxu0
      %v2554 = vadd.f32 %v2489, %v2553
      %v2555 = vpop.f32.mrf.mxu0
      %2556 = vmatprep.mubr.bf16.mxu0 %v2226
      %2557 = vmatmul.mubr.bf16.gmra.mxu0 %v2225
      %v2558 = vpop.f32.mrf.mxu0
      %v2559 = vadd.f32 %v2494, %v2558
      %v2560 = vpop.f32.mrf.mxu0
      %v2561 = vpop.f32.mrf.mxu0
      %v2562 = vadd.f32 %v2497, %v2561
      %v2563 = vpop.f32.mrf.mxu0
      %2564 = vdwg.mxu0
      %v2565 = vld [vmem:[#allocation3] sm:$0xff]
      %v2566 = vld [vmem:[#allocation3 + $0x8] sm:$0xff]
      %v2567 = vld [vmem:[#allocation3 + $0x10] sm:$0xff]
      %v2568 = vld [vmem:[#allocation3 + $0x18] sm:$0xff]
      %v2569 = vld [vmem:[#allocation3 + $0x20] sm:$0xff]
      %v2570 = vld [vmem:[#allocation3 + $0x28] sm:$0xff]
      %v2571 = vld [vmem:[#allocation3 + $0x30] sm:$0xff]
      %v2572 = vld [vmem:[#allocation3 + $0x38] sm:$0xff]
      %v2573 = vadd.f32 %v2565, %v2535
      %v2574 = vadd.f32 %v2566, %v2538
      %v2575 = vadd.f32 %v2567, %v2543
      %v2576 = vadd.f32 %v2568, %v2546
      %v2577 = vadd.f32 %v2569, %v2551
      %v2578 = vadd.f32 %v2570, %v2554
      %v2579 = vadd.f32 %v2571, %v2559
      %v2580 = vadd.f32 %v2572, %v2562
      %2581 = vst [vmem:[#allocation3] sm:$0xff] %v2573
      %2582 = vst [vmem:[#allocation3 + $0x8] sm:$0xff] %v2574
      %2583 = vst [vmem:[#allocation3 + $0x10] sm:$0xff] %v2575
      %2584 = vst [vmem:[#allocation3 + $0x18] sm:$0xff] %v2576
      %2585 = vst [vmem:[#allocation3 + $0x20] sm:$0xff] %v2577
      %2586 = vst [vmem:[#allocation3 + $0x28] sm:$0xff] %v2578
      %2587 = vst [vmem:[#allocation3 + $0x30] sm:$0xff] %v2579
      %2588 = vst [vmem:[#allocation3 + $0x38] sm:$0xff] %v2580
      %v2589 = vld [vmem:[#allocation3] sm:$0xff]
      %v2590 = vld [vmem:[#allocation3 + $0x8] sm:$0xff]
      %v2591 = vld [vmem:[#allocation3 + $0x10] sm:$0xff]
      %v2592 = vld [vmem:[#allocation3 + $0x18] sm:$0xff]
      %v2593 = vld [vmem:[#allocation3 + $0x20] sm:$0xff]
      %v2594 = vld [vmem:[#allocation3 + $0x28] sm:$0xff]
      %v2595 = vld [vmem:[#allocation3 + $0x30] sm:$0xff]
      %v2596 = vld [vmem:[#allocation3 + $0x38] sm:$0xff]
      %v2597 = vmul.f32 %v2589, 0.1
      %v2598 = vmul.f32 %v2590, 0.1
      %v2599 = vmul.f32 %v2591, 0.1
      %v2600 = vmul.f32 %v2592, 0.1
      %v2601 = vmul.f32 %v2593, 0.1
      %v2602 = vmul.f32 %v2594, 0.1
      %v2603 = vmul.f32 %v2595, 0.1
      %v2604 = vmul.f32 %v2596, 0.1
      %v2605 = vmax.f32 %v2589, %v2597
      %v2606 = vmax.f32 %v2590, %v2598
      %v2607 = vmax.f32 %v2591, %v2599
      %v2608 = vmax.f32 %v2592, %v2600
      %v2609 = vmax.f32 %v2593, %v2601
      %v2610 = vmax.f32 %v2594, %v2602
      %v2611 = vmax.f32 %v2595, %v2603
      %v2612 = vmax.f32 %v2596, %v2604
      %2613 = vst [vmem:[%s238] sm:$0xff] %v2605
      %2614 = vst [vmem:[%s238 + $0x8] sm:$0xff] %v2606
      %2615 = vst [vmem:[%s238 + $0x10] sm:$0xff] %v2607
      %2616 = vst [vmem:[%s238 + $0x18] sm:$0xff] %v2608
      %2617 = vst [vmem:[%s238 + $0x20] sm:$0xff] %v2609
      %2618 = vst [vmem:[%s238 + $0x28] sm:$0xff] %v2610
      %2619 = vst [vmem:[%s238 + $0x30] sm:$0xff] %v2611
      %2620 = vst [vmem:[%s238 + $0x38] sm:$0xff] %v2612
      %s2621 = smul.u32 8, %s21
      %p2622 = scmp.lt.s32.totalorder %s20, 1
      %s2623 = scalar_select %p2622, %s20, 1
      %p2624 = scmp.lt.s32.totalorder %s2621, 7
      %s2625 = scalar_select %p2624, %s2621, 7
      %p2626 = scmp.lt.s32.totalorder %s19, 0
      %s2627 = scalar_select %p2626, %s19, 0
      %s2628 = sadd.s32 %s2627, %s2625
      %s2629 = smul.addr %s2623, 8
      %s2630 = sadd.s32 %s2628, %s2629
      %s2631 = smul.addr %s2630, 8
      %s2632 = scalar_lea.vmem %s3, %s2631
      // Predicated region
      $region33: #{disc_block_forward.3} parent=31 // pred_check
        %p2633 = pneg %p133
      $region34: #{disc_block_forward.3} parent=31 // pred_check_branch
        %2635 = sbr.rel (%p2633) target = $region36
      $region35: #{disc_block_forward.3} parent=31 // pred_region
        %s2636 = smul.u32 8, %s21
      $region36: #{disc_block_forward.3} parent=31 // pred_fallthru
        _
    $region32: #{disc_block_forward.3} parent=5 // pred_fallthru
      _
    %p2637 = scmp.le.s32.totalorder 2, %s9
    // Predicated region
    $region37: #{disc_block_forward.3} parent=5 // pred_check
      %p2638 = pneg %p2637
    $region38: #{disc_block_forward.3} parent=5 // pred_check_branch
      %2640 = sbr.rel (%p2638) target = $region40
    $region39: #{disc_block_forward.3} parent=5 // pred_region
      %s2641 = ssub.s32 %s9, 2
      // Predicated region
      $region41: #{disc_block_forward.3} parent=39 // pred_check
        %p2642 = pneg %p139
      $region42: #{disc_block_forward.3} parent=39 // pred_check_branch
        %2644 = sbr.rel (%p2642) target = $region44
      $region43: #{disc_block_forward.3} parent=39 // pred_region
        %s2645 = smul.u32 8, %s24
        %p2646 = scmp.lt.s32.totalorder %s23, 1
        %s2647 = scalar_select %p2646, %s23, 1
        %p2648 = scmp.lt.s32.totalorder %s2645, 7
        %s2649 = scalar_select %p2648, %s2645, 7
        %p2650 = scmp.lt.s32.totalorder %s22, 0
        %s2651 = scalar_select %p2650, %s22, 0
        %s2652 = sadd.s32 %s2651, %s2649
        %s2653 = smul.addr %s2647, 8
        %s2654 = sadd.s32 %s2652, %s2653
        %s2655 = smul.addr %s2654, 8
        %s2656 = scalar_lea.vmem %s3, %s2655
      $region44: #{disc_block_forward.3} parent=39 // pred_fallthru
        _
    $region40: #{disc_block_forward.3} parent=5 // pred_fallthru
      _
  $region6: #{disc_block_forward.3} parent=0 // loop_footer
    %s13 = sadd.s32 1, %s9
  $region7: #{disc_block_forward.3} parent=0 // loop_footer_branch
    %8 = sbr.rel target = $region3
  $region8: #{disc_block_forward.3} parent=0 // loop_exit
    _

</llo_original>
